<compile_context>
chip_gen: v7x
topology: tpu7x:2x2x1
jax: 0.10.0
libtpu: 0.0.40
codegen_flags: <defaults>
</compile_context>

<pallas_src>
import functools
import math

import numpy as np
import jax
import jax.numpy as jnp
from jax.experimental import pallas as pl
from jax.experimental.pallas import tpu as pltpu

G = 128          # lane-aligned gate stride == padded feature width
PPAD = 8         # sublane-padded path rows (one sublane group)

_SELU_ALPHA = 1.6732632423543772848170429916717
_SELU_SCALE = 1.0507009873554804934193349852946


# ----------------------------------------------------------------------------- helpers

def _full_spec(shape):
    # whole-array block (exempt from the (8,128) divisibility rule), grid=(1,)
    return pl.BlockSpec(shape, lambda *_: (0,) * len(shape))


# ----------------------------------------------------------------------------- kernel

def actor_kernel(link_ref, path_ref, msc_ref, magg_ref, w_ref, b_ref,
                 out_ref, h_scratch, *, t, seq_len, num_paths):
    """Full Actor.forward in one kernel (t rounds + readout).

    w_ref  : [7*128, 384] bf16 weight slab
             rows 0:128   msg W_ih   (gate-aligned [128, 3*128], gates r|z|n)
             rows 128:256 msg W_hh
             rows 256:384 upd W_ih
             rows 384:512 upd W_hh
             rows 512:640 readout W1 in lanes 0:128
             rows 640:768 readout W2 in lanes 0:128
             rows 768:896 out W      in lanes 0:128 (column 0)
    b_ref  : [8, 384] f32 bias slab (msg b_ih, msg b_hh, upd b_ih, upd b_hh,
             ro b1, ro b2, out b, pad) — gate/lane aligned like the weights.
    """
    f32 = jnp.float32
    bf16 = jnp.bfloat16

    def dot(a, b):
        # bf16 MXU operands, f32 accumulation.
        return jnp.dot(a.astype(bf16), b.astype(bf16),
                       preferred_element_type=f32)

    def selu(v):
        return _SELU_SCALE * jnp.where(v > 0, v, _SELU_ALPHA * (jnp.exp(v) - 1.0))

    def gates(gx, gh, h):
        # PyTorch GRU gate math; r/z/n live at lane offsets 0/128/256.
        r = jax.nn.sigmoid(gx[:, 0:G] + gh[:, 0:G])
        z = jax.nn.sigmoid(gx[:, G:2 * G] + gh[:, G:2 * G])
        n = jnp.tanh(gx[:, 2 * G:3 * G] + r * gh[:, 2 * G:3 * G])
        return n + z * (h - n)                      # == (1-z)*n + z*h

    link_state = link_ref[...]                      # [num_links, 128] f32
    path_state = path_ref[...]                      # [8, 128]         f32
    msc = msc_ref[...]                              # [L*8, num_links] bf16
    magg = magg_ref[...]                            # [num_links, L*8] bf16

    for _ in range(t):
        # ---- hoisted input projection for the whole sequence (2 matmuls) ----
        x_all = dot(msc, link_state)                              # [L*8, 128]
        gx_all = dot(x_all, w_ref[0:G, :]) + b_ref[0:1, :]        # [L*8, 384]

        # ---- sequence GRU recurrence: one matmul (h @ W_hh) per step ----
        h = path_state
        for l in range(seq_len):
            gh = dot(h, w_ref[G:2 * G, :]) + b_ref[1:2, :]        # [8, 384]
            h = gates(gx_all[l * PPAD:(l + 1) * PPAD, :], gh, h)
            h_scratch[l * PPAD:(l + 1) * PPAD, :] = h             # stash for scatter-add
        path_state = h                                            # GRU final hidden

        # ---- batched scatter-add onto links (one matmul) ----
        m_agg = dot(magg, h_scratch[...])                         # [num_links, 128]

        # ---- link-update GRUCell ----
        gx_u = dot(m_agg, w_ref[2 * G:3 * G, :]) + b_ref[2:3, :]
        gh_u = dot(link_state, w_ref[3 * G:4 * G, :]) + b_ref[3:4, :]
        link_state = gates(gx_u, gh_u, link_state)

    # ---- readout: Linear -> SELU -> Linear -> SELU -> Linear(->1) ----
    h1 = selu(dot(path_state, w_ref[4 * G:5 * G, 0:G]) + b_ref[4:5, 0:G])
    h2 = selu(dot(h1, w_ref[5 * G:6 * G, 0:G]) + b_ref[5:6, 0:G])
    out = dot(h2, w_ref[6 * G:7 * G, 0:G]) + b_ref[6:7, 0:G]      # lane 0 = result
    out_ref[...] = out[0:num_paths, 0:1]


# ----------------------------------------------------------------------------- wrapper

def actor_forward(w_slab, b_slab, link_state_pad, path_state_pad, msc, magg,
                  *, t, seq_len, num_paths):
    """Mirror of Actor.forward.  Returns [num_actions, 1] f32."""
    args = (link_state_pad, path_state_pad, msc, magg, w_slab, b_slab)
    kernel = functools.partial(actor_kernel, t=t, seq_len=seq_len,
                               num_paths=num_paths)
    return pl.pallas_call(
        kernel,
        grid=(1,),
        in_specs=[_full_spec(a.shape) for a in args],
        out_specs=_full_spec((num_paths, 1)),
        out_shape=jax.ShapeDtypeStruct((num_paths, 1), jnp.float32),
        scratch_shapes=[pltpu.VMEM((seq_len * PPAD, G), jnp.float32)],
        compiler_params=pltpu.CompilerParams(dimension_semantics=("arbitrary",)),
    )(*args)


# ----------------------------------------------------------------------------- routing

def build_routing(link_id, path_id, sequence, num_links, num_paths):
    """Host-side one-hot routing matrices (max_len stays a static Python int).

    msc [L*8, num_links] : message_input[(s,p)] = msc_row(s,p) @ link_state
                           (assignment — matches torch's index_put semantics)
    magg[num_links, L*8] : m_agg = magg @ H     (scatter_add semantics)
    """
    link_id = np.asarray(link_id)
    path_id = np.asarray(path_id)
    sequence = np.asarray(sequence)
    max_len = int(sequence.max()) + 1

    rows = sequence * PPAD + path_id                 # step-major, 8 path rows per step
    msc = np.zeros((max_len * PPAD, num_links), np.float32)
    msc[rows, link_id] = 1.0
    magg = np.zeros((num_links, max_len * PPAD), np.float32)
    np.add.at(magg, (link_id, rows), 1.0)

    return jnp.asarray(msc, jnp.bfloat16), jnp.asarray(magg, jnp.bfloat16), max_len


# ----------------------------------------------------------------------------- params

def init_params(key, feature_size=20, readout_units=20):
    """Weights stored [in, out]; fused GRU gates in r|z|n (PyTorch) order.

    To load real PyTorch weights: transpose weight_ih_l0 / weight_hh_l0
    ([3F, F] -> [F, 3F]) keeping the r|z|n gate order.
    """
    F, R = feature_size, readout_units
    keys = jax.random.split(key, 7)
    glorot = jax.nn.initializers.glorot_uniform()

    def orth(g, k, shape):
        return jax.nn.initializers.orthogonal(scale=g)(k, shape, jnp.float32)

    return {
        'msg_w_ih': glorot(keys[0], (F, 3 * F), jnp.float32),
        'msg_w_hh': glorot(keys[1], (F, 3 * F), jnp.float32),
        'msg_b_ih': jnp.zeros((1, 3 * F), jnp.float32),
        'msg_b_hh': jnp.zeros((1, 3 * F), jnp.float32),
        'upd_w_ih': glorot(keys[2], (F, 3 * F), jnp.float32),
        'upd_w_hh': glorot(keys[3], (F, 3 * F), jnp.float32),
        'upd_b_ih': jnp.zeros((1, 3 * F), jnp.float32),
        'upd_b_hh': jnp.zeros((1, 3 * F), jnp.float32),
        'ro_w1': orth(math.sqrt(2.0), keys[4], (F, R)),
        'ro_b1': jnp.zeros((1, R), jnp.float32),
        'ro_w2': orth(math.sqrt(2.0), keys[5], (R, R)),
        'ro_b2': jnp.zeros((1, R), jnp.float32),
        'out_w': orth(math.sqrt(0.01), keys[6], (R, 1)),
        'out_b': jnp.zeros((1, 1), jnp.float32),
    }


def pack_params(params, feature_size, readout_units):
    """Pack all weights into one bf16 slab + one f32 bias slab (lane-aligned)."""
    F, R = feature_size, readout_units

    def gate_pack_w(w):                       # [F, 3F] (r|z|n) -> [128, 384]
        w = np.asarray(w, np.float32)
        out = np.zeros((G, 3 * G), np.float32)
        for g in range(3):
            out[:F, g * G:g * G + F] = w[:, g * F:(g + 1) * F]
        return out

    def gate_pack_b(b):                       # [*, 3F] -> [384]
        b = np.asarray(b, np.float32).reshape(-1)
        out = np.zeros((3 * G,), np.float32)
        for g in range(3):
            out[g * G:g * G + F] = b[g * F:(g + 1) * F]
        return out

    w_slab = np.zeros((7 * G, 3 * G), np.float32)
    w_slab[0 * G:1 * G] = gate_pack_w(params['msg_w_ih'])
    w_slab[1 * G:2 * G] = gate_pack_w(params['msg_w_hh'])
    w_slab[2 * G:3 * G] = gate_pack_w(params['upd_w_ih'])
    w_slab[3 * G:4 * G] = gate_pack_w(params['upd_w_hh'])
    w_slab[4 * G:4 * G + F, 0:R] = np.asarray(params['ro_w1'], np.float32)
    w_slab[5 * G:5 * G + R, 0:R] = np.asarray(params['ro_w2'], np.float32)
    w_slab[6 * G:6 * G + R, 0:1] = np.asarray(params['out_w'], np.float32)

    b_slab = np.zeros((8, 3 * G), np.float32)
    b_slab[0] = gate_pack_b(params['msg_b_ih'])
    b_slab[1] = gate_pack_b(params['msg_b_hh'])
    b_slab[2] = gate_pack_b(params['upd_b_ih'])
    b_slab[3] = gate_pack_b(params['upd_b_hh'])
    b_slab[4, 0:R] = np.asarray(params['ro_b1'], np.float32).reshape(-1)
    b_slab[5, 0:R] = np.asarray(params['ro_b2'], np.float32).reshape(-1)
    b_slab[6, 0:1] = np.asarray(params['out_b'], np.float32).reshape(-1)

    return jnp.asarray(w_slab, jnp.bfloat16), jnp.asarray(b_slab, jnp.float32)


# ----------------------------------------------------------------------------- pure-JAX reference (f32)

def actor_reference(params, link_state, path_state, link_id, path_id, sequence,
                    num_links, num_paths, t):
    F = link_state.shape[1]
    L = int(np.max(sequence)) + 1

    def gru(x, h, wih, whh, bih, bhh):
        gx = x @ wih + bih
        gh = h @ whh + bhh
        r = jax.nn.sigmoid(gx[:, :F] + gh[:, :F])
        z = jax.nn.sigmoid(gx[:, F:2 * F] + gh[:, F:2 * F])
        n = jnp.tanh(gx[:, 2 * F:] + r * gh[:, 2 * F:])
        return (1.0 - z) * n + z * h

    for _ in range(t):
        msg = jnp.zeros((num_paths, L, F), jnp.float32)
        msg = msg.at[path_id, sequence].set(link_state[link_id])
        h = path_state
        hs = []
        for s in range(L):
            h = gru(msg[:, s, :], h, params['msg_w_ih'], params['msg_w_hh'],
                    params['msg_b_ih'], params['msg_b_hh'])
            hs.append(h)
        path_state = h
        m_seq = jnp.stack(hs, axis=1)                       # [P, L, F]
        gathered = m_seq[path_id, sequence]                 # [E, F]
        m_agg = jnp.zeros((num_links, F), jnp.float32).at[link_id].add(gathered)
        link_state = gru(m_agg, link_state, params['upd_w_ih'], params['upd_w_hh'],
                         params['upd_b_ih'], params['upd_b_hh'])

    def selu(v):
        return _SELU_SCALE * jnp.where(v > 0, v, _SELU_ALPHA * (jnp.exp(v) - 1.0))

    h1 = selu(path_state @ params['ro_w1'] + params['ro_b1'])
    h2 = selu(h1 @ params['ro_w2'] + params['ro_b2'])
    return h2 @ params['out_w'] + params['out_b']


# ----------------------------------------------------------------------------- main

if __name__ == "__main__":
    FEATURE_SIZE = 20
    READOUT_UNITS = 20
    T = 4
    NUM_LINKS = 6
    NUM_ACTIONS = 4   # number of candidate paths

    key = jax.random.PRNGKey(0)
    k_link, k_path, k_params = jax.random.split(key, 3)

    # paths over links:
    #   path 0: links 0->1->2 ; path 1: 2->3 ; path 2: 4->5->0 ; path 3: 1->3
    link_id = np.array([0, 1, 2, 2, 3, 4, 5, 0, 1, 3], dtype=np.int32)
    path_id = np.array([0, 0, 0, 1, 1, 2, 2, 2, 3, 3], dtype=np.int32)
    sequence = np.array([0, 1, 2, 0, 1, 0, 1, 2, 0, 1], dtype=np.int32)

    link_state = jax.random.normal(k_link, (NUM_LINKS, FEATURE_SIZE), jnp.float32)
    path_state = jax.random.normal(k_path, (NUM_ACTIONS, FEATURE_SIZE), jnp.float32)

    params = init_params(k_params, FEATURE_SIZE, READOUT_UNITS)

    # Host-side packing: routing matrices, weight/bias slabs, padded states.
    msc, magg, max_len = build_routing(link_id, path_id, sequence,
                                       NUM_LINKS, NUM_ACTIONS)
    w_slab, b_slab = pack_params(params, FEATURE_SIZE, READOUT_UNITS)

    link_pad = jnp.zeros((NUM_LINKS, G), jnp.float32)
    link_pad = link_pad.at[:, :FEATURE_SIZE].set(link_state)
    path_pad = jnp.zeros((PPAD, G), jnp.float32)
    path_pad = path_pad.at[:NUM_ACTIONS, :FEATURE_SIZE].set(path_state)

    out = actor_forward(w_slab, b_slab, link_pad, path_pad, msc, magg,
                        t=T, seq_len=max_len, num_paths=NUM_ACTIONS)
    out = jax.block_until_ready(out)

    assert out.shape == (NUM_ACTIONS, 1), out.shape
    assert bool(jnp.all(jnp.isfinite(out)))

    # Validate against an f32 pure-JAX reference (relaxed tol for bf16 MXU operands).
    ref = actor_reference(params, link_state, path_state, link_id, path_id,
                          sequence, NUM_LINKS, NUM_ACTIONS, T)
    np.testing.assert_allclose(np.asarray(out), np.asarray(ref),
                               atol=5e-2, rtol=1e-1)

    print("KERNEL_OK")
</pallas_src>

<mosaic_0001>
module attributes {stable_mosaic.version = 11 : i64} {
  func.func @actor_kernel(%arg0: i32, %arg1: memref<6x128xf32, #tpu.memory_space<vmem>>, %arg2: memref<8x128xf32, #tpu.memory_space<vmem>>, %arg3: memref<24x6xbf16, #tpu.memory_space<vmem>>, %arg4: memref<6x24xbf16, #tpu.memory_space<vmem>>, %arg5: memref<896x384xbf16, #tpu.memory_space<vmem>>, %arg6: memref<8x384xf32, #tpu.memory_space<vmem>>, %arg7: memref<4x1xf32, #tpu.memory_space<vmem>>, %arg8: memref<24x128xf32, #tpu.memory_space<vmem>>) attributes {dimension_semantics = [#tpu.dimension_semantics<arbitrary>], iteration_bounds = array<i64: 1>, scalar_prefetch = 0 : i64, scratch_operands = 1 : i64, tpu.core_type = #tpu.core_type<tc>, window_params = [{pipeline_mode = #tpu.pipeline_mode<synchronous>, transform_indices = @transform_0, window_bounds = array<i64: 6, 128>}, {pipeline_mode = #tpu.pipeline_mode<synchronous>, transform_indices = @transform_1, window_bounds = array<i64: 8, 128>}, {pipeline_mode = #tpu.pipeline_mode<synchronous>, transform_indices = @transform_2, window_bounds = array<i64: 24, 6>}, {pipeline_mode = #tpu.pipeline_mode<synchronous>, transform_indices = @transform_3, window_bounds = array<i64: 6, 24>}, {pipeline_mode = #tpu.pipeline_mode<synchronous>, transform_indices = @transform_4, window_bounds = array<i64: 896, 384>}, {pipeline_mode = #tpu.pipeline_mode<synchronous>, transform_indices = @transform_5, window_bounds = array<i64: 8, 384>}, {pipeline_mode = #tpu.pipeline_mode<synchronous>, transform_indices = @transform_6, window_bounds = array<i64: 4, 1>}]} {
    %c0 = arith.constant 0 : index
    %c0_0 = arith.constant 0 : index
    %0 = vector.load %arg1[%c0, %c0_0] : memref<6x128xf32, #tpu.memory_space<vmem>>, vector<6x128xf32>
    %c0_1 = arith.constant 0 : index
    %c0_2 = arith.constant 0 : index
    %1 = vector.load %arg2[%c0_1, %c0_2] : memref<8x128xf32, #tpu.memory_space<vmem>>, vector<8x128xf32>
    %c0_3 = arith.constant 0 : index
    %c0_4 = arith.constant 0 : index
    %2 = vector.load %arg3[%c0_3, %c0_4] : memref<24x6xbf16, #tpu.memory_space<vmem>>, vector<24x6xbf16>
    %c0_5 = arith.constant 0 : index
    %c0_6 = arith.constant 0 : index
    %3 = vector.load %arg4[%c0_5, %c0_6] : memref<6x24xbf16, #tpu.memory_space<vmem>>, vector<6x24xbf16>
    %4 = arith.truncf %0 : vector<6x128xf32> to vector<6x128xbf16>
    %cst = arith.constant dense<0.000000e+00> : vector<24x128xf32>
    %5 = tpu.matmul %2, %4, %cst {dimension_numbers = #tpu.dot_dimension_numbers<[1], [0], [0], [1], [0, 0, 1, 1], [], []>} : vector<24x6xbf16>, vector<6x128xbf16>, vector<24x128xf32> -> vector<24x128xf32>
    %c0_7 = arith.constant 0 : index
    %c0_8 = arith.constant 0 : index
    %6 = vector.load %arg5[%c0_7, %c0_8] : memref<896x384xbf16, #tpu.memory_space<vmem>>, vector<128x384xbf16>
    %7 = arith.truncf %5 : vector<24x128xf32> to vector<24x128xbf16>
    %cst_9 = arith.constant dense<0.000000e+00> : vector<24x384xf32>
    %8 = tpu.matmul %7, %6, %cst_9 {dimension_numbers = #tpu.dot_dimension_numbers<[1], [0], [0], [1], [0, 0, 1, 1], [], []>} : vector<24x128xbf16>, vector<128x384xbf16>, vector<24x384xf32> -> vector<24x384xf32>
    %c0_10 = arith.constant 0 : index
    %c0_11 = arith.constant 0 : index
    %9 = vector.load %arg6[%c0_10, %c0_11] : memref<8x384xf32, #tpu.memory_space<vmem>>, vector<1x384xf32>
    %10 = vector.broadcast %9 : vector<1x384xf32> to vector<24x384xf32>
    %11 = arith.addf %8, %10 : vector<24x384xf32>
    %c128 = arith.constant 128 : index
    %c0_12 = arith.constant 0 : index
    %12 = vector.load %arg5[%c128, %c0_12] : memref<896x384xbf16, #tpu.memory_space<vmem>>, vector<128x384xbf16>
    %13 = arith.truncf %1 : vector<8x128xf32> to vector<8x128xbf16>
    %cst_13 = arith.constant dense<0.000000e+00> : vector<8x384xf32>
    %14 = tpu.matmul %13, %12, %cst_13 {dimension_numbers = #tpu.dot_dimension_numbers<[1], [0], [0], [1], [0, 0, 1, 1], [], []>} : vector<8x128xbf16>, vector<128x384xbf16>, vector<8x384xf32> -> vector<8x384xf32>
    %c1 = arith.constant 1 : index
    %c0_14 = arith.constant 0 : index
    %15 = vector.load %arg6[%c1, %c0_14] : memref<8x384xf32, #tpu.memory_space<vmem>>, vector<1x384xf32>
    %16 = vector.broadcast %15 : vector<1x384xf32> to vector<8x384xf32>
    %17 = arith.addf %14, %16 : vector<8x384xf32>
    %18 = vector.extract_strided_slice %11 {offsets = [0, 0], sizes = [8, 384], strides = [1, 1]} : vector<24x384xf32> to vector<8x384xf32>
    %19 = vector.extract_strided_slice %18 {offsets = [0, 0], sizes = [8, 128], strides = [1, 1]} : vector<8x384xf32> to vector<8x128xf32>
    %20 = vector.extract_strided_slice %17 {offsets = [0, 0], sizes = [8, 128], strides = [1, 1]} : vector<8x384xf32> to vector<8x128xf32>
    %21 = arith.addf %19, %20 : vector<8x128xf32>
    %22 = arith.negf %21 : vector<8x128xf32>
    %23 = math.exp %22 : vector<8x128xf32>
    %cst_15 = arith.constant 1.000000e+00 : f32
    %24 = vector.broadcast %cst_15 : f32 to vector<8x128xf32>
    %25 = arith.addf %24, %23 : vector<8x128xf32>
    %26 = arith.divf %24, %25 : vector<8x128xf32>
    %27 = vector.extract_strided_slice %18 {offsets = [0, 128], sizes = [8, 128], strides = [1, 1]} : vector<8x384xf32> to vector<8x128xf32>
    %28 = vector.extract_strided_slice %17 {offsets = [0, 128], sizes = [8, 128], strides = [1, 1]} : vector<8x384xf32> to vector<8x128xf32>
    %29 = arith.addf %27, %28 : vector<8x128xf32>
    %30 = arith.negf %29 : vector<8x128xf32>
    %31 = math.exp %30 : vector<8x128xf32>
    %cst_16 = arith.constant 1.000000e+00 : f32
    %32 = vector.broadcast %cst_16 : f32 to vector<8x128xf32>
    %33 = arith.addf %32, %31 : vector<8x128xf32>
    %34 = arith.divf %32, %33 : vector<8x128xf32>
    %35 = vector.extract_strided_slice %18 {offsets = [0, 256], sizes = [8, 128], strides = [1, 1]} : vector<8x384xf32> to vector<8x128xf32>
    %36 = vector.extract_strided_slice %17 {offsets = [0, 256], sizes = [8, 128], strides = [1, 1]} : vector<8x384xf32> to vector<8x128xf32>
    %37 = arith.mulf %26, %36 : vector<8x128xf32>
    %38 = arith.addf %35, %37 : vector<8x128xf32>
    %39 = math.tanh %38 : vector<8x128xf32>
    %40 = arith.subf %1, %39 : vector<8x128xf32>
    %41 = arith.mulf %34, %40 : vector<8x128xf32>
    %42 = arith.addf %39, %41 : vector<8x128xf32>
    %c0_17 = arith.constant 0 : index
    %c0_18 = arith.constant 0 : index
    %43 = vector.load %arg8[%c0_17, %c0_18] : memref<24x128xf32, #tpu.memory_space<vmem>>, vector<8x128xf32>
    tpu.vector_store %arg8[%c0_17, %c0_18], %42 {strides = array<i32>} : memref<24x128xf32, #tpu.memory_space<vmem>>, vector<8x128xf32>,
    %c128_19 = arith.constant 128 : index
    %c0_20 = arith.constant 0 : index
    %44 = vector.load %arg5[%c128_19, %c0_20] : memref<896x384xbf16, #tpu.memory_space<vmem>>, vector<128x384xbf16>
    %45 = arith.truncf %42 : vector<8x128xf32> to vector<8x128xbf16>
    %cst_21 = arith.constant dense<0.000000e+00> : vector<8x384xf32>
    %46 = tpu.matmul %45, %44, %cst_21 {dimension_numbers = #tpu.dot_dimension_numbers<[1], [0], [0], [1], [0, 0, 1, 1], [], []>} : vector<8x128xbf16>, vector<128x384xbf16>, vector<8x384xf32> -> vector<8x384xf32>
    %c1_22 = arith.constant 1 : index
    %c0_23 = arith.constant 0 : index
    %47 = vector.load %arg6[%c1_22, %c0_23] : memref<8x384xf32, #tpu.memory_space<vmem>>, vector<1x384xf32>
    %48 = vector.broadcast %47 : vector<1x384xf32> to vector<8x384xf32>
    %49 = arith.addf %46, %48 : vector<8x384xf32>
    %50 = vector.extract_strided_slice %11 {offsets = [8, 0], sizes = [8, 384], strides = [1, 1]} : vector<24x384xf32> to vector<8x384xf32>
    %51 = vector.extract_strided_slice %50 {offsets = [0, 0], sizes = [8, 128], strides = [1, 1]} : vector<8x384xf32> to vector<8x128xf32>
    %52 = vector.extract_strided_slice %49 {offsets = [0, 0], sizes = [8, 128], strides = [1, 1]} : vector<8x384xf32> to vector<8x128xf32>
    %53 = arith.addf %51, %52 : vector<8x128xf32>
    %54 = arith.negf %53 : vector<8x128xf32>
    %55 = math.exp %54 : vector<8x128xf32>
    %cst_24 = arith.constant 1.000000e+00 : f32
    %56 = vector.broadcast %cst_24 : f32 to vector<8x128xf32>
    %57 = arith.addf %56, %55 : vector<8x128xf32>
    %58 = arith.divf %56, %57 : vector<8x128xf32>
    %59 = vector.extract_strided_slice %50 {offsets = [0, 128], sizes = [8, 128], strides = [1, 1]} : vector<8x384xf32> to vector<8x128xf32>
    %60 = vector.extract_strided_slice %49 {offsets = [0, 128], sizes = [8, 128], strides = [1, 1]} : vector<8x384xf32> to vector<8x128xf32>
    %61 = arith.addf %59, %60 : vector<8x128xf32>
    %62 = arith.negf %61 : vector<8x128xf32>
    %63 = math.exp %62 : vector<8x128xf32>
    %cst_25 = arith.constant 1.000000e+00 : f32
    %64 = vector.broadcast %cst_25 : f32 to vector<8x128xf32>
    %65 = arith.addf %64, %63 : vector<8x128xf32>
    %66 = arith.divf %64, %65 : vector<8x128xf32>
    %67 = vector.extract_strided_slice %50 {offsets = [0, 256], sizes = [8, 128], strides = [1, 1]} : vector<8x384xf32> to vector<8x128xf32>
    %68 = vector.extract_strided_slice %49 {offsets = [0, 256], sizes = [8, 128], strides = [1, 1]} : vector<8x384xf32> to vector<8x128xf32>
    %69 = arith.mulf %58, %68 : vector<8x128xf32>
    %70 = arith.addf %67, %69 : vector<8x128xf32>
    %71 = math.tanh %70 : vector<8x128xf32>
    %72 = arith.subf %42, %71 : vector<8x128xf32>
    %73 = arith.mulf %66, %72 : vector<8x128xf32>
    %74 = arith.addf %71, %73 : vector<8x128xf32>
    %c8 = arith.constant 8 : index
    %c0_26 = arith.constant 0 : index
    %75 = vector.load %arg8[%c8, %c0_26] : memref<24x128xf32, #tpu.memory_space<vmem>>, vector<8x128xf32>
    tpu.vector_store %arg8[%c8, %c0_26], %74 {strides = array<i32>} : memref<24x128xf32, #tpu.memory_space<vmem>>, vector<8x128xf32>,
    %c128_27 = arith.constant 128 : index
    %c0_28 = arith.constant 0 : index
    %76 = vector.load %arg5[%c128_27, %c0_28] : memref<896x384xbf16, #tpu.memory_space<vmem>>, vector<128x384xbf16>
    %77 = arith.truncf %74 : vector<8x128xf32> to vector<8x128xbf16>
    %cst_29 = arith.constant dense<0.000000e+00> : vector<8x384xf32>
    %78 = tpu.matmul %77, %76, %cst_29 {dimension_numbers = #tpu.dot_dimension_numbers<[1], [0], [0], [1], [0, 0, 1, 1], [], []>} : vector<8x128xbf16>, vector<128x384xbf16>, vector<8x384xf32> -> vector<8x384xf32>
    %c1_30 = arith.constant 1 : index
    %c0_31 = arith.constant 0 : index
    %79 = vector.load %arg6[%c1_30, %c0_31] : memref<8x384xf32, #tpu.memory_space<vmem>>, vector<1x384xf32>
    %80 = vector.broadcast %79 : vector<1x384xf32> to vector<8x384xf32>
    %81 = arith.addf %78, %80 : vector<8x384xf32>
    %82 = vector.extract_strided_slice %11 {offsets = [16, 0], sizes = [8, 384], strides = [1, 1]} : vector<24x384xf32> to vector<8x384xf32>
    %83 = vector.extract_strided_slice %82 {offsets = [0, 0], sizes = [8, 128], strides = [1, 1]} : vector<8x384xf32> to vector<8x128xf32>
    %84 = vector.extract_strided_slice %81 {offsets = [0, 0], sizes = [8, 128], strides = [1, 1]} : vector<8x384xf32> to vector<8x128xf32>
    %85 = arith.addf %83, %84 : vector<8x128xf32>
    %86 = arith.negf %85 : vector<8x128xf32>
    %87 = math.exp %86 : vector<8x128xf32>
    %cst_32 = arith.constant 1.000000e+00 : f32
    %88 = vector.broadcast %cst_32 : f32 to vector<8x128xf32>
    %89 = arith.addf %88, %87 : vector<8x128xf32>
    %90 = arith.divf %88, %89 : vector<8x128xf32>
    %91 = vector.extract_strided_slice %82 {offsets = [0, 128], sizes = [8, 128], strides = [1, 1]} : vector<8x384xf32> to vector<8x128xf32>
    %92 = vector.extract_strided_slice %81 {offsets = [0, 128], sizes = [8, 128], strides = [1, 1]} : vector<8x384xf32> to vector<8x128xf32>
    %93 = arith.addf %91, %92 : vector<8x128xf32>
    %94 = arith.negf %93 : vector<8x128xf32>
    %95 = math.exp %94 : vector<8x128xf32>
    %cst_33 = arith.constant 1.000000e+00 : f32
    %96 = vector.broadcast %cst_33 : f32 to vector<8x128xf32>
    %97 = arith.addf %96, %95 : vector<8x128xf32>
    %98 = arith.divf %96, %97 : vector<8x128xf32>
    %99 = vector.extract_strided_slice %82 {offsets = [0, 256], sizes = [8, 128], strides = [1, 1]} : vector<8x384xf32> to vector<8x128xf32>
    %100 = vector.extract_strided_slice %81 {offsets = [0, 256], sizes = [8, 128], strides = [1, 1]} : vector<8x384xf32> to vector<8x128xf32>
    %101 = arith.mulf %90, %100 : vector<8x128xf32>
    %102 = arith.addf %99, %101 : vector<8x128xf32>
    %103 = math.tanh %102 : vector<8x128xf32>
    %104 = arith.subf %74, %103 : vector<8x128xf32>
    %105 = arith.mulf %98, %104 : vector<8x128xf32>
    %106 = arith.addf %103, %105 : vector<8x128xf32>
    %c16 = arith.constant 16 : index
    %c0_34 = arith.constant 0 : index
    %107 = vector.load %arg8[%c16, %c0_34] : memref<24x128xf32, #tpu.memory_space<vmem>>, vector<8x128xf32>
    tpu.vector_store %arg8[%c16, %c0_34], %106 {strides = array<i32>} : memref<24x128xf32, #tpu.memory_space<vmem>>, vector<8x128xf32>,
    %c0_35 = arith.constant 0 : index
    %c0_36 = arith.constant 0 : index
    %108 = vector.load %arg8[%c0_35, %c0_36] : memref<24x128xf32, #tpu.memory_space<vmem>>, vector<24x128xf32>
    %109 = arith.truncf %108 : vector<24x128xf32> to vector<24x128xbf16>
    %cst_37 = arith.constant dense<0.000000e+00> : vector<6x128xf32>
    %110 = tpu.matmul %3, %109, %cst_37 {dimension_numbers = #tpu.dot_dimension_numbers<[1], [0], [0], [1], [0, 0, 1, 1], [], []>} : vector<6x24xbf16>, vector<24x128xbf16>, vector<6x128xf32> -> vector<6x128xf32>
    %c256 = arith.constant 256 : index
    %c0_38 = arith.constant 0 : index
    %111 = vector.load %arg5[%c256, %c0_38] : memref<896x384xbf16, #tpu.memory_space<vmem>>, vector<128x384xbf16>
    %112 = arith.truncf %110 : vector<6x128xf32> to vector<6x128xbf16>
    %cst_39 = arith.constant dense<0.000000e+00> : vector<6x384xf32>
    %113 = tpu.matmul %112, %111, %cst_39 {dimension_numbers = #tpu.dot_dimension_numbers<[1], [0], [0], [1], [0, 0, 1, 1], [], []>} : vector<6x128xbf16>, vector<128x384xbf16>, vector<6x384xf32> -> vector<6x384xf32>
    %c2 = arith.constant 2 : index
    %c0_40 = arith.constant 0 : index
    %114 = vector.load %arg6[%c2, %c0_40] : memref<8x384xf32, #tpu.memory_space<vmem>>, vector<1x384xf32>
    %115 = vector.broadcast %114 : vector<1x384xf32> to vector<6x384xf32>
    %116 = arith.addf %113, %115 : vector<6x384xf32>
    %c384 = arith.constant 384 : index
    %c0_41 = arith.constant 0 : index
    %117 = vector.load %arg5[%c384, %c0_41] : memref<896x384xbf16, #tpu.memory_space<vmem>>, vector<128x384xbf16>
    %118 = arith.truncf %0 : vector<6x128xf32> to vector<6x128xbf16>
    %cst_42 = arith.constant dense<0.000000e+00> : vector<6x384xf32>
    %119 = tpu.matmul %118, %117, %cst_42 {dimension_numbers = #tpu.dot_dimension_numbers<[1], [0], [0], [1], [0, 0, 1, 1], [], []>} : vector<6x128xbf16>, vector<128x384xbf16>, vector<6x384xf32> -> vector<6x384xf32>
    %c3 = arith.constant 3 : index
    %c0_43 = arith.constant 0 : index
    %120 = vector.load %arg6[%c3, %c0_43] : memref<8x384xf32, #tpu.memory_space<vmem>>, vector<1x384xf32>
    %121 = vector.broadcast %120 : vector<1x384xf32> to vector<6x384xf32>
    %122 = arith.addf %119, %121 : vector<6x384xf32>
    %123 = vector.extract_strided_slice %116 {offsets = [0, 0], sizes = [6, 128], strides = [1, 1]} : vector<6x384xf32> to vector<6x128xf32>
    %124 = vector.extract_strided_slice %122 {offsets = [0, 0], sizes = [6, 128], strides = [1, 1]} : vector<6x384xf32> to vector<6x128xf32>
    %125 = arith.addf %123, %124 : vector<6x128xf32>
    %126 = arith.negf %125 : vector<6x128xf32>
    %127 = math.exp %126 : vector<6x128xf32>
    %cst_44 = arith.constant 1.000000e+00 : f32
    %128 = vector.broadcast %cst_44 : f32 to vector<6x128xf32>
    %129 = arith.addf %128, %127 : vector<6x128xf32>
    %130 = arith.divf %128, %129 : vector<6x128xf32>
    %131 = vector.extract_strided_slice %116 {offsets = [0, 128], sizes = [6, 128], strides = [1, 1]} : vector<6x384xf32> to vector<6x128xf32>
    %132 = vector.extract_strided_slice %122 {offsets = [0, 128], sizes = [6, 128], strides = [1, 1]} : vector<6x384xf32> to vector<6x128xf32>
    %133 = arith.addf %131, %132 : vector<6x128xf32>
    %134 = arith.negf %133 : vector<6x128xf32>
    %135 = math.exp %134 : vector<6x128xf32>
    %cst_45 = arith.constant 1.000000e+00 : f32
    %136 = vector.broadcast %cst_45 : f32 to vector<6x128xf32>
    %137 = arith.addf %136, %135 : vector<6x128xf32>
    %138 = arith.divf %136, %137 : vector<6x128xf32>
    %139 = vector.extract_strided_slice %116 {offsets = [0, 256], sizes = [6, 128], strides = [1, 1]} : vector<6x384xf32> to vector<6x128xf32>
    %140 = vector.extract_strided_slice %122 {offsets = [0, 256], sizes = [6, 128], strides = [1, 1]} : vector<6x384xf32> to vector<6x128xf32>
    %141 = arith.mulf %130, %140 : vector<6x128xf32>
    %142 = arith.addf %139, %141 : vector<6x128xf32>
    %143 = math.tanh %142 : vector<6x128xf32>
    %144 = arith.subf %0, %143 : vector<6x128xf32>
    %145 = arith.mulf %138, %144 : vector<6x128xf32>
    %146 = arith.addf %143, %145 : vector<6x128xf32>
    %147 = arith.truncf %146 : vector<6x128xf32> to vector<6x128xbf16>
    %cst_46 = arith.constant dense<0.000000e+00> : vector<24x128xf32>
    %148 = tpu.matmul %2, %147, %cst_46 {dimension_numbers = #tpu.dot_dimension_numbers<[1], [0], [0], [1], [0, 0, 1, 1], [], []>} : vector<24x6xbf16>, vector<6x128xbf16>, vector<24x128xf32> -> vector<24x128xf32>
    %c0_47 = arith.constant 0 : index
    %c0_48 = arith.constant 0 : index
    %149 = vector.load %arg5[%c0_47, %c0_48] : memref<896x384xbf16, #tpu.memory_space<vmem>>, vector<128x384xbf16>
    %150 = arith.truncf %148 : vector<24x128xf32> to vector<24x128xbf16>
    %cst_49 = arith.constant dense<0.000000e+00> : vector<24x384xf32>
    %151 = tpu.matmul %150, %149, %cst_49 {dimension_numbers = #tpu.dot_dimension_numbers<[1], [0], [0], [1], [0, 0, 1, 1], [], []>} : vector<24x128xbf16>, vector<128x384xbf16>, vector<24x384xf32> -> vector<24x384xf32>
    %c0_50 = arith.constant 0 : index
    %c0_51 = arith.constant 0 : index
    %152 = vector.load %arg6[%c0_50, %c0_51] : memref<8x384xf32, #tpu.memory_space<vmem>>, vector<1x384xf32>
    %153 = vector.broadcast %152 : vector<1x384xf32> to vector<24x384xf32>
    %154 = arith.addf %151, %153 : vector<24x384xf32>
    %c128_52 = arith.constant 128 : index
    %c0_53 = arith.constant 0 : index
    %155 = vector.load %arg5[%c128_52, %c0_53] : memref<896x384xbf16, #tpu.memory_space<vmem>>, vector<128x384xbf16>
    %156 = arith.truncf %106 : vector<8x128xf32> to vector<8x128xbf16>
    %cst_54 = arith.constant dense<0.000000e+00> : vector<8x384xf32>
    %157 = tpu.matmul %156, %155, %cst_54 {dimension_numbers = #tpu.dot_dimension_numbers<[1], [0], [0], [1], [0, 0, 1, 1], [], []>} : vector<8x128xbf16>, vector<128x384xbf16>, vector<8x384xf32> -> vector<8x384xf32>
    %c1_55 = arith.constant 1 : index
    %c0_56 = arith.constant 0 : index
    %158 = vector.load %arg6[%c1_55, %c0_56] : memref<8x384xf32, #tpu.memory_space<vmem>>, vector<1x384xf32>
    %159 = vector.broadcast %158 : vector<1x384xf32> to vector<8x384xf32>
    %160 = arith.addf %157, %159 : vector<8x384xf32>
    %161 = vector.extract_strided_slice %154 {offsets = [0, 0], sizes = [8, 384], strides = [1, 1]} : vector<24x384xf32> to vector<8x384xf32>
    %162 = vector.extract_strided_slice %161 {offsets = [0, 0], sizes = [8, 128], strides = [1, 1]} : vector<8x384xf32> to vector<8x128xf32>
    %163 = vector.extract_strided_slice %160 {offsets = [0, 0], sizes = [8, 128], strides = [1, 1]} : vector<8x384xf32> to vector<8x128xf32>
    %164 = arith.addf %162, %163 : vector<8x128xf32>
    %165 = arith.negf %164 : vector<8x128xf32>
    %166 = math.exp %165 : vector<8x128xf32>
    %cst_57 = arith.constant 1.000000e+00 : f32
    %167 = vector.broadcast %cst_57 : f32 to vector<8x128xf32>
    %168 = arith.addf %167, %166 : vector<8x128xf32>
    %169 = arith.divf %167, %168 : vector<8x128xf32>
    %170 = vector.extract_strided_slice %161 {offsets = [0, 128], sizes = [8, 128], strides = [1, 1]} : vector<8x384xf32> to vector<8x128xf32>
    %171 = vector.extract_strided_slice %160 {offsets = [0, 128], sizes = [8, 128], strides = [1, 1]} : vector<8x384xf32> to vector<8x128xf32>
    %172 = arith.addf %170, %171 : vector<8x128xf32>
    %173 = arith.negf %172 : vector<8x128xf32>
    %174 = math.exp %173 : vector<8x128xf32>
    %cst_58 = arith.constant 1.000000e+00 : f32
    %175 = vector.broadcast %cst_58 : f32 to vector<8x128xf32>
    %176 = arith.addf %175, %174 : vector<8x128xf32>
    %177 = arith.divf %175, %176 : vector<8x128xf32>
    %178 = vector.extract_strided_slice %161 {offsets = [0, 256], sizes = [8, 128], strides = [1, 1]} : vector<8x384xf32> to vector<8x128xf32>
    %179 = vector.extract_strided_slice %160 {offsets = [0, 256], sizes = [8, 128], strides = [1, 1]} : vector<8x384xf32> to vector<8x128xf32>
    %180 = arith.mulf %169, %179 : vector<8x128xf32>
    %181 = arith.addf %178, %180 : vector<8x128xf32>
    %182 = math.tanh %181 : vector<8x128xf32>
    %183 = arith.subf %106, %182 : vector<8x128xf32>
    %184 = arith.mulf %177, %183 : vector<8x128xf32>
    %185 = arith.addf %182, %184 : vector<8x128xf32>
    %c0_59 = arith.constant 0 : index
    %c0_60 = arith.constant 0 : index
    %186 = vector.load %arg8[%c0_59, %c0_60] : memref<24x128xf32, #tpu.memory_space<vmem>>, vector<8x128xf32>
    tpu.vector_store %arg8[%c0_59, %c0_60], %185 {strides = array<i32>} : memref<24x128xf32, #tpu.memory_space<vmem>>, vector<8x128xf32>,
    %c128_61 = arith.constant 128 : index
    %c0_62 = arith.constant 0 : index
    %187 = vector.load %arg5[%c128_61, %c0_62] : memref<896x384xbf16, #tpu.memory_space<vmem>>, vector<128x384xbf16>
    %188 = arith.truncf %185 : vector<8x128xf32> to vector<8x128xbf16>
    %cst_63 = arith.constant dense<0.000000e+00> : vector<8x384xf32>
    %189 = tpu.matmul %188, %187, %cst_63 {dimension_numbers = #tpu.dot_dimension_numbers<[1], [0], [0], [1], [0, 0, 1, 1], [], []>} : vector<8x128xbf16>, vector<128x384xbf16>, vector<8x384xf32> -> vector<8x384xf32>
    %c1_64 = arith.constant 1 : index
    %c0_65 = arith.constant 0 : index
    %190 = vector.load %arg6[%c1_64, %c0_65] : memref<8x384xf32, #tpu.memory_space<vmem>>, vector<1x384xf32>
    %191 = vector.broadcast %190 : vector<1x384xf32> to vector<8x384xf32>
    %192 = arith.addf %189, %191 : vector<8x384xf32>
    %193 = vector.extract_strided_slice %154 {offsets = [8, 0], sizes = [8, 384], strides = [1, 1]} : vector<24x384xf32> to vector<8x384xf32>
    %194 = vector.extract_strided_slice %193 {offsets = [0, 0], sizes = [8, 128], strides = [1, 1]} : vector<8x384xf32> to vector<8x128xf32>
    %195 = vector.extract_strided_slice %192 {offsets = [0, 0], sizes = [8, 128], strides = [1, 1]} : vector<8x384xf32> to vector<8x128xf32>
    %196 = arith.addf %194, %195 : vector<8x128xf32>
    %197 = arith.negf %196 : vector<8x128xf32>
    %198 = math.exp %197 : vector<8x128xf32>
    %cst_66 = arith.constant 1.000000e+00 : f32
    %199 = vector.broadcast %cst_66 : f32 to vector<8x128xf32>
    %200 = arith.addf %199, %198 : vector<8x128xf32>
    %201 = arith.divf %199, %200 : vector<8x128xf32>
    %202 = vector.extract_strided_slice %193 {offsets = [0, 128], sizes = [8, 128], strides = [1, 1]} : vector<8x384xf32> to vector<8x128xf32>
    %203 = vector.extract_strided_slice %192 {offsets = [0, 128], sizes = [8, 128], strides = [1, 1]} : vector<8x384xf32> to vector<8x128xf32>
    %204 = arith.addf %202, %203 : vector<8x128xf32>
    %205 = arith.negf %204 : vector<8x128xf32>
    %206 = math.exp %205 : vector<8x128xf32>
    %cst_67 = arith.constant 1.000000e+00 : f32
    %207 = vector.broadcast %cst_67 : f32 to vector<8x128xf32>
    %208 = arith.addf %207, %206 : vector<8x128xf32>
    %209 = arith.divf %207, %208 : vector<8x128xf32>
    %210 = vector.extract_strided_slice %193 {offsets = [0, 256], sizes = [8, 128], strides = [1, 1]} : vector<8x384xf32> to vector<8x128xf32>
    %211 = vector.extract_strided_slice %192 {offsets = [0, 256], sizes = [8, 128], strides = [1, 1]} : vector<8x384xf32> to vector<8x128xf32>
    %212 = arith.mulf %201, %211 : vector<8x128xf32>
    %213 = arith.addf %210, %212 : vector<8x128xf32>
    %214 = math.tanh %213 : vector<8x128xf32>
    %215 = arith.subf %185, %214 : vector<8x128xf32>
    %216 = arith.mulf %209, %215 : vector<8x128xf32>
    %217 = arith.addf %214, %216 : vector<8x128xf32>
    %c8_68 = arith.constant 8 : index
    %c0_69 = arith.constant 0 : index
    %218 = vector.load %arg8[%c8_68, %c0_69] : memref<24x128xf32, #tpu.memory_space<vmem>>, vector<8x128xf32>
    tpu.vector_store %arg8[%c8_68, %c0_69], %217 {strides = array<i32>} : memref<24x128xf32, #tpu.memory_space<vmem>>, vector<8x128xf32>,
    %c128_70 = arith.constant 128 : index
    %c0_71 = arith.constant 0 : index
    %219 = vector.load %arg5[%c128_70, %c0_71] : memref<896x384xbf16, #tpu.memory_space<vmem>>, vector<128x384xbf16>
    %220 = arith.truncf %217 : vector<8x128xf32> to vector<8x128xbf16>
    %cst_72 = arith.constant dense<0.000000e+00> : vector<8x384xf32>
    %221 = tpu.matmul %220, %219, %cst_72 {dimension_numbers = #tpu.dot_dimension_numbers<[1], [0], [0], [1], [0, 0, 1, 1], [], []>} : vector<8x128xbf16>, vector<128x384xbf16>, vector<8x384xf32> -> vector<8x384xf32>
    %c1_73 = arith.constant 1 : index
    %c0_74 = arith.constant 0 : index
    %222 = vector.load %arg6[%c1_73, %c0_74] : memref<8x384xf32, #tpu.memory_space<vmem>>, vector<1x384xf32>
    %223 = vector.broadcast %222 : vector<1x384xf32> to vector<8x384xf32>
    %224 = arith.addf %221, %223 : vector<8x384xf32>
    %225 = vector.extract_strided_slice %154 {offsets = [16, 0], sizes = [8, 384], strides = [1, 1]} : vector<24x384xf32> to vector<8x384xf32>
    %226 = vector.extract_strided_slice %225 {offsets = [0, 0], sizes = [8, 128], strides = [1, 1]} : vector<8x384xf32> to vector<8x128xf32>
    %227 = vector.extract_strided_slice %224 {offsets = [0, 0], sizes = [8, 128], strides = [1, 1]} : vector<8x384xf32> to vector<8x128xf32>
    %228 = arith.addf %226, %227 : vector<8x128xf32>
    %229 = arith.negf %228 : vector<8x128xf32>
    %230 = math.exp %229 : vector<8x128xf32>
    %cst_75 = arith.constant 1.000000e+00 : f32
    %231 = vector.broadcast %cst_75 : f32 to vector<8x128xf32>
    %232 = arith.addf %231, %230 : vector<8x128xf32>
    %233 = arith.divf %231, %232 : vector<8x128xf32>
    %234 = vector.extract_strided_slice %225 {offsets = [0, 128], sizes = [8, 128], strides = [1, 1]} : vector<8x384xf32> to vector<8x128xf32>
    %235 = vector.extract_strided_slice %224 {offsets = [0, 128], sizes = [8, 128], strides = [1, 1]} : vector<8x384xf32> to vector<8x128xf32>
    %236 = arith.addf %234, %235 : vector<8x128xf32>
    %237 = arith.negf %236 : vector<8x128xf32>
    %238 = math.exp %237 : vector<8x128xf32>
    %cst_76 = arith.constant 1.000000e+00 : f32
    %239 = vector.broadcast %cst_76 : f32 to vector<8x128xf32>
    %240 = arith.addf %239, %238 : vector<8x128xf32>
    %241 = arith.divf %239, %240 : vector<8x128xf32>
    %242 = vector.extract_strided_slice %225 {offsets = [0, 256], sizes = [8, 128], strides = [1, 1]} : vector<8x384xf32> to vector<8x128xf32>
    %243 = vector.extract_strided_slice %224 {offsets = [0, 256], sizes = [8, 128], strides = [1, 1]} : vector<8x384xf32> to vector<8x128xf32>
    %244 = arith.mulf %233, %243 : vector<8x128xf32>
    %245 = arith.addf %242, %244 : vector<8x128xf32>
    %246 = math.tanh %245 : vector<8x128xf32>
    %247 = arith.subf %217, %246 : vector<8x128xf32>
    %248 = arith.mulf %241, %247 : vector<8x128xf32>
    %249 = arith.addf %246, %248 : vector<8x128xf32>
    %c16_77 = arith.constant 16 : index
    %c0_78 = arith.constant 0 : index
    %250 = vector.load %arg8[%c16_77, %c0_78] : memref<24x128xf32, #tpu.memory_space<vmem>>, vector<8x128xf32>
    tpu.vector_store %arg8[%c16_77, %c0_78], %249 {strides = array<i32>} : memref<24x128xf32, #tpu.memory_space<vmem>>, vector<8x128xf32>,
    %c0_79 = arith.constant 0 : index
    %c0_80 = arith.constant 0 : index
    %251 = vector.load %arg8[%c0_79, %c0_80] : memref<24x128xf32, #tpu.memory_space<vmem>>, vector<24x128xf32>
    %252 = arith.truncf %251 : vector<24x128xf32> to vector<24x128xbf16>
    %cst_81 = arith.constant dense<0.000000e+00> : vector<6x128xf32>
    %253 = tpu.matmul %3, %252, %cst_81 {dimension_numbers = #tpu.dot_dimension_numbers<[1], [0], [0], [1], [0, 0, 1, 1], [], []>} : vector<6x24xbf16>, vector<24x128xbf16>, vector<6x128xf32> -> vector<6x128xf32>
    %c256_82 = arith.constant 256 : index
    %c0_83 = arith.constant 0 : index
    %254 = vector.load %arg5[%c256_82, %c0_83] : memref<896x384xbf16, #tpu.memory_space<vmem>>, vector<128x384xbf16>
    %255 = arith.truncf %253 : vector<6x128xf32> to vector<6x128xbf16>
    %cst_84 = arith.constant dense<0.000000e+00> : vector<6x384xf32>
    %256 = tpu.matmul %255, %254, %cst_84 {dimension_numbers = #tpu.dot_dimension_numbers<[1], [0], [0], [1], [0, 0, 1, 1], [], []>} : vector<6x128xbf16>, vector<128x384xbf16>, vector<6x384xf32> -> vector<6x384xf32>
    %c2_85 = arith.constant 2 : index
    %c0_86 = arith.constant 0 : index
    %257 = vector.load %arg6[%c2_85, %c0_86] : memref<8x384xf32, #tpu.memory_space<vmem>>, vector<1x384xf32>
    %258 = vector.broadcast %257 : vector<1x384xf32> to vector<6x384xf32>
    %259 = arith.addf %256, %258 : vector<6x384xf32>
    %c384_87 = arith.constant 384 : index
    %c0_88 = arith.constant 0 : index
    %260 = vector.load %arg5[%c384_87, %c0_88] : memref<896x384xbf16, #tpu.memory_space<vmem>>, vector<128x384xbf16>
    %261 = arith.truncf %146 : vector<6x128xf32> to vector<6x128xbf16>
    %cst_89 = arith.constant dense<0.000000e+00> : vector<6x384xf32>
    %262 = tpu.matmul %261, %260, %cst_89 {dimension_numbers = #tpu.dot_dimension_numbers<[1], [0], [0], [1], [0, 0, 1, 1], [], []>} : vector<6x128xbf16>, vector<128x384xbf16>, vector<6x384xf32> -> vector<6x384xf32>
    %c3_90 = arith.constant 3 : index
    %c0_91 = arith.constant 0 : index
    %263 = vector.load %arg6[%c3_90, %c0_91] : memref<8x384xf32, #tpu.memory_space<vmem>>, vector<1x384xf32>
    %264 = vector.broadcast %263 : vector<1x384xf32> to vector<6x384xf32>
    %265 = arith.addf %262, %264 : vector<6x384xf32>
    %266 = vector.extract_strided_slice %259 {offsets = [0, 0], sizes = [6, 128], strides = [1, 1]} : vector<6x384xf32> to vector<6x128xf32>
    %267 = vector.extract_strided_slice %265 {offsets = [0, 0], sizes = [6, 128], strides = [1, 1]} : vector<6x384xf32> to vector<6x128xf32>
    %268 = arith.addf %266, %267 : vector<6x128xf32>
    %269 = arith.negf %268 : vector<6x128xf32>
    %270 = math.exp %269 : vector<6x128xf32>
    %cst_92 = arith.constant 1.000000e+00 : f32
    %271 = vector.broadcast %cst_92 : f32 to vector<6x128xf32>
    %272 = arith.addf %271, %270 : vector<6x128xf32>
    %273 = arith.divf %271, %272 : vector<6x128xf32>
    %274 = vector.extract_strided_slice %259 {offsets = [0, 128], sizes = [6, 128], strides = [1, 1]} : vector<6x384xf32> to vector<6x128xf32>
    %275 = vector.extract_strided_slice %265 {offsets = [0, 128], sizes = [6, 128], strides = [1, 1]} : vector<6x384xf32> to vector<6x128xf32>
    %276 = arith.addf %274, %275 : vector<6x128xf32>
    %277 = arith.negf %276 : vector<6x128xf32>
    %278 = math.exp %277 : vector<6x128xf32>
    %cst_93 = arith.constant 1.000000e+00 : f32
    %279 = vector.broadcast %cst_93 : f32 to vector<6x128xf32>
    %280 = arith.addf %279, %278 : vector<6x128xf32>
    %281 = arith.divf %279, %280 : vector<6x128xf32>
    %282 = vector.extract_strided_slice %259 {offsets = [0, 256], sizes = [6, 128], strides = [1, 1]} : vector<6x384xf32> to vector<6x128xf32>
    %283 = vector.extract_strided_slice %265 {offsets = [0, 256], sizes = [6, 128], strides = [1, 1]} : vector<6x384xf32> to vector<6x128xf32>
    %284 = arith.mulf %273, %283 : vector<6x128xf32>
    %285 = arith.addf %282, %284 : vector<6x128xf32>
    %286 = math.tanh %285 : vector<6x128xf32>
    %287 = arith.subf %146, %286 : vector<6x128xf32>
    %288 = arith.mulf %281, %287 : vector<6x128xf32>
    %289 = arith.addf %286, %288 : vector<6x128xf32>
    %290 = arith.truncf %289 : vector<6x128xf32> to vector<6x128xbf16>
    %cst_94 = arith.constant dense<0.000000e+00> : vector<24x128xf32>
    %291 = tpu.matmul %2, %290, %cst_94 {dimension_numbers = #tpu.dot_dimension_numbers<[1], [0], [0], [1], [0, 0, 1, 1], [], []>} : vector<24x6xbf16>, vector<6x128xbf16>, vector<24x128xf32> -> vector<24x128xf32>
    %c0_95 = arith.constant 0 : index
    %c0_96 = arith.constant 0 : index
    %292 = vector.load %arg5[%c0_95, %c0_96] : memref<896x384xbf16, #tpu.memory_space<vmem>>, vector<128x384xbf16>
    %293 = arith.truncf %291 : vector<24x128xf32> to vector<24x128xbf16>
    %cst_97 = arith.constant dense<0.000000e+00> : vector<24x384xf32>
    %294 = tpu.matmul %293, %292, %cst_97 {dimension_numbers = #tpu.dot_dimension_numbers<[1], [0], [0], [1], [0, 0, 1, 1], [], []>} : vector<24x128xbf16>, vector<128x384xbf16>, vector<24x384xf32> -> vector<24x384xf32>
    %c0_98 = arith.constant 0 : index
    %c0_99 = arith.constant 0 : index
    %295 = vector.load %arg6[%c0_98, %c0_99] : memref<8x384xf32, #tpu.memory_space<vmem>>, vector<1x384xf32>
    %296 = vector.broadcast %295 : vector<1x384xf32> to vector<24x384xf32>
    %297 = arith.addf %294, %296 : vector<24x384xf32>
    %c128_100 = arith.constant 128 : index
    %c0_101 = arith.constant 0 : index
    %298 = vector.load %arg5[%c128_100, %c0_101] : memref<896x384xbf16, #tpu.memory_space<vmem>>, vector<128x384xbf16>
    %299 = arith.truncf %249 : vector<8x128xf32> to vector<8x128xbf16>
    %cst_102 = arith.constant dense<0.000000e+00> : vector<8x384xf32>
    %300 = tpu.matmul %299, %298, %cst_102 {dimension_numbers = #tpu.dot_dimension_numbers<[1], [0], [0], [1], [0, 0, 1, 1], [], []>} : vector<8x128xbf16>, vector<128x384xbf16>, vector<8x384xf32> -> vector<8x384xf32>
    %c1_103 = arith.constant 1 : index
    %c0_104 = arith.constant 0 : index
    %301 = vector.load %arg6[%c1_103, %c0_104] : memref<8x384xf32, #tpu.memory_space<vmem>>, vector<1x384xf32>
    %302 = vector.broadcast %301 : vector<1x384xf32> to vector<8x384xf32>
    %303 = arith.addf %300, %302 : vector<8x384xf32>
    %304 = vector.extract_strided_slice %297 {offsets = [0, 0], sizes = [8, 384], strides = [1, 1]} : vector<24x384xf32> to vector<8x384xf32>
    %305 = vector.extract_strided_slice %304 {offsets = [0, 0], sizes = [8, 128], strides = [1, 1]} : vector<8x384xf32> to vector<8x128xf32>
    %306 = vector.extract_strided_slice %303 {offsets = [0, 0], sizes = [8, 128], strides = [1, 1]} : vector<8x384xf32> to vector<8x128xf32>
    %307 = arith.addf %305, %306 : vector<8x128xf32>
    %308 = arith.negf %307 : vector<8x128xf32>
    %309 = math.exp %308 : vector<8x128xf32>
    %cst_105 = arith.constant 1.000000e+00 : f32
    %310 = vector.broadcast %cst_105 : f32 to vector<8x128xf32>
    %311 = arith.addf %310, %309 : vector<8x128xf32>
    %312 = arith.divf %310, %311 : vector<8x128xf32>
    %313 = vector.extract_strided_slice %304 {offsets = [0, 128], sizes = [8, 128], strides = [1, 1]} : vector<8x384xf32> to vector<8x128xf32>
    %314 = vector.extract_strided_slice %303 {offsets = [0, 128], sizes = [8, 128], strides = [1, 1]} : vector<8x384xf32> to vector<8x128xf32>
    %315 = arith.addf %313, %314 : vector<8x128xf32>
    %316 = arith.negf %315 : vector<8x128xf32>
    %317 = math.exp %316 : vector<8x128xf32>
    %cst_106 = arith.constant 1.000000e+00 : f32
    %318 = vector.broadcast %cst_106 : f32 to vector<8x128xf32>
    %319 = arith.addf %318, %317 : vector<8x128xf32>
    %320 = arith.divf %318, %319 : vector<8x128xf32>
    %321 = vector.extract_strided_slice %304 {offsets = [0, 256], sizes = [8, 128], strides = [1, 1]} : vector<8x384xf32> to vector<8x128xf32>
    %322 = vector.extract_strided_slice %303 {offsets = [0, 256], sizes = [8, 128], strides = [1, 1]} : vector<8x384xf32> to vector<8x128xf32>
    %323 = arith.mulf %312, %322 : vector<8x128xf32>
    %324 = arith.addf %321, %323 : vector<8x128xf32>
    %325 = math.tanh %324 : vector<8x128xf32>
    %326 = arith.subf %249, %325 : vector<8x128xf32>
    %327 = arith.mulf %320, %326 : vector<8x128xf32>
    %328 = arith.addf %325, %327 : vector<8x128xf32>
    %c0_107 = arith.constant 0 : index
    %c0_108 = arith.constant 0 : index
    %329 = vector.load %arg8[%c0_107, %c0_108] : memref<24x128xf32, #tpu.memory_space<vmem>>, vector<8x128xf32>
    tpu.vector_store %arg8[%c0_107, %c0_108], %328 {strides = array<i32>} : memref<24x128xf32, #tpu.memory_space<vmem>>, vector<8x128xf32>,
    %c128_109 = arith.constant 128 : index
    %c0_110 = arith.constant 0 : index
    %330 = vector.load %arg5[%c128_109, %c0_110] : memref<896x384xbf16, #tpu.memory_space<vmem>>, vector<128x384xbf16>
    %331 = arith.truncf %328 : vector<8x128xf32> to vector<8x128xbf16>
    %cst_111 = arith.constant dense<0.000000e+00> : vector<8x384xf32>
    %332 = tpu.matmul %331, %330, %cst_111 {dimension_numbers = #tpu.dot_dimension_numbers<[1], [0], [0], [1], [0, 0, 1, 1], [], []>} : vector<8x128xbf16>, vector<128x384xbf16>, vector<8x384xf32> -> vector<8x384xf32>
    %c1_112 = arith.constant 1 : index
    %c0_113 = arith.constant 0 : index
    %333 = vector.load %arg6[%c1_112, %c0_113] : memref<8x384xf32, #tpu.memory_space<vmem>>, vector<1x384xf32>
    %334 = vector.broadcast %333 : vector<1x384xf32> to vector<8x384xf32>
    %335 = arith.addf %332, %334 : vector<8x384xf32>
    %336 = vector.extract_strided_slice %297 {offsets = [8, 0], sizes = [8, 384], strides = [1, 1]} : vector<24x384xf32> to vector<8x384xf32>
    %337 = vector.extract_strided_slice %336 {offsets = [0, 0], sizes = [8, 128], strides = [1, 1]} : vector<8x384xf32> to vector<8x128xf32>
    %338 = vector.extract_strided_slice %335 {offsets = [0, 0], sizes = [8, 128], strides = [1, 1]} : vector<8x384xf32> to vector<8x128xf32>
    %339 = arith.addf %337, %338 : vector<8x128xf32>
    %340 = arith.negf %339 : vector<8x128xf32>
    %341 = math.exp %340 : vector<8x128xf32>
    %cst_114 = arith.constant 1.000000e+00 : f32
    %342 = vector.broadcast %cst_114 : f32 to vector<8x128xf32>
    %343 = arith.addf %342, %341 : vector<8x128xf32>
    %344 = arith.divf %342, %343 : vector<8x128xf32>
    %345 = vector.extract_strided_slice %336 {offsets = [0, 128], sizes = [8, 128], strides = [1, 1]} : vector<8x384xf32> to vector<8x128xf32>
    %346 = vector.extract_strided_slice %335 {offsets = [0, 128], sizes = [8, 128], strides = [1, 1]} : vector<8x384xf32> to vector<8x128xf32>
    %347 = arith.addf %345, %346 : vector<8x128xf32>
    %348 = arith.negf %347 : vector<8x128xf32>
    %349 = math.exp %348 : vector<8x128xf32>
    %cst_115 = arith.constant 1.000000e+00 : f32
    %350 = vector.broadcast %cst_115 : f32 to vector<8x128xf32>
    %351 = arith.addf %350, %349 : vector<8x128xf32>
    %352 = arith.divf %350, %351 : vector<8x128xf32>
    %353 = vector.extract_strided_slice %336 {offsets = [0, 256], sizes = [8, 128], strides = [1, 1]} : vector<8x384xf32> to vector<8x128xf32>
    %354 = vector.extract_strided_slice %335 {offsets = [0, 256], sizes = [8, 128], strides = [1, 1]} : vector<8x384xf32> to vector<8x128xf32>
    %355 = arith.mulf %344, %354 : vector<8x128xf32>
    %356 = arith.addf %353, %355 : vector<8x128xf32>
    %357 = math.tanh %356 : vector<8x128xf32>
    %358 = arith.subf %328, %357 : vector<8x128xf32>
    %359 = arith.mulf %352, %358 : vector<8x128xf32>
    %360 = arith.addf %357, %359 : vector<8x128xf32>
    %c8_116 = arith.constant 8 : index
    %c0_117 = arith.constant 0 : index
    %361 = vector.load %arg8[%c8_116, %c0_117] : memref<24x128xf32, #tpu.memory_space<vmem>>, vector<8x128xf32>
    tpu.vector_store %arg8[%c8_116, %c0_117], %360 {strides = array<i32>} : memref<24x128xf32, #tpu.memory_space<vmem>>, vector<8x128xf32>,
    %c128_118 = arith.constant 128 : index
    %c0_119 = arith.constant 0 : index
    %362 = vector.load %arg5[%c128_118, %c0_119] : memref<896x384xbf16, #tpu.memory_space<vmem>>, vector<128x384xbf16>
    %363 = arith.truncf %360 : vector<8x128xf32> to vector<8x128xbf16>
    %cst_120 = arith.constant dense<0.000000e+00> : vector<8x384xf32>
    %364 = tpu.matmul %363, %362, %cst_120 {dimension_numbers = #tpu.dot_dimension_numbers<[1], [0], [0], [1], [0, 0, 1, 1], [], []>} : vector<8x128xbf16>, vector<128x384xbf16>, vector<8x384xf32> -> vector<8x384xf32>
    %c1_121 = arith.constant 1 : index
    %c0_122 = arith.constant 0 : index
    %365 = vector.load %arg6[%c1_121, %c0_122] : memref<8x384xf32, #tpu.memory_space<vmem>>, vector<1x384xf32>
    %366 = vector.broadcast %365 : vector<1x384xf32> to vector<8x384xf32>
    %367 = arith.addf %364, %366 : vector<8x384xf32>
    %368 = vector.extract_strided_slice %297 {offsets = [16, 0], sizes = [8, 384], strides = [1, 1]} : vector<24x384xf32> to vector<8x384xf32>
    %369 = vector.extract_strided_slice %368 {offsets = [0, 0], sizes = [8, 128], strides = [1, 1]} : vector<8x384xf32> to vector<8x128xf32>
    %370 = vector.extract_strided_slice %367 {offsets = [0, 0], sizes = [8, 128], strides = [1, 1]} : vector<8x384xf32> to vector<8x128xf32>
    %371 = arith.addf %369, %370 : vector<8x128xf32>
    %372 = arith.negf %371 : vector<8x128xf32>
    %373 = math.exp %372 : vector<8x128xf32>
    %cst_123 = arith.constant 1.000000e+00 : f32
    %374 = vector.broadcast %cst_123 : f32 to vector<8x128xf32>
    %375 = arith.addf %374, %373 : vector<8x128xf32>
    %376 = arith.divf %374, %375 : vector<8x128xf32>
    %377 = vector.extract_strided_slice %368 {offsets = [0, 128], sizes = [8, 128], strides = [1, 1]} : vector<8x384xf32> to vector<8x128xf32>
    %378 = vector.extract_strided_slice %367 {offsets = [0, 128], sizes = [8, 128], strides = [1, 1]} : vector<8x384xf32> to vector<8x128xf32>
    %379 = arith.addf %377, %378 : vector<8x128xf32>
    %380 = arith.negf %379 : vector<8x128xf32>
    %381 = math.exp %380 : vector<8x128xf32>
    %cst_124 = arith.constant 1.000000e+00 : f32
    %382 = vector.broadcast %cst_124 : f32 to vector<8x128xf32>
    %383 = arith.addf %382, %381 : vector<8x128xf32>
    %384 = arith.divf %382, %383 : vector<8x128xf32>
    %385 = vector.extract_strided_slice %368 {offsets = [0, 256], sizes = [8, 128], strides = [1, 1]} : vector<8x384xf32> to vector<8x128xf32>
    %386 = vector.extract_strided_slice %367 {offsets = [0, 256], sizes = [8, 128], strides = [1, 1]} : vector<8x384xf32> to vector<8x128xf32>
    %387 = arith.mulf %376, %386 : vector<8x128xf32>
    %388 = arith.addf %385, %387 : vector<8x128xf32>
    %389 = math.tanh %388 : vector<8x128xf32>
    %390 = arith.subf %360, %389 : vector<8x128xf32>
    %391 = arith.mulf %384, %390 : vector<8x128xf32>
    %392 = arith.addf %389, %391 : vector<8x128xf32>
    %c16_125 = arith.constant 16 : index
    %c0_126 = arith.constant 0 : index
    %393 = vector.load %arg8[%c16_125, %c0_126] : memref<24x128xf32, #tpu.memory_space<vmem>>, vector<8x128xf32>
    tpu.vector_store %arg8[%c16_125, %c0_126], %392 {strides = array<i32>} : memref<24x128xf32, #tpu.memory_space<vmem>>, vector<8x128xf32>,
    %c0_127 = arith.constant 0 : index
    %c0_128 = arith.constant 0 : index
    %394 = vector.load %arg8[%c0_127, %c0_128] : memref<24x128xf32, #tpu.memory_space<vmem>>, vector<24x128xf32>
    %395 = arith.truncf %394 : vector<24x128xf32> to vector<24x128xbf16>
    %cst_129 = arith.constant dense<0.000000e+00> : vector<6x128xf32>
    %396 = tpu.matmul %3, %395, %cst_129 {dimension_numbers = #tpu.dot_dimension_numbers<[1], [0], [0], [1], [0, 0, 1, 1], [], []>} : vector<6x24xbf16>, vector<24x128xbf16>, vector<6x128xf32> -> vector<6x128xf32>
    %c256_130 = arith.constant 256 : index
    %c0_131 = arith.constant 0 : index
    %397 = vector.load %arg5[%c256_130, %c0_131] : memref<896x384xbf16, #tpu.memory_space<vmem>>, vector<128x384xbf16>
    %398 = arith.truncf %396 : vector<6x128xf32> to vector<6x128xbf16>
    %cst_132 = arith.constant dense<0.000000e+00> : vector<6x384xf32>
    %399 = tpu.matmul %398, %397, %cst_132 {dimension_numbers = #tpu.dot_dimension_numbers<[1], [0], [0], [1], [0, 0, 1, 1], [], []>} : vector<6x128xbf16>, vector<128x384xbf16>, vector<6x384xf32> -> vector<6x384xf32>
    %c2_133 = arith.constant 2 : index
    %c0_134 = arith.constant 0 : index
    %400 = vector.load %arg6[%c2_133, %c0_134] : memref<8x384xf32, #tpu.memory_space<vmem>>, vector<1x384xf32>
    %401 = vector.broadcast %400 : vector<1x384xf32> to vector<6x384xf32>
    %402 = arith.addf %399, %401 : vector<6x384xf32>
    %c384_135 = arith.constant 384 : index
    %c0_136 = arith.constant 0 : index
    %403 = vector.load %arg5[%c384_135, %c0_136] : memref<896x384xbf16, #tpu.memory_space<vmem>>, vector<128x384xbf16>
    %404 = arith.truncf %289 : vector<6x128xf32> to vector<6x128xbf16>
    %cst_137 = arith.constant dense<0.000000e+00> : vector<6x384xf32>
    %405 = tpu.matmul %404, %403, %cst_137 {dimension_numbers = #tpu.dot_dimension_numbers<[1], [0], [0], [1], [0, 0, 1, 1], [], []>} : vector<6x128xbf16>, vector<128x384xbf16>, vector<6x384xf32> -> vector<6x384xf32>
    %c3_138 = arith.constant 3 : index
    %c0_139 = arith.constant 0 : index
    %406 = vector.load %arg6[%c3_138, %c0_139] : memref<8x384xf32, #tpu.memory_space<vmem>>, vector<1x384xf32>
    %407 = vector.broadcast %406 : vector<1x384xf32> to vector<6x384xf32>
    %408 = arith.addf %405, %407 : vector<6x384xf32>
    %409 = vector.extract_strided_slice %402 {offsets = [0, 0], sizes = [6, 128], strides = [1, 1]} : vector<6x384xf32> to vector<6x128xf32>
    %410 = vector.extract_strided_slice %408 {offsets = [0, 0], sizes = [6, 128], strides = [1, 1]} : vector<6x384xf32> to vector<6x128xf32>
    %411 = arith.addf %409, %410 : vector<6x128xf32>
    %412 = arith.negf %411 : vector<6x128xf32>
    %413 = math.exp %412 : vector<6x128xf32>
    %cst_140 = arith.constant 1.000000e+00 : f32
    %414 = vector.broadcast %cst_140 : f32 to vector<6x128xf32>
    %415 = arith.addf %414, %413 : vector<6x128xf32>
    %416 = arith.divf %414, %415 : vector<6x128xf32>
    %417 = vector.extract_strided_slice %402 {offsets = [0, 128], sizes = [6, 128], strides = [1, 1]} : vector<6x384xf32> to vector<6x128xf32>
    %418 = vector.extract_strided_slice %408 {offsets = [0, 128], sizes = [6, 128], strides = [1, 1]} : vector<6x384xf32> to vector<6x128xf32>
    %419 = arith.addf %417, %418 : vector<6x128xf32>
    %420 = arith.negf %419 : vector<6x128xf32>
    %421 = math.exp %420 : vector<6x128xf32>
    %cst_141 = arith.constant 1.000000e+00 : f32
    %422 = vector.broadcast %cst_141 : f32 to vector<6x128xf32>
    %423 = arith.addf %422, %421 : vector<6x128xf32>
    %424 = arith.divf %422, %423 : vector<6x128xf32>
    %425 = vector.extract_strided_slice %402 {offsets = [0, 256], sizes = [6, 128], strides = [1, 1]} : vector<6x384xf32> to vector<6x128xf32>
    %426 = vector.extract_strided_slice %408 {offsets = [0, 256], sizes = [6, 128], strides = [1, 1]} : vector<6x384xf32> to vector<6x128xf32>
    %427 = arith.mulf %416, %426 : vector<6x128xf32>
    %428 = arith.addf %425, %427 : vector<6x128xf32>
    %429 = math.tanh %428 : vector<6x128xf32>
    %430 = arith.subf %289, %429 : vector<6x128xf32>
    %431 = arith.mulf %424, %430 : vector<6x128xf32>
    %432 = arith.addf %429, %431 : vector<6x128xf32>
    %433 = arith.truncf %432 : vector<6x128xf32> to vector<6x128xbf16>
    %cst_142 = arith.constant dense<0.000000e+00> : vector<24x128xf32>
    %434 = tpu.matmul %2, %433, %cst_142 {dimension_numbers = #tpu.dot_dimension_numbers<[1], [0], [0], [1], [0, 0, 1, 1], [], []>} : vector<24x6xbf16>, vector<6x128xbf16>, vector<24x128xf32> -> vector<24x128xf32>
    %c0_143 = arith.constant 0 : index
    %c0_144 = arith.constant 0 : index
    %435 = vector.load %arg5[%c0_143, %c0_144] : memref<896x384xbf16, #tpu.memory_space<vmem>>, vector<128x384xbf16>
    %436 = arith.truncf %434 : vector<24x128xf32> to vector<24x128xbf16>
    %cst_145 = arith.constant dense<0.000000e+00> : vector<24x384xf32>
    %437 = tpu.matmul %436, %435, %cst_145 {dimension_numbers = #tpu.dot_dimension_numbers<[1], [0], [0], [1], [0, 0, 1, 1], [], []>} : vector<24x128xbf16>, vector<128x384xbf16>, vector<24x384xf32> -> vector<24x384xf32>
    %c0_146 = arith.constant 0 : index
    %c0_147 = arith.constant 0 : index
    %438 = vector.load %arg6[%c0_146, %c0_147] : memref<8x384xf32, #tpu.memory_space<vmem>>, vector<1x384xf32>
    %439 = vector.broadcast %438 : vector<1x384xf32> to vector<24x384xf32>
    %440 = arith.addf %437, %439 : vector<24x384xf32>
    %c128_148 = arith.constant 128 : index
    %c0_149 = arith.constant 0 : index
    %441 = vector.load %arg5[%c128_148, %c0_149] : memref<896x384xbf16, #tpu.memory_space<vmem>>, vector<128x384xbf16>
    %442 = arith.truncf %392 : vector<8x128xf32> to vector<8x128xbf16>
    %cst_150 = arith.constant dense<0.000000e+00> : vector<8x384xf32>
    %443 = tpu.matmul %442, %441, %cst_150 {dimension_numbers = #tpu.dot_dimension_numbers<[1], [0], [0], [1], [0, 0, 1, 1], [], []>} : vector<8x128xbf16>, vector<128x384xbf16>, vector<8x384xf32> -> vector<8x384xf32>
    %c1_151 = arith.constant 1 : index
    %c0_152 = arith.constant 0 : index
    %444 = vector.load %arg6[%c1_151, %c0_152] : memref<8x384xf32, #tpu.memory_space<vmem>>, vector<1x384xf32>
    %445 = vector.broadcast %444 : vector<1x384xf32> to vector<8x384xf32>
    %446 = arith.addf %443, %445 : vector<8x384xf32>
    %447 = vector.extract_strided_slice %440 {offsets = [0, 0], sizes = [8, 384], strides = [1, 1]} : vector<24x384xf32> to vector<8x384xf32>
    %448 = vector.extract_strided_slice %447 {offsets = [0, 0], sizes = [8, 128], strides = [1, 1]} : vector<8x384xf32> to vector<8x128xf32>
    %449 = vector.extract_strided_slice %446 {offsets = [0, 0], sizes = [8, 128], strides = [1, 1]} : vector<8x384xf32> to vector<8x128xf32>
    %450 = arith.addf %448, %449 : vector<8x128xf32>
    %451 = arith.negf %450 : vector<8x128xf32>
    %452 = math.exp %451 : vector<8x128xf32>
    %cst_153 = arith.constant 1.000000e+00 : f32
    %453 = vector.broadcast %cst_153 : f32 to vector<8x128xf32>
    %454 = arith.addf %453, %452 : vector<8x128xf32>
    %455 = arith.divf %453, %454 : vector<8x128xf32>
    %456 = vector.extract_strided_slice %447 {offsets = [0, 128], sizes = [8, 128], strides = [1, 1]} : vector<8x384xf32> to vector<8x128xf32>
    %457 = vector.extract_strided_slice %446 {offsets = [0, 128], sizes = [8, 128], strides = [1, 1]} : vector<8x384xf32> to vector<8x128xf32>
    %458 = arith.addf %456, %457 : vector<8x128xf32>
    %459 = arith.negf %458 : vector<8x128xf32>
    %460 = math.exp %459 : vector<8x128xf32>
    %cst_154 = arith.constant 1.000000e+00 : f32
    %461 = vector.broadcast %cst_154 : f32 to vector<8x128xf32>
    %462 = arith.addf %461, %460 : vector<8x128xf32>
    %463 = arith.divf %461, %462 : vector<8x128xf32>
    %464 = vector.extract_strided_slice %447 {offsets = [0, 256], sizes = [8, 128], strides = [1, 1]} : vector<8x384xf32> to vector<8x128xf32>
    %465 = vector.extract_strided_slice %446 {offsets = [0, 256], sizes = [8, 128], strides = [1, 1]} : vector<8x384xf32> to vector<8x128xf32>
    %466 = arith.mulf %455, %465 : vector<8x128xf32>
    %467 = arith.addf %464, %466 : vector<8x128xf32>
    %468 = math.tanh %467 : vector<8x128xf32>
    %469 = arith.subf %392, %468 : vector<8x128xf32>
    %470 = arith.mulf %463, %469 : vector<8x128xf32>
    %471 = arith.addf %468, %470 : vector<8x128xf32>
    %c0_155 = arith.constant 0 : index
    %c0_156 = arith.constant 0 : index
    %472 = vector.load %arg8[%c0_155, %c0_156] : memref<24x128xf32, #tpu.memory_space<vmem>>, vector<8x128xf32>
    tpu.vector_store %arg8[%c0_155, %c0_156], %471 {strides = array<i32>} : memref<24x128xf32, #tpu.memory_space<vmem>>, vector<8x128xf32>,
    %c128_157 = arith.constant 128 : index
    %c0_158 = arith.constant 0 : index
    %473 = vector.load %arg5[%c128_157, %c0_158] : memref<896x384xbf16, #tpu.memory_space<vmem>>, vector<128x384xbf16>
    %474 = arith.truncf %471 : vector<8x128xf32> to vector<8x128xbf16>
    %cst_159 = arith.constant dense<0.000000e+00> : vector<8x384xf32>
    %475 = tpu.matmul %474, %473, %cst_159 {dimension_numbers = #tpu.dot_dimension_numbers<[1], [0], [0], [1], [0, 0, 1, 1], [], []>} : vector<8x128xbf16>, vector<128x384xbf16>, vector<8x384xf32> -> vector<8x384xf32>
    %c1_160 = arith.constant 1 : index
    %c0_161 = arith.constant 0 : index
    %476 = vector.load %arg6[%c1_160, %c0_161] : memref<8x384xf32, #tpu.memory_space<vmem>>, vector<1x384xf32>
    %477 = vector.broadcast %476 : vector<1x384xf32> to vector<8x384xf32>
    %478 = arith.addf %475, %477 : vector<8x384xf32>
    %479 = vector.extract_strided_slice %440 {offsets = [8, 0], sizes = [8, 384], strides = [1, 1]} : vector<24x384xf32> to vector<8x384xf32>
    %480 = vector.extract_strided_slice %479 {offsets = [0, 0], sizes = [8, 128], strides = [1, 1]} : vector<8x384xf32> to vector<8x128xf32>
    %481 = vector.extract_strided_slice %478 {offsets = [0, 0], sizes = [8, 128], strides = [1, 1]} : vector<8x384xf32> to vector<8x128xf32>
    %482 = arith.addf %480, %481 : vector<8x128xf32>
    %483 = arith.negf %482 : vector<8x128xf32>
    %484 = math.exp %483 : vector<8x128xf32>
    %cst_162 = arith.constant 1.000000e+00 : f32
    %485 = vector.broadcast %cst_162 : f32 to vector<8x128xf32>
    %486 = arith.addf %485, %484 : vector<8x128xf32>
    %487 = arith.divf %485, %486 : vector<8x128xf32>
    %488 = vector.extract_strided_slice %479 {offsets = [0, 128], sizes = [8, 128], strides = [1, 1]} : vector<8x384xf32> to vector<8x128xf32>
    %489 = vector.extract_strided_slice %478 {offsets = [0, 128], sizes = [8, 128], strides = [1, 1]} : vector<8x384xf32> to vector<8x128xf32>
    %490 = arith.addf %488, %489 : vector<8x128xf32>
    %491 = arith.negf %490 : vector<8x128xf32>
    %492 = math.exp %491 : vector<8x128xf32>
    %cst_163 = arith.constant 1.000000e+00 : f32
    %493 = vector.broadcast %cst_163 : f32 to vector<8x128xf32>
    %494 = arith.addf %493, %492 : vector<8x128xf32>
    %495 = arith.divf %493, %494 : vector<8x128xf32>
    %496 = vector.extract_strided_slice %479 {offsets = [0, 256], sizes = [8, 128], strides = [1, 1]} : vector<8x384xf32> to vector<8x128xf32>
    %497 = vector.extract_strided_slice %478 {offsets = [0, 256], sizes = [8, 128], strides = [1, 1]} : vector<8x384xf32> to vector<8x128xf32>
    %498 = arith.mulf %487, %497 : vector<8x128xf32>
    %499 = arith.addf %496, %498 : vector<8x128xf32>
    %500 = math.tanh %499 : vector<8x128xf32>
    %501 = arith.subf %471, %500 : vector<8x128xf32>
    %502 = arith.mulf %495, %501 : vector<8x128xf32>
    %503 = arith.addf %500, %502 : vector<8x128xf32>
    %c8_164 = arith.constant 8 : index
    %c0_165 = arith.constant 0 : index
    %504 = vector.load %arg8[%c8_164, %c0_165] : memref<24x128xf32, #tpu.memory_space<vmem>>, vector<8x128xf32>
    tpu.vector_store %arg8[%c8_164, %c0_165], %503 {strides = array<i32>} : memref<24x128xf32, #tpu.memory_space<vmem>>, vector<8x128xf32>,
    %c128_166 = arith.constant 128 : index
    %c0_167 = arith.constant 0 : index
    %505 = vector.load %arg5[%c128_166, %c0_167] : memref<896x384xbf16, #tpu.memory_space<vmem>>, vector<128x384xbf16>
    %506 = arith.truncf %503 : vector<8x128xf32> to vector<8x128xbf16>
    %cst_168 = arith.constant dense<0.000000e+00> : vector<8x384xf32>
    %507 = tpu.matmul %506, %505, %cst_168 {dimension_numbers = #tpu.dot_dimension_numbers<[1], [0], [0], [1], [0, 0, 1, 1], [], []>} : vector<8x128xbf16>, vector<128x384xbf16>, vector<8x384xf32> -> vector<8x384xf32>
    %c1_169 = arith.constant 1 : index
    %c0_170 = arith.constant 0 : index
    %508 = vector.load %arg6[%c1_169, %c0_170] : memref<8x384xf32, #tpu.memory_space<vmem>>, vector<1x384xf32>
    %509 = vector.broadcast %508 : vector<1x384xf32> to vector<8x384xf32>
    %510 = arith.addf %507, %509 : vector<8x384xf32>
    %511 = vector.extract_strided_slice %440 {offsets = [16, 0], sizes = [8, 384], strides = [1, 1]} : vector<24x384xf32> to vector<8x384xf32>
    %512 = vector.extract_strided_slice %511 {offsets = [0, 0], sizes = [8, 128], strides = [1, 1]} : vector<8x384xf32> to vector<8x128xf32>
    %513 = vector.extract_strided_slice %510 {offsets = [0, 0], sizes = [8, 128], strides = [1, 1]} : vector<8x384xf32> to vector<8x128xf32>
    %514 = arith.addf %512, %513 : vector<8x128xf32>
    %515 = arith.negf %514 : vector<8x128xf32>
    %516 = math.exp %515 : vector<8x128xf32>
    %cst_171 = arith.constant 1.000000e+00 : f32
    %517 = vector.broadcast %cst_171 : f32 to vector<8x128xf32>
    %518 = arith.addf %517, %516 : vector<8x128xf32>
    %519 = arith.divf %517, %518 : vector<8x128xf32>
    %520 = vector.extract_strided_slice %511 {offsets = [0, 128], sizes = [8, 128], strides = [1, 1]} : vector<8x384xf32> to vector<8x128xf32>
    %521 = vector.extract_strided_slice %510 {offsets = [0, 128], sizes = [8, 128], strides = [1, 1]} : vector<8x384xf32> to vector<8x128xf32>
    %522 = arith.addf %520, %521 : vector<8x128xf32>
    %523 = arith.negf %522 : vector<8x128xf32>
    %524 = math.exp %523 : vector<8x128xf32>
    %cst_172 = arith.constant 1.000000e+00 : f32
    %525 = vector.broadcast %cst_172 : f32 to vector<8x128xf32>
    %526 = arith.addf %525, %524 : vector<8x128xf32>
    %527 = arith.divf %525, %526 : vector<8x128xf32>
    %528 = vector.extract_strided_slice %511 {offsets = [0, 256], sizes = [8, 128], strides = [1, 1]} : vector<8x384xf32> to vector<8x128xf32>
    %529 = vector.extract_strided_slice %510 {offsets = [0, 256], sizes = [8, 128], strides = [1, 1]} : vector<8x384xf32> to vector<8x128xf32>
    %530 = arith.mulf %519, %529 : vector<8x128xf32>
    %531 = arith.addf %528, %530 : vector<8x128xf32>
    %532 = math.tanh %531 : vector<8x128xf32>
    %533 = arith.subf %503, %532 : vector<8x128xf32>
    %534 = arith.mulf %527, %533 : vector<8x128xf32>
    %535 = arith.addf %532, %534 : vector<8x128xf32>
    %c16_173 = arith.constant 16 : index
    %c0_174 = arith.constant 0 : index
    %536 = vector.load %arg8[%c16_173, %c0_174] : memref<24x128xf32, #tpu.memory_space<vmem>>, vector<8x128xf32>
    tpu.vector_store %arg8[%c16_173, %c0_174], %535 {strides = array<i32>} : memref<24x128xf32, #tpu.memory_space<vmem>>, vector<8x128xf32>,
    %c512 = arith.constant 512 : index
    %c0_175 = arith.constant 0 : index
    %537 = vector.load %arg5[%c512, %c0_175] : memref<896x384xbf16, #tpu.memory_space<vmem>>, vector<128x128xbf16>
    %538 = arith.truncf %535 : vector<8x128xf32> to vector<8x128xbf16>
    %cst_176 = arith.constant dense<0.000000e+00> : vector<8x128xf32>
    %539 = tpu.matmul %538, %537, %cst_176 {dimension_numbers = #tpu.dot_dimension_numbers<[1], [0], [0], [1], [0, 0, 1, 1], [], []>} : vector<8x128xbf16>, vector<128x128xbf16>, vector<8x128xf32> -> vector<8x128xf32>
    %c4 = arith.constant 4 : index
    %c0_177 = arith.constant 0 : index
    %540 = vector.load %arg6[%c4, %c0_177] : memref<8x384xf32, #tpu.memory_space<vmem>>, vector<1x128xf32>
    %541 = vector.broadcast %540 : vector<1x128xf32> to vector<8x128xf32>
    %542 = arith.addf %539, %541 : vector<8x128xf32>
    %cst_178 = arith.constant 0.000000e+00 : f32
    %543 = vector.broadcast %cst_178 : f32 to vector<8x128xf32>
    %544 = arith.cmpf ogt, %542, %543 : vector<8x128xf32>
    %545 = math.exp %542 : vector<8x128xf32>
    %cst_179 = arith.constant 1.000000e+00 : f32
    %546 = vector.broadcast %cst_179 : f32 to vector<8x128xf32>
    %547 = arith.subf %545, %546 : vector<8x128xf32>
    %cst_180 = arith.constant 1.67326319 : f32
    %548 = vector.broadcast %cst_180 : f32 to vector<8x128xf32>
    %549 = arith.mulf %548, %547 : vector<8x128xf32>
    %550 = arith.select %544, %542, %549 : vector<8x128xi1>, vector<8x128xf32>
    %cst_181 = arith.constant 1.05070102 : f32
    %551 = vector.broadcast %cst_181 : f32 to vector<8x128xf32>
    %552 = arith.mulf %551, %550 : vector<8x128xf32>
    %c640 = arith.constant 640 : index
    %c0_182 = arith.constant 0 : index
    %553 = vector.load %arg5[%c640, %c0_182] : memref<896x384xbf16, #tpu.memory_space<vmem>>, vector<128x128xbf16>
    %554 = arith.truncf %552 : vector<8x128xf32> to vector<8x128xbf16>
    %cst_183 = arith.constant dense<0.000000e+00> : vector<8x128xf32>
    %555 = tpu.matmul %554, %553, %cst_183 {dimension_numbers = #tpu.dot_dimension_numbers<[1], [0], [0], [1], [0, 0, 1, 1], [], []>} : vector<8x128xbf16>, vector<128x128xbf16>, vector<8x128xf32> -> vector<8x128xf32>
    %c5 = arith.constant 5 : index
    %c0_184 = arith.constant 0 : index
    %556 = vector.load %arg6[%c5, %c0_184] : memref<8x384xf32, #tpu.memory_space<vmem>>, vector<1x128xf32>
    %557 = vector.broadcast %556 : vector<1x128xf32> to vector<8x128xf32>
    %558 = arith.addf %555, %557 : vector<8x128xf32>
    %cst_185 = arith.constant 0.000000e+00 : f32
    %559 = vector.broadcast %cst_185 : f32 to vector<8x128xf32>
    %560 = arith.cmpf ogt, %558, %559 : vector<8x128xf32>
    %561 = math.exp %558 : vector<8x128xf32>
    %cst_186 = arith.constant 1.000000e+00 : f32
    %562 = vector.broadcast %cst_186 : f32 to vector<8x128xf32>
    %563 = arith.subf %561, %562 : vector<8x128xf32>
    %cst_187 = arith.constant 1.67326319 : f32
    %564 = vector.broadcast %cst_187 : f32 to vector<8x128xf32>
    %565 = arith.mulf %564, %563 : vector<8x128xf32>
    %566 = arith.select %560, %558, %565 : vector<8x128xi1>, vector<8x128xf32>
    %cst_188 = arith.constant 1.05070102 : f32
    %567 = vector.broadcast %cst_188 : f32 to vector<8x128xf32>
    %568 = arith.mulf %567, %566 : vector<8x128xf32>
    %c768 = arith.constant 768 : index
    %c0_189 = arith.constant 0 : index
    %569 = vector.load %arg5[%c768, %c0_189] : memref<896x384xbf16, #tpu.memory_space<vmem>>, vector<128x128xbf16>
    %570 = arith.truncf %568 : vector<8x128xf32> to vector<8x128xbf16>
    %cst_190 = arith.constant dense<0.000000e+00> : vector<8x128xf32>
    %571 = tpu.matmul %570, %569, %cst_190 {dimension_numbers = #tpu.dot_dimension_numbers<[1], [0], [0], [1], [0, 0, 1, 1], [], []>} : vector<8x128xbf16>, vector<128x128xbf16>, vector<8x128xf32> -> vector<8x128xf32>
    %c6 = arith.constant 6 : index
    %c0_191 = arith.constant 0 : index
    %572 = vector.load %arg6[%c6, %c0_191] : memref<8x384xf32, #tpu.memory_space<vmem>>, vector<1x128xf32>
    %573 = vector.broadcast %572 : vector<1x128xf32> to vector<8x128xf32>
    %574 = arith.addf %571, %573 : vector<8x128xf32>
    %575 = vector.extract_strided_slice %574 {offsets = [0, 0], sizes = [4, 1], strides = [1, 1]} : vector<8x128xf32> to vector<4x1xf32>
    %c0_192 = arith.constant 0 : index
    %c0_193 = arith.constant 0 : index
    %576 = vector.load %arg7[%c0_192, %c0_193] : memref<4x1xf32, #tpu.memory_space<vmem>>, vector<4x1xf32>
    tpu.vector_store %arg7[%c0_192, %c0_193], %575 {strides = array<i32>} : memref<4x1xf32, #tpu.memory_space<vmem>>, vector<4x1xf32>,
    return
  }
  func.func @transform_0(%arg0: i32) -> (i32, i32) {
    %c0_i32 = arith.constant 0 : i32
    %c0_i32_0 = arith.constant 0 : i32
    %c0_i32_1 = arith.constant 0 : i32
    return %c0_i32, %c0_i32_0 : i32, i32
  }
  func.func @transform_1(%arg0: i32) -> (i32, i32) {
    %c0_i32 = arith.constant 0 : i32
    %c0_i32_0 = arith.constant 0 : i32
    %c0_i32_1 = arith.constant 0 : i32
    return %c0_i32, %c0_i32_0 : i32, i32
  }
  func.func @transform_2(%arg0: i32) -> (i32, i32) {
    %c0_i32 = arith.constant 0 : i32
    %c0_i32_0 = arith.constant 0 : i32
    %c0_i32_1 = arith.constant 0 : i32
    return %c0_i32, %c0_i32_0 : i32, i32
  }
  func.func @transform_3(%arg0: i32) -> (i32, i32) {
    %c0_i32 = arith.constant 0 : i32
    %c0_i32_0 = arith.constant 0 : i32
    %c0_i32_1 = arith.constant 0 : i32
    return %c0_i32, %c0_i32_0 : i32, i32
  }
  func.func @transform_4(%arg0: i32) -> (i32, i32) {
    %c0_i32 = arith.constant 0 : i32
    %c0_i32_0 = arith.constant 0 : i32
    %c0_i32_1 = arith.constant 0 : i32
    return %c0_i32, %c0_i32_0 : i32, i32
  }
  func.func @transform_5(%arg0: i32) -> (i32, i32) {
    %c0_i32 = arith.constant 0 : i32
    %c0_i32_0 = arith.constant 0 : i32
    %c0_i32_1 = arith.constant 0 : i32
    return %c0_i32, %c0_i32_0 : i32, i32
  }
  func.func @transform_6(%arg0: i32) -> (i32, i32) {
    %c0_i32 = arith.constant 0 : i32
    %c0_i32_0 = arith.constant 0 : i32
    %c0_i32_1 = arith.constant 0 : i32
    return %c0_i32, %c0_i32_0 : i32, i32
  }
}

</mosaic_0001>

<llo_original>
// kernel: tpu_custom_call.1
$region0: #{tpu_custom_call.1}
  #allocation0 [shape = 'u32[]', space=smem, size = 0x4, offset = 0x4, fixed_abs, tag = 'smem constant byte address 0x4 - core index']
  #allocation1 [shape = 'u32[144,128]{1,0:T(1,128)}', space=vmem, size = 0x12000, scoped, tag = 'internal scratch']
  #allocation2 [shape = 'f32[24,128]{1,0:T(8,128)}', space=vmem, size = 0x3000, scoped, tag = 'scratch operand']
  %s0 = inlined_call_operand.vmem [shape: f32[6,128], index: 0, kind: input, shape index: {}]
  %s1 = inlined_call_operand.hbm [shape: f32[8,128], index: 1, kind: input, shape index: {}]
  %s2 = inlined_call_operand.vmem [shape: bf16[24,6], index: 2, kind: input, shape index: {}]
  %s3 = inlined_call_operand.hbm [shape: bf16[6,24], index: 3, kind: input, shape index: {}]
  %s4 = inlined_call_operand.hbm [shape: bf16[896,384], index: 4, kind: input, shape index: {}]
  %s5 = inlined_call_operand.vmem [shape: f32[8,384], index: 5, kind: input, shape index: {}]
  %s6 = inlined_call_operand.vmem [shape: f32[4,1], index: 6, kind: output, shape index: {}]
  %s7 = sld [smem:[#allocation0]]
  $region46: #{tpu_custom_call.1} parent=0
    _
  %s9 = ssub.s32 1, %s7
  %s10 = scalar_select 0, %s9, %s7
  $region1: #{tpu_custom_call.1} parent=0
    #allocation3 [shape = 'u8[4096]{0}', space=vmem, size = 0x1000, scoped, tag = 'input window, operand 1, single buffered']
    #allocation4 [shape = 's32[1]{0}', space=sflag, size = 0x4, scoped, tag = 'scoped memory for tpu_custom_call.1']
    #allocation5 [shape = 'u8[2048]{0}', space=vmem, size = 0x800, scoped, tag = 'input window, operand 3, single buffered']
    #allocation6 [shape = 's32[1]{0}', space=sflag, size = 0x4, scoped, tag = 'scoped memory for tpu_custom_call.1']
    #allocation7 [shape = 'u8[688128]{0}', space=vmem, size = 0xa8000, scoped, tag = 'input window, operand 4, single buffered']
    %11 = vsyncpa [#allocation4], 0
    %12 = vsyncpa [#allocation6], 0
    // Predicated region
    $region2: #{tpu_custom_call.1} parent=1 // pred_check
      _
    $region3: #{tpu_custom_call.1} parent=1 // pred_check_branch
      %14 = sbr.rel (0) target = $region5
    $region4: #{tpu_custom_call.1} parent=1 // pred_region
      _
    $region5: #{tpu_custom_call.1} parent=1 // pred_fallthru
      _
    // Predicated region
    $region6: #{tpu_custom_call.1} parent=1 // pred_check
      _
    $region7: #{tpu_custom_call.1} parent=1 // pred_check_branch
      %16 = sbr.rel (0) target = $region9
    $region8: #{tpu_custom_call.1} parent=1 // pred_region
      %s18 = ssub.s32 128, 128
      %19 = vsyncadd [#allocation4], %s18
      %s21 = sshll.u32 [#allocation3], 4
      %s22 = int_to_ptr.vmem [resolvable:$true] %s21
      %24 = dma.hbm_to_vmem [thread:$0]  %s1, 128, %s22, [#allocation4]
    $region9: #{tpu_custom_call.1} parent=1 // pred_fallthru
      _
    // Predicated region
    $region10: #{tpu_custom_call.1} parent=1 // pred_check
      _
    $region11: #{tpu_custom_call.1} parent=1 // pred_check_branch
      %26 = sbr.rel (0) target = $region13
    $region12: #{tpu_custom_call.1} parent=1 // pred_region
      _
    $region13: #{tpu_custom_call.1} parent=1 // pred_fallthru
      _
    // Predicated region
    $region14: #{tpu_custom_call.1} parent=1 // pred_check
      _
    $region15: #{tpu_custom_call.1} parent=1 // pred_check_branch
      %28 = sbr.rel (0) target = $region17
    $region16: #{tpu_custom_call.1} parent=1 // pred_region
      %s30 = ssub.s32 64, 64
      %31 = vsyncadd [#allocation6], %s30
      %s33 = sshll.u32 [#allocation5], 4
      %s34 = int_to_ptr.vmem [resolvable:$true] %s33
      %36 = dma.hbm_to_vmem [thread:$0]  %s3, 64, %s34, [#allocation6]
    $region17: #{tpu_custom_call.1} parent=1 // pred_fallthru
      _
    // Predicated region
    $region18: #{tpu_custom_call.1} parent=1 // pred_check
      _
    $region19: #{tpu_custom_call.1} parent=1 // pred_check_branch
      %38 = sbr.rel (0) target = $region21
    $region20: #{tpu_custom_call.1} parent=1 // pred_region
      %s40 = ssub.s32 21504, 21504
      %41 = vsyncadd [#allocation6], %s40
      %s42 = sshll.u32 [#allocation7], 4
      %s43 = int_to_ptr.vmem [resolvable:$true] %s42
      %48 = dma.hbm_to_vmem [thread:$0]  %s4, 21504, %s43, [#allocation6], 192, 192, 12
    $region21: #{tpu_custom_call.1} parent=1 // pred_fallthru
      _
    // Predicated region
    $region22: #{tpu_custom_call.1} parent=1 // pred_check
      _
    $region23: #{tpu_custom_call.1} parent=1 // pred_check_branch
      %50 = sbr.rel (0) target = $region25
    $region24: #{tpu_custom_call.1} parent=1 // pred_region
      _
    $region25: #{tpu_custom_call.1} parent=1 // pred_fallthru
      _
    // Predicated region
    $region26: #{tpu_custom_call.1} parent=1 // pred_check
      _
    $region27: #{tpu_custom_call.1} parent=1 // pred_check_branch
      %52 = sbr.rel (0) target = $region29
    $region28: #{tpu_custom_call.1} parent=1 // pred_region
      %53 = dma.done [#allocation4], 128
    $region29: #{tpu_custom_call.1} parent=1 // pred_fallthru
      _
    // Predicated region
    $region30: #{tpu_custom_call.1} parent=1 // pred_check
      _
    $region31: #{tpu_custom_call.1} parent=1 // pred_check_branch
      %55 = sbr.rel (0) target = $region33
    $region32: #{tpu_custom_call.1} parent=1 // pred_region
      %56 = dma.done [#allocation6], 64
    $region33: #{tpu_custom_call.1} parent=1 // pred_fallthru
      _
    // Predicated region
    $region34: #{tpu_custom_call.1} parent=1 // pred_check
      _
    $region35: #{tpu_custom_call.1} parent=1 // pred_check_branch
      %58 = sbr.rel (0) target = $region37
    $region36: #{tpu_custom_call.1} parent=1 // pred_region
      %59 = dma.done [#allocation6], 21504
    $region37: #{tpu_custom_call.1} parent=1 // pred_fallthru
      _
    %v61 = vld [vmem:[%s0] sm:$0x3f]
    %v62 = vld [vmem:[#allocation3] sm:$0xff]
    %v63 = vld [vmem:[%s2] sm:$0xf]
    %v64 = vld [vmem:[%s2 + $0x4] sm:$0xf]
    %v65 = vld [vmem:[%s2 + $0x8] sm:$0xf]
    %v66 = vld [vmem:[#allocation5] sm:$0x7]
    %v67 = vpack.c.bf16 %v61, %v61
    %v71 = vunpack.c.l.b16 %v63
    %v72 = vunpack.c.l.b16 %v64
    %v73 = vunpack.c.l.b16 %v65
    %v74 = vpack.c.b16 %v72, %v71
    %v75 = vpack.c.b16 %v73, %v73
    %vm76 = vcmask 48128
    %v78 = vsel %vm76, %v74, 0
    %v81 = vsel %vm76, %v75, 0
    %vm83 = vcmask 1042432
    %v85 = vsel %vm83, %v67, 0
    %87 = vmatprep.subr.bf16.mxu0 0
    %88 = vmatpush1.bf16.msra.mxu0 %v85
    %89 = vmatprep.subr.bf16.mxu0 0
    %90 = vmatpush1.bf16.msra.mxu0 0
    %91 = vmatprep.subr.bf16.mxu0 0
    %92 = vmatpush1.bf16.msra.mxu0 0
    %93 = vmatprep.subr.bf16.mxu0 0
    %94 = vmatpush1.bf16.msra.mxu0 0
    %95 = vmatprep.subr.bf16.mxu0 0
    %96 = vmatpush1.bf16.msra.mxu0 0
    %97 = vmatprep.subr.bf16.mxu0 0
    %98 = vmatpush1.bf16.msra.mxu0 0
    %99 = vmatprep.subr.bf16.mxu0 0
    %100 = vmatpush1.bf16.msra.mxu0 0
    %101 = vmatprep.subr.bf16.mxu0 0
    %102 = vmatpush1.bf16.msra.mxu0 0
    %103 = vmatprep.subr.bf16.mxu0 0
    %104 = vmatpush1.bf16.msra.mxu0 0
    %105 = vmatprep.subr.bf16.mxu0 0
    %106 = vmatpush1.bf16.msra.mxu0 0
    %107 = vmatprep.subr.bf16.mxu0 0
    %108 = vmatpush1.bf16.msra.mxu0 0
    %109 = vmatprep.subr.bf16.mxu0 0
    %110 = vmatpush1.bf16.msra.mxu0 0
    %111 = vmatprep.subr.bf16.mxu0 0
    %112 = vmatpush1.bf16.msra.mxu0 0
    %113 = vmatprep.subr.bf16.mxu0 0
    %114 = vmatpush1.bf16.msra.mxu0 0
    %115 = vmatprep.subr.bf16.mxu0 0
    %116 = vmatpush1.bf16.msra.mxu0 0
    %117 = vmatprep.subr.bf16.mxu0 0
    %118 = vmatpush1.bf16.msra.mxu0 0
    %119 = vmatprep.mubr.bf16.mxu0 0
    %120 = vmatmul.mubr.bf16.gmra.mrb[0].mxu0 %v78
    %v121 = vpop.f32.mrb[0].mxu0
    %v122 = vadd.f32 0.0, %v121
    %v123 = vpop.f32.mrb[0].mxu0
    %v124 = vpop.f32.mrb[0].mxu0
    %v125 = vadd.f32 0.0, %v124
    %v126 = vpop.f32.mrb[0].mxu0
    %127 = vmatprep.mubr.bf16.mxu0 0
    %128 = vmatmul.mubr.bf16.gmra.mrb[0].mxu0 %v81
    %v129 = vpop.f32.mrb[0].mxu0
    %v130 = vadd.f32 0.0, %v129
    %v131 = vpop.f32.mrb[0].mxu0
    %v132 = vpop.f32.mrb[0].mxu0
    %v133 = vpop.f32.mrb[0].mxu0
    %134 = vdwg.mxu0
    %v135 = vld [vmem:[#allocation7] sm:$0xff]
    %v136 = vld [vmem:[#allocation7 + $0x8] sm:$0xf]
    %v137 = vld [vmem:[#allocation7 + $0xc] sm:$0xff]
    %v138 = vld [vmem:[#allocation7 + $0x14] sm:$0xf]
    %v139 = vld [vmem:[#allocation7 + $0x18] sm:$0xff]
    %v140 = vld [vmem:[#allocation7 + $0x20] sm:$0xf]
    %v141 = vld [vmem:[#allocation7 + $0x24] sm:$0xff]
    %v142 = vld [vmem:[#allocation7 + $0x2c] sm:$0xf]
    %v143 = vld [vmem:[#allocation7 + $0x30] sm:$0xff]
    %v144 = vld [vmem:[#allocation7 + $0x38] sm:$0xf]
    %v145 = vld [vmem:[#allocation7 + $0x3c] sm:$0xff]
    %v146 = vld [vmem:[#allocation7 + $0x44] sm:$0xf]
    %v147 = vld [vmem:[#allocation7 + $0x48] sm:$0xff]
    %v148 = vld [vmem:[#allocation7 + $0x50] sm:$0xf]
    %v149 = vld [vmem:[#allocation7 + $0x54] sm:$0xff]
    %v150 = vld [vmem:[#allocation7 + $0x5c] sm:$0xf]
    %v151 = vld [vmem:[#allocation7 + $0x60] sm:$0xff]
    %v152 = vld [vmem:[#allocation7 + $0x68] sm:$0xf]
    %v153 = vld [vmem:[#allocation7 + $0x6c] sm:$0xff]
    %v154 = vld [vmem:[#allocation7 + $0x74] sm:$0xf]
    %v155 = vld [vmem:[#allocation7 + $0x78] sm:$0xff]
    %v156 = vld [vmem:[#allocation7 + $0x80] sm:$0xf]
    %v157 = vld [vmem:[#allocation7 + $0x84] sm:$0xff]
    %v158 = vld [vmem:[#allocation7 + $0x8c] sm:$0xf]
    %v159 = vld [vmem:[#allocation7 + $0x90] sm:$0xff]
    %v160 = vld [vmem:[#allocation7 + $0x98] sm:$0xf]
    %v161 = vld [vmem:[#allocation7 + $0x9c] sm:$0xff]
    %v162 = vld [vmem:[#allocation7 + $0xa4] sm:$0xf]
    %v163 = vld [vmem:[#allocation7 + $0xa8] sm:$0xff]
    %v164 = vld [vmem:[#allocation7 + $0xb0] sm:$0xf]
    %v165 = vld [vmem:[#allocation7 + $0xb4] sm:$0xff]
    %v166 = vld [vmem:[#allocation7 + $0xbc] sm:$0xf]
    %v167 = vpack.c.bf16 %v125, %v122
    %v168 = vpack.c.bf16 %v130, %v130
    %v169 = vld [vmem:[%s5] ss:$8 sm:$0x7]
    %v171 = vlaneseq
    %v172 = vshrl.u32 %v171, 7
    %v173 = vsub.s32 0, %v172
    %v174 = vrot.slane %v169, %v173
    %v175 = vlaneseq
    %v176 = vshrl.u32 %v175, 7
    %v177 = vsub.s32 1, %v176
    %v178 = vrot.slane %v169, %v177
    %v179 = vlaneseq
    %v180 = vshrl.u32 %v179, 7
    %v181 = vsub.s32 2, %v180
    %v182 = vrot.slane %v169, %v181
    %v218 = vunpack.c.l.b16 %v135
    %v219 = vunpack.c.h.b16 %v135
    %v220 = vunpack.c.l.b16 %v136
    %v221 = vunpack.c.l.b16 %v137
    %v222 = vunpack.c.h.b16 %v137
    %v223 = vunpack.c.l.b16 %v138
    %v224 = vunpack.c.l.b16 %v139
    %v225 = vunpack.c.h.b16 %v139
    %v226 = vunpack.c.l.b16 %v140
    %v227 = vunpack.c.l.b16 %v141
    %v228 = vunpack.c.h.b16 %v141
    %v229 = vunpack.c.l.b16 %v142
    %v230 = vunpack.c.l.b16 %v143
    %v231 = vunpack.c.h.b16 %v143
    %v232 = vunpack.c.l.b16 %v144
    %v233 = vunpack.c.l.b16 %v145
    %v234 = vunpack.c.h.b16 %v145
    %v235 = vunpack.c.l.b16 %v146
    %v236 = vunpack.c.l.b16 %v147
    %v237 = vunpack.c.h.b16 %v147
    %v238 = vunpack.c.l.b16 %v148
    %v239 = vunpack.c.l.b16 %v149
    %v240 = vunpack.c.h.b16 %v149
    %v241 = vunpack.c.l.b16 %v150
    %v242 = vunpack.c.l.b16 %v151
    %v243 = vunpack.c.h.b16 %v151
    %v244 = vunpack.c.l.b16 %v152
    %v245 = vunpack.c.l.b16 %v153
    %v246 = vunpack.c.h.b16 %v153
    %v247 = vunpack.c.l.b16 %v154
    %v248 = vunpack.c.l.b16 %v155
    %v249 = vunpack.c.h.b16 %v155
    %v250 = vunpack.c.l.b16 %v156
    %v251 = vunpack.c.l.b16 %v157
    %v252 = vunpack.c.h.b16 %v157
    %v253 = vunpack.c.l.b16 %v158
    %v254 = vunpack.c.l.b16 %v159
    %v255 = vunpack.c.h.b16 %v159
    %v256 = vunpack.c.l.b16 %v160
    %v257 = vunpack.c.l.b16 %v161
    %v258 = vunpack.c.h.b16 %v161
    %v259 = vunpack.c.l.b16 %v162
    %v260 = vunpack.c.l.b16 %v163
    %v261 = vunpack.c.h.b16 %v163
    %v262 = vunpack.c.l.b16 %v164
    %v263 = vunpack.c.l.b16 %v165
    %v264 = vunpack.c.h.b16 %v165
    %v265 = vunpack.c.l.b16 %v166
    %v266 = vpack.c.b16 %v221, %v218
    %v267 = vpack.c.b16 %v222, %v219
    %v268 = vpack.c.b16 %v223, %v220
    %v269 = vpack.c.b16 %v227, %v224
    %v270 = vpack.c.b16 %v228, %v225
    %v271 = vpack.c.b16 %v229, %v226
    %v272 = vpack.c.b16 %v233, %v230
    %v273 = vpack.c.b16 %v234, %v231
    %v274 = vpack.c.b16 %v235, %v232
    %v275 = vpack.c.b16 %v239, %v236
    %v276 = vpack.c.b16 %v240, %v237
    %v277 = vpack.c.b16 %v241, %v238
    %v278 = vpack.c.b16 %v245, %v242
    %v279 = vpack.c.b16 %v246, %v243
    %v280 = vpack.c.b16 %v247, %v244
    %v281 = vpack.c.b16 %v251, %v248
    %v282 = vpack.c.b16 %v252, %v249
    %v283 = vpack.c.b16 %v253, %v250
    %v284 = vpack.c.b16 %v257, %v254
    %v285 = vpack.c.b16 %v258, %v255
    %v286 = vpack.c.b16 %v259, %v256
    %v287 = vpack.c.b16 %v263, %v260
    %v288 = vpack.c.b16 %v264, %v261
    %v289 = vpack.c.b16 %v265, %v262
    %314 = vmatprep.subr.bf16.mxu0 %v267
    %315 = vmatpush1.bf16.msra.mxu0 %v266
    %316 = vmatprep.subr.bf16.mxu0 %v270
    %317 = vmatpush1.bf16.msra.mxu0 %v269
    %318 = vmatprep.subr.bf16.mxu0 %v273
    %319 = vmatpush1.bf16.msra.mxu0 %v272
    %320 = vmatprep.subr.bf16.mxu0 %v276
    %321 = vmatpush1.bf16.msra.mxu0 %v275
    %322 = vmatprep.subr.bf16.mxu0 %v279
    %323 = vmatpush1.bf16.msra.mxu0 %v278
    %324 = vmatprep.subr.bf16.mxu0 %v282
    %325 = vmatpush1.bf16.msra.mxu0 %v281
    %326 = vmatprep.subr.bf16.mxu0 %v285
    %327 = vmatpush1.bf16.msra.mxu0 %v284
    %328 = vmatprep.subr.bf16.mxu0 %v288
    %329 = vmatpush1.bf16.msra.mxu0 %v287
    %330 = vmatprep.subr.bf16.mxu0 0
    %331 = vmatpush1.bf16.msra.mxu0 0
    %332 = vmatprep.subr.bf16.mxu0 0
    %333 = vmatpush1.bf16.msra.mxu0 0
    %334 = vmatprep.subr.bf16.mxu0 0
    %335 = vmatpush1.bf16.msra.mxu0 0
    %336 = vmatprep.subr.bf16.mxu0 0
    %337 = vmatpush1.bf16.msra.mxu0 0
    %338 = vmatprep.subr.bf16.mxu0 0
    %339 = vmatpush1.bf16.msra.mxu0 0
    %340 = vmatprep.subr.bf16.mxu0 0
    %341 = vmatpush1.bf16.msra.mxu0 0
    %342 = vmatprep.subr.bf16.mxu0 0
    %343 = vmatpush1.bf16.msra.mxu0 0
    %344 = vmatprep.subr.bf16.mxu0 0
    %345 = vmatpush1.bf16.msra.mxu0 0
    %346 = vmatprep.mubr.bf16.mxu0 0
    %347 = vmatmul.mubr.bf16.gmra.mrb[0].mxu0 %v167
    %v348 = vpop.f32.mrb[0].mxu0
    %v349 = vadd.f32 %v174, %v348
    %v350 = vpop.f32.mrb[0].mxu0
    %v351 = vadd.f32 %v178, %v350
    %v352 = vpop.f32.mrb[0].mxu0
    %v353 = vadd.f32 %v174, %v352
    %v354 = vpop.f32.mrb[0].mxu0
    %v355 = vadd.f32 %v178, %v354
    %356 = vmatprep.mubr.bf16.mxu0 0
    %357 = vmatmul.mubr.bf16.gmra.mrb[0].mxu0 %v168
    %v358 = vpop.f32.mrb[0].mxu0
    %v359 = vadd.f32 %v174, %v358
    %v360 = vpop.f32.mrb[0].mxu0
    %v361 = vadd.f32 %v178, %v360
    %v362 = vpop.f32.mrb[0].mxu0
    %v363 = vpop.f32.mrb[0].mxu0
    %364 = vdwg.mxu0
    %365 = vmatprep.subr.bf16.mxu0 0
    %366 = vmatpush1.bf16.msra.mxu0 %v268
    %367 = vmatprep.subr.bf16.mxu0 0
    %368 = vmatpush1.bf16.msra.mxu0 %v271
    %369 = vmatprep.subr.bf16.mxu0 0
    %370 = vmatpush1.bf16.msra.mxu0 %v274
    %371 = vmatprep.subr.bf16.mxu0 0
    %372 = vmatpush1.bf16.msra.mxu0 %v277
    %373 = vmatprep.subr.bf16.mxu0 0
    %374 = vmatpush1.bf16.msra.mxu0 %v280
    %375 = vmatprep.subr.bf16.mxu0 0
    %376 = vmatpush1.bf16.msra.mxu0 %v283
    %377 = vmatprep.subr.bf16.mxu0 0
    %378 = vmatpush1.bf16.msra.mxu0 %v286
    %379 = vmatprep.subr.bf16.mxu0 0
    %380 = vmatpush1.bf16.msra.mxu0 %v289
    %381 = vmatprep.subr.bf16.mxu0 0
    %382 = vmatpush1.bf16.msra.mxu0 0
    %383 = vmatprep.subr.bf16.mxu0 0
    %384 = vmatpush1.bf16.msra.mxu0 0
    %385 = vmatprep.subr.bf16.mxu0 0
    %386 = vmatpush1.bf16.msra.mxu0 0
    %387 = vmatprep.subr.bf16.mxu0 0
    %388 = vmatpush1.bf16.msra.mxu0 0
    %389 = vmatprep.subr.bf16.mxu0 0
    %390 = vmatpush1.bf16.msra.mxu0 0
    %391 = vmatprep.subr.bf16.mxu0 0
    %392 = vmatpush1.bf16.msra.mxu0 0
    %393 = vmatprep.subr.bf16.mxu0 0
    %394 = vmatpush1.bf16.msra.mxu0 0
    %395 = vmatprep.subr.bf16.mxu0 0
    %396 = vmatpush1.bf16.msra.mxu0 0
    %397 = vmatprep.mubr.bf16.mxu0 0
    %398 = vmatmul.mubr.bf16.gmra.mrb[0].mxu0 %v167
    %v399 = vpop.f32.mrb[0].mxu0
    %v400 = vadd.f32 %v182, %v399
    %v401 = vpop.f32.mrb[0].mxu0
    %v402 = vpop.f32.mrb[0].mxu0
    %v403 = vadd.f32 %v182, %v402
    %v404 = vpop.f32.mrb[0].mxu0
    %405 = vmatprep.mubr.bf16.mxu0 0
    %406 = vmatmul.mubr.bf16.gmra.mrb[0].mxu0 %v168
    %v407 = vpop.f32.mrb[0].mxu0
    %v408 = vadd.f32 %v182, %v407
    %v409 = vpop.f32.mrb[0].mxu0
    %v410 = vpop.f32.mrb[0].mxu0
    %v411 = vpop.f32.mrb[0].mxu0
    %412 = vdwg.mxu0
    %v413 = vld [vmem:[#allocation7 + $0xc0] sm:$0xff]
    %v414 = vld [vmem:[#allocation7 + $0xc8] sm:$0xf]
    %v415 = vld [vmem:[#allocation7 + $0xcc] sm:$0xff]
    %v416 = vld [vmem:[#allocation7 + $0xd4] sm:$0xf]
    %v417 = vld [vmem:[#allocation7 + $0xd8] sm:$0xff]
    %v418 = vld [vmem:[#allocation7 + $0xe0] sm:$0xf]
    %v419 = vld [vmem:[#allocation7 + $0xe4] sm:$0xff]
    %v420 = vld [vmem:[#allocation7 + $0xec] sm:$0xf]
    %v421 = vld [vmem:[#allocation7 + $0xf0] sm:$0xff]
    %v422 = vld [vmem:[#allocation7 + $0xf8] sm:$0xf]
    %v423 = vld [vmem:[#allocation7 + $0xfc] sm:$0xff]
    %v424 = vld [vmem:[#allocation7 + $0x104] sm:$0xf]
    %v425 = vld [vmem:[#allocation7 + $0x108] sm:$0xff]
    %v426 = vld [vmem:[#allocation7 + $0x110] sm:$0xf]
    %v427 = vld [vmem:[#allocation7 + $0x114] sm:$0xff]
    %v428 = vld [vmem:[#allocation7 + $0x11c] sm:$0xf]
    %v429 = vld [vmem:[#allocation7 + $0x120] sm:$0xff]
    %v430 = vld [vmem:[#allocation7 + $0x128] sm:$0xf]
    %v431 = vld [vmem:[#allocation7 + $0x12c] sm:$0xff]
    %v432 = vld [vmem:[#allocation7 + $0x134] sm:$0xf]
    %v433 = vld [vmem:[#allocation7 + $0x138] sm:$0xff]
    %v434 = vld [vmem:[#allocation7 + $0x140] sm:$0xf]
    %v435 = vld [vmem:[#allocation7 + $0x144] sm:$0xff]
    %v436 = vld [vmem:[#allocation7 + $0x14c] sm:$0xf]
    %v437 = vld [vmem:[#allocation7 + $0x150] sm:$0xff]
    %v438 = vld [vmem:[#allocation7 + $0x158] sm:$0xf]
    %v439 = vld [vmem:[#allocation7 + $0x15c] sm:$0xff]
    %v440 = vld [vmem:[#allocation7 + $0x164] sm:$0xf]
    %v441 = vld [vmem:[#allocation7 + $0x168] sm:$0xff]
    %v442 = vld [vmem:[#allocation7 + $0x170] sm:$0xf]
    %v443 = vld [vmem:[#allocation7 + $0x174] sm:$0xff]
    %v444 = vld [vmem:[#allocation7 + $0x17c] sm:$0xf]
    %v445 = vpack.c.bf16 %v62, %v62
    %s446 = scalar_lea.vmem %s5, 1
    %v447 = vld [vmem:[%s446] ss:$8 sm:$0x7]
    %v449 = vlaneseq
    %v450 = vshrl.u32 %v449, 7
    %v451 = vsub.s32 0, %v450
    %v452 = vrot.slane %v447, %v451
    %v453 = vlaneseq
    %v454 = vshrl.u32 %v453, 7
    %v455 = vsub.s32 1, %v454
    %v456 = vrot.slane %v447, %v455
    %v457 = vlaneseq
    %v458 = vshrl.u32 %v457, 7
    %v459 = vsub.s32 2, %v458
    %v460 = vrot.slane %v447, %v459
    %v496 = vunpack.c.l.b16 %v413
    %v497 = vunpack.c.h.b16 %v413
    %v498 = vunpack.c.l.b16 %v414
    %v499 = vunpack.c.l.b16 %v415
    %v500 = vunpack.c.h.b16 %v415
    %v501 = vunpack.c.l.b16 %v416
    %v502 = vunpack.c.l.b16 %v417
    %v503 = vunpack.c.h.b16 %v417
    %v504 = vunpack.c.l.b16 %v418
    %v505 = vunpack.c.l.b16 %v419
    %v506 = vunpack.c.h.b16 %v419
    %v507 = vunpack.c.l.b16 %v420
    %v508 = vunpack.c.l.b16 %v421
    %v509 = vunpack.c.h.b16 %v421
    %v510 = vunpack.c.l.b16 %v422
    %v511 = vunpack.c.l.b16 %v423
    %v512 = vunpack.c.h.b16 %v423
    %v513 = vunpack.c.l.b16 %v424
    %v514 = vunpack.c.l.b16 %v425
    %v515 = vunpack.c.h.b16 %v425
    %v516 = vunpack.c.l.b16 %v426
    %v517 = vunpack.c.l.b16 %v427
    %v518 = vunpack.c.h.b16 %v427
    %v519 = vunpack.c.l.b16 %v428
    %v520 = vunpack.c.l.b16 %v429
    %v521 = vunpack.c.h.b16 %v429
    %v522 = vunpack.c.l.b16 %v430
    %v523 = vunpack.c.l.b16 %v431
    %v524 = vunpack.c.h.b16 %v431
    %v525 = vunpack.c.l.b16 %v432
    %v526 = vunpack.c.l.b16 %v433
    %v527 = vunpack.c.h.b16 %v433
    %v528 = vunpack.c.l.b16 %v434
    %v529 = vunpack.c.l.b16 %v435
    %v530 = vunpack.c.h.b16 %v435
    %v531 = vunpack.c.l.b16 %v436
    %v532 = vunpack.c.l.b16 %v437
    %v533 = vunpack.c.h.b16 %v437
    %v534 = vunpack.c.l.b16 %v438
    %v535 = vunpack.c.l.b16 %v439
    %v536 = vunpack.c.h.b16 %v439
    %v537 = vunpack.c.l.b16 %v440
    %v538 = vunpack.c.l.b16 %v441
    %v539 = vunpack.c.h.b16 %v441
    %v540 = vunpack.c.l.b16 %v442
    %v541 = vunpack.c.l.b16 %v443
    %v542 = vunpack.c.h.b16 %v443
    %v543 = vunpack.c.l.b16 %v444
    %v544 = vpack.c.b16 %v499, %v496
    %v545 = vpack.c.b16 %v500, %v497
    %v546 = vpack.c.b16 %v501, %v498
    %v547 = vpack.c.b16 %v505, %v502
    %v548 = vpack.c.b16 %v506, %v503
    %v549 = vpack.c.b16 %v507, %v504
    %v550 = vpack.c.b16 %v511, %v508
    %v551 = vpack.c.b16 %v512, %v509
    %v552 = vpack.c.b16 %v513, %v510
    %v553 = vpack.c.b16 %v517, %v514
    %v554 = vpack.c.b16 %v518, %v515
    %v555 = vpack.c.b16 %v519, %v516
    %v556 = vpack.c.b16 %v523, %v520
    %v557 = vpack.c.b16 %v524, %v521
    %v558 = vpack.c.b16 %v525, %v522
    %v559 = vpack.c.b16 %v529, %v526
    %v560 = vpack.c.b16 %v530, %v527
    %v561 = vpack.c.b16 %v531, %v528
    %v562 = vpack.c.b16 %v535, %v532
    %v563 = vpack.c.b16 %v536, %v533
    %v564 = vpack.c.b16 %v537, %v534
    %v565 = vpack.c.b16 %v541, %v538
    %v566 = vpack.c.b16 %v542, %v539
    %v567 = vpack.c.b16 %v543, %v540
    %592 = vmatprep.subr.bf16.mxu0 %v545
    %593 = vmatpush1.bf16.msra.mxu0 %v544
    %594 = vmatprep.subr.bf16.mxu0 %v548
    %595 = vmatpush1.bf16.msra.mxu0 %v547
    %596 = vmatprep.subr.bf16.mxu0 %v551
    %597 = vmatpush1.bf16.msra.mxu0 %v550
    %598 = vmatprep.subr.bf16.mxu0 %v554
    %599 = vmatpush1.bf16.msra.mxu0 %v553
    %600 = vmatprep.subr.bf16.mxu0 %v557
    %601 = vmatpush1.bf16.msra.mxu0 %v556
    %602 = vmatprep.subr.bf16.mxu0 %v560
    %603 = vmatpush1.bf16.msra.mxu0 %v559
    %604 = vmatprep.subr.bf16.mxu0 %v563
    %605 = vmatpush1.bf16.msra.mxu0 %v562
    %606 = vmatprep.subr.bf16.mxu0 %v566
    %607 = vmatpush1.bf16.msra.mxu0 %v565
    %608 = vmatprep.subr.bf16.mxu0 0
    %609 = vmatpush1.bf16.msra.mxu0 0
    %610 = vmatprep.subr.bf16.mxu0 0
    %611 = vmatpush1.bf16.msra.mxu0 0
    %612 = vmatprep.subr.bf16.mxu0 0
    %613 = vmatpush1.bf16.msra.mxu0 0
    %614 = vmatprep.subr.bf16.mxu0 0
    %615 = vmatpush1.bf16.msra.mxu0 0
    %616 = vmatprep.subr.bf16.mxu0 0
    %617 = vmatpush1.bf16.msra.mxu0 0
    %618 = vmatprep.subr.bf16.mxu0 0
    %619 = vmatpush1.bf16.msra.mxu0 0
    %620 = vmatprep.subr.bf16.mxu0 0
    %621 = vmatpush1.bf16.msra.mxu0 0
    %622 = vmatprep.subr.bf16.mxu0 0
    %623 = vmatpush1.bf16.msra.mxu0 0
    %624 = vmatprep.mubr.bf16.mxu0 0
    %625 = vmatmul.mubr.bf16.gmra.mrb[0].mxu0 %v445
    %v626 = vpop.f32.mrb[0].mxu0
    %v627 = vadd.f32 %v452, %v626
    %v628 = vpop.f32.mrb[0].mxu0
    %v629 = vadd.f32 %v456, %v628
    %v630 = vpop.f32.mrb[0].mxu0
    %v631 = vpop.f32.mrb[0].mxu0
    %632 = vdwg.mxu0
    %633 = vmatprep.subr.bf16.mxu0 0
    %634 = vmatpush1.bf16.msra.mxu0 %v546
    %635 = vmatprep.subr.bf16.mxu0 0
    %636 = vmatpush1.bf16.msra.mxu0 %v549
    %637 = vmatprep.subr.bf16.mxu0 0
    %638 = vmatpush1.bf16.msra.mxu0 %v552
    %639 = vmatprep.subr.bf16.mxu0 0
    %640 = vmatpush1.bf16.msra.mxu0 %v555
    %641 = vmatprep.subr.bf16.mxu0 0
    %642 = vmatpush1.bf16.msra.mxu0 %v558
    %643 = vmatprep.subr.bf16.mxu0 0
    %644 = vmatpush1.bf16.msra.mxu0 %v561
    %645 = vmatprep.subr.bf16.mxu0 0
    %646 = vmatpush1.bf16.msra.mxu0 %v564
    %647 = vmatprep.subr.bf16.mxu0 0
    %648 = vmatpush1.bf16.msra.mxu0 %v567
    %649 = vmatprep.subr.bf16.mxu0 0
    %650 = vmatpush1.bf16.msra.mxu0 0
    %651 = vmatprep.subr.bf16.mxu0 0
    %652 = vmatpush1.bf16.msra.mxu0 0
    %653 = vmatprep.subr.bf16.mxu0 0
    %654 = vmatpush1.bf16.msra.mxu0 0
    %655 = vmatprep.subr.bf16.mxu0 0
    %656 = vmatpush1.bf16.msra.mxu0 0
    %657 = vmatprep.subr.bf16.mxu0 0
    %658 = vmatpush1.bf16.msra.mxu0 0
    %659 = vmatprep.subr.bf16.mxu0 0
    %660 = vmatpush1.bf16.msra.mxu0 0
    %661 = vmatprep.subr.bf16.mxu0 0
    %662 = vmatpush1.bf16.msra.mxu0 0
    %663 = vmatprep.subr.bf16.mxu0 0
    %664 = vmatpush1.bf16.msra.mxu0 0
    %665 = vmatprep.mubr.bf16.mxu0 0
    %666 = vmatmul.mubr.bf16.gmra.mrb[0].mxu0 %v445
    %v667 = vpop.f32.mrb[0].mxu0
    %v668 = vadd.f32 %v460, %v667
    %v669 = vpop.f32.mrb[0].mxu0
    %v670 = vpop.f32.mrb[0].mxu0
    %v671 = vpop.f32.mrb[0].mxu0
    %672 = vdwg.mxu0
    %v673 = vadd.f32 %v349, %v627
    %v674 = vxor.u32 %v673, 2147483648
    %v675 = vmul.f32 %v674, 1.442695
    %v676 = vpow.pop %v675
    %v677 = vadd.f32 %v676, 1.0
    %v678 = vrcp.pop %v677
    %v679 = vmul.f32 1.0, %v678
    %v680 = vadd.f32 %v351, %v629
    %v681 = vxor.u32 %v680, 2147483648
    %v682 = vmul.f32 %v681, 1.442695
    %v683 = vpow.pop %v682
    %v684 = vadd.f32 %v683, 1.0
    %v685 = vrcp.pop %v684
    %v686 = vmul.f32 1.0, %v685
    %v687 = vmul.f32 %v679, %v668
    %v688 = vadd.f32 %v400, %v687
    %v689 = vtanh.pop %v688
    %v690 = vsub.f32 %v62, %v689
    %v691 = vmul.f32 %v686, %v690
    %v692 = vadd.f32 %v689, %v691
    %693 = vst [vmem:[#allocation2] sm:$0xff] %v692
    %v694 = vld [vmem:[#allocation7 + $0xc0] sm:$0xff]
    %v695 = vld [vmem:[#allocation7 + $0xc8] sm:$0xf]
    %v696 = vld [vmem:[#allocation7 + $0xcc] sm:$0xff]
    %v697 = vld [vmem:[#allocation7 + $0xd4] sm:$0xf]
    %v698 = vld [vmem:[#allocation7 + $0xd8] sm:$0xff]
    %v699 = vld [vmem:[#allocation7 + $0xe0] sm:$0xf]
    %v700 = vld [vmem:[#allocation7 + $0xe4] sm:$0xff]
    %v701 = vld [vmem:[#allocation7 + $0xec] sm:$0xf]
    %v702 = vld [vmem:[#allocation7 + $0xf0] sm:$0xff]
    %v703 = vld [vmem:[#allocation7 + $0xf8] sm:$0xf]
    %v704 = vld [vmem:[#allocation7 + $0xfc] sm:$0xff]
    %v705 = vld [vmem:[#allocation7 + $0x104] sm:$0xf]
    %v706 = vld [vmem:[#allocation7 + $0x108] sm:$0xff]
    %v707 = vld [vmem:[#allocation7 + $0x110] sm:$0xf]
    %v708 = vld [vmem:[#allocation7 + $0x114] sm:$0xff]
    %v709 = vld [vmem:[#allocation7 + $0x11c] sm:$0xf]
    %v710 = vld [vmem:[#allocation7 + $0x120] sm:$0xff]
    %v711 = vld [vmem:[#allocation7 + $0x128] sm:$0xf]
    %v712 = vld [vmem:[#allocation7 + $0x12c] sm:$0xff]
    %v713 = vld [vmem:[#allocation7 + $0x134] sm:$0xf]
    %v714 = vld [vmem:[#allocation7 + $0x138] sm:$0xff]
    %v715 = vld [vmem:[#allocation7 + $0x140] sm:$0xf]
    %v716 = vld [vmem:[#allocation7 + $0x144] sm:$0xff]
    %v717 = vld [vmem:[#allocation7 + $0x14c] sm:$0xf]
    %v718 = vld [vmem:[#allocation7 + $0x150] sm:$0xff]
    %v719 = vld [vmem:[#allocation7 + $0x158] sm:$0xf]
    %v720 = vld [vmem:[#allocation7 + $0x15c] sm:$0xff]
    %v721 = vld [vmem:[#allocation7 + $0x164] sm:$0xf]
    %v722 = vld [vmem:[#allocation7 + $0x168] sm:$0xff]
    %v723 = vld [vmem:[#allocation7 + $0x170] sm:$0xf]
    %v724 = vld [vmem:[#allocation7 + $0x174] sm:$0xff]
    %v725 = vld [vmem:[#allocation7 + $0x17c] sm:$0xf]
    %v726 = vpack.c.bf16 %v692, %v692
    %v727 = vld [vmem:[%s446] ss:$8 sm:$0x7]
    %v729 = vlaneseq
    %v730 = vshrl.u32 %v729, 7
    %v731 = vsub.s32 0, %v730
    %v732 = vrot.slane %v727, %v731
    %v733 = vlaneseq
    %v734 = vshrl.u32 %v733, 7
    %v735 = vsub.s32 1, %v734
    %v736 = vrot.slane %v727, %v735
    %v737 = vlaneseq
    %v738 = vshrl.u32 %v737, 7
    %v739 = vsub.s32 2, %v738
    %v740 = vrot.slane %v727, %v739
    %v776 = vunpack.c.l.b16 %v694
    %v777 = vunpack.c.h.b16 %v694
    %v778 = vunpack.c.l.b16 %v695
    %v779 = vunpack.c.l.b16 %v696
    %v780 = vunpack.c.h.b16 %v696
    %v781 = vunpack.c.l.b16 %v697
    %v782 = vunpack.c.l.b16 %v698
    %v783 = vunpack.c.h.b16 %v698
    %v784 = vunpack.c.l.b16 %v699
    %v785 = vunpack.c.l.b16 %v700
    %v786 = vunpack.c.h.b16 %v700
    %v787 = vunpack.c.l.b16 %v701
    %v788 = vunpack.c.l.b16 %v702
    %v789 = vunpack.c.h.b16 %v702
    %v790 = vunpack.c.l.b16 %v703
    %v791 = vunpack.c.l.b16 %v704
    %v792 = vunpack.c.h.b16 %v704
    %v793 = vunpack.c.l.b16 %v705
    %v794 = vunpack.c.l.b16 %v706
    %v795 = vunpack.c.h.b16 %v706
    %v796 = vunpack.c.l.b16 %v707
    %v797 = vunpack.c.l.b16 %v708
    %v798 = vunpack.c.h.b16 %v708
    %v799 = vunpack.c.l.b16 %v709
    %v800 = vunpack.c.l.b16 %v710
    %v801 = vunpack.c.h.b16 %v710
    %v802 = vunpack.c.l.b16 %v711
    %v803 = vunpack.c.l.b16 %v712
    %v804 = vunpack.c.h.b16 %v712
    %v805 = vunpack.c.l.b16 %v713
    %v806 = vunpack.c.l.b16 %v714
    %v807 = vunpack.c.h.b16 %v714
    %v808 = vunpack.c.l.b16 %v715
    %v809 = vunpack.c.l.b16 %v716
    %v810 = vunpack.c.h.b16 %v716
    %v811 = vunpack.c.l.b16 %v717
    %v812 = vunpack.c.l.b16 %v718
    %v813 = vunpack.c.h.b16 %v718
    %v814 = vunpack.c.l.b16 %v719
    %v815 = vunpack.c.l.b16 %v720
    %v816 = vunpack.c.h.b16 %v720
    %v817 = vunpack.c.l.b16 %v721
    %v818 = vunpack.c.l.b16 %v722
    %v819 = vunpack.c.h.b16 %v722
    %v820 = vunpack.c.l.b16 %v723
    %v821 = vunpack.c.l.b16 %v724
    %v822 = vunpack.c.h.b16 %v724
    %v823 = vunpack.c.l.b16 %v725
    %v824 = vpack.c.b16 %v779, %v776
    %v825 = vpack.c.b16 %v780, %v777
    %v826 = vpack.c.b16 %v781, %v778
    %v827 = vpack.c.b16 %v785, %v782
    %v828 = vpack.c.b16 %v786, %v783
    %v829 = vpack.c.b16 %v787, %v784
    %v830 = vpack.c.b16 %v791, %v788
    %v831 = vpack.c.b16 %v792, %v789
    %v832 = vpack.c.b16 %v793, %v790
    %v833 = vpack.c.b16 %v797, %v794
    %v834 = vpack.c.b16 %v798, %v795
    %v835 = vpack.c.b16 %v799, %v796
    %v836 = vpack.c.b16 %v803, %v800
    %v837 = vpack.c.b16 %v804, %v801
    %v838 = vpack.c.b16 %v805, %v802
    %v839 = vpack.c.b16 %v809, %v806
    %v840 = vpack.c.b16 %v810, %v807
    %v841 = vpack.c.b16 %v811, %v808
    %v842 = vpack.c.b16 %v815, %v812
    %v843 = vpack.c.b16 %v816, %v813
    %v844 = vpack.c.b16 %v817, %v814
    %v845 = vpack.c.b16 %v821, %v818
    %v846 = vpack.c.b16 %v822, %v819
    %v847 = vpack.c.b16 %v823, %v820
    %872 = vmatprep.subr.bf16.mxu0 %v825
    %873 = vmatpush1.bf16.msra.mxu0 %v824
    %874 = vmatprep.subr.bf16.mxu0 %v828
    %875 = vmatpush1.bf16.msra.mxu0 %v827
    %876 = vmatprep.subr.bf16.mxu0 %v831
    %877 = vmatpush1.bf16.msra.mxu0 %v830
    %878 = vmatprep.subr.bf16.mxu0 %v834
    %879 = vmatpush1.bf16.msra.mxu0 %v833
    %880 = vmatprep.subr.bf16.mxu0 %v837
    %881 = vmatpush1.bf16.msra.mxu0 %v836
    %882 = vmatprep.subr.bf16.mxu0 %v840
    %883 = vmatpush1.bf16.msra.mxu0 %v839
    %884 = vmatprep.subr.bf16.mxu0 %v843
    %885 = vmatpush1.bf16.msra.mxu0 %v842
    %886 = vmatprep.subr.bf16.mxu0 %v846
    %887 = vmatpush1.bf16.msra.mxu0 %v845
    %888 = vmatprep.subr.bf16.mxu0 0
    %889 = vmatpush1.bf16.msra.mxu0 0
    %890 = vmatprep.subr.bf16.mxu0 0
    %891 = vmatpush1.bf16.msra.mxu0 0
    %892 = vmatprep.subr.bf16.mxu0 0
    %893 = vmatpush1.bf16.msra.mxu0 0
    %894 = vmatprep.subr.bf16.mxu0 0
    %895 = vmatpush1.bf16.msra.mxu0 0
    %896 = vmatprep.subr.bf16.mxu0 0
    %897 = vmatpush1.bf16.msra.mxu0 0
    %898 = vmatprep.subr.bf16.mxu0 0
    %899 = vmatpush1.bf16.msra.mxu0 0
    %900 = vmatprep.subr.bf16.mxu0 0
    %901 = vmatpush1.bf16.msra.mxu0 0
    %902 = vmatprep.subr.bf16.mxu0 0
    %903 = vmatpush1.bf16.msra.mxu0 0
    %904 = vmatprep.mubr.bf16.mxu0 0
    %905 = vmatmul.mubr.bf16.gmra.mrb[0].mxu0 %v726
    %v906 = vpop.f32.mrb[0].mxu0
    %v907 = vadd.f32 %v732, %v906
    %v908 = vpop.f32.mrb[0].mxu0
    %v909 = vadd.f32 %v736, %v908
    %v910 = vpop.f32.mrb[0].mxu0
    %v911 = vpop.f32.mrb[0].mxu0
    %912 = vdwg.mxu0
    %913 = vmatprep.subr.bf16.mxu0 0
    %914 = vmatpush1.bf16.msra.mxu0 %v826
    %915 = vmatprep.subr.bf16.mxu0 0
    %916 = vmatpush1.bf16.msra.mxu0 %v829
    %917 = vmatprep.subr.bf16.mxu0 0
    %918 = vmatpush1.bf16.msra.mxu0 %v832
    %919 = vmatprep.subr.bf16.mxu0 0
    %920 = vmatpush1.bf16.msra.mxu0 %v835
    %921 = vmatprep.subr.bf16.mxu0 0
    %922 = vmatpush1.bf16.msra.mxu0 %v838
    %923 = vmatprep.subr.bf16.mxu0 0
    %924 = vmatpush1.bf16.msra.mxu0 %v841
    %925 = vmatprep.subr.bf16.mxu0 0
    %926 = vmatpush1.bf16.msra.mxu0 %v844
    %927 = vmatprep.subr.bf16.mxu0 0
    %928 = vmatpush1.bf16.msra.mxu0 %v847
    %929 = vmatprep.subr.bf16.mxu0 0
    %930 = vmatpush1.bf16.msra.mxu0 0
    %931 = vmatprep.subr.bf16.mxu0 0
    %932 = vmatpush1.bf16.msra.mxu0 0
    %933 = vmatprep.subr.bf16.mxu0 0
    %934 = vmatpush1.bf16.msra.mxu0 0
    %935 = vmatprep.subr.bf16.mxu0 0
    %936 = vmatpush1.bf16.msra.mxu0 0
    %937 = vmatprep.subr.bf16.mxu0 0
    %938 = vmatpush1.bf16.msra.mxu0 0
    %939 = vmatprep.subr.bf16.mxu0 0
    %940 = vmatpush1.bf16.msra.mxu0 0
    %941 = vmatprep.subr.bf16.mxu0 0
    %942 = vmatpush1.bf16.msra.mxu0 0
    %943 = vmatprep.subr.bf16.mxu0 0
    %944 = vmatpush1.bf16.msra.mxu0 0
    %945 = vmatprep.mubr.bf16.mxu0 0
    %946 = vmatmul.mubr.bf16.gmra.mrb[0].mxu0 %v726
    %v947 = vpop.f32.mrb[0].mxu0
    %v948 = vadd.f32 %v740, %v947
    %v949 = vpop.f32.mrb[0].mxu0
    %v950 = vpop.f32.mrb[0].mxu0
    %v951 = vpop.f32.mrb[0].mxu0
    %952 = vdwg.mxu0
    %v953 = vadd.f32 %v353, %v907
    %v954 = vxor.u32 %v953, 2147483648
    %v955 = vmul.f32 %v954, 1.442695
    %v956 = vpow.pop %v955
    %v957 = vadd.f32 %v956, 1.0
    %v958 = vrcp.pop %v957
    %v959 = vmul.f32 1.0, %v958
    %v960 = vadd.f32 %v355, %v909
    %v961 = vxor.u32 %v960, 2147483648
    %v962 = vmul.f32 %v961, 1.442695
    %v963 = vpow.pop %v962
    %v964 = vadd.f32 %v963, 1.0
    %v965 = vrcp.pop %v964
    %v966 = vmul.f32 1.0, %v965
    %v967 = vmul.f32 %v959, %v948
    %v968 = vadd.f32 %v403, %v967
    %v969 = vtanh.pop %v968
    %v970 = vsub.f32 %v692, %v969
    %v971 = vmul.f32 %v966, %v970
    %v972 = vadd.f32 %v969, %v971
    %973 = vst [vmem:[#allocation2 + $0x8] sm:$0xff] %v972
    %v974 = vld [vmem:[#allocation7 + $0xc0] sm:$0xff]
    %v975 = vld [vmem:[#allocation7 + $0xc8] sm:$0xf]
    %v976 = vld [vmem:[#allocation7 + $0xcc] sm:$0xff]
    %v977 = vld [vmem:[#allocation7 + $0xd4] sm:$0xf]
    %v978 = vld [vmem:[#allocation7 + $0xd8] sm:$0xff]
    %v979 = vld [vmem:[#allocation7 + $0xe0] sm:$0xf]
    %v980 = vld [vmem:[#allocation7 + $0xe4] sm:$0xff]
    %v981 = vld [vmem:[#allocation7 + $0xec] sm:$0xf]
    %v982 = vld [vmem:[#allocation7 + $0xf0] sm:$0xff]
    %v983 = vld [vmem:[#allocation7 + $0xf8] sm:$0xf]
    %v984 = vld [vmem:[#allocation7 + $0xfc] sm:$0xff]
    %v985 = vld [vmem:[#allocation7 + $0x104] sm:$0xf]
    %v986 = vld [vmem:[#allocation7 + $0x108] sm:$0xff]
    %v987 = vld [vmem:[#allocation7 + $0x110] sm:$0xf]
    %v988 = vld [vmem:[#allocation7 + $0x114] sm:$0xff]
    %v989 = vld [vmem:[#allocation7 + $0x11c] sm:$0xf]
    %v990 = vld [vmem:[#allocation7 + $0x120] sm:$0xff]
    %v991 = vld [vmem:[#allocation7 + $0x128] sm:$0xf]
    %v992 = vld [vmem:[#allocation7 + $0x12c] sm:$0xff]
    %v993 = vld [vmem:[#allocation7 + $0x134] sm:$0xf]
    %v994 = vld [vmem:[#allocation7 + $0x138] sm:$0xff]
    %v995 = vld [vmem:[#allocation7 + $0x140] sm:$0xf]
    %v996 = vld [vmem:[#allocation7 + $0x144] sm:$0xff]
    %v997 = vld [vmem:[#allocation7 + $0x14c] sm:$0xf]
    %v998 = vld [vmem:[#allocation7 + $0x150] sm:$0xff]
    %v999 = vld [vmem:[#allocation7 + $0x158] sm:$0xf]
    %v1000 = vld [vmem:[#allocation7 + $0x15c] sm:$0xff]
    %v1001 = vld [vmem:[#allocation7 + $0x164] sm:$0xf]
    %v1002 = vld [vmem:[#allocation7 + $0x168] sm:$0xff]
    %v1003 = vld [vmem:[#allocation7 + $0x170] sm:$0xf]
    %v1004 = vld [vmem:[#allocation7 + $0x174] sm:$0xff]
    %v1005 = vld [vmem:[#allocation7 + $0x17c] sm:$0xf]
    %v1006 = vpack.c.bf16 %v972, %v972
    %v1007 = vld [vmem:[%s446] ss:$8 sm:$0x7]
    %v1009 = vlaneseq
    %v1010 = vshrl.u32 %v1009, 7
    %v1011 = vsub.s32 0, %v1010
    %v1012 = vrot.slane %v1007, %v1011
    %v1013 = vlaneseq
    %v1014 = vshrl.u32 %v1013, 7
    %v1015 = vsub.s32 1, %v1014
    %v1016 = vrot.slane %v1007, %v1015
    %v1017 = vlaneseq
    %v1018 = vshrl.u32 %v1017, 7
    %v1019 = vsub.s32 2, %v1018
    %v1020 = vrot.slane %v1007, %v1019
    %v1056 = vunpack.c.l.b16 %v974
    %v1057 = vunpack.c.h.b16 %v974
    %v1058 = vunpack.c.l.b16 %v975
    %v1059 = vunpack.c.l.b16 %v976
    %v1060 = vunpack.c.h.b16 %v976
    %v1061 = vunpack.c.l.b16 %v977
    %v1062 = vunpack.c.l.b16 %v978
    %v1063 = vunpack.c.h.b16 %v978
    %v1064 = vunpack.c.l.b16 %v979
    %v1065 = vunpack.c.l.b16 %v980
    %v1066 = vunpack.c.h.b16 %v980
    %v1067 = vunpack.c.l.b16 %v981
    %v1068 = vunpack.c.l.b16 %v982
    %v1069 = vunpack.c.h.b16 %v982
    %v1070 = vunpack.c.l.b16 %v983
    %v1071 = vunpack.c.l.b16 %v984
    %v1072 = vunpack.c.h.b16 %v984
    %v1073 = vunpack.c.l.b16 %v985
    %v1074 = vunpack.c.l.b16 %v986
    %v1075 = vunpack.c.h.b16 %v986
    %v1076 = vunpack.c.l.b16 %v987
    %v1077 = vunpack.c.l.b16 %v988
    %v1078 = vunpack.c.h.b16 %v988
    %v1079 = vunpack.c.l.b16 %v989
    %v1080 = vunpack.c.l.b16 %v990
    %v1081 = vunpack.c.h.b16 %v990
    %v1082 = vunpack.c.l.b16 %v991
    %v1083 = vunpack.c.l.b16 %v992
    %v1084 = vunpack.c.h.b16 %v992
    %v1085 = vunpack.c.l.b16 %v993
    %v1086 = vunpack.c.l.b16 %v994
    %v1087 = vunpack.c.h.b16 %v994
    %v1088 = vunpack.c.l.b16 %v995
    %v1089 = vunpack.c.l.b16 %v996
    %v1090 = vunpack.c.h.b16 %v996
    %v1091 = vunpack.c.l.b16 %v997
    %v1092 = vunpack.c.l.b16 %v998
    %v1093 = vunpack.c.h.b16 %v998
    %v1094 = vunpack.c.l.b16 %v999
    %v1095 = vunpack.c.l.b16 %v1000
    %v1096 = vunpack.c.h.b16 %v1000
    %v1097 = vunpack.c.l.b16 %v1001
    %v1098 = vunpack.c.l.b16 %v1002
    %v1099 = vunpack.c.h.b16 %v1002
    %v1100 = vunpack.c.l.b16 %v1003
    %v1101 = vunpack.c.l.b16 %v1004
    %v1102 = vunpack.c.h.b16 %v1004
    %v1103 = vunpack.c.l.b16 %v1005
    %v1104 = vpack.c.b16 %v1059, %v1056
    %v1105 = vpack.c.b16 %v1060, %v1057
    %v1106 = vpack.c.b16 %v1061, %v1058
    %v1107 = vpack.c.b16 %v1065, %v1062
    %v1108 = vpack.c.b16 %v1066, %v1063
    %v1109 = vpack.c.b16 %v1067, %v1064
    %v1110 = vpack.c.b16 %v1071, %v1068
    %v1111 = vpack.c.b16 %v1072, %v1069
    %v1112 = vpack.c.b16 %v1073, %v1070
    %v1113 = vpack.c.b16 %v1077, %v1074
    %v1114 = vpack.c.b16 %v1078, %v1075
    %v1115 = vpack.c.b16 %v1079, %v1076
    %v1116 = vpack.c.b16 %v1083, %v1080
    %v1117 = vpack.c.b16 %v1084, %v1081
    %v1118 = vpack.c.b16 %v1085, %v1082
    %v1119 = vpack.c.b16 %v1089, %v1086
    %v1120 = vpack.c.b16 %v1090, %v1087
    %v1121 = vpack.c.b16 %v1091, %v1088
    %v1122 = vpack.c.b16 %v1095, %v1092
    %v1123 = vpack.c.b16 %v1096, %v1093
    %v1124 = vpack.c.b16 %v1097, %v1094
    %v1125 = vpack.c.b16 %v1101, %v1098
    %v1126 = vpack.c.b16 %v1102, %v1099
    %v1127 = vpack.c.b16 %v1103, %v1100
    %1152 = vmatprep.subr.bf16.mxu0 %v1105
    %1153 = vmatpush1.bf16.msra.mxu0 %v1104
    %1154 = vmatprep.subr.bf16.mxu0 %v1108
    %1155 = vmatpush1.bf16.msra.mxu0 %v1107
    %1156 = vmatprep.subr.bf16.mxu0 %v1111
    %1157 = vmatpush1.bf16.msra.mxu0 %v1110
    %1158 = vmatprep.subr.bf16.mxu0 %v1114
    %1159 = vmatpush1.bf16.msra.mxu0 %v1113
    %1160 = vmatprep.subr.bf16.mxu0 %v1117
    %1161 = vmatpush1.bf16.msra.mxu0 %v1116
    %1162 = vmatprep.subr.bf16.mxu0 %v1120
    %1163 = vmatpush1.bf16.msra.mxu0 %v1119
    %1164 = vmatprep.subr.bf16.mxu0 %v1123
    %1165 = vmatpush1.bf16.msra.mxu0 %v1122
    %1166 = vmatprep.subr.bf16.mxu0 %v1126
    %1167 = vmatpush1.bf16.msra.mxu0 %v1125
    %1168 = vmatprep.subr.bf16.mxu0 0
    %1169 = vmatpush1.bf16.msra.mxu0 0
    %1170 = vmatprep.subr.bf16.mxu0 0
    %1171 = vmatpush1.bf16.msra.mxu0 0
    %1172 = vmatprep.subr.bf16.mxu0 0
    %1173 = vmatpush1.bf16.msra.mxu0 0
    %1174 = vmatprep.subr.bf16.mxu0 0
    %1175 = vmatpush1.bf16.msra.mxu0 0
    %1176 = vmatprep.subr.bf16.mxu0 0
    %1177 = vmatpush1.bf16.msra.mxu0 0
    %1178 = vmatprep.subr.bf16.mxu0 0
    %1179 = vmatpush1.bf16.msra.mxu0 0
    %1180 = vmatprep.subr.bf16.mxu0 0
    %1181 = vmatpush1.bf16.msra.mxu0 0
    %1182 = vmatprep.subr.bf16.mxu0 0
    %1183 = vmatpush1.bf16.msra.mxu0 0
    %1184 = vmatprep.mubr.bf16.mxu0 0
    %1185 = vmatmul.mubr.bf16.gmra.mrb[0].mxu0 %v1006
    %v1186 = vpop.f32.mrb[0].mxu0
    %v1187 = vadd.f32 %v1012, %v1186
    %v1188 = vpop.f32.mrb[0].mxu0
    %v1189 = vadd.f32 %v1016, %v1188
    %v1190 = vpop.f32.mrb[0].mxu0
    %v1191 = vpop.f32.mrb[0].mxu0
    %1192 = vdwg.mxu0
    %1193 = vmatprep.subr.bf16.mxu0 0
    %1194 = vmatpush1.bf16.msra.mxu0 %v1106
    %1195 = vmatprep.subr.bf16.mxu0 0
    %1196 = vmatpush1.bf16.msra.mxu0 %v1109
    %1197 = vmatprep.subr.bf16.mxu0 0
    %1198 = vmatpush1.bf16.msra.mxu0 %v1112
    %1199 = vmatprep.subr.bf16.mxu0 0
    %1200 = vmatpush1.bf16.msra.mxu0 %v1115
    %1201 = vmatprep.subr.bf16.mxu0 0
    %1202 = vmatpush1.bf16.msra.mxu0 %v1118
    %1203 = vmatprep.subr.bf16.mxu0 0
    %1204 = vmatpush1.bf16.msra.mxu0 %v1121
    %1205 = vmatprep.subr.bf16.mxu0 0
    %1206 = vmatpush1.bf16.msra.mxu0 %v1124
    %1207 = vmatprep.subr.bf16.mxu0 0
    %1208 = vmatpush1.bf16.msra.mxu0 %v1127
    %1209 = vmatprep.subr.bf16.mxu0 0
    %1210 = vmatpush1.bf16.msra.mxu0 0
    %1211 = vmatprep.subr.bf16.mxu0 0
    %1212 = vmatpush1.bf16.msra.mxu0 0
    %1213 = vmatprep.subr.bf16.mxu0 0
    %1214 = vmatpush1.bf16.msra.mxu0 0
    %1215 = vmatprep.subr.bf16.mxu0 0
    %1216 = vmatpush1.bf16.msra.mxu0 0
    %1217 = vmatprep.subr.bf16.mxu0 0
    %1218 = vmatpush1.bf16.msra.mxu0 0
    %1219 = vmatprep.subr.bf16.mxu0 0
    %1220 = vmatpush1.bf16.msra.mxu0 0
    %1221 = vmatprep.subr.bf16.mxu0 0
    %1222 = vmatpush1.bf16.msra.mxu0 0
    %1223 = vmatprep.subr.bf16.mxu0 0
    %1224 = vmatpush1.bf16.msra.mxu0 0
    %1225 = vmatprep.mubr.bf16.mxu0 0
    %1226 = vmatmul.mubr.bf16.gmra.mrb[0].mxu0 %v1006
    %v1227 = vpop.f32.mrb[0].mxu0
    %v1228 = vadd.f32 %v1020, %v1227
    %v1229 = vpop.f32.mrb[0].mxu0
    %v1230 = vpop.f32.mrb[0].mxu0
    %v1231 = vpop.f32.mrb[0].mxu0
    %1232 = vdwg.mxu0
    %v1233 = vadd.f32 %v359, %v1187
    %v1234 = vxor.u32 %v1233, 2147483648
    %v1235 = vmul.f32 %v1234, 1.442695
    %v1236 = vpow.pop %v1235
    %v1237 = vadd.f32 %v1236, 1.0
    %v1238 = vrcp.pop %v1237
    %v1239 = vmul.f32 1.0, %v1238
    %v1240 = vadd.f32 %v361, %v1189
    %v1241 = vxor.u32 %v1240, 2147483648
    %v1242 = vmul.f32 %v1241, 1.442695
    %v1243 = vpow.pop %v1242
    %v1244 = vadd.f32 %v1243, 1.0
    %v1245 = vrcp.pop %v1244
    %v1246 = vmul.f32 1.0, %v1245
    %v1247 = vmul.f32 %v1239, %v1228
    %v1248 = vadd.f32 %v408, %v1247
    %v1249 = vtanh.pop %v1248
    %v1250 = vsub.f32 %v972, %v1249
    %v1251 = vmul.f32 %v1246, %v1250
    %v1252 = vadd.f32 %v1249, %v1251
    %1253 = vst [vmem:[#allocation2 + $0x10] sm:$0xff] %v1252
    %v1254 = vld [vmem:[#allocation2] sm:$0xff]
    %v1255 = vld [vmem:[#allocation2 + $0x8] sm:$0xff]
    %v1256 = vld [vmem:[#allocation2 + $0x10] sm:$0xff]
    %v1257 = vpack.c.bf16 %v1255, %v1254
    %v1258 = vpack.c.bf16 %v1256, %v1256
    %vm1259 = vcmask 195584
    %v1261 = vsel %vm1259, %v66, 0
    %vm1263 = vcmask 1043456
    %v1265 = vsel %vm1263, %v1258, 0
    %1267 = vmatprep.subr.bf16.mxu0 0
    %1268 = vmatpush1.bf16.msra.mxu0 %v1257
    %1269 = vmatprep.subr.bf16.mxu0 0
    %1270 = vmatpush1.bf16.msra.mxu0 %v1265
    %1271 = vmatprep.subr.bf16.mxu0 0
    %1272 = vmatpush1.bf16.msra.mxu0 0
    %1273 = vmatprep.subr.bf16.mxu0 0
    %1274 = vmatpush1.bf16.msra.mxu0 0
    %1275 = vmatprep.subr.bf16.mxu0 0
    %1276 = vmatpush1.bf16.msra.mxu0 0
    %1277 = vmatprep.subr.bf16.mxu0 0
    %1278 = vmatpush1.bf16.msra.mxu0 0
    %1279 = vmatprep.subr.bf16.mxu0 0
    %1280 = vmatpush1.bf16.msra.mxu0 0
    %1281 = vmatprep.subr.bf16.mxu0 0
    %1282 = vmatpush1.bf16.msra.mxu0 0
    %1283 = vmatprep.subr.bf16.mxu0 0
    %1284 = vmatpush1.bf16.msra.mxu0 0
    %1285 = vmatprep.subr.bf16.mxu0 0
    %1286 = vmatpush1.bf16.msra.mxu0 0
    %1287 = vmatprep.subr.bf16.mxu0 0
    %1288 = vmatpush1.bf16.msra.mxu0 0
    %1289 = vmatprep.subr.bf16.mxu0 0
    %1290 = vmatpush1.bf16.msra.mxu0 0
    %1291 = vmatprep.subr.bf16.mxu0 0
    %1292 = vmatpush1.bf16.msra.mxu0 0
    %1293 = vmatprep.subr.bf16.mxu0 0
    %1294 = vmatpush1.bf16.msra.mxu0 0
    %1295 = vmatprep.subr.bf16.mxu0 0
    %1296 = vmatpush1.bf16.msra.mxu0 0
    %1297 = vmatprep.subr.bf16.mxu0 0
    %1298 = vmatpush1.bf16.msra.mxu0 0
    %1299 = vmatprep.mubr.bf16.mxu0 0
    %1300 = vmatmul.mubr.bf16.gmra.mrb[0].mxu0 %v1261
    %v1301 = vpop.f32.mrb[0].mxu0
    %v1302 = vadd.f32 0.0, %v1301
    %v1303 = vpop.f32.mrb[0].mxu0
    %v1304 = vpop.f32.mrb[0].mxu0
    %v1305 = vpop.f32.mrb[0].mxu0
    %1306 = vdwg.mxu0
    %v1307 = vld [vmem:[#allocation7 + $0x180] sm:$0xff]
    %v1308 = vld [vmem:[#allocation7 + $0x188] sm:$0xf]
    %v1309 = vld [vmem:[#allocation7 + $0x18c] sm:$0xff]
    %v1310 = vld [vmem:[#allocation7 + $0x194] sm:$0xf]
    %v1311 = vld [vmem:[#allocation7 + $0x198] sm:$0xff]
    %v1312 = vld [vmem:[#allocation7 + $0x1a0] sm:$0xf]
    %v1313 = vld [vmem:[#allocation7 + $0x1a4] sm:$0xff]
    %v1314 = vld [vmem:[#allocation7 + $0x1ac] sm:$0xf]
    %v1315 = vld [vmem:[#allocation7 + $0x1b0] sm:$0xff]
    %v1316 = vld [vmem:[#allocation7 + $0x1b8] sm:$0xf]
    %v1317 = vld [vmem:[#allocation7 + $0x1bc] sm:$0xff]
    %v1318 = vld [vmem:[#allocation7 + $0x1c4] sm:$0xf]
    %v1319 = vld [vmem:[#allocation7 + $0x1c8] sm:$0xff]
    %v1320 = vld [vmem:[#allocation7 + $0x1d0] sm:$0xf]
    %v1321 = vld [vmem:[#allocation7 + $0x1d4] sm:$0xff]
    %v1322 = vld [vmem:[#allocation7 + $0x1dc] sm:$0xf]
    %v1323 = vld [vmem:[#allocation7 + $0x1e0] sm:$0xff]
    %v1324 = vld [vmem:[#allocation7 + $0x1e8] sm:$0xf]
    %v1325 = vld [vmem:[#allocation7 + $0x1ec] sm:$0xff]
    %v1326 = vld [vmem:[#allocation7 + $0x1f4] sm:$0xf]
    %v1327 = vld [vmem:[#allocation7 + $0x1f8] sm:$0xff]
    %v1328 = vld [vmem:[#allocation7 + $0x200] sm:$0xf]
    %v1329 = vld [vmem:[#allocation7 + $0x204] sm:$0xff]
    %v1330 = vld [vmem:[#allocation7 + $0x20c] sm:$0xf]
    %v1331 = vld [vmem:[#allocation7 + $0x210] sm:$0xff]
    %v1332 = vld [vmem:[#allocation7 + $0x218] sm:$0xf]
    %v1333 = vld [vmem:[#allocation7 + $0x21c] sm:$0xff]
    %v1334 = vld [vmem:[#allocation7 + $0x224] sm:$0xf]
    %v1335 = vld [vmem:[#allocation7 + $0x228] sm:$0xff]
    %v1336 = vld [vmem:[#allocation7 + $0x230] sm:$0xf]
    %v1337 = vld [vmem:[#allocation7 + $0x234] sm:$0xff]
    %v1338 = vld [vmem:[#allocation7 + $0x23c] sm:$0xf]
    %v1339 = vpack.c.bf16 %v1302, %v1302
    %s1340 = scalar_lea.vmem %s5, 2
    %v1341 = vld [vmem:[%s1340] ss:$8 sm:$0x7]
    %v1343 = vlaneseq
    %v1344 = vshrl.u32 %v1343, 7
    %v1345 = vsub.s32 0, %v1344
    %v1346 = vrot.slane %v1341, %v1345
    %v1347 = vlaneseq
    %v1348 = vshrl.u32 %v1347, 7
    %v1349 = vsub.s32 1, %v1348
    %v1350 = vrot.slane %v1341, %v1349
    %v1351 = vlaneseq
    %v1352 = vshrl.u32 %v1351, 7
    %v1353 = vsub.s32 2, %v1352
    %v1354 = vrot.slane %v1341, %v1353
    %v1390 = vunpack.c.l.b16 %v1307
    %v1391 = vunpack.c.h.b16 %v1307
    %v1392 = vunpack.c.l.b16 %v1308
    %v1393 = vunpack.c.l.b16 %v1309
    %v1394 = vunpack.c.h.b16 %v1309
    %v1395 = vunpack.c.l.b16 %v1310
    %v1396 = vunpack.c.l.b16 %v1311
    %v1397 = vunpack.c.h.b16 %v1311
    %v1398 = vunpack.c.l.b16 %v1312
    %v1399 = vunpack.c.l.b16 %v1313
    %v1400 = vunpack.c.h.b16 %v1313
    %v1401 = vunpack.c.l.b16 %v1314
    %v1402 = vunpack.c.l.b16 %v1315
    %v1403 = vunpack.c.h.b16 %v1315
    %v1404 = vunpack.c.l.b16 %v1316
    %v1405 = vunpack.c.l.b16 %v1317
    %v1406 = vunpack.c.h.b16 %v1317
    %v1407 = vunpack.c.l.b16 %v1318
    %v1408 = vunpack.c.l.b16 %v1319
    %v1409 = vunpack.c.h.b16 %v1319
    %v1410 = vunpack.c.l.b16 %v1320
    %v1411 = vunpack.c.l.b16 %v1321
    %v1412 = vunpack.c.h.b16 %v1321
    %v1413 = vunpack.c.l.b16 %v1322
    %v1414 = vunpack.c.l.b16 %v1323
    %v1415 = vunpack.c.h.b16 %v1323
    %v1416 = vunpack.c.l.b16 %v1324
    %v1417 = vunpack.c.l.b16 %v1325
    %v1418 = vunpack.c.h.b16 %v1325
    %v1419 = vunpack.c.l.b16 %v1326
    %v1420 = vunpack.c.l.b16 %v1327
    %v1421 = vunpack.c.h.b16 %v1327
    %v1422 = vunpack.c.l.b16 %v1328
    %v1423 = vunpack.c.l.b16 %v1329
    %v1424 = vunpack.c.h.b16 %v1329
    %v1425 = vunpack.c.l.b16 %v1330
    %v1426 = vunpack.c.l.b16 %v1331
    %v1427 = vunpack.c.h.b16 %v1331
    %v1428 = vunpack.c.l.b16 %v1332
    %v1429 = vunpack.c.l.b16 %v1333
    %v1430 = vunpack.c.h.b16 %v1333
    %v1431 = vunpack.c.l.b16 %v1334
    %v1432 = vunpack.c.l.b16 %v1335
    %v1433 = vunpack.c.h.b16 %v1335
    %v1434 = vunpack.c.l.b16 %v1336
    %v1435 = vunpack.c.l.b16 %v1337
    %v1436 = vunpack.c.h.b16 %v1337
    %v1437 = vunpack.c.l.b16 %v1338
    %v1438 = vpack.c.b16 %v1393, %v1390
    %v1439 = vpack.c.b16 %v1394, %v1391
    %v1440 = vpack.c.b16 %v1395, %v1392
    %v1441 = vpack.c.b16 %v1399, %v1396
    %v1442 = vpack.c.b16 %v1400, %v1397
    %v1443 = vpack.c.b16 %v1401, %v1398
    %v1444 = vpack.c.b16 %v1405, %v1402
    %v1445 = vpack.c.b16 %v1406, %v1403
    %v1446 = vpack.c.b16 %v1407, %v1404
    %v1447 = vpack.c.b16 %v1411, %v1408
    %v1448 = vpack.c.b16 %v1412, %v1409
    %v1449 = vpack.c.b16 %v1413, %v1410
    %v1450 = vpack.c.b16 %v1417, %v1414
    %v1451 = vpack.c.b16 %v1418, %v1415
    %v1452 = vpack.c.b16 %v1419, %v1416
    %v1453 = vpack.c.b16 %v1423, %v1420
    %v1454 = vpack.c.b16 %v1424, %v1421
    %v1455 = vpack.c.b16 %v1425, %v1422
    %v1456 = vpack.c.b16 %v1429, %v1426
    %v1457 = vpack.c.b16 %v1430, %v1427
    %v1458 = vpack.c.b16 %v1431, %v1428
    %v1459 = vpack.c.b16 %v1435, %v1432
    %v1460 = vpack.c.b16 %v1436, %v1433
    %v1461 = vpack.c.b16 %v1437, %v1434
    %1486 = vmatprep.subr.bf16.mxu0 %v1439
    %1487 = vmatpush1.bf16.msra.mxu0 %v1438
    %1488 = vmatprep.subr.bf16.mxu0 %v1442
    %1489 = vmatpush1.bf16.msra.mxu0 %v1441
    %1490 = vmatprep.subr.bf16.mxu0 %v1445
    %1491 = vmatpush1.bf16.msra.mxu0 %v1444
    %1492 = vmatprep.subr.bf16.mxu0 %v1448
    %1493 = vmatpush1.bf16.msra.mxu0 %v1447
    %1494 = vmatprep.subr.bf16.mxu0 %v1451
    %1495 = vmatpush1.bf16.msra.mxu0 %v1450
    %1496 = vmatprep.subr.bf16.mxu0 %v1454
    %1497 = vmatpush1.bf16.msra.mxu0 %v1453
    %1498 = vmatprep.subr.bf16.mxu0 %v1457
    %1499 = vmatpush1.bf16.msra.mxu0 %v1456
    %1500 = vmatprep.subr.bf16.mxu0 %v1460
    %1501 = vmatpush1.bf16.msra.mxu0 %v1459
    %1502 = vmatprep.subr.bf16.mxu0 0
    %1503 = vmatpush1.bf16.msra.mxu0 0
    %1504 = vmatprep.subr.bf16.mxu0 0
    %1505 = vmatpush1.bf16.msra.mxu0 0
    %1506 = vmatprep.subr.bf16.mxu0 0
    %1507 = vmatpush1.bf16.msra.mxu0 0
    %1508 = vmatprep.subr.bf16.mxu0 0
    %1509 = vmatpush1.bf16.msra.mxu0 0
    %1510 = vmatprep.subr.bf16.mxu0 0
    %1511 = vmatpush1.bf16.msra.mxu0 0
    %1512 = vmatprep.subr.bf16.mxu0 0
    %1513 = vmatpush1.bf16.msra.mxu0 0
    %1514 = vmatprep.subr.bf16.mxu0 0
    %1515 = vmatpush1.bf16.msra.mxu0 0
    %1516 = vmatprep.subr.bf16.mxu0 0
    %1517 = vmatpush1.bf16.msra.mxu0 0
    %1518 = vmatprep.mubr.bf16.mxu0 0
    %1519 = vmatmul.mubr.bf16.gmra.mrb[0].mxu0 %v1339
    %v1520 = vpop.f32.mrb[0].mxu0
    %v1521 = vadd.f32 %v1346, %v1520
    %v1522 = vpop.f32.mrb[0].mxu0
    %v1523 = vadd.f32 %v1350, %v1522
    %v1524 = vpop.f32.mrb[0].mxu0
    %v1525 = vpop.f32.mrb[0].mxu0
    %1526 = vdwg.mxu0
    %1527 = vmatprep.subr.bf16.mxu0 0
    %1528 = vmatpush1.bf16.msra.mxu0 %v1440
    %1529 = vmatprep.subr.bf16.mxu0 0
    %1530 = vmatpush1.bf16.msra.mxu0 %v1443
    %1531 = vmatprep.subr.bf16.mxu0 0
    %1532 = vmatpush1.bf16.msra.mxu0 %v1446
    %1533 = vmatprep.subr.bf16.mxu0 0
    %1534 = vmatpush1.bf16.msra.mxu0 %v1449
    %1535 = vmatprep.subr.bf16.mxu0 0
    %1536 = vmatpush1.bf16.msra.mxu0 %v1452
    %1537 = vmatprep.subr.bf16.mxu0 0
    %1538 = vmatpush1.bf16.msra.mxu0 %v1455
    %1539 = vmatprep.subr.bf16.mxu0 0
    %1540 = vmatpush1.bf16.msra.mxu0 %v1458
    %1541 = vmatprep.subr.bf16.mxu0 0
    %1542 = vmatpush1.bf16.msra.mxu0 %v1461
    %1543 = vmatprep.subr.bf16.mxu0 0
    %1544 = vmatpush1.bf16.msra.mxu0 0
    %1545 = vmatprep.subr.bf16.mxu0 0
    %1546 = vmatpush1.bf16.msra.mxu0 0
    %1547 = vmatprep.subr.bf16.mxu0 0
    %1548 = vmatpush1.bf16.msra.mxu0 0
    %1549 = vmatprep.subr.bf16.mxu0 0
    %1550 = vmatpush1.bf16.msra.mxu0 0
    %1551 = vmatprep.subr.bf16.mxu0 0
    %1552 = vmatpush1.bf16.msra.mxu0 0
    %1553 = vmatprep.subr.bf16.mxu0 0
    %1554 = vmatpush1.bf16.msra.mxu0 0
    %1555 = vmatprep.subr.bf16.mxu0 0
    %1556 = vmatpush1.bf16.msra.mxu0 0
    %1557 = vmatprep.subr.bf16.mxu0 0
    %1558 = vmatpush1.bf16.msra.mxu0 0
    %1559 = vmatprep.mubr.bf16.mxu0 0
    %1560 = vmatmul.mubr.bf16.gmra.mrb[0].mxu0 %v1339
    %v1561 = vpop.f32.mrb[0].mxu0
    %v1562 = vadd.f32 %v1354, %v1561
    %v1563 = vpop.f32.mrb[0].mxu0
    %v1564 = vpop.f32.mrb[0].mxu0
    %v1565 = vpop.f32.mrb[0].mxu0
    %1566 = vdwg.mxu0
    %v1567 = vld [vmem:[#allocation7 + $0x240] sm:$0xff]
    %v1568 = vld [vmem:[#allocation7 + $0x248] sm:$0xf]
    %v1569 = vld [vmem:[#allocation7 + $0x24c] sm:$0xff]
    %v1570 = vld [vmem:[#allocation7 + $0x254] sm:$0xf]
    %v1571 = vld [vmem:[#allocation7 + $0x258] sm:$0xff]
    %v1572 = vld [vmem:[#allocation7 + $0x260] sm:$0xf]
    %v1573 = vld [vmem:[#allocation7 + $0x264] sm:$0xff]
    %v1574 = vld [vmem:[#allocation7 + $0x26c] sm:$0xf]
    %v1575 = vld [vmem:[#allocation7 + $0x270] sm:$0xff]
    %v1576 = vld [vmem:[#allocation7 + $0x278] sm:$0xf]
    %v1577 = vld [vmem:[#allocation7 + $0x27c] sm:$0xff]
    %v1578 = vld [vmem:[#allocation7 + $0x284] sm:$0xf]
    %v1579 = vld [vmem:[#allocation7 + $0x288] sm:$0xff]
    %v1580 = vld [vmem:[#allocation7 + $0x290] sm:$0xf]
    %v1581 = vld [vmem:[#allocation7 + $0x294] sm:$0xff]
    %v1582 = vld [vmem:[#allocation7 + $0x29c] sm:$0xf]
    %v1583 = vld [vmem:[#allocation7 + $0x2a0] sm:$0xff]
    %v1584 = vld [vmem:[#allocation7 + $0x2a8] sm:$0xf]
    %v1585 = vld [vmem:[#allocation7 + $0x2ac] sm:$0xff]
    %v1586 = vld [vmem:[#allocation7 + $0x2b4] sm:$0xf]
    %v1587 = vld [vmem:[#allocation7 + $0x2b8] sm:$0xff]
    %v1588 = vld [vmem:[#allocation7 + $0x2c0] sm:$0xf]
    %v1589 = vld [vmem:[#allocation7 + $0x2c4] sm:$0xff]
    %v1590 = vld [vmem:[#allocation7 + $0x2cc] sm:$0xf]
    %v1591 = vld [vmem:[#allocation7 + $0x2d0] sm:$0xff]
    %v1592 = vld [vmem:[#allocation7 + $0x2d8] sm:$0xf]
    %v1593 = vld [vmem:[#allocation7 + $0x2dc] sm:$0xff]
    %v1594 = vld [vmem:[#allocation7 + $0x2e4] sm:$0xf]
    %v1595 = vld [vmem:[#allocation7 + $0x2e8] sm:$0xff]
    %v1596 = vld [vmem:[#allocation7 + $0x2f0] sm:$0xf]
    %v1597 = vld [vmem:[#allocation7 + $0x2f4] sm:$0xff]
    %v1598 = vld [vmem:[#allocation7 + $0x2fc] sm:$0xf]
    %s1599 = scalar_lea.vmem %s5, 3
    %v1600 = vld [vmem:[%s1599] ss:$8 sm:$0x7]
    %v1602 = vlaneseq
    %v1603 = vshrl.u32 %v1602, 7
    %v1604 = vsub.s32 0, %v1603
    %v1605 = vrot.slane %v1600, %v1604
    %v1606 = vlaneseq
    %v1607 = vshrl.u32 %v1606, 7
    %v1608 = vsub.s32 1, %v1607
    %v1609 = vrot.slane %v1600, %v1608
    %v1610 = vlaneseq
    %v1611 = vshrl.u32 %v1610, 7
    %v1612 = vsub.s32 2, %v1611
    %v1613 = vrot.slane %v1600, %v1612
    %v1649 = vunpack.c.l.b16 %v1567
    %v1650 = vunpack.c.h.b16 %v1567
    %v1651 = vunpack.c.l.b16 %v1568
    %v1652 = vunpack.c.l.b16 %v1569
    %v1653 = vunpack.c.h.b16 %v1569
    %v1654 = vunpack.c.l.b16 %v1570
    %v1655 = vunpack.c.l.b16 %v1571
    %v1656 = vunpack.c.h.b16 %v1571
    %v1657 = vunpack.c.l.b16 %v1572
    %v1658 = vunpack.c.l.b16 %v1573
    %v1659 = vunpack.c.h.b16 %v1573
    %v1660 = vunpack.c.l.b16 %v1574
    %v1661 = vunpack.c.l.b16 %v1575
    %v1662 = vunpack.c.h.b16 %v1575
    %v1663 = vunpack.c.l.b16 %v1576
    %v1664 = vunpack.c.l.b16 %v1577
    %v1665 = vunpack.c.h.b16 %v1577
    %v1666 = vunpack.c.l.b16 %v1578
    %v1667 = vunpack.c.l.b16 %v1579
    %v1668 = vunpack.c.h.b16 %v1579
    %v1669 = vunpack.c.l.b16 %v1580
    %v1670 = vunpack.c.l.b16 %v1581
    %v1671 = vunpack.c.h.b16 %v1581
    %v1672 = vunpack.c.l.b16 %v1582
    %v1673 = vunpack.c.l.b16 %v1583
    %v1674 = vunpack.c.h.b16 %v1583
    %v1675 = vunpack.c.l.b16 %v1584
    %v1676 = vunpack.c.l.b16 %v1585
    %v1677 = vunpack.c.h.b16 %v1585
    %v1678 = vunpack.c.l.b16 %v1586
    %v1679 = vunpack.c.l.b16 %v1587
    %v1680 = vunpack.c.h.b16 %v1587
    %v1681 = vunpack.c.l.b16 %v1588
    %v1682 = vunpack.c.l.b16 %v1589
    %v1683 = vunpack.c.h.b16 %v1589
    %v1684 = vunpack.c.l.b16 %v1590
    %v1685 = vunpack.c.l.b16 %v1591
    %v1686 = vunpack.c.h.b16 %v1591
    %v1687 = vunpack.c.l.b16 %v1592
    %v1688 = vunpack.c.l.b16 %v1593
    %v1689 = vunpack.c.h.b16 %v1593
    %v1690 = vunpack.c.l.b16 %v1594
    %v1691 = vunpack.c.l.b16 %v1595
    %v1692 = vunpack.c.h.b16 %v1595
    %v1693 = vunpack.c.l.b16 %v1596
    %v1694 = vunpack.c.l.b16 %v1597
    %v1695 = vunpack.c.h.b16 %v1597
    %v1696 = vunpack.c.l.b16 %v1598
    %v1697 = vpack.c.b16 %v1652, %v1649
    %v1698 = vpack.c.b16 %v1653, %v1650
    %v1699 = vpack.c.b16 %v1654, %v1651
    %v1700 = vpack.c.b16 %v1658, %v1655
    %v1701 = vpack.c.b16 %v1659, %v1656
    %v1702 = vpack.c.b16 %v1660, %v1657
    %v1703 = vpack.c.b16 %v1664, %v1661
    %v1704 = vpack.c.b16 %v1665, %v1662
    %v1705 = vpack.c.b16 %v1666, %v1663
    %v1706 = vpack.c.b16 %v1670, %v1667
    %v1707 = vpack.c.b16 %v1671, %v1668
    %v1708 = vpack.c.b16 %v1672, %v1669
    %v1709 = vpack.c.b16 %v1676, %v1673
    %v1710 = vpack.c.b16 %v1677, %v1674
    %v1711 = vpack.c.b16 %v1678, %v1675
    %v1712 = vpack.c.b16 %v1682, %v1679
    %v1713 = vpack.c.b16 %v1683, %v1680
    %v1714 = vpack.c.b16 %v1684, %v1681
    %v1715 = vpack.c.b16 %v1688, %v1685
    %v1716 = vpack.c.b16 %v1689, %v1686
    %v1717 = vpack.c.b16 %v1690, %v1687
    %v1718 = vpack.c.b16 %v1694, %v1691
    %v1719 = vpack.c.b16 %v1695, %v1692
    %v1720 = vpack.c.b16 %v1696, %v1693
    %1745 = vmatprep.subr.bf16.mxu0 %v1698
    %1746 = vmatpush1.bf16.msra.mxu0 %v1697
    %1747 = vmatprep.subr.bf16.mxu0 %v1701
    %1748 = vmatpush1.bf16.msra.mxu0 %v1700
    %1749 = vmatprep.subr.bf16.mxu0 %v1704
    %1750 = vmatpush1.bf16.msra.mxu0 %v1703
    %1751 = vmatprep.subr.bf16.mxu0 %v1707
    %1752 = vmatpush1.bf16.msra.mxu0 %v1706
    %1753 = vmatprep.subr.bf16.mxu0 %v1710
    %1754 = vmatpush1.bf16.msra.mxu0 %v1709
    %1755 = vmatprep.subr.bf16.mxu0 %v1713
    %1756 = vmatpush1.bf16.msra.mxu0 %v1712
    %1757 = vmatprep.subr.bf16.mxu0 %v1716
    %1758 = vmatpush1.bf16.msra.mxu0 %v1715
    %1759 = vmatprep.subr.bf16.mxu0 %v1719
    %1760 = vmatpush1.bf16.msra.mxu0 %v1718
    %1761 = vmatprep.subr.bf16.mxu0 0
    %1762 = vmatpush1.bf16.msra.mxu0 0
    %1763 = vmatprep.subr.bf16.mxu0 0
    %1764 = vmatpush1.bf16.msra.mxu0 0
    %1765 = vmatprep.subr.bf16.mxu0 0
    %1766 = vmatpush1.bf16.msra.mxu0 0
    %1767 = vmatprep.subr.bf16.mxu0 0
    %1768 = vmatpush1.bf16.msra.mxu0 0
    %1769 = vmatprep.subr.bf16.mxu0 0
    %1770 = vmatpush1.bf16.msra.mxu0 0
    %1771 = vmatprep.subr.bf16.mxu0 0
    %1772 = vmatpush1.bf16.msra.mxu0 0
    %1773 = vmatprep.subr.bf16.mxu0 0
    %1774 = vmatpush1.bf16.msra.mxu0 0
    %1775 = vmatprep.subr.bf16.mxu0 0
    %1776 = vmatpush1.bf16.msra.mxu0 0
    %1777 = vmatprep.mubr.bf16.mxu0 0
    %1778 = vmatmul.mubr.bf16.gmra.mrb[0].mxu0 %v67
    %v1779 = vpop.f32.mrb[0].mxu0
    %v1780 = vadd.f32 %v1605, %v1779
    %v1781 = vpop.f32.mrb[0].mxu0
    %v1782 = vadd.f32 %v1609, %v1781
    %v1783 = vpop.f32.mrb[0].mxu0
    %v1784 = vpop.f32.mrb[0].mxu0
    %1785 = vdwg.mxu0
    %1786 = vmatprep.subr.bf16.mxu0 0
    %1787 = vmatpush1.bf16.msra.mxu0 %v1699
    %1788 = vmatprep.subr.bf16.mxu0 0
    %1789 = vmatpush1.bf16.msra.mxu0 %v1702
    %1790 = vmatprep.subr.bf16.mxu0 0
    %1791 = vmatpush1.bf16.msra.mxu0 %v1705
    %1792 = vmatprep.subr.bf16.mxu0 0
    %1793 = vmatpush1.bf16.msra.mxu0 %v1708
    %1794 = vmatprep.subr.bf16.mxu0 0
    %1795 = vmatpush1.bf16.msra.mxu0 %v1711
    %1796 = vmatprep.subr.bf16.mxu0 0
    %1797 = vmatpush1.bf16.msra.mxu0 %v1714
    %1798 = vmatprep.subr.bf16.mxu0 0
    %1799 = vmatpush1.bf16.msra.mxu0 %v1717
    %1800 = vmatprep.subr.bf16.mxu0 0
    %1801 = vmatpush1.bf16.msra.mxu0 %v1720
    %1802 = vmatprep.subr.bf16.mxu0 0
    %1803 = vmatpush1.bf16.msra.mxu0 0
    %1804 = vmatprep.subr.bf16.mxu0 0
    %1805 = vmatpush1.bf16.msra.mxu0 0
    %1806 = vmatprep.subr.bf16.mxu0 0
    %1807 = vmatpush1.bf16.msra.mxu0 0
    %1808 = vmatprep.subr.bf16.mxu0 0
    %1809 = vmatpush1.bf16.msra.mxu0 0
    %1810 = vmatprep.subr.bf16.mxu0 0
    %1811 = vmatpush1.bf16.msra.mxu0 0
    %1812 = vmatprep.subr.bf16.mxu0 0
    %1813 = vmatpush1.bf16.msra.mxu0 0
    %1814 = vmatprep.subr.bf16.mxu0 0
    %1815 = vmatpush1.bf16.msra.mxu0 0
    %1816 = vmatprep.subr.bf16.mxu0 0
    %1817 = vmatpush1.bf16.msra.mxu0 0
    %1818 = vmatprep.mubr.bf16.mxu0 0
    %1819 = vmatmul.mubr.bf16.gmra.mrb[0].mxu0 %v67
    %v1820 = vpop.f32.mrb[0].mxu0
    %v1821 = vadd.f32 %v1613, %v1820
    %v1822 = vpop.f32.mrb[0].mxu0
    %v1823 = vpop.f32.mrb[0].mxu0
    %v1824 = vpop.f32.mrb[0].mxu0
    %1825 = vdwg.mxu0
    %v1826 = vadd.f32 %v1521, %v1780
    %v1827 = vxor.u32 %v1826, 2147483648
    %v1828 = vmul.f32 %v1827, 1.442695
    %v1829 = vpow.pop %v1828
    %v1830 = vadd.f32 %v1829, 1.0
    %v1831 = vrcp.pop %v1830
    %v1832 = vmul.f32 1.0, %v1831
    %v1833 = vadd.f32 %v1523, %v1782
    %v1834 = vxor.u32 %v1833, 2147483648
    %v1835 = vmul.f32 %v1834, 1.442695
    %v1836 = vpow.pop %v1835
    %v1837 = vadd.f32 %v1836, 1.0
    %v1838 = vrcp.pop %v1837
    %v1839 = vmul.f32 1.0, %v1838
    %v1840 = vmul.f32 %v1832, %v1821
    %v1841 = vadd.f32 %v1562, %v1840
    %v1842 = vtanh.pop %v1841
    %v1843 = vsub.f32 %v61, %v1842
    %v1844 = vmul.f32 %v1839, %v1843
    %v1845 = vadd.f32 %v1842, %v1844
    %v1846 = vpack.c.bf16 %v1845, %v1845
    %v1848 = vsel %vm83, %v1846, 0
    %1850 = vmatprep.subr.bf16.mxu0 0
    %1851 = vmatpush1.bf16.msra.mxu0 %v1848
    %1852 = vmatprep.subr.bf16.mxu0 0
    %1853 = vmatpush1.bf16.msra.mxu0 0
    %1854 = vmatprep.subr.bf16.mxu0 0
    %1855 = vmatpush1.bf16.msra.mxu0 0
    %1856 = vmatprep.subr.bf16.mxu0 0
    %1857 = vmatpush1.bf16.msra.mxu0 0
    %1858 = vmatprep.subr.bf16.mxu0 0
    %1859 = vmatpush1.bf16.msra.mxu0 0
    %1860 = vmatprep.subr.bf16.mxu0 0
    %1861 = vmatpush1.bf16.msra.mxu0 0
    %1862 = vmatprep.subr.bf16.mxu0 0
    %1863 = vmatpush1.bf16.msra.mxu0 0
    %1864 = vmatprep.subr.bf16.mxu0 0
    %1865 = vmatpush1.bf16.msra.mxu0 0
    %1866 = vmatprep.subr.bf16.mxu0 0
    %1867 = vmatpush1.bf16.msra.mxu0 0
    %1868 = vmatprep.subr.bf16.mxu0 0
    %1869 = vmatpush1.bf16.msra.mxu0 0
    %1870 = vmatprep.subr.bf16.mxu0 0
    %1871 = vmatpush1.bf16.msra.mxu0 0
    %1872 = vmatprep.subr.bf16.mxu0 0
    %1873 = vmatpush1.bf16.msra.mxu0 0
    %1874 = vmatprep.subr.bf16.mxu0 0
    %1875 = vmatpush1.bf16.msra.mxu0 0
    %1876 = vmatprep.subr.bf16.mxu0 0
    %1877 = vmatpush1.bf16.msra.mxu0 0
    %1878 = vmatprep.subr.bf16.mxu0 0
    %1879 = vmatpush1.bf16.msra.mxu0 0
    %1880 = vmatprep.subr.bf16.mxu0 0
    %1881 = vmatpush1.bf16.msra.mxu0 0
    %1882 = vmatprep.mubr.bf16.mxu0 0
    %1883 = vmatmul.mubr.bf16.gmra.mrb[0].mxu0 %v78
    %v1884 = vpop.f32.mrb[0].mxu0
    %v1885 = vadd.f32 0.0, %v1884
    %v1886 = vpop.f32.mrb[0].mxu0
    %v1887 = vpop.f32.mrb[0].mxu0
    %v1888 = vadd.f32 0.0, %v1887
    %v1889 = vpop.f32.mrb[0].mxu0
    %1890 = vmatprep.mubr.bf16.mxu0 0
    %1891 = vmatmul.mubr.bf16.gmra.mrb[0].mxu0 %v81
    %v1892 = vpop.f32.mrb[0].mxu0
    %v1893 = vadd.f32 0.0, %v1892
    %v1894 = vpop.f32.mrb[0].mxu0
    %v1895 = vpop.f32.mrb[0].mxu0
    %v1896 = vpop.f32.mrb[0].mxu0
    %1897 = vdwg.mxu0
    %v1898 = vld [vmem:[#allocation7] sm:$0xff]
    %v1899 = vld [vmem:[#allocation7 + $0x8] sm:$0xf]
    %v1900 = vld [vmem:[#allocation7 + $0xc] sm:$0xff]
    %v1901 = vld [vmem:[#allocation7 + $0x14] sm:$0xf]
    %v1902 = vld [vmem:[#allocation7 + $0x18] sm:$0xff]
    %v1903 = vld [vmem:[#allocation7 + $0x20] sm:$0xf]
    %v1904 = vld [vmem:[#allocation7 + $0x24] sm:$0xff]
    %v1905 = vld [vmem:[#allocation7 + $0x2c] sm:$0xf]
    %v1906 = vld [vmem:[#allocation7 + $0x30] sm:$0xff]
    %v1907 = vld [vmem:[#allocation7 + $0x38] sm:$0xf]
    %v1908 = vld [vmem:[#allocation7 + $0x3c] sm:$0xff]
    %v1909 = vld [vmem:[#allocation7 + $0x44] sm:$0xf]
    %v1910 = vld [vmem:[#allocation7 + $0x48] sm:$0xff]
    %v1911 = vld [vmem:[#allocation7 + $0x50] sm:$0xf]
    %v1912 = vld [vmem:[#allocation7 + $0x54] sm:$0xff]
    %v1913 = vld [vmem:[#allocation7 + $0x5c] sm:$0xf]
    %v1914 = vld [vmem:[#allocation7 + $0x60] sm:$0xff]
    %v1915 = vld [vmem:[#allocation7 + $0x68] sm:$0xf]
    %v1916 = vld [vmem:[#allocation7 + $0x6c] sm:$0xff]
    %v1917 = vld [vmem:[#allocation7 + $0x74] sm:$0xf]
    %v1918 = vld [vmem:[#allocation7 + $0x78] sm:$0xff]
    %v1919 = vld [vmem:[#allocation7 + $0x80] sm:$0xf]
    %v1920 = vld [vmem:[#allocation7 + $0x84] sm:$0xff]
    %v1921 = vld [vmem:[#allocation7 + $0x8c] sm:$0xf]
    %v1922 = vld [vmem:[#allocation7 + $0x90] sm:$0xff]
    %v1923 = vld [vmem:[#allocation7 + $0x98] sm:$0xf]
    %v1924 = vld [vmem:[#allocation7 + $0x9c] sm:$0xff]
    %v1925 = vld [vmem:[#allocation7 + $0xa4] sm:$0xf]
    %v1926 = vld [vmem:[#allocation7 + $0xa8] sm:$0xff]
    %v1927 = vld [vmem:[#allocation7 + $0xb0] sm:$0xf]
    %v1928 = vld [vmem:[#allocation7 + $0xb4] sm:$0xff]
    %v1929 = vld [vmem:[#allocation7 + $0xbc] sm:$0xf]
    %v1930 = vpack.c.bf16 %v1888, %v1885
    %v1931 = vpack.c.bf16 %v1893, %v1893
    %v1932 = vld [vmem:[%s5] ss:$8 sm:$0x7]
    %v1934 = vlaneseq
    %v1935 = vshrl.u32 %v1934, 7
    %v1936 = vsub.s32 0, %v1935
    %v1937 = vrot.slane %v1932, %v1936
    %v1938 = vlaneseq
    %v1939 = vshrl.u32 %v1938, 7
    %v1940 = vsub.s32 1, %v1939
    %v1941 = vrot.slane %v1932, %v1940
    %v1942 = vlaneseq
    %v1943 = vshrl.u32 %v1942, 7
    %v1944 = vsub.s32 2, %v1943
    %v1945 = vrot.slane %v1932, %v1944
    %v1981 = vunpack.c.l.b16 %v1898
    %v1982 = vunpack.c.h.b16 %v1898
    %v1983 = vunpack.c.l.b16 %v1899
    %v1984 = vunpack.c.l.b16 %v1900
    %v1985 = vunpack.c.h.b16 %v1900
    %v1986 = vunpack.c.l.b16 %v1901
    %v1987 = vunpack.c.l.b16 %v1902
    %v1988 = vunpack.c.h.b16 %v1902
    %v1989 = vunpack.c.l.b16 %v1903
    %v1990 = vunpack.c.l.b16 %v1904
    %v1991 = vunpack.c.h.b16 %v1904
    %v1992 = vunpack.c.l.b16 %v1905
    %v1993 = vunpack.c.l.b16 %v1906
    %v1994 = vunpack.c.h.b16 %v1906
    %v1995 = vunpack.c.l.b16 %v1907
    %v1996 = vunpack.c.l.b16 %v1908
    %v1997 = vunpack.c.h.b16 %v1908
    %v1998 = vunpack.c.l.b16 %v1909
    %v1999 = vunpack.c.l.b16 %v1910
    %v2000 = vunpack.c.h.b16 %v1910
    %v2001 = vunpack.c.l.b16 %v1911
    %v2002 = vunpack.c.l.b16 %v1912
    %v2003 = vunpack.c.h.b16 %v1912
    %v2004 = vunpack.c.l.b16 %v1913
    %v2005 = vunpack.c.l.b16 %v1914
    %v2006 = vunpack.c.h.b16 %v1914
    %v2007 = vunpack.c.l.b16 %v1915
    %v2008 = vunpack.c.l.b16 %v1916
    %v2009 = vunpack.c.h.b16 %v1916
    %v2010 = vunpack.c.l.b16 %v1917
    %v2011 = vunpack.c.l.b16 %v1918
    %v2012 = vunpack.c.h.b16 %v1918
    %v2013 = vunpack.c.l.b16 %v1919
    %v2014 = vunpack.c.l.b16 %v1920
    %v2015 = vunpack.c.h.b16 %v1920
    %v2016 = vunpack.c.l.b16 %v1921
    %v2017 = vunpack.c.l.b16 %v1922
    %v2018 = vunpack.c.h.b16 %v1922
    %v2019 = vunpack.c.l.b16 %v1923
    %v2020 = vunpack.c.l.b16 %v1924
    %v2021 = vunpack.c.h.b16 %v1924
    %v2022 = vunpack.c.l.b16 %v1925
    %v2023 = vunpack.c.l.b16 %v1926
    %v2024 = vunpack.c.h.b16 %v1926
    %v2025 = vunpack.c.l.b16 %v1927
    %v2026 = vunpack.c.l.b16 %v1928
    %v2027 = vunpack.c.h.b16 %v1928
    %v2028 = vunpack.c.l.b16 %v1929
    %v2029 = vpack.c.b16 %v1984, %v1981
    %v2030 = vpack.c.b16 %v1985, %v1982
    %v2031 = vpack.c.b16 %v1986, %v1983
    %v2032 = vpack.c.b16 %v1990, %v1987
    %v2033 = vpack.c.b16 %v1991, %v1988
    %v2034 = vpack.c.b16 %v1992, %v1989
    %v2035 = vpack.c.b16 %v1996, %v1993
    %v2036 = vpack.c.b16 %v1997, %v1994
    %v2037 = vpack.c.b16 %v1998, %v1995
    %v2038 = vpack.c.b16 %v2002, %v1999
    %v2039 = vpack.c.b16 %v2003, %v2000
    %v2040 = vpack.c.b16 %v2004, %v2001
    %v2041 = vpack.c.b16 %v2008, %v2005
    %v2042 = vpack.c.b16 %v2009, %v2006
    %v2043 = vpack.c.b16 %v2010, %v2007
    %v2044 = vpack.c.b16 %v2014, %v2011
    %v2045 = vpack.c.b16 %v2015, %v2012
    %v2046 = vpack.c.b16 %v2016, %v2013
    %v2047 = vpack.c.b16 %v2020, %v2017
    %v2048 = vpack.c.b16 %v2021, %v2018
    %v2049 = vpack.c.b16 %v2022, %v2019
    %v2050 = vpack.c.b16 %v2026, %v2023
    %v2051 = vpack.c.b16 %v2027, %v2024
    %v2052 = vpack.c.b16 %v2028, %v2025
    %2077 = vmatprep.subr.bf16.mxu0 %v2030
    %2078 = vmatpush1.bf16.msra.mxu0 %v2029
    %2079 = vmatprep.subr.bf16.mxu0 %v2033
    %2080 = vmatpush1.bf16.msra.mxu0 %v2032
    %2081 = vmatprep.subr.bf16.mxu0 %v2036
    %2082 = vmatpush1.bf16.msra.mxu0 %v2035
    %2083 = vmatprep.subr.bf16.mxu0 %v2039
    %2084 = vmatpush1.bf16.msra.mxu0 %v2038
    %2085 = vmatprep.subr.bf16.mxu0 %v2042
    %2086 = vmatpush1.bf16.msra.mxu0 %v2041
    %2087 = vmatprep.subr.bf16.mxu0 %v2045
    %2088 = vmatpush1.bf16.msra.mxu0 %v2044
    %2089 = vmatprep.subr.bf16.mxu0 %v2048
    %2090 = vmatpush1.bf16.msra.mxu0 %v2047
    %2091 = vmatprep.subr.bf16.mxu0 %v2051
    %2092 = vmatpush1.bf16.msra.mxu0 %v2050
    %2093 = vmatprep.subr.bf16.mxu0 0
    %2094 = vmatpush1.bf16.msra.mxu0 0
    %2095 = vmatprep.subr.bf16.mxu0 0
    %2096 = vmatpush1.bf16.msra.mxu0 0
    %2097 = vmatprep.subr.bf16.mxu0 0
    %2098 = vmatpush1.bf16.msra.mxu0 0
    %2099 = vmatprep.subr.bf16.mxu0 0
    %2100 = vmatpush1.bf16.msra.mxu0 0
    %2101 = vmatprep.subr.bf16.mxu0 0
    %2102 = vmatpush1.bf16.msra.mxu0 0
    %2103 = vmatprep.subr.bf16.mxu0 0
    %2104 = vmatpush1.bf16.msra.mxu0 0
    %2105 = vmatprep.subr.bf16.mxu0 0
    %2106 = vmatpush1.bf16.msra.mxu0 0
    %2107 = vmatprep.subr.bf16.mxu0 0
    %2108 = vmatpush1.bf16.msra.mxu0 0
    %2109 = vmatprep.mubr.bf16.mxu0 0
    %2110 = vmatmul.mubr.bf16.gmra.mrb[0].mxu0 %v1930
    %v2111 = vpop.f32.mrb[0].mxu0
    %v2112 = vadd.f32 %v1937, %v2111
    %v2113 = vpop.f32.mrb[0].mxu0
    %v2114 = vadd.f32 %v1941, %v2113
    %v2115 = vpop.f32.mrb[0].mxu0
    %v2116 = vadd.f32 %v1937, %v2115
    %v2117 = vpop.f32.mrb[0].mxu0
    %v2118 = vadd.f32 %v1941, %v2117
    %2119 = vmatprep.mubr.bf16.mxu0 0
    %2120 = vmatmul.mubr.bf16.gmra.mrb[0].mxu0 %v1931
    %v2121 = vpop.f32.mrb[0].mxu0
    %v2122 = vadd.f32 %v1937, %v2121
    %v2123 = vpop.f32.mrb[0].mxu0
    %v2124 = vadd.f32 %v1941, %v2123
    %v2125 = vpop.f32.mrb[0].mxu0
    %v2126 = vpop.f32.mrb[0].mxu0
    %2127 = vdwg.mxu0
    %2128 = vmatprep.subr.bf16.mxu0 0
    %2129 = vmatpush1.bf16.msra.mxu0 %v2031
    %2130 = vmatprep.subr.bf16.mxu0 0
    %2131 = vmatpush1.bf16.msra.mxu0 %v2034
    %2132 = vmatprep.subr.bf16.mxu0 0
    %2133 = vmatpush1.bf16.msra.mxu0 %v2037
    %2134 = vmatprep.subr.bf16.mxu0 0
    %2135 = vmatpush1.bf16.msra.mxu0 %v2040
    %2136 = vmatprep.subr.bf16.mxu0 0
    %2137 = vmatpush1.bf16.msra.mxu0 %v2043
    %2138 = vmatprep.subr.bf16.mxu0 0
    %2139 = vmatpush1.bf16.msra.mxu0 %v2046
    %2140 = vmatprep.subr.bf16.mxu0 0
    %2141 = vmatpush1.bf16.msra.mxu0 %v2049
    %2142 = vmatprep.subr.bf16.mxu0 0
    %2143 = vmatpush1.bf16.msra.mxu0 %v2052
    %2144 = vmatprep.subr.bf16.mxu0 0
    %2145 = vmatpush1.bf16.msra.mxu0 0
    %2146 = vmatprep.subr.bf16.mxu0 0
    %2147 = vmatpush1.bf16.msra.mxu0 0
    %2148 = vmatprep.subr.bf16.mxu0 0
    %2149 = vmatpush1.bf16.msra.mxu0 0
    %2150 = vmatprep.subr.bf16.mxu0 0
    %2151 = vmatpush1.bf16.msra.mxu0 0
    %2152 = vmatprep.subr.bf16.mxu0 0
    %2153 = vmatpush1.bf16.msra.mxu0 0
    %2154 = vmatprep.subr.bf16.mxu0 0
    %2155 = vmatpush1.bf16.msra.mxu0 0
    %2156 = vmatprep.subr.bf16.mxu0 0
    %2157 = vmatpush1.bf16.msra.mxu0 0
    %2158 = vmatprep.subr.bf16.mxu0 0
    %2159 = vmatpush1.bf16.msra.mxu0 0
    %2160 = vmatprep.mubr.bf16.mxu0 0
    %2161 = vmatmul.mubr.bf16.gmra.mrb[0].mxu0 %v1930
    %v2162 = vpop.f32.mrb[0].mxu0
    %v2163 = vadd.f32 %v1945, %v2162
    %v2164 = vpop.f32.mrb[0].mxu0
    %v2165 = vpop.f32.mrb[0].mxu0
    %v2166 = vadd.f32 %v1945, %v2165
    %v2167 = vpop.f32.mrb[0].mxu0
    %2168 = vmatprep.mubr.bf16.mxu0 0
    %2169 = vmatmul.mubr.bf16.gmra.mrb[0].mxu0 %v1931
    %v2170 = vpop.f32.mrb[0].mxu0
    %v2171 = vadd.f32 %v1945, %v2170
    %v2172 = vpop.f32.mrb[0].mxu0
    %v2173 = vpop.f32.mrb[0].mxu0
    %v2174 = vpop.f32.mrb[0].mxu0
    %2175 = vdwg.mxu0
    %v2176 = vld [vmem:[#allocation7 + $0xc0] sm:$0xff]
    %v2177 = vld [vmem:[#allocation7 + $0xc8] sm:$0xf]
    %v2178 = vld [vmem:[#allocation7 + $0xcc] sm:$0xff]
    %v2179 = vld [vmem:[#allocation7 + $0xd4] sm:$0xf]
    %v2180 = vld [vmem:[#allocation7 + $0xd8] sm:$0xff]
    %v2181 = vld [vmem:[#allocation7 + $0xe0] sm:$0xf]
    %v2182 = vld [vmem:[#allocation7 + $0xe4] sm:$0xff]
    %v2183 = vld [vmem:[#allocation7 + $0xec] sm:$0xf]
    %v2184 = vld [vmem:[#allocation7 + $0xf0] sm:$0xff]
    %v2185 = vld [vmem:[#allocation7 + $0xf8] sm:$0xf]
    %v2186 = vld [vmem:[#allocation7 + $0xfc] sm:$0xff]
    %v2187 = vld [vmem:[#allocation7 + $0x104] sm:$0xf]
    %v2188 = vld [vmem:[#allocation7 + $0x108] sm:$0xff]
    %v2189 = vld [vmem:[#allocation7 + $0x110] sm:$0xf]
    %v2190 = vld [vmem:[#allocation7 + $0x114] sm:$0xff]
    %v2191 = vld [vmem:[#allocation7 + $0x11c] sm:$0xf]
    %v2192 = vld [vmem:[#allocation7 + $0x120] sm:$0xff]
    %v2193 = vld [vmem:[#allocation7 + $0x128] sm:$0xf]
    %v2194 = vld [vmem:[#allocation7 + $0x12c] sm:$0xff]
    %v2195 = vld [vmem:[#allocation7 + $0x134] sm:$0xf]
    %v2196 = vld [vmem:[#allocation7 + $0x138] sm:$0xff]
    %v2197 = vld [vmem:[#allocation7 + $0x140] sm:$0xf]
    %v2198 = vld [vmem:[#allocation7 + $0x144] sm:$0xff]
    %v2199 = vld [vmem:[#allocation7 + $0x14c] sm:$0xf]
    %v2200 = vld [vmem:[#allocation7 + $0x150] sm:$0xff]
    %v2201 = vld [vmem:[#allocation7 + $0x158] sm:$0xf]
    %v2202 = vld [vmem:[#allocation7 + $0x15c] sm:$0xff]
    %v2203 = vld [vmem:[#allocation7 + $0x164] sm:$0xf]
    %v2204 = vld [vmem:[#allocation7 + $0x168] sm:$0xff]
    %v2205 = vld [vmem:[#allocation7 + $0x170] sm:$0xf]
    %v2206 = vld [vmem:[#allocation7 + $0x174] sm:$0xff]
    %v2207 = vld [vmem:[#allocation7 + $0x17c] sm:$0xf]
    %v2208 = vpack.c.bf16 %v1252, %v1252
    %v2209 = vld [vmem:[%s446] ss:$8 sm:$0x7]
    %v2211 = vlaneseq
    %v2212 = vshrl.u32 %v2211, 7
    %v2213 = vsub.s32 0, %v2212
    %v2214 = vrot.slane %v2209, %v2213
    %v2215 = vlaneseq
    %v2216 = vshrl.u32 %v2215, 7
    %v2217 = vsub.s32 1, %v2216
    %v2218 = vrot.slane %v2209, %v2217
    %v2219 = vlaneseq
    %v2220 = vshrl.u32 %v2219, 7
    %v2221 = vsub.s32 2, %v2220
    %v2222 = vrot.slane %v2209, %v2221
    %v2258 = vunpack.c.l.b16 %v2176
    %v2259 = vunpack.c.h.b16 %v2176
    %v2260 = vunpack.c.l.b16 %v2177
    %v2261 = vunpack.c.l.b16 %v2178
    %v2262 = vunpack.c.h.b16 %v2178
    %v2263 = vunpack.c.l.b16 %v2179
    %v2264 = vunpack.c.l.b16 %v2180
    %v2265 = vunpack.c.h.b16 %v2180
    %v2266 = vunpack.c.l.b16 %v2181
    %v2267 = vunpack.c.l.b16 %v2182
    %v2268 = vunpack.c.h.b16 %v2182
    %v2269 = vunpack.c.l.b16 %v2183
    %v2270 = vunpack.c.l.b16 %v2184
    %v2271 = vunpack.c.h.b16 %v2184
    %v2272 = vunpack.c.l.b16 %v2185
    %v2273 = vunpack.c.l.b16 %v2186
    %v2274 = vunpack.c.h.b16 %v2186
    %v2275 = vunpack.c.l.b16 %v2187
    %v2276 = vunpack.c.l.b16 %v2188
    %v2277 = vunpack.c.h.b16 %v2188
    %v2278 = vunpack.c.l.b16 %v2189
    %v2279 = vunpack.c.l.b16 %v2190
    %v2280 = vunpack.c.h.b16 %v2190
    %v2281 = vunpack.c.l.b16 %v2191
    %v2282 = vunpack.c.l.b16 %v2192
    %v2283 = vunpack.c.h.b16 %v2192
    %v2284 = vunpack.c.l.b16 %v2193
    %v2285 = vunpack.c.l.b16 %v2194
    %v2286 = vunpack.c.h.b16 %v2194
    %v2287 = vunpack.c.l.b16 %v2195
    %v2288 = vunpack.c.l.b16 %v2196
    %v2289 = vunpack.c.h.b16 %v2196
    %v2290 = vunpack.c.l.b16 %v2197
    %v2291 = vunpack.c.l.b16 %v2198
    %v2292 = vunpack.c.h.b16 %v2198
    %v2293 = vunpack.c.l.b16 %v2199
    %v2294 = vunpack.c.l.b16 %v2200
    %v2295 = vunpack.c.h.b16 %v2200
    %v2296 = vunpack.c.l.b16 %v2201
    %v2297 = vunpack.c.l.b16 %v2202
    %v2298 = vunpack.c.h.b16 %v2202
    %v2299 = vunpack.c.l.b16 %v2203
    %v2300 = vunpack.c.l.b16 %v2204
    %v2301 = vunpack.c.h.b16 %v2204
    %v2302 = vunpack.c.l.b16 %v2205
    %v2303 = vunpack.c.l.b16 %v2206
    %v2304 = vunpack.c.h.b16 %v2206
    %v2305 = vunpack.c.l.b16 %v2207
    %v2306 = vpack.c.b16 %v2261, %v2258
    %v2307 = vpack.c.b16 %v2262, %v2259
    %v2308 = vpack.c.b16 %v2263, %v2260
    %v2309 = vpack.c.b16 %v2267, %v2264
    %v2310 = vpack.c.b16 %v2268, %v2265
    %v2311 = vpack.c.b16 %v2269, %v2266
    %v2312 = vpack.c.b16 %v2273, %v2270
    %v2313 = vpack.c.b16 %v2274, %v2271
    %v2314 = vpack.c.b16 %v2275, %v2272
    %v2315 = vpack.c.b16 %v2279, %v2276
    %v2316 = vpack.c.b16 %v2280, %v2277
    %v2317 = vpack.c.b16 %v2281, %v2278
    %v2318 = vpack.c.b16 %v2285, %v2282
    %v2319 = vpack.c.b16 %v2286, %v2283
    %v2320 = vpack.c.b16 %v2287, %v2284
    %v2321 = vpack.c.b16 %v2291, %v2288
    %v2322 = vpack.c.b16 %v2292, %v2289
    %v2323 = vpack.c.b16 %v2293, %v2290
    %v2324 = vpack.c.b16 %v2297, %v2294
    %v2325 = vpack.c.b16 %v2298, %v2295
    %v2326 = vpack.c.b16 %v2299, %v2296
    %v2327 = vpack.c.b16 %v2303, %v2300
    %v2328 = vpack.c.b16 %v2304, %v2301
    %v2329 = vpack.c.b16 %v2305, %v2302
    %2354 = vmatprep.subr.bf16.mxu0 %v2307
    %2355 = vmatpush1.bf16.msra.mxu0 %v2306
    %2356 = vmatprep.subr.bf16.mxu0 %v2310
    %2357 = vmatpush1.bf16.msra.mxu0 %v2309
    %2358 = vmatprep.subr.bf16.mxu0 %v2313
    %2359 = vmatpush1.bf16.msra.mxu0 %v2312
    %2360 = vmatprep.subr.bf16.mxu0 %v2316
    %2361 = vmatpush1.bf16.msra.mxu0 %v2315
    %2362 = vmatprep.subr.bf16.mxu0 %v2319
    %2363 = vmatpush1.bf16.msra.mxu0 %v2318
    %2364 = vmatprep.subr.bf16.mxu0 %v2322
    %2365 = vmatpush1.bf16.msra.mxu0 %v2321
    %2366 = vmatprep.subr.bf16.mxu0 %v2325
    %2367 = vmatpush1.bf16.msra.mxu0 %v2324
    %2368 = vmatprep.subr.bf16.mxu0 %v2328
    %2369 = vmatpush1.bf16.msra.mxu0 %v2327
    %2370 = vmatprep.subr.bf16.mxu0 0
    %2371 = vmatpush1.bf16.msra.mxu0 0
    %2372 = vmatprep.subr.bf16.mxu0 0
    %2373 = vmatpush1.bf16.msra.mxu0 0
    %2374 = vmatprep.subr.bf16.mxu0 0
    %2375 = vmatpush1.bf16.msra.mxu0 0
    %2376 = vmatprep.subr.bf16.mxu0 0
    %2377 = vmatpush1.bf16.msra.mxu0 0
    %2378 = vmatprep.subr.bf16.mxu0 0
    %2379 = vmatpush1.bf16.msra.mxu0 0
    %2380 = vmatprep.subr.bf16.mxu0 0
    %2381 = vmatpush1.bf16.msra.mxu0 0
    %2382 = vmatprep.subr.bf16.mxu0 0
    %2383 = vmatpush1.bf16.msra.mxu0 0
    %2384 = vmatprep.subr.bf16.mxu0 0
    %2385 = vmatpush1.bf16.msra.mxu0 0
    %2386 = vmatprep.mubr.bf16.mxu0 0
    %2387 = vmatmul.mubr.bf16.gmra.mrb[0].mxu0 %v2208
    %v2388 = vpop.f32.mrb[0].mxu0
    %v2389 = vadd.f32 %v2214, %v2388
    %v2390 = vpop.f32.mrb[0].mxu0
    %v2391 = vadd.f32 %v2218, %v2390
    %v2392 = vpop.f32.mrb[0].mxu0
    %v2393 = vpop.f32.mrb[0].mxu0
    %2394 = vdwg.mxu0
    %2395 = vmatprep.subr.bf16.mxu0 0
    %2396 = vmatpush1.bf16.msra.mxu0 %v2308
    %2397 = vmatprep.subr.bf16.mxu0 0
    %2398 = vmatpush1.bf16.msra.mxu0 %v2311
    %2399 = vmatprep.subr.bf16.mxu0 0
    %2400 = vmatpush1.bf16.msra.mxu0 %v2314
    %2401 = vmatprep.subr.bf16.mxu0 0
    %2402 = vmatpush1.bf16.msra.mxu0 %v2317
    %2403 = vmatprep.subr.bf16.mxu0 0
    %2404 = vmatpush1.bf16.msra.mxu0 %v2320
    %2405 = vmatprep.subr.bf16.mxu0 0
    %2406 = vmatpush1.bf16.msra.mxu0 %v2323
    %2407 = vmatprep.subr.bf16.mxu0 0
    %2408 = vmatpush1.bf16.msra.mxu0 %v2326
    %2409 = vmatprep.subr.bf16.mxu0 0
    %2410 = vmatpush1.bf16.msra.mxu0 %v2329
    %2411 = vmatprep.subr.bf16.mxu0 0
    %2412 = vmatpush1.bf16.msra.mxu0 0
    %2413 = vmatprep.subr.bf16.mxu0 0
    %2414 = vmatpush1.bf16.msra.mxu0 0
    %2415 = vmatprep.subr.bf16.mxu0 0
    %2416 = vmatpush1.bf16.msra.mxu0 0
    %2417 = vmatprep.subr.bf16.mxu0 0
    %2418 = vmatpush1.bf16.msra.mxu0 0
    %2419 = vmatprep.subr.bf16.mxu0 0
    %2420 = vmatpush1.bf16.msra.mxu0 0
    %2421 = vmatprep.subr.bf16.mxu0 0
    %2422 = vmatpush1.bf16.msra.mxu0 0
    %2423 = vmatprep.subr.bf16.mxu0 0
    %2424 = vmatpush1.bf16.msra.mxu0 0
    %2425 = vmatprep.subr.bf16.mxu0 0
    %2426 = vmatpush1.bf16.msra.mxu0 0
    %2427 = vmatprep.mubr.bf16.mxu0 0
    %2428 = vmatmul.mubr.bf16.gmra.mrb[0].mxu0 %v2208
    %v2429 = vpop.f32.mrb[0].mxu0
    %v2430 = vadd.f32 %v2222, %v2429
    %v2431 = vpop.f32.mrb[0].mxu0
    %v2432 = vpop.f32.mrb[0].mxu0
    %v2433 = vpop.f32.mrb[0].mxu0
    %2434 = vdwg.mxu0
    %v2435 = vadd.f32 %v2112, %v2389
    %v2436 = vxor.u32 %v2435, 2147483648
    %v2437 = vmul.f32 %v2436, 1.442695
    %v2438 = vpow.pop %v2437
    %v2439 = vadd.f32 %v2438, 1.0
    %v2440 = vrcp.pop %v2439
    %v2441 = vmul.f32 1.0, %v2440
    %v2442 = vadd.f32 %v2114, %v2391
    %v2443 = vxor.u32 %v2442, 2147483648
    %v2444 = vmul.f32 %v2443, 1.442695
    %v2445 = vpow.pop %v2444
    %v2446 = vadd.f32 %v2445, 1.0
    %v2447 = vrcp.pop %v2446
    %v2448 = vmul.f32 1.0, %v2447
    %v2449 = vmul.f32 %v2441, %v2430
    %v2450 = vadd.f32 %v2163, %v2449
    %v2451 = vtanh.pop %v2450
    %v2452 = vsub.f32 %v1252, %v2451
    %v2453 = vmul.f32 %v2448, %v2452
    %v2454 = vadd.f32 %v2451, %v2453
    %2455 = vst [vmem:[#allocation2] sm:$0xff] %v2454
    %v2456 = vld [vmem:[#allocation7 + $0xc0] sm:$0xff]
    %v2457 = vld [vmem:[#allocation7 + $0xc8] sm:$0xf]
    %v2458 = vld [vmem:[#allocation7 + $0xcc] sm:$0xff]
    %v2459 = vld [vmem:[#allocation7 + $0xd4] sm:$0xf]
    %v2460 = vld [vmem:[#allocation7 + $0xd8] sm:$0xff]
    %v2461 = vld [vmem:[#allocation7 + $0xe0] sm:$0xf]
    %v2462 = vld [vmem:[#allocation7 + $0xe4] sm:$0xff]
    %v2463 = vld [vmem:[#allocation7 + $0xec] sm:$0xf]
    %v2464 = vld [vmem:[#allocation7 + $0xf0] sm:$0xff]
    %v2465 = vld [vmem:[#allocation7 + $0xf8] sm:$0xf]
    %v2466 = vld [vmem:[#allocation7 + $0xfc] sm:$0xff]
    %v2467 = vld [vmem:[#allocation7 + $0x104] sm:$0xf]
    %v2468 = vld [vmem:[#allocation7 + $0x108] sm:$0xff]
    %v2469 = vld [vmem:[#allocation7 + $0x110] sm:$0xf]
    %v2470 = vld [vmem:[#allocation7 + $0x114] sm:$0xff]
    %v2471 = vld [vmem:[#allocation7 + $0x11c] sm:$0xf]
    %v2472 = vld [vmem:[#allocation7 + $0x120] sm:$0xff]
    %v2473 = vld [vmem:[#allocation7 + $0x128] sm:$0xf]
    %v2474 = vld [vmem:[#allocation7 + $0x12c] sm:$0xff]
    %v2475 = vld [vmem:[#allocation7 + $0x134] sm:$0xf]
    %v2476 = vld [vmem:[#allocation7 + $0x138] sm:$0xff]
    %v2477 = vld [vmem:[#allocation7 + $0x140] sm:$0xf]
    %v2478 = vld [vmem:[#allocation7 + $0x144] sm:$0xff]
    %v2479 = vld [vmem:[#allocation7 + $0x14c] sm:$0xf]
    %v2480 = vld [vmem:[#allocation7 + $0x150] sm:$0xff]
    %v2481 = vld [vmem:[#allocation7 + $0x158] sm:$0xf]
    %v2482 = vld [vmem:[#allocation7 + $0x15c] sm:$0xff]
    %v2483 = vld [vmem:[#allocation7 + $0x164] sm:$0xf]
    %v2484 = vld [vmem:[#allocation7 + $0x168] sm:$0xff]
    %v2485 = vld [vmem:[#allocation7 + $0x170] sm:$0xf]
    %v2486 = vld [vmem:[#allocation7 + $0x174] sm:$0xff]
    %v2487 = vld [vmem:[#allocation7 + $0x17c] sm:$0xf]
    %v2488 = vpack.c.bf16 %v2454, %v2454
    %v2489 = vld [vmem:[%s446] ss:$8 sm:$0x7]
    %v2491 = vlaneseq
    %v2492 = vshrl.u32 %v2491, 7
    %v2493 = vsub.s32 0, %v2492
    %v2494 = vrot.slane %v2489, %v2493
    %v2495 = vlaneseq
    %v2496 = vshrl.u32 %v2495, 7
    %v2497 = vsub.s32 1, %v2496
    %v2498 = vrot.slane %v2489, %v2497
    %v2499 = vlaneseq
    %v2500 = vshrl.u32 %v2499, 7
    %v2501 = vsub.s32 2, %v2500
    %v2502 = vrot.slane %v2489, %v2501
    %v2538 = vunpack.c.l.b16 %v2456
    %v2539 = vunpack.c.h.b16 %v2456
    %v2540 = vunpack.c.l.b16 %v2457
    %v2541 = vunpack.c.l.b16 %v2458
    %v2542 = vunpack.c.h.b16 %v2458
    %v2543 = vunpack.c.l.b16 %v2459
    %v2544 = vunpack.c.l.b16 %v2460
    %v2545 = vunpack.c.h.b16 %v2460
    %v2546 = vunpack.c.l.b16 %v2461
    %v2547 = vunpack.c.l.b16 %v2462
    %v2548 = vunpack.c.h.b16 %v2462
    %v2549 = vunpack.c.l.b16 %v2463
    %v2550 = vunpack.c.l.b16 %v2464
    %v2551 = vunpack.c.h.b16 %v2464
    %v2552 = vunpack.c.l.b16 %v2465
    %v2553 = vunpack.c.l.b16 %v2466
    %v2554 = vunpack.c.h.b16 %v2466
    %v2555 = vunpack.c.l.b16 %v2467
    %v2556 = vunpack.c.l.b16 %v2468
    %v2557 = vunpack.c.h.b16 %v2468
    %v2558 = vunpack.c.l.b16 %v2469
    %v2559 = vunpack.c.l.b16 %v2470
    %v2560 = vunpack.c.h.b16 %v2470
    %v2561 = vunpack.c.l.b16 %v2471
    %v2562 = vunpack.c.l.b16 %v2472
    %v2563 = vunpack.c.h.b16 %v2472
    %v2564 = vunpack.c.l.b16 %v2473
    %v2565 = vunpack.c.l.b16 %v2474
    %v2566 = vunpack.c.h.b16 %v2474
    %v2567 = vunpack.c.l.b16 %v2475
    %v2568 = vunpack.c.l.b16 %v2476
    %v2569 = vunpack.c.h.b16 %v2476
    %v2570 = vunpack.c.l.b16 %v2477
    %v2571 = vunpack.c.l.b16 %v2478
    %v2572 = vunpack.c.h.b16 %v2478
    %v2573 = vunpack.c.l.b16 %v2479
    %v2574 = vunpack.c.l.b16 %v2480
    %v2575 = vunpack.c.h.b16 %v2480
    %v2576 = vunpack.c.l.b16 %v2481
    %v2577 = vunpack.c.l.b16 %v2482
    %v2578 = vunpack.c.h.b16 %v2482
    %v2579 = vunpack.c.l.b16 %v2483
    %v2580 = vunpack.c.l.b16 %v2484
    %v2581 = vunpack.c.h.b16 %v2484
    %v2582 = vunpack.c.l.b16 %v2485
    %v2583 = vunpack.c.l.b16 %v2486
    %v2584 = vunpack.c.h.b16 %v2486
    %v2585 = vunpack.c.l.b16 %v2487
    %v2586 = vpack.c.b16 %v2541, %v2538
    %v2587 = vpack.c.b16 %v2542, %v2539
    %v2588 = vpack.c.b16 %v2543, %v2540
    %v2589 = vpack.c.b16 %v2547, %v2544
    %v2590 = vpack.c.b16 %v2548, %v2545
    %v2591 = vpack.c.b16 %v2549, %v2546
    %v2592 = vpack.c.b16 %v2553, %v2550
    %v2593 = vpack.c.b16 %v2554, %v2551
    %v2594 = vpack.c.b16 %v2555, %v2552
    %v2595 = vpack.c.b16 %v2559, %v2556
    %v2596 = vpack.c.b16 %v2560, %v2557
    %v2597 = vpack.c.b16 %v2561, %v2558
    %v2598 = vpack.c.b16 %v2565, %v2562
    %v2599 = vpack.c.b16 %v2566, %v2563
    %v2600 = vpack.c.b16 %v2567, %v2564
    %v2601 = vpack.c.b16 %v2571, %v2568
    %v2602 = vpack.c.b16 %v2572, %v2569
    %v2603 = vpack.c.b16 %v2573, %v2570
    %v2604 = vpack.c.b16 %v2577, %v2574
    %v2605 = vpack.c.b16 %v2578, %v2575
    %v2606 = vpack.c.b16 %v2579, %v2576
    %v2607 = vpack.c.b16 %v2583, %v2580
    %v2608 = vpack.c.b16 %v2584, %v2581
    %v2609 = vpack.c.b16 %v2585, %v2582
    %2634 = vmatprep.subr.bf16.mxu0 %v2587
    %2635 = vmatpush1.bf16.msra.mxu0 %v2586
    %2636 = vmatprep.subr.bf16.mxu0 %v2590
    %2637 = vmatpush1.bf16.msra.mxu0 %v2589
    %2638 = vmatprep.subr.bf16.mxu0 %v2593
    %2639 = vmatpush1.bf16.msra.mxu0 %v2592
    %2640 = vmatprep.subr.bf16.mxu0 %v2596
    %2641 = vmatpush1.bf16.msra.mxu0 %v2595
    %2642 = vmatprep.subr.bf16.mxu0 %v2599
    %2643 = vmatpush1.bf16.msra.mxu0 %v2598
    %2644 = vmatprep.subr.bf16.mxu0 %v2602
    %2645 = vmatpush1.bf16.msra.mxu0 %v2601
    %2646 = vmatprep.subr.bf16.mxu0 %v2605
    %2647 = vmatpush1.bf16.msra.mxu0 %v2604
    %2648 = vmatprep.subr.bf16.mxu0 %v2608
    %2649 = vmatpush1.bf16.msra.mxu0 %v2607
    %2650 = vmatprep.subr.bf16.mxu0 0
    %2651 = vmatpush1.bf16.msra.mxu0 0
    %2652 = vmatprep.subr.bf16.mxu0 0
    %2653 = vmatpush1.bf16.msra.mxu0 0
    %2654 = vmatprep.subr.bf16.mxu0 0
    %2655 = vmatpush1.bf16.msra.mxu0 0
    %2656 = vmatprep.subr.bf16.mxu0 0
    %2657 = vmatpush1.bf16.msra.mxu0 0
    %2658 = vmatprep.subr.bf16.mxu0 0
    %2659 = vmatpush1.bf16.msra.mxu0 0
    %2660 = vmatprep.subr.bf16.mxu0 0
    %2661 = vmatpush1.bf16.msra.mxu0 0
    %2662 = vmatprep.subr.bf16.mxu0 0
    %2663 = vmatpush1.bf16.msra.mxu0 0
    %2664 = vmatprep.subr.bf16.mxu0 0
    %2665 = vmatpush1.bf16.msra.mxu0 0
    %2666 = vmatprep.mubr.bf16.mxu0 0
    %2667 = vmatmul.mubr.bf16.gmra.mrb[0].mxu0 %v2488
    %v2668 = vpop.f32.mrb[0].mxu0
    %v2669 = vadd.f32 %v2494, %v2668
    %v2670 = vpop.f32.mrb[0].mxu0
    %v2671 = vadd.f32 %v2498, %v2670
    %v2672 = vpop.f32.mrb[0].mxu0
    %v2673 = vpop.f32.mrb[0].mxu0
    %2674 = vdwg.mxu0
    %2675 = vmatprep.subr.bf16.mxu0 0
    %2676 = vmatpush1.bf16.msra.mxu0 %v2588
    %2677 = vmatprep.subr.bf16.mxu0 0
    %2678 = vmatpush1.bf16.msra.mxu0 %v2591
    %2679 = vmatprep.subr.bf16.mxu0 0
    %2680 = vmatpush1.bf16.msra.mxu0 %v2594
    %2681 = vmatprep.subr.bf16.mxu0 0
    %2682 = vmatpush1.bf16.msra.mxu0 %v2597
    %2683 = vmatprep.subr.bf16.mxu0 0
    %2684 = vmatpush1.bf16.msra.mxu0 %v2600
    %2685 = vmatprep.subr.bf16.mxu0 0
    %2686 = vmatpush1.bf16.msra.mxu0 %v2603
    %2687 = vmatprep.subr.bf16.mxu0 0
    %2688 = vmatpush1.bf16.msra.mxu0 %v2606
    %2689 = vmatprep.subr.bf16.mxu0 0
    %2690 = vmatpush1.bf16.msra.mxu0 %v2609
    %2691 = vmatprep.subr.bf16.mxu0 0
    %2692 = vmatpush1.bf16.msra.mxu0 0
    %2693 = vmatprep.subr.bf16.mxu0 0
    %2694 = vmatpush1.bf16.msra.mxu0 0
    %2695 = vmatprep.subr.bf16.mxu0 0
    %2696 = vmatpush1.bf16.msra.mxu0 0
    %2697 = vmatprep.subr.bf16.mxu0 0
    %2698 = vmatpush1.bf16.msra.mxu0 0
    %2699 = vmatprep.subr.bf16.mxu0 0
    %2700 = vmatpush1.bf16.msra.mxu0 0
    %2701 = vmatprep.subr.bf16.mxu0 0
    %2702 = vmatpush1.bf16.msra.mxu0 0
    %2703 = vmatprep.subr.bf16.mxu0 0
    %2704 = vmatpush1.bf16.msra.mxu0 0
    %2705 = vmatprep.subr.bf16.mxu0 0
    %2706 = vmatpush1.bf16.msra.mxu0 0
    %2707 = vmatprep.mubr.bf16.mxu0 0
    %2708 = vmatmul.mubr.bf16.gmra.mrb[0].mxu0 %v2488
    %v2709 = vpop.f32.mrb[0].mxu0
    %v2710 = vadd.f32 %v2502, %v2709
    %v2711 = vpop.f32.mrb[0].mxu0
    %v2712 = vpop.f32.mrb[0].mxu0
    %v2713 = vpop.f32.mrb[0].mxu0
    %2714 = vdwg.mxu0
    %v2715 = vadd.f32 %v2116, %v2669
    %v2716 = vxor.u32 %v2715, 2147483648
    %v2717 = vmul.f32 %v2716, 1.442695
    %v2718 = vpow.pop %v2717
    %v2719 = vadd.f32 %v2718, 1.0
    %v2720 = vrcp.pop %v2719
    %v2721 = vmul.f32 1.0, %v2720
    %v2722 = vadd.f32 %v2118, %v2671
    %v2723 = vxor.u32 %v2722, 2147483648
    %v2724 = vmul.f32 %v2723, 1.442695
    %v2725 = vpow.pop %v2724
    %v2726 = vadd.f32 %v2725, 1.0
    %v2727 = vrcp.pop %v2726
    %v2728 = vmul.f32 1.0, %v2727
    %v2729 = vmul.f32 %v2721, %v2710
    %v2730 = vadd.f32 %v2166, %v2729
    %v2731 = vtanh.pop %v2730
    %v2732 = vsub.f32 %v2454, %v2731
    %v2733 = vmul.f32 %v2728, %v2732
    %v2734 = vadd.f32 %v2731, %v2733
    %2735 = vst [vmem:[#allocation2 + $0x8] sm:$0xff] %v2734
    %v2736 = vld [vmem:[#allocation7 + $0xc0] sm:$0xff]
    %v2737 = vld [vmem:[#allocation7 + $0xc8] sm:$0xf]
    %v2738 = vld [vmem:[#allocation7 + $0xcc] sm:$0xff]
    %v2739 = vld [vmem:[#allocation7 + $0xd4] sm:$0xf]
    %v2740 = vld [vmem:[#allocation7 + $0xd8] sm:$0xff]
    %v2741 = vld [vmem:[#allocation7 + $0xe0] sm:$0xf]
    %v2742 = vld [vmem:[#allocation7 + $0xe4] sm:$0xff]
    %v2743 = vld [vmem:[#allocation7 + $0xec] sm:$0xf]
    %v2744 = vld [vmem:[#allocation7 + $0xf0] sm:$0xff]
    %v2745 = vld [vmem:[#allocation7 + $0xf8] sm:$0xf]
    %v2746 = vld [vmem:[#allocation7 + $0xfc] sm:$0xff]
    %v2747 = vld [vmem:[#allocation7 + $0x104] sm:$0xf]
    %v2748 = vld [vmem:[#allocation7 + $0x108] sm:$0xff]
    %v2749 = vld [vmem:[#allocation7 + $0x110] sm:$0xf]
    %v2750 = vld [vmem:[#allocation7 + $0x114] sm:$0xff]
    %v2751 = vld [vmem:[#allocation7 + $0x11c] sm:$0xf]
    %v2752 = vld [vmem:[#allocation7 + $0x120] sm:$0xff]
    %v2753 = vld [vmem:[#allocation7 + $0x128] sm:$0xf]
    %v2754 = vld [vmem:[#allocation7 + $0x12c] sm:$0xff]
    %v2755 = vld [vmem:[#allocation7 + $0x134] sm:$0xf]
    %v2756 = vld [vmem:[#allocation7 + $0x138] sm:$0xff]
    %v2757 = vld [vmem:[#allocation7 + $0x140] sm:$0xf]
    %v2758 = vld [vmem:[#allocation7 + $0x144] sm:$0xff]
    %v2759 = vld [vmem:[#allocation7 + $0x14c] sm:$0xf]
    %v2760 = vld [vmem:[#allocation7 + $0x150] sm:$0xff]
    %v2761 = vld [vmem:[#allocation7 + $0x158] sm:$0xf]
    %v2762 = vld [vmem:[#allocation7 + $0x15c] sm:$0xff]
    %v2763 = vld [vmem:[#allocation7 + $0x164] sm:$0xf]
    %v2764 = vld [vmem:[#allocation7 + $0x168] sm:$0xff]
    %v2765 = vld [vmem:[#allocation7 + $0x170] sm:$0xf]
    %v2766 = vld [vmem:[#allocation7 + $0x174] sm:$0xff]
    %v2767 = vld [vmem:[#allocation7 + $0x17c] sm:$0xf]
    %v2768 = vpack.c.bf16 %v2734, %v2734
    %v2769 = vld [vmem:[%s446] ss:$8 sm:$0x7]
    %v2771 = vlaneseq
    %v2772 = vshrl.u32 %v2771, 7
    %v2773 = vsub.s32 0, %v2772
    %v2774 = vrot.slane %v2769, %v2773
    %v2775 = vlaneseq
    %v2776 = vshrl.u32 %v2775, 7
    %v2777 = vsub.s32 1, %v2776
    %v2778 = vrot.slane %v2769, %v2777
    %v2779 = vlaneseq
    %v2780 = vshrl.u32 %v2779, 7
    %v2781 = vsub.s32 2, %v2780
    %v2782 = vrot.slane %v2769, %v2781
    %v2818 = vunpack.c.l.b16 %v2736
    %v2819 = vunpack.c.h.b16 %v2736
    %v2820 = vunpack.c.l.b16 %v2737
    %v2821 = vunpack.c.l.b16 %v2738
    %v2822 = vunpack.c.h.b16 %v2738
    %v2823 = vunpack.c.l.b16 %v2739
    %v2824 = vunpack.c.l.b16 %v2740
    %v2825 = vunpack.c.h.b16 %v2740
    %v2826 = vunpack.c.l.b16 %v2741
    %v2827 = vunpack.c.l.b16 %v2742
    %v2828 = vunpack.c.h.b16 %v2742
    %v2829 = vunpack.c.l.b16 %v2743
    %v2830 = vunpack.c.l.b16 %v2744
    %v2831 = vunpack.c.h.b16 %v2744
    %v2832 = vunpack.c.l.b16 %v2745
    %v2833 = vunpack.c.l.b16 %v2746
    %v2834 = vunpack.c.h.b16 %v2746
    %v2835 = vunpack.c.l.b16 %v2747
    %v2836 = vunpack.c.l.b16 %v2748
    %v2837 = vunpack.c.h.b16 %v2748
    %v2838 = vunpack.c.l.b16 %v2749
    %v2839 = vunpack.c.l.b16 %v2750
    %v2840 = vunpack.c.h.b16 %v2750
    %v2841 = vunpack.c.l.b16 %v2751
    %v2842 = vunpack.c.l.b16 %v2752
    %v2843 = vunpack.c.h.b16 %v2752
    %v2844 = vunpack.c.l.b16 %v2753
    %v2845 = vunpack.c.l.b16 %v2754
    %v2846 = vunpack.c.h.b16 %v2754
    %v2847 = vunpack.c.l.b16 %v2755
    %v2848 = vunpack.c.l.b16 %v2756
    %v2849 = vunpack.c.h.b16 %v2756
    %v2850 = vunpack.c.l.b16 %v2757
    %v2851 = vunpack.c.l.b16 %v2758
    %v2852 = vunpack.c.h.b16 %v2758
    %v2853 = vunpack.c.l.b16 %v2759
    %v2854 = vunpack.c.l.b16 %v2760
    %v2855 = vunpack.c.h.b16 %v2760
    %v2856 = vunpack.c.l.b16 %v2761
    %v2857 = vunpack.c.l.b16 %v2762
    %v2858 = vunpack.c.h.b16 %v2762
    %v2859 = vunpack.c.l.b16 %v2763
    %v2860 = vunpack.c.l.b16 %v2764
    %v2861 = vunpack.c.h.b16 %v2764
    %v2862 = vunpack.c.l.b16 %v2765
    %v2863 = vunpack.c.l.b16 %v2766
    %v2864 = vunpack.c.h.b16 %v2766
    %v2865 = vunpack.c.l.b16 %v2767
    %v2866 = vpack.c.b16 %v2821, %v2818
    %v2867 = vpack.c.b16 %v2822, %v2819
    %v2868 = vpack.c.b16 %v2823, %v2820
    %v2869 = vpack.c.b16 %v2827, %v2824
    %v2870 = vpack.c.b16 %v2828, %v2825
    %v2871 = vpack.c.b16 %v2829, %v2826
    %v2872 = vpack.c.b16 %v2833, %v2830
    %v2873 = vpack.c.b16 %v2834, %v2831
    %v2874 = vpack.c.b16 %v2835, %v2832
    %v2875 = vpack.c.b16 %v2839, %v2836
    %v2876 = vpack.c.b16 %v2840, %v2837
    %v2877 = vpack.c.b16 %v2841, %v2838
    %v2878 = vpack.c.b16 %v2845, %v2842
    %v2879 = vpack.c.b16 %v2846, %v2843
    %v2880 = vpack.c.b16 %v2847, %v2844
    %v2881 = vpack.c.b16 %v2851, %v2848
    %v2882 = vpack.c.b16 %v2852, %v2849
    %v2883 = vpack.c.b16 %v2853, %v2850
    %v2884 = vpack.c.b16 %v2857, %v2854
    %v2885 = vpack.c.b16 %v2858, %v2855
    %v2886 = vpack.c.b16 %v2859, %v2856
    %v2887 = vpack.c.b16 %v2863, %v2860
    %v2888 = vpack.c.b16 %v2864, %v2861
    %v2889 = vpack.c.b16 %v2865, %v2862
    %2914 = vmatprep.subr.bf16.mxu0 %v2867
    %2915 = vmatpush1.bf16.msra.mxu0 %v2866
    %2916 = vmatprep.subr.bf16.mxu0 %v2870
    %2917 = vmatpush1.bf16.msra.mxu0 %v2869
    %2918 = vmatprep.subr.bf16.mxu0 %v2873
    %2919 = vmatpush1.bf16.msra.mxu0 %v2872
    %2920 = vmatprep.subr.bf16.mxu0 %v2876
    %2921 = vmatpush1.bf16.msra.mxu0 %v2875
    %2922 = vmatprep.subr.bf16.mxu0 %v2879
    %2923 = vmatpush1.bf16.msra.mxu0 %v2878
    %2924 = vmatprep.subr.bf16.mxu0 %v2882
    %2925 = vmatpush1.bf16.msra.mxu0 %v2881
    %2926 = vmatprep.subr.bf16.mxu0 %v2885
    %2927 = vmatpush1.bf16.msra.mxu0 %v2884
    %2928 = vmatprep.subr.bf16.mxu0 %v2888
    %2929 = vmatpush1.bf16.msra.mxu0 %v2887
    %2930 = vmatprep.subr.bf16.mxu0 0
    %2931 = vmatpush1.bf16.msra.mxu0 0
    %2932 = vmatprep.subr.bf16.mxu0 0
    %2933 = vmatpush1.bf16.msra.mxu0 0
    %2934 = vmatprep.subr.bf16.mxu0 0
    %2935 = vmatpush1.bf16.msra.mxu0 0
    %2936 = vmatprep.subr.bf16.mxu0 0
    %2937 = vmatpush1.bf16.msra.mxu0 0
    %2938 = vmatprep.subr.bf16.mxu0 0
    %2939 = vmatpush1.bf16.msra.mxu0 0
    %2940 = vmatprep.subr.bf16.mxu0 0
    %2941 = vmatpush1.bf16.msra.mxu0 0
    %2942 = vmatprep.subr.bf16.mxu0 0
    %2943 = vmatpush1.bf16.msra.mxu0 0
    %2944 = vmatprep.subr.bf16.mxu0 0
    %2945 = vmatpush1.bf16.msra.mxu0 0
    %2946 = vmatprep.mubr.bf16.mxu0 0
    %2947 = vmatmul.mubr.bf16.gmra.mrb[0].mxu0 %v2768
    %v2948 = vpop.f32.mrb[0].mxu0
    %v2949 = vadd.f32 %v2774, %v2948
    %v2950 = vpop.f32.mrb[0].mxu0
    %v2951 = vadd.f32 %v2778, %v2950
    %v2952 = vpop.f32.mrb[0].mxu0
    %v2953 = vpop.f32.mrb[0].mxu0
    %2954 = vdwg.mxu0
    %2955 = vmatprep.subr.bf16.mxu0 0
    %2956 = vmatpush1.bf16.msra.mxu0 %v2868
    %2957 = vmatprep.subr.bf16.mxu0 0
    %2958 = vmatpush1.bf16.msra.mxu0 %v2871
    %2959 = vmatprep.subr.bf16.mxu0 0
    %2960 = vmatpush1.bf16.msra.mxu0 %v2874
    %2961 = vmatprep.subr.bf16.mxu0 0
    %2962 = vmatpush1.bf16.msra.mxu0 %v2877
    %2963 = vmatprep.subr.bf16.mxu0 0
    %2964 = vmatpush1.bf16.msra.mxu0 %v2880
    %2965 = vmatprep.subr.bf16.mxu0 0
    %2966 = vmatpush1.bf16.msra.mxu0 %v2883
    %2967 = vmatprep.subr.bf16.mxu0 0
    %2968 = vmatpush1.bf16.msra.mxu0 %v2886
    %2969 = vmatprep.subr.bf16.mxu0 0
    %2970 = vmatpush1.bf16.msra.mxu0 %v2889
    %2971 = vmatprep.subr.bf16.mxu0 0
    %2972 = vmatpush1.bf16.msra.mxu0 0
    %2973 = vmatprep.subr.bf16.mxu0 0
    %2974 = vmatpush1.bf16.msra.mxu0 0
    %2975 = vmatprep.subr.bf16.mxu0 0
    %2976 = vmatpush1.bf16.msra.mxu0 0
    %2977 = vmatprep.subr.bf16.mxu0 0
    %2978 = vmatpush1.bf16.msra.mxu0 0
    %2979 = vmatprep.subr.bf16.mxu0 0
    %2980 = vmatpush1.bf16.msra.mxu0 0
    %2981 = vmatprep.subr.bf16.mxu0 0
    %2982 = vmatpush1.bf16.msra.mxu0 0
    %2983 = vmatprep.subr.bf16.mxu0 0
    %2984 = vmatpush1.bf16.msra.mxu0 0
    %2985 = vmatprep.subr.bf16.mxu0 0
    %2986 = vmatpush1.bf16.msra.mxu0 0
    %2987 = vmatprep.mubr.bf16.mxu0 0
    %2988 = vmatmul.mubr.bf16.gmra.mrb[0].mxu0 %v2768
    %v2989 = vpop.f32.mrb[0].mxu0
    %v2990 = vadd.f32 %v2782, %v2989
    %v2991 = vpop.f32.mrb[0].mxu0
    %v2992 = vpop.f32.mrb[0].mxu0
    %v2993 = vpop.f32.mrb[0].mxu0
    %2994 = vdwg.mxu0
    %v2995 = vadd.f32 %v2122, %v2949
    %v2996 = vxor.u32 %v2995, 2147483648
    %v2997 = vmul.f32 %v2996, 1.442695
    %v2998 = vpow.pop %v2997
    %v2999 = vadd.f32 %v2998, 1.0
    %v3000 = vrcp.pop %v2999
    %v3001 = vmul.f32 1.0, %v3000
    %v3002 = vadd.f32 %v2124, %v2951
    %v3003 = vxor.u32 %v3002, 2147483648
    %v3004 = vmul.f32 %v3003, 1.442695
    %v3005 = vpow.pop %v3004
    %v3006 = vadd.f32 %v3005, 1.0
    %v3007 = vrcp.pop %v3006
    %v3008 = vmul.f32 1.0, %v3007
    %v3009 = vmul.f32 %v3001, %v2990
    %v3010 = vadd.f32 %v2171, %v3009
    %v3011 = vtanh.pop %v3010
    %v3012 = vsub.f32 %v2734, %v3011
    %v3013 = vmul.f32 %v3008, %v3012
    %v3014 = vadd.f32 %v3011, %v3013
    %3015 = vst [vmem:[#allocation2 + $0x10] sm:$0xff] %v3014
    %v3016 = vld [vmem:[#allocation2] sm:$0xff]
    %v3017 = vld [vmem:[#allocation2 + $0x8] sm:$0xff]
    %v3018 = vld [vmem:[#allocation2 + $0x10] sm:$0xff]
    %v3019 = vpack.c.bf16 %v3017, %v3016
    %v3020 = vpack.c.bf16 %v3018, %v3018
    %v3022 = vsel %vm1263, %v3020, 0
    %3024 = vmatprep.subr.bf16.mxu0 0
    %3025 = vmatpush1.bf16.msra.mxu0 %v3019
    %3026 = vmatprep.subr.bf16.mxu0 0
    %3027 = vmatpush1.bf16.msra.mxu0 %v3022
    %3028 = vmatprep.subr.bf16.mxu0 0
    %3029 = vmatpush1.bf16.msra.mxu0 0
    %3030 = vmatprep.subr.bf16.mxu0 0
    %3031 = vmatpush1.bf16.msra.mxu0 0
    %3032 = vmatprep.subr.bf16.mxu0 0
    %3033 = vmatpush1.bf16.msra.mxu0 0
    %3034 = vmatprep.subr.bf16.mxu0 0
    %3035 = vmatpush1.bf16.msra.mxu0 0
    %3036 = vmatprep.subr.bf16.mxu0 0
    %3037 = vmatpush1.bf16.msra.mxu0 0
    %3038 = vmatprep.subr.bf16.mxu0 0
    %3039 = vmatpush1.bf16.msra.mxu0 0
    %3040 = vmatprep.subr.bf16.mxu0 0
    %3041 = vmatpush1.bf16.msra.mxu0 0
    %3042 = vmatprep.subr.bf16.mxu0 0
    %3043 = vmatpush1.bf16.msra.mxu0 0
    %3044 = vmatprep.subr.bf16.mxu0 0
    %3045 = vmatpush1.bf16.msra.mxu0 0
    %3046 = vmatprep.subr.bf16.mxu0 0
    %3047 = vmatpush1.bf16.msra.mxu0 0
    %3048 = vmatprep.subr.bf16.mxu0 0
    %3049 = vmatpush1.bf16.msra.mxu0 0
    %3050 = vmatprep.subr.bf16.mxu0 0
    %3051 = vmatpush1.bf16.msra.mxu0 0
    %3052 = vmatprep.subr.bf16.mxu0 0
    %3053 = vmatpush1.bf16.msra.mxu0 0
    %3054 = vmatprep.subr.bf16.mxu0 0
    %3055 = vmatpush1.bf16.msra.mxu0 0
    %3056 = vmatprep.mubr.bf16.mxu0 0
    %3057 = vmatmul.mubr.bf16.gmra.mrb[0].mxu0 %v1261
    %v3058 = vpop.f32.mrb[0].mxu0
    %v3059 = vadd.f32 0.0, %v3058
    %v3060 = vpop.f32.mrb[0].mxu0
    %v3061 = vpop.f32.mrb[0].mxu0
    %v3062 = vpop.f32.mrb[0].mxu0
    %3063 = vdwg.mxu0
    %v3064 = vld [vmem:[#allocation7 + $0x180] sm:$0xff]
    %v3065 = vld [vmem:[#allocation7 + $0x188] sm:$0xf]
    %v3066 = vld [vmem:[#allocation7 + $0x18c] sm:$0xff]
    %v3067 = vld [vmem:[#allocation7 + $0x194] sm:$0xf]
    %v3068 = vld [vmem:[#allocation7 + $0x198] sm:$0xff]
    %v3069 = vld [vmem:[#allocation7 + $0x1a0] sm:$0xf]
    %v3070 = vld [vmem:[#allocation7 + $0x1a4] sm:$0xff]
    %v3071 = vld [vmem:[#allocation7 + $0x1ac] sm:$0xf]
    %v3072 = vld [vmem:[#allocation7 + $0x1b0] sm:$0xff]
    %v3073 = vld [vmem:[#allocation7 + $0x1b8] sm:$0xf]
    %v3074 = vld [vmem:[#allocation7 + $0x1bc] sm:$0xff]
    %v3075 = vld [vmem:[#allocation7 + $0x1c4] sm:$0xf]
    %v3076 = vld [vmem:[#allocation7 + $0x1c8] sm:$0xff]
    %v3077 = vld [vmem:[#allocation7 + $0x1d0] sm:$0xf]
    %v3078 = vld [vmem:[#allocation7 + $0x1d4] sm:$0xff]
    %v3079 = vld [vmem:[#allocation7 + $0x1dc] sm:$0xf]
    %v3080 = vld [vmem:[#allocation7 + $0x1e0] sm:$0xff]
    %v3081 = vld [vmem:[#allocation7 + $0x1e8] sm:$0xf]
    %v3082 = vld [vmem:[#allocation7 + $0x1ec] sm:$0xff]
    %v3083 = vld [vmem:[#allocation7 + $0x1f4] sm:$0xf]
    %v3084 = vld [vmem:[#allocation7 + $0x1f8] sm:$0xff]
    %v3085 = vld [vmem:[#allocation7 + $0x200] sm:$0xf]
    %v3086 = vld [vmem:[#allocation7 + $0x204] sm:$0xff]
    %v3087 = vld [vmem:[#allocation7 + $0x20c] sm:$0xf]
    %v3088 = vld [vmem:[#allocation7 + $0x210] sm:$0xff]
    %v3089 = vld [vmem:[#allocation7 + $0x218] sm:$0xf]
    %v3090 = vld [vmem:[#allocation7 + $0x21c] sm:$0xff]
    %v3091 = vld [vmem:[#allocation7 + $0x224] sm:$0xf]
    %v3092 = vld [vmem:[#allocation7 + $0x228] sm:$0xff]
    %v3093 = vld [vmem:[#allocation7 + $0x230] sm:$0xf]
    %v3094 = vld [vmem:[#allocation7 + $0x234] sm:$0xff]
    %v3095 = vld [vmem:[#allocation7 + $0x23c] sm:$0xf]
    %v3096 = vpack.c.bf16 %v3059, %v3059
    %v3097 = vld [vmem:[%s1340] ss:$8 sm:$0x7]
    %v3099 = vlaneseq
    %v3100 = vshrl.u32 %v3099, 7
    %v3101 = vsub.s32 0, %v3100
    %v3102 = vrot.slane %v3097, %v3101
    %v3103 = vlaneseq
    %v3104 = vshrl.u32 %v3103, 7
    %v3105 = vsub.s32 1, %v3104
    %v3106 = vrot.slane %v3097, %v3105
    %v3107 = vlaneseq
    %v3108 = vshrl.u32 %v3107, 7
    %v3109 = vsub.s32 2, %v3108
    %v3110 = vrot.slane %v3097, %v3109
    %v3146 = vunpack.c.l.b16 %v3064
    %v3147 = vunpack.c.h.b16 %v3064
    %v3148 = vunpack.c.l.b16 %v3065
    %v3149 = vunpack.c.l.b16 %v3066
    %v3150 = vunpack.c.h.b16 %v3066
    %v3151 = vunpack.c.l.b16 %v3067
    %v3152 = vunpack.c.l.b16 %v3068
    %v3153 = vunpack.c.h.b16 %v3068
    %v3154 = vunpack.c.l.b16 %v3069
    %v3155 = vunpack.c.l.b16 %v3070
    %v3156 = vunpack.c.h.b16 %v3070
    %v3157 = vunpack.c.l.b16 %v3071
    %v3158 = vunpack.c.l.b16 %v3072
    %v3159 = vunpack.c.h.b16 %v3072
    %v3160 = vunpack.c.l.b16 %v3073
    %v3161 = vunpack.c.l.b16 %v3074
    %v3162 = vunpack.c.h.b16 %v3074
    %v3163 = vunpack.c.l.b16 %v3075
    %v3164 = vunpack.c.l.b16 %v3076
    %v3165 = vunpack.c.h.b16 %v3076
    %v3166 = vunpack.c.l.b16 %v3077
    %v3167 = vunpack.c.l.b16 %v3078
    %v3168 = vunpack.c.h.b16 %v3078
    %v3169 = vunpack.c.l.b16 %v3079
    %v3170 = vunpack.c.l.b16 %v3080
    %v3171 = vunpack.c.h.b16 %v3080
    %v3172 = vunpack.c.l.b16 %v3081
    %v3173 = vunpack.c.l.b16 %v3082
    %v3174 = vunpack.c.h.b16 %v3082
    %v3175 = vunpack.c.l.b16 %v3083
    %v3176 = vunpack.c.l.b16 %v3084
    %v3177 = vunpack.c.h.b16 %v3084
    %v3178 = vunpack.c.l.b16 %v3085
    %v3179 = vunpack.c.l.b16 %v3086
    %v3180 = vunpack.c.h.b16 %v3086
    %v3181 = vunpack.c.l.b16 %v3087
    %v3182 = vunpack.c.l.b16 %v3088
    %v3183 = vunpack.c.h.b16 %v3088
    %v3184 = vunpack.c.l.b16 %v3089
    %v3185 = vunpack.c.l.b16 %v3090
    %v3186 = vunpack.c.h.b16 %v3090
    %v3187 = vunpack.c.l.b16 %v3091
    %v3188 = vunpack.c.l.b16 %v3092
    %v3189 = vunpack.c.h.b16 %v3092
    %v3190 = vunpack.c.l.b16 %v3093
    %v3191 = vunpack.c.l.b16 %v3094
    %v3192 = vunpack.c.h.b16 %v3094
    %v3193 = vunpack.c.l.b16 %v3095
    %v3194 = vpack.c.b16 %v3149, %v3146
    %v3195 = vpack.c.b16 %v3150, %v3147
    %v3196 = vpack.c.b16 %v3151, %v3148
    %v3197 = vpack.c.b16 %v3155, %v3152
    %v3198 = vpack.c.b16 %v3156, %v3153
    %v3199 = vpack.c.b16 %v3157, %v3154
    %v3200 = vpack.c.b16 %v3161, %v3158
    %v3201 = vpack.c.b16 %v3162, %v3159
    %v3202 = vpack.c.b16 %v3163, %v3160
    %v3203 = vpack.c.b16 %v3167, %v3164
    %v3204 = vpack.c.b16 %v3168, %v3165
    %v3205 = vpack.c.b16 %v3169, %v3166
    %v3206 = vpack.c.b16 %v3173, %v3170
    %v3207 = vpack.c.b16 %v3174, %v3171
    %v3208 = vpack.c.b16 %v3175, %v3172
    %v3209 = vpack.c.b16 %v3179, %v3176
    %v3210 = vpack.c.b16 %v3180, %v3177
    %v3211 = vpack.c.b16 %v3181, %v3178
    %v3212 = vpack.c.b16 %v3185, %v3182
    %v3213 = vpack.c.b16 %v3186, %v3183
    %v3214 = vpack.c.b16 %v3187, %v3184
    %v3215 = vpack.c.b16 %v3191, %v3188
    %v3216 = vpack.c.b16 %v3192, %v3189
    %v3217 = vpack.c.b16 %v3193, %v3190
    %3242 = vmatprep.subr.bf16.mxu0 %v3195
    %3243 = vmatpush1.bf16.msra.mxu0 %v3194
    %3244 = vmatprep.subr.bf16.mxu0 %v3198
    %3245 = vmatpush1.bf16.msra.mxu0 %v3197
    %3246 = vmatprep.subr.bf16.mxu0 %v3201
    %3247 = vmatpush1.bf16.msra.mxu0 %v3200
    %3248 = vmatprep.subr.bf16.mxu0 %v3204
    %3249 = vmatpush1.bf16.msra.mxu0 %v3203
    %3250 = vmatprep.subr.bf16.mxu0 %v3207
    %3251 = vmatpush1.bf16.msra.mxu0 %v3206
    %3252 = vmatprep.subr.bf16.mxu0 %v3210
    %3253 = vmatpush1.bf16.msra.mxu0 %v3209
    %3254 = vmatprep.subr.bf16.mxu0 %v3213
    %3255 = vmatpush1.bf16.msra.mxu0 %v3212
    %3256 = vmatprep.subr.bf16.mxu0 %v3216
    %3257 = vmatpush1.bf16.msra.mxu0 %v3215
    %3258 = vmatprep.subr.bf16.mxu0 0
    %3259 = vmatpush1.bf16.msra.mxu0 0
    %3260 = vmatprep.subr.bf16.mxu0 0
    %3261 = vmatpush1.bf16.msra.mxu0 0
    %3262 = vmatprep.subr.bf16.mxu0 0
    %3263 = vmatpush1.bf16.msra.mxu0 0
    %3264 = vmatprep.subr.bf16.mxu0 0
    %3265 = vmatpush1.bf16.msra.mxu0 0
    %3266 = vmatprep.subr.bf16.mxu0 0
    %3267 = vmatpush1.bf16.msra.mxu0 0
    %3268 = vmatprep.subr.bf16.mxu0 0
    %3269 = vmatpush1.bf16.msra.mxu0 0
    %3270 = vmatprep.subr.bf16.mxu0 0
    %3271 = vmatpush1.bf16.msra.mxu0 0
    %3272 = vmatprep.subr.bf16.mxu0 0
    %3273 = vmatpush1.bf16.msra.mxu0 0
    %3274 = vmatprep.mubr.bf16.mxu0 0
    %3275 = vmatmul.mubr.bf16.gmra.mrb[0].mxu0 %v3096
    %v3276 = vpop.f32.mrb[0].mxu0
    %v3277 = vadd.f32 %v3102, %v3276
    %v3278 = vpop.f32.mrb[0].mxu0
    %v3279 = vadd.f32 %v3106, %v3278
    %v3280 = vpop.f32.mrb[0].mxu0
    %v3281 = vpop.f32.mrb[0].mxu0
    %3282 = vdwg.mxu0
    %3283 = vmatprep.subr.bf16.mxu0 0
    %3284 = vmatpush1.bf16.msra.mxu0 %v3196
    %3285 = vmatprep.subr.bf16.mxu0 0
    %3286 = vmatpush1.bf16.msra.mxu0 %v3199
    %3287 = vmatprep.subr.bf16.mxu0 0
    %3288 = vmatpush1.bf16.msra.mxu0 %v3202
    %3289 = vmatprep.subr.bf16.mxu0 0
    %3290 = vmatpush1.bf16.msra.mxu0 %v3205
    %3291 = vmatprep.subr.bf16.mxu0 0
    %3292 = vmatpush1.bf16.msra.mxu0 %v3208
    %3293 = vmatprep.subr.bf16.mxu0 0
    %3294 = vmatpush1.bf16.msra.mxu0 %v3211
    %3295 = vmatprep.subr.bf16.mxu0 0
    %3296 = vmatpush1.bf16.msra.mxu0 %v3214
    %3297 = vmatprep.subr.bf16.mxu0 0
    %3298 = vmatpush1.bf16.msra.mxu0 %v3217
    %3299 = vmatprep.subr.bf16.mxu0 0
    %3300 = vmatpush1.bf16.msra.mxu0 0
    %3301 = vmatprep.subr.bf16.mxu0 0
    %3302 = vmatpush1.bf16.msra.mxu0 0
    %3303 = vmatprep.subr.bf16.mxu0 0
    %3304 = vmatpush1.bf16.msra.mxu0 0
    %3305 = vmatprep.subr.bf16.mxu0 0
    %3306 = vmatpush1.bf16.msra.mxu0 0
    %3307 = vmatprep.subr.bf16.mxu0 0
    %3308 = vmatpush1.bf16.msra.mxu0 0
    %3309 = vmatprep.subr.bf16.mxu0 0
    %3310 = vmatpush1.bf16.msra.mxu0 0
    %3311 = vmatprep.subr.bf16.mxu0 0
    %3312 = vmatpush1.bf16.msra.mxu0 0
    %3313 = vmatprep.subr.bf16.mxu0 0
    %3314 = vmatpush1.bf16.msra.mxu0 0
    %3315 = vmatprep.mubr.bf16.mxu0 0
    %3316 = vmatmul.mubr.bf16.gmra.mrb[0].mxu0 %v3096
    %v3317 = vpop.f32.mrb[0].mxu0
    %v3318 = vadd.f32 %v3110, %v3317
    %v3319 = vpop.f32.mrb[0].mxu0
    %v3320 = vpop.f32.mrb[0].mxu0
    %v3321 = vpop.f32.mrb[0].mxu0
    %3322 = vdwg.mxu0
    %v3323 = vld [vmem:[#allocation7 + $0x240] sm:$0xff]
    %v3324 = vld [vmem:[#allocation7 + $0x248] sm:$0xf]
    %v3325 = vld [vmem:[#allocation7 + $0x24c] sm:$0xff]
    %v3326 = vld [vmem:[#allocation7 + $0x254] sm:$0xf]
    %v3327 = vld [vmem:[#allocation7 + $0x258] sm:$0xff]
    %v3328 = vld [vmem:[#allocation7 + $0x260] sm:$0xf]
    %v3329 = vld [vmem:[#allocation7 + $0x264] sm:$0xff]
    %v3330 = vld [vmem:[#allocation7 + $0x26c] sm:$0xf]
    %v3331 = vld [vmem:[#allocation7 + $0x270] sm:$0xff]
    %v3332 = vld [vmem:[#allocation7 + $0x278] sm:$0xf]
    %v3333 = vld [vmem:[#allocation7 + $0x27c] sm:$0xff]
    %v3334 = vld [vmem:[#allocation7 + $0x284] sm:$0xf]
    %v3335 = vld [vmem:[#allocation7 + $0x288] sm:$0xff]
    %v3336 = vld [vmem:[#allocation7 + $0x290] sm:$0xf]
    %v3337 = vld [vmem:[#allocation7 + $0x294] sm:$0xff]
    %v3338 = vld [vmem:[#allocation7 + $0x29c] sm:$0xf]
    %v3339 = vld [vmem:[#allocation7 + $0x2a0] sm:$0xff]
    %v3340 = vld [vmem:[#allocation7 + $0x2a8] sm:$0xf]
    %v3341 = vld [vmem:[#allocation7 + $0x2ac] sm:$0xff]
    %v3342 = vld [vmem:[#allocation7 + $0x2b4] sm:$0xf]
    %v3343 = vld [vmem:[#allocation7 + $0x2b8] sm:$0xff]
    %v3344 = vld [vmem:[#allocation7 + $0x2c0] sm:$0xf]
    %v3345 = vld [vmem:[#allocation7 + $0x2c4] sm:$0xff]
    %v3346 = vld [vmem:[#allocation7 + $0x2cc] sm:$0xf]
    %v3347 = vld [vmem:[#allocation7 + $0x2d0] sm:$0xff]
    %v3348 = vld [vmem:[#allocation7 + $0x2d8] sm:$0xf]
    %v3349 = vld [vmem:[#allocation7 + $0x2dc] sm:$0xff]
    %v3350 = vld [vmem:[#allocation7 + $0x2e4] sm:$0xf]
    %v3351 = vld [vmem:[#allocation7 + $0x2e8] sm:$0xff]
    %v3352 = vld [vmem:[#allocation7 + $0x2f0] sm:$0xf]
    %v3353 = vld [vmem:[#allocation7 + $0x2f4] sm:$0xff]
    %v3354 = vld [vmem:[#allocation7 + $0x2fc] sm:$0xf]
    %v3355 = vld [vmem:[%s1599] ss:$8 sm:$0x7]
    %v3357 = vlaneseq
    %v3358 = vshrl.u32 %v3357, 7
    %v3359 = vsub.s32 0, %v3358
    %v3360 = vrot.slane %v3355, %v3359
    %v3361 = vlaneseq
    %v3362 = vshrl.u32 %v3361, 7
    %v3363 = vsub.s32 1, %v3362
    %v3364 = vrot.slane %v3355, %v3363
    %v3365 = vlaneseq
    %v3366 = vshrl.u32 %v3365, 7
    %v3367 = vsub.s32 2, %v3366
    %v3368 = vrot.slane %v3355, %v3367
    %v3404 = vunpack.c.l.b16 %v3323
    %v3405 = vunpack.c.h.b16 %v3323
    %v3406 = vunpack.c.l.b16 %v3324
    %v3407 = vunpack.c.l.b16 %v3325
    %v3408 = vunpack.c.h.b16 %v3325
    %v3409 = vunpack.c.l.b16 %v3326
    %v3410 = vunpack.c.l.b16 %v3327
    %v3411 = vunpack.c.h.b16 %v3327
    %v3412 = vunpack.c.l.b16 %v3328
    %v3413 = vunpack.c.l.b16 %v3329
    %v3414 = vunpack.c.h.b16 %v3329
    %v3415 = vunpack.c.l.b16 %v3330
    %v3416 = vunpack.c.l.b16 %v3331
    %v3417 = vunpack.c.h.b16 %v3331
    %v3418 = vunpack.c.l.b16 %v3332
    %v3419 = vunpack.c.l.b16 %v3333
    %v3420 = vunpack.c.h.b16 %v3333
    %v3421 = vunpack.c.l.b16 %v3334
    %v3422 = vunpack.c.l.b16 %v3335
    %v3423 = vunpack.c.h.b16 %v3335
    %v3424 = vunpack.c.l.b16 %v3336
    %v3425 = vunpack.c.l.b16 %v3337
    %v3426 = vunpack.c.h.b16 %v3337
    %v3427 = vunpack.c.l.b16 %v3338
    %v3428 = vunpack.c.l.b16 %v3339
    %v3429 = vunpack.c.h.b16 %v3339
    %v3430 = vunpack.c.l.b16 %v3340
    %v3431 = vunpack.c.l.b16 %v3341
    %v3432 = vunpack.c.h.b16 %v3341
    %v3433 = vunpack.c.l.b16 %v3342
    %v3434 = vunpack.c.l.b16 %v3343
    %v3435 = vunpack.c.h.b16 %v3343
    %v3436 = vunpack.c.l.b16 %v3344
    %v3437 = vunpack.c.l.b16 %v3345
    %v3438 = vunpack.c.h.b16 %v3345
    %v3439 = vunpack.c.l.b16 %v3346
    %v3440 = vunpack.c.l.b16 %v3347
    %v3441 = vunpack.c.h.b16 %v3347
    %v3442 = vunpack.c.l.b16 %v3348
    %v3443 = vunpack.c.l.b16 %v3349
    %v3444 = vunpack.c.h.b16 %v3349
    %v3445 = vunpack.c.l.b16 %v3350
    %v3446 = vunpack.c.l.b16 %v3351
    %v3447 = vunpack.c.h.b16 %v3351
    %v3448 = vunpack.c.l.b16 %v3352
    %v3449 = vunpack.c.l.b16 %v3353
    %v3450 = vunpack.c.h.b16 %v3353
    %v3451 = vunpack.c.l.b16 %v3354
    %v3452 = vpack.c.b16 %v3407, %v3404
    %v3453 = vpack.c.b16 %v3408, %v3405
    %v3454 = vpack.c.b16 %v3409, %v3406
    %v3455 = vpack.c.b16 %v3413, %v3410
    %v3456 = vpack.c.b16 %v3414, %v3411
    %v3457 = vpack.c.b16 %v3415, %v3412
    %v3458 = vpack.c.b16 %v3419, %v3416
    %v3459 = vpack.c.b16 %v3420, %v3417
    %v3460 = vpack.c.b16 %v3421, %v3418
    %v3461 = vpack.c.b16 %v3425, %v3422
    %v3462 = vpack.c.b16 %v3426, %v3423
    %v3463 = vpack.c.b16 %v3427, %v3424
    %v3464 = vpack.c.b16 %v3431, %v3428
    %v3465 = vpack.c.b16 %v3432, %v3429
    %v3466 = vpack.c.b16 %v3433, %v3430
    %v3467 = vpack.c.b16 %v3437, %v3434
    %v3468 = vpack.c.b16 %v3438, %v3435
    %v3469 = vpack.c.b16 %v3439, %v3436
    %v3470 = vpack.c.b16 %v3443, %v3440
    %v3471 = vpack.c.b16 %v3444, %v3441
    %v3472 = vpack.c.b16 %v3445, %v3442
    %v3473 = vpack.c.b16 %v3449, %v3446
    %v3474 = vpack.c.b16 %v3450, %v3447
    %v3475 = vpack.c.b16 %v3451, %v3448
    %3500 = vmatprep.subr.bf16.mxu0 %v3453
    %3501 = vmatpush1.bf16.msra.mxu0 %v3452
    %3502 = vmatprep.subr.bf16.mxu0 %v3456
    %3503 = vmatpush1.bf16.msra.mxu0 %v3455
    %3504 = vmatprep.subr.bf16.mxu0 %v3459
    %3505 = vmatpush1.bf16.msra.mxu0 %v3458
    %3506 = vmatprep.subr.bf16.mxu0 %v3462
    %3507 = vmatpush1.bf16.msra.mxu0 %v3461
    %3508 = vmatprep.subr.bf16.mxu0 %v3465
    %3509 = vmatpush1.bf16.msra.mxu0 %v3464
    %3510 = vmatprep.subr.bf16.mxu0 %v3468
    %3511 = vmatpush1.bf16.msra.mxu0 %v3467
    %3512 = vmatprep.subr.bf16.mxu0 %v3471
    %3513 = vmatpush1.bf16.msra.mxu0 %v3470
    %3514 = vmatprep.subr.bf16.mxu0 %v3474
    %3515 = vmatpush1.bf16.msra.mxu0 %v3473
    %3516 = vmatprep.subr.bf16.mxu0 0
    %3517 = vmatpush1.bf16.msra.mxu0 0
    %3518 = vmatprep.subr.bf16.mxu0 0
    %3519 = vmatpush1.bf16.msra.mxu0 0
    %3520 = vmatprep.subr.bf16.mxu0 0
    %3521 = vmatpush1.bf16.msra.mxu0 0
    %3522 = vmatprep.subr.bf16.mxu0 0
    %3523 = vmatpush1.bf16.msra.mxu0 0
    %3524 = vmatprep.subr.bf16.mxu0 0
    %3525 = vmatpush1.bf16.msra.mxu0 0
    %3526 = vmatprep.subr.bf16.mxu0 0
    %3527 = vmatpush1.bf16.msra.mxu0 0
    %3528 = vmatprep.subr.bf16.mxu0 0
    %3529 = vmatpush1.bf16.msra.mxu0 0
    %3530 = vmatprep.subr.bf16.mxu0 0
    %3531 = vmatpush1.bf16.msra.mxu0 0
    %3532 = vmatprep.mubr.bf16.mxu0 0
    %3533 = vmatmul.mubr.bf16.gmra.mrb[0].mxu0 %v1846
    %v3534 = vpop.f32.mrb[0].mxu0
    %v3535 = vadd.f32 %v3360, %v3534
    %v3536 = vpop.f32.mrb[0].mxu0
    %v3537 = vadd.f32 %v3364, %v3536
    %v3538 = vpop.f32.mrb[0].mxu0
    %v3539 = vpop.f32.mrb[0].mxu0
    %3540 = vdwg.mxu0
    %3541 = vmatprep.subr.bf16.mxu0 0
    %3542 = vmatpush1.bf16.msra.mxu0 %v3454
    %3543 = vmatprep.subr.bf16.mxu0 0
    %3544 = vmatpush1.bf16.msra.mxu0 %v3457
    %3545 = vmatprep.subr.bf16.mxu0 0
    %3546 = vmatpush1.bf16.msra.mxu0 %v3460
    %3547 = vmatprep.subr.bf16.mxu0 0
    %3548 = vmatpush1.bf16.msra.mxu0 %v3463
    %3549 = vmatprep.subr.bf16.mxu0 0
    %3550 = vmatpush1.bf16.msra.mxu0 %v3466
    %3551 = vmatprep.subr.bf16.mxu0 0
    %3552 = vmatpush1.bf16.msra.mxu0 %v3469
    %3553 = vmatprep.subr.bf16.mxu0 0
    %3554 = vmatpush1.bf16.msra.mxu0 %v3472
    %3555 = vmatprep.subr.bf16.mxu0 0
    %3556 = vmatpush1.bf16.msra.mxu0 %v3475
    %3557 = vmatprep.subr.bf16.mxu0 0
    %3558 = vmatpush1.bf16.msra.mxu0 0
    %3559 = vmatprep.subr.bf16.mxu0 0
    %3560 = vmatpush1.bf16.msra.mxu0 0
    %3561 = vmatprep.subr.bf16.mxu0 0
    %3562 = vmatpush1.bf16.msra.mxu0 0
    %3563 = vmatprep.subr.bf16.mxu0 0
    %3564 = vmatpush1.bf16.msra.mxu0 0
    %3565 = vmatprep.subr.bf16.mxu0 0
    %3566 = vmatpush1.bf16.msra.mxu0 0
    %3567 = vmatprep.subr.bf16.mxu0 0
    %3568 = vmatpush1.bf16.msra.mxu0 0
    %3569 = vmatprep.subr.bf16.mxu0 0
    %3570 = vmatpush1.bf16.msra.mxu0 0
    %3571 = vmatprep.subr.bf16.mxu0 0
    %3572 = vmatpush1.bf16.msra.mxu0 0
    %3573 = vmatprep.mubr.bf16.mxu0 0
    %3574 = vmatmul.mubr.bf16.gmra.mrb[0].mxu0 %v1846
    %v3575 = vpop.f32.mrb[0].mxu0
    %v3576 = vadd.f32 %v3368, %v3575
    %v3577 = vpop.f32.mrb[0].mxu0
    %v3578 = vpop.f32.mrb[0].mxu0
    %v3579 = vpop.f32.mrb[0].mxu0
    %3580 = vdwg.mxu0
    %v3581 = vadd.f32 %v3277, %v3535
    %v3582 = vxor.u32 %v3581, 2147483648
    %v3583 = vmul.f32 %v3582, 1.442695
    %v3584 = vpow.pop %v3583
    %v3585 = vadd.f32 %v3584, 1.0
    %v3586 = vrcp.pop %v3585
    %v3587 = vmul.f32 1.0, %v3586
    %v3588 = vadd.f32 %v3279, %v3537
    %v3589 = vxor.u32 %v3588, 2147483648
    %v3590 = vmul.f32 %v3589, 1.442695
    %v3591 = vpow.pop %v3590
    %v3592 = vadd.f32 %v3591, 1.0
    %v3593 = vrcp.pop %v3592
    %v3594 = vmul.f32 1.0, %v3593
    %v3595 = vmul.f32 %v3587, %v3576
    %v3596 = vadd.f32 %v3318, %v3595
    %v3597 = vtanh.pop %v3596
    %v3598 = vsub.f32 %v1845, %v3597
    %v3599 = vmul.f32 %v3594, %v3598
    %v3600 = vadd.f32 %v3597, %v3599
    %v3601 = vpack.c.bf16 %v3600, %v3600
    %v3603 = vsel %vm83, %v3601, 0
    %3605 = vmatprep.subr.bf16.mxu0 0
    %3606 = vmatpush1.bf16.msra.mxu0 %v3603
    %3607 = vmatprep.subr.bf16.mxu0 0
    %3608 = vmatpush1.bf16.msra.mxu0 0
    %3609 = vmatprep.subr.bf16.mxu0 0
    %3610 = vmatpush1.bf16.msra.mxu0 0
    %3611 = vmatprep.subr.bf16.mxu0 0
    %3612 = vmatpush1.bf16.msra.mxu0 0
    %3613 = vmatprep.subr.bf16.mxu0 0
    %3614 = vmatpush1.bf16.msra.mxu0 0
    %3615 = vmatprep.subr.bf16.mxu0 0
    %3616 = vmatpush1.bf16.msra.mxu0 0
    %3617 = vmatprep.subr.bf16.mxu0 0
    %3618 = vmatpush1.bf16.msra.mxu0 0
    %3619 = vmatprep.subr.bf16.mxu0 0
    %3620 = vmatpush1.bf16.msra.mxu0 0
    %3621 = vmatprep.subr.bf16.mxu0 0
    %3622 = vmatpush1.bf16.msra.mxu0 0
    %3623 = vmatprep.subr.bf16.mxu0 0
    %3624 = vmatpush1.bf16.msra.mxu0 0
    %3625 = vmatprep.subr.bf16.mxu0 0
    %3626 = vmatpush1.bf16.msra.mxu0 0
    %3627 = vmatprep.subr.bf16.mxu0 0
    %3628 = vmatpush1.bf16.msra.mxu0 0
    %3629 = vmatprep.subr.bf16.mxu0 0
    %3630 = vmatpush1.bf16.msra.mxu0 0
    %3631 = vmatprep.subr.bf16.mxu0 0
    %3632 = vmatpush1.bf16.msra.mxu0 0
    %3633 = vmatprep.subr.bf16.mxu0 0
    %3634 = vmatpush1.bf16.msra.mxu0 0
    %3635 = vmatprep.subr.bf16.mxu0 0
    %3636 = vmatpush1.bf16.msra.mxu0 0
    %3637 = vmatprep.mubr.bf16.mxu0 0
    %3638 = vmatmul.mubr.bf16.gmra.mrb[0].mxu0 %v78
    %v3639 = vpop.f32.mrb[0].mxu0
    %v3640 = vadd.f32 0.0, %v3639
    %v3641 = vpop.f32.mrb[0].mxu0
    %v3642 = vpop.f32.mrb[0].mxu0
    %v3643 = vadd.f32 0.0, %v3642
    %v3644 = vpop.f32.mrb[0].mxu0
    %3645 = vmatprep.mubr.bf16.mxu0 0
    %3646 = vmatmul.mubr.bf16.gmra.mrb[0].mxu0 %v81
    %v3647 = vpop.f32.mrb[0].mxu0
    %v3648 = vadd.f32 0.0, %v3647
    %v3649 = vpop.f32.mrb[0].mxu0
    %v3650 = vpop.f32.mrb[0].mxu0
    %v3651 = vpop.f32.mrb[0].mxu0
    %3652 = vdwg.mxu0
    %v3653 = vld [vmem:[#allocation7] sm:$0xff]
    %v3654 = vld [vmem:[#allocation7 + $0x8] sm:$0xf]
    %v3655 = vld [vmem:[#allocation7 + $0xc] sm:$0xff]
    %v3656 = vld [vmem:[#allocation7 + $0x14] sm:$0xf]
    %v3657 = vld [vmem:[#allocation7 + $0x18] sm:$0xff]
    %v3658 = vld [vmem:[#allocation7 + $0x20] sm:$0xf]
    %v3659 = vld [vmem:[#allocation7 + $0x24] sm:$0xff]
    %v3660 = vld [vmem:[#allocation7 + $0x2c] sm:$0xf]
    %v3661 = vld [vmem:[#allocation7 + $0x30] sm:$0xff]
    %v3662 = vld [vmem:[#allocation7 + $0x38] sm:$0xf]
    %v3663 = vld [vmem:[#allocation7 + $0x3c] sm:$0xff]
    %v3664 = vld [vmem:[#allocation7 + $0x44] sm:$0xf]
    %v3665 = vld [vmem:[#allocation7 + $0x48] sm:$0xff]
    %v3666 = vld [vmem:[#allocation7 + $0x50] sm:$0xf]
    %v3667 = vld [vmem:[#allocation7 + $0x54] sm:$0xff]
    %v3668 = vld [vmem:[#allocation7 + $0x5c] sm:$0xf]
    %v3669 = vld [vmem:[#allocation7 + $0x60] sm:$0xff]
    %v3670 = vld [vmem:[#allocation7 + $0x68] sm:$0xf]
    %v3671 = vld [vmem:[#allocation7 + $0x6c] sm:$0xff]
    %v3672 = vld [vmem:[#allocation7 + $0x74] sm:$0xf]
    %v3673 = vld [vmem:[#allocation7 + $0x78] sm:$0xff]
    %v3674 = vld [vmem:[#allocation7 + $0x80] sm:$0xf]
    %v3675 = vld [vmem:[#allocation7 + $0x84] sm:$0xff]
    %v3676 = vld [vmem:[#allocation7 + $0x8c] sm:$0xf]
    %v3677 = vld [vmem:[#allocation7 + $0x90] sm:$0xff]
    %v3678 = vld [vmem:[#allocation7 + $0x98] sm:$0xf]
    %v3679 = vld [vmem:[#allocation7 + $0x9c] sm:$0xff]
    %v3680 = vld [vmem:[#allocation7 + $0xa4] sm:$0xf]
    %v3681 = vld [vmem:[#allocation7 + $0xa8] sm:$0xff]
    %v3682 = vld [vmem:[#allocation7 + $0xb0] sm:$0xf]
    %v3683 = vld [vmem:[#allocation7 + $0xb4] sm:$0xff]
    %v3684 = vld [vmem:[#allocation7 + $0xbc] sm:$0xf]
    %v3685 = vpack.c.bf16 %v3643, %v3640
    %v3686 = vpack.c.bf16 %v3648, %v3648
    %v3687 = vld [vmem:[%s5] ss:$8 sm:$0x7]
    %v3689 = vlaneseq
    %v3690 = vshrl.u32 %v3689, 7
    %v3691 = vsub.s32 0, %v3690
    %v3692 = vrot.slane %v3687, %v3691
    %v3693 = vlaneseq
    %v3694 = vshrl.u32 %v3693, 7
    %v3695 = vsub.s32 1, %v3694
    %v3696 = vrot.slane %v3687, %v3695
    %v3697 = vlaneseq
    %v3698 = vshrl.u32 %v3697, 7
    %v3699 = vsub.s32 2, %v3698
    %v3700 = vrot.slane %v3687, %v3699
    %v3736 = vunpack.c.l.b16 %v3653
    %v3737 = vunpack.c.h.b16 %v3653
    %v3738 = vunpack.c.l.b16 %v3654
    %v3739 = vunpack.c.l.b16 %v3655
    %v3740 = vunpack.c.h.b16 %v3655
    %v3741 = vunpack.c.l.b16 %v3656
    %v3742 = vunpack.c.l.b16 %v3657
    %v3743 = vunpack.c.h.b16 %v3657
    %v3744 = vunpack.c.l.b16 %v3658
    %v3745 = vunpack.c.l.b16 %v3659
    %v3746 = vunpack.c.h.b16 %v3659
    %v3747 = vunpack.c.l.b16 %v3660
    %v3748 = vunpack.c.l.b16 %v3661
    %v3749 = vunpack.c.h.b16 %v3661
    %v3750 = vunpack.c.l.b16 %v3662
    %v3751 = vunpack.c.l.b16 %v3663
    %v3752 = vunpack.c.h.b16 %v3663
    %v3753 = vunpack.c.l.b16 %v3664
    %v3754 = vunpack.c.l.b16 %v3665
    %v3755 = vunpack.c.h.b16 %v3665
    %v3756 = vunpack.c.l.b16 %v3666
    %v3757 = vunpack.c.l.b16 %v3667
    %v3758 = vunpack.c.h.b16 %v3667
    %v3759 = vunpack.c.l.b16 %v3668
    %v3760 = vunpack.c.l.b16 %v3669
    %v3761 = vunpack.c.h.b16 %v3669
    %v3762 = vunpack.c.l.b16 %v3670
    %v3763 = vunpack.c.l.b16 %v3671
    %v3764 = vunpack.c.h.b16 %v3671
    %v3765 = vunpack.c.l.b16 %v3672
    %v3766 = vunpack.c.l.b16 %v3673
    %v3767 = vunpack.c.h.b16 %v3673
    %v3768 = vunpack.c.l.b16 %v3674
    %v3769 = vunpack.c.l.b16 %v3675
    %v3770 = vunpack.c.h.b16 %v3675
    %v3771 = vunpack.c.l.b16 %v3676
    %v3772 = vunpack.c.l.b16 %v3677
    %v3773 = vunpack.c.h.b16 %v3677
    %v3774 = vunpack.c.l.b16 %v3678
    %v3775 = vunpack.c.l.b16 %v3679
    %v3776 = vunpack.c.h.b16 %v3679
    %v3777 = vunpack.c.l.b16 %v3680
    %v3778 = vunpack.c.l.b16 %v3681
    %v3779 = vunpack.c.h.b16 %v3681
    %v3780 = vunpack.c.l.b16 %v3682
    %v3781 = vunpack.c.l.b16 %v3683
    %v3782 = vunpack.c.h.b16 %v3683
    %v3783 = vunpack.c.l.b16 %v3684
    %v3784 = vpack.c.b16 %v3739, %v3736
    %v3785 = vpack.c.b16 %v3740, %v3737
    %v3786 = vpack.c.b16 %v3741, %v3738
    %v3787 = vpack.c.b16 %v3745, %v3742
    %v3788 = vpack.c.b16 %v3746, %v3743
    %v3789 = vpack.c.b16 %v3747, %v3744
    %v3790 = vpack.c.b16 %v3751, %v3748
    %v3791 = vpack.c.b16 %v3752, %v3749
    %v3792 = vpack.c.b16 %v3753, %v3750
    %v3793 = vpack.c.b16 %v3757, %v3754
    %v3794 = vpack.c.b16 %v3758, %v3755
    %v3795 = vpack.c.b16 %v3759, %v3756
    %v3796 = vpack.c.b16 %v3763, %v3760
    %v3797 = vpack.c.b16 %v3764, %v3761
    %v3798 = vpack.c.b16 %v3765, %v3762
    %v3799 = vpack.c.b16 %v3769, %v3766
    %v3800 = vpack.c.b16 %v3770, %v3767
    %v3801 = vpack.c.b16 %v3771, %v3768
    %v3802 = vpack.c.b16 %v3775, %v3772
    %v3803 = vpack.c.b16 %v3776, %v3773
    %v3804 = vpack.c.b16 %v3777, %v3774
    %v3805 = vpack.c.b16 %v3781, %v3778
    %v3806 = vpack.c.b16 %v3782, %v3779
    %v3807 = vpack.c.b16 %v3783, %v3780
    %3832 = vmatprep.subr.bf16.mxu0 %v3785
    %3833 = vmatpush1.bf16.msra.mxu0 %v3784
    %3834 = vmatprep.subr.bf16.mxu0 %v3788
    %3835 = vmatpush1.bf16.msra.mxu0 %v3787
    %3836 = vmatprep.subr.bf16.mxu0 %v3791
    %3837 = vmatpush1.bf16.msra.mxu0 %v3790
    %3838 = vmatprep.subr.bf16.mxu0 %v3794
    %3839 = vmatpush1.bf16.msra.mxu0 %v3793
    %3840 = vmatprep.subr.bf16.mxu0 %v3797
    %3841 = vmatpush1.bf16.msra.mxu0 %v3796
    %3842 = vmatprep.subr.bf16.mxu0 %v3800
    %3843 = vmatpush1.bf16.msra.mxu0 %v3799
    %3844 = vmatprep.subr.bf16.mxu0 %v3803
    %3845 = vmatpush1.bf16.msra.mxu0 %v3802
    %3846 = vmatprep.subr.bf16.mxu0 %v3806
    %3847 = vmatpush1.bf16.msra.mxu0 %v3805
    %3848 = vmatprep.subr.bf16.mxu0 0
    %3849 = vmatpush1.bf16.msra.mxu0 0
    %3850 = vmatprep.subr.bf16.mxu0 0
    %3851 = vmatpush1.bf16.msra.mxu0 0
    %3852 = vmatprep.subr.bf16.mxu0 0
    %3853 = vmatpush1.bf16.msra.mxu0 0
    %3854 = vmatprep.subr.bf16.mxu0 0
    %3855 = vmatpush1.bf16.msra.mxu0 0
    %3856 = vmatprep.subr.bf16.mxu0 0
    %3857 = vmatpush1.bf16.msra.mxu0 0
    %3858 = vmatprep.subr.bf16.mxu0 0
    %3859 = vmatpush1.bf16.msra.mxu0 0
    %3860 = vmatprep.subr.bf16.mxu0 0
    %3861 = vmatpush1.bf16.msra.mxu0 0
    %3862 = vmatprep.subr.bf16.mxu0 0
    %3863 = vmatpush1.bf16.msra.mxu0 0
    %3864 = vmatprep.mubr.bf16.mxu0 0
    %3865 = vmatmul.mubr.bf16.gmra.mrb[0].mxu0 %v3685
    %v3866 = vpop.f32.mrb[0].mxu0
    %v3867 = vadd.f32 %v3692, %v3866
    %v3868 = vpop.f32.mrb[0].mxu0
    %v3869 = vadd.f32 %v3696, %v3868
    %v3870 = vpop.f32.mrb[0].mxu0
    %v3871 = vadd.f32 %v3692, %v3870
    %v3872 = vpop.f32.mrb[0].mxu0
    %v3873 = vadd.f32 %v3696, %v3872
    %3874 = vmatprep.mubr.bf16.mxu0 0
    %3875 = vmatmul.mubr.bf16.gmra.mrb[0].mxu0 %v3686
    %v3876 = vpop.f32.mrb[0].mxu0
    %v3877 = vadd.f32 %v3692, %v3876
    %v3878 = vpop.f32.mrb[0].mxu0
    %v3879 = vadd.f32 %v3696, %v3878
    %v3880 = vpop.f32.mrb[0].mxu0
    %v3881 = vpop.f32.mrb[0].mxu0
    %3882 = vdwg.mxu0
    %3883 = vmatprep.subr.bf16.mxu0 0
    %3884 = vmatpush1.bf16.msra.mxu0 %v3786
    %3885 = vmatprep.subr.bf16.mxu0 0
    %3886 = vmatpush1.bf16.msra.mxu0 %v3789
    %3887 = vmatprep.subr.bf16.mxu0 0
    %3888 = vmatpush1.bf16.msra.mxu0 %v3792
    %3889 = vmatprep.subr.bf16.mxu0 0
    %3890 = vmatpush1.bf16.msra.mxu0 %v3795
    %3891 = vmatprep.subr.bf16.mxu0 0
    %3892 = vmatpush1.bf16.msra.mxu0 %v3798
    %3893 = vmatprep.subr.bf16.mxu0 0
    %3894 = vmatpush1.bf16.msra.mxu0 %v3801
    %3895 = vmatprep.subr.bf16.mxu0 0
    %3896 = vmatpush1.bf16.msra.mxu0 %v3804
    %3897 = vmatprep.subr.bf16.mxu0 0
    %3898 = vmatpush1.bf16.msra.mxu0 %v3807
    %3899 = vmatprep.subr.bf16.mxu0 0
    %3900 = vmatpush1.bf16.msra.mxu0 0
    %3901 = vmatprep.subr.bf16.mxu0 0
    %3902 = vmatpush1.bf16.msra.mxu0 0
    %3903 = vmatprep.subr.bf16.mxu0 0
    %3904 = vmatpush1.bf16.msra.mxu0 0
    %3905 = vmatprep.subr.bf16.mxu0 0
    %3906 = vmatpush1.bf16.msra.mxu0 0
    %3907 = vmatprep.subr.bf16.mxu0 0
    %3908 = vmatpush1.bf16.msra.mxu0 0
    %3909 = vmatprep.subr.bf16.mxu0 0
    %3910 = vmatpush1.bf16.msra.mxu0 0
    %3911 = vmatprep.subr.bf16.mxu0 0
    %3912 = vmatpush1.bf16.msra.mxu0 0
    %3913 = vmatprep.subr.bf16.mxu0 0
    %3914 = vmatpush1.bf16.msra.mxu0 0
    %3915 = vmatprep.mubr.bf16.mxu0 0
    %3916 = vmatmul.mubr.bf16.gmra.mrb[0].mxu0 %v3685
    %v3917 = vpop.f32.mrb[0].mxu0
    %v3918 = vadd.f32 %v3700, %v3917
    %v3919 = vpop.f32.mrb[0].mxu0
    %v3920 = vpop.f32.mrb[0].mxu0
    %v3921 = vadd.f32 %v3700, %v3920
    %v3922 = vpop.f32.mrb[0].mxu0
    %3923 = vmatprep.mubr.bf16.mxu0 0
    %3924 = vmatmul.mubr.bf16.gmra.mrb[0].mxu0 %v3686
    %v3925 = vpop.f32.mrb[0].mxu0
    %v3926 = vadd.f32 %v3700, %v3925
    %v3927 = vpop.f32.mrb[0].mxu0
    %v3928 = vpop.f32.mrb[0].mxu0
    %v3929 = vpop.f32.mrb[0].mxu0
    %3930 = vdwg.mxu0
    %v3931 = vld [vmem:[#allocation7 + $0xc0] sm:$0xff]
    %v3932 = vld [vmem:[#allocation7 + $0xc8] sm:$0xf]
    %v3933 = vld [vmem:[#allocation7 + $0xcc] sm:$0xff]
    %v3934 = vld [vmem:[#allocation7 + $0xd4] sm:$0xf]
    %v3935 = vld [vmem:[#allocation7 + $0xd8] sm:$0xff]
    %v3936 = vld [vmem:[#allocation7 + $0xe0] sm:$0xf]
    %v3937 = vld [vmem:[#allocation7 + $0xe4] sm:$0xff]
    %v3938 = vld [vmem:[#allocation7 + $0xec] sm:$0xf]
    %v3939 = vld [vmem:[#allocation7 + $0xf0] sm:$0xff]
    %v3940 = vld [vmem:[#allocation7 + $0xf8] sm:$0xf]
    %v3941 = vld [vmem:[#allocation7 + $0xfc] sm:$0xff]
    %v3942 = vld [vmem:[#allocation7 + $0x104] sm:$0xf]
    %v3943 = vld [vmem:[#allocation7 + $0x108] sm:$0xff]
    %v3944 = vld [vmem:[#allocation7 + $0x110] sm:$0xf]
    %v3945 = vld [vmem:[#allocation7 + $0x114] sm:$0xff]
    %v3946 = vld [vmem:[#allocation7 + $0x11c] sm:$0xf]
    %v3947 = vld [vmem:[#allocation7 + $0x120] sm:$0xff]
    %v3948 = vld [vmem:[#allocation7 + $0x128] sm:$0xf]
    %v3949 = vld [vmem:[#allocation7 + $0x12c] sm:$0xff]
    %v3950 = vld [vmem:[#allocation7 + $0x134] sm:$0xf]
    %v3951 = vld [vmem:[#allocation7 + $0x138] sm:$0xff]
    %v3952 = vld [vmem:[#allocation7 + $0x140] sm:$0xf]
    %v3953 = vld [vmem:[#allocation7 + $0x144] sm:$0xff]
    %v3954 = vld [vmem:[#allocation7 + $0x14c] sm:$0xf]
    %v3955 = vld [vmem:[#allocation7 + $0x150] sm:$0xff]
    %v3956 = vld [vmem:[#allocation7 + $0x158] sm:$0xf]
    %v3957 = vld [vmem:[#allocation7 + $0x15c] sm:$0xff]
    %v3958 = vld [vmem:[#allocation7 + $0x164] sm:$0xf]
    %v3959 = vld [vmem:[#allocation7 + $0x168] sm:$0xff]
    %v3960 = vld [vmem:[#allocation7 + $0x170] sm:$0xf]
    %v3961 = vld [vmem:[#allocation7 + $0x174] sm:$0xff]
    %v3962 = vld [vmem:[#allocation7 + $0x17c] sm:$0xf]
    %v3963 = vpack.c.bf16 %v3014, %v3014
    %v3964 = vld [vmem:[%s446] ss:$8 sm:$0x7]
    %v3966 = vlaneseq
    %v3967 = vshrl.u32 %v3966, 7
    %v3968 = vsub.s32 0, %v3967
    %v3969 = vrot.slane %v3964, %v3968
    %v3970 = vlaneseq
    %v3971 = vshrl.u32 %v3970, 7
    %v3972 = vsub.s32 1, %v3971
    %v3973 = vrot.slane %v3964, %v3972
    %v3974 = vlaneseq
    %v3975 = vshrl.u32 %v3974, 7
    %v3976 = vsub.s32 2, %v3975
    %v3977 = vrot.slane %v3964, %v3976
    %v4013 = vunpack.c.l.b16 %v3931
    %v4014 = vunpack.c.h.b16 %v3931
    %v4015 = vunpack.c.l.b16 %v3932
    %v4016 = vunpack.c.l.b16 %v3933
    %v4017 = vunpack.c.h.b16 %v3933
    %v4018 = vunpack.c.l.b16 %v3934
    %v4019 = vunpack.c.l.b16 %v3935
    %v4020 = vunpack.c.h.b16 %v3935
    %v4021 = vunpack.c.l.b16 %v3936
    %v4022 = vunpack.c.l.b16 %v3937
    %v4023 = vunpack.c.h.b16 %v3937
    %v4024 = vunpack.c.l.b16 %v3938
    %v4025 = vunpack.c.l.b16 %v3939
    %v4026 = vunpack.c.h.b16 %v3939
    %v4027 = vunpack.c.l.b16 %v3940
    %v4028 = vunpack.c.l.b16 %v3941
    %v4029 = vunpack.c.h.b16 %v3941
    %v4030 = vunpack.c.l.b16 %v3942
    %v4031 = vunpack.c.l.b16 %v3943
    %v4032 = vunpack.c.h.b16 %v3943
    %v4033 = vunpack.c.l.b16 %v3944
    %v4034 = vunpack.c.l.b16 %v3945
    %v4035 = vunpack.c.h.b16 %v3945
    %v4036 = vunpack.c.l.b16 %v3946
    %v4037 = vunpack.c.l.b16 %v3947
    %v4038 = vunpack.c.h.b16 %v3947
    %v4039 = vunpack.c.l.b16 %v3948
    %v4040 = vunpack.c.l.b16 %v3949
    %v4041 = vunpack.c.h.b16 %v3949
    %v4042 = vunpack.c.l.b16 %v3950
    %v4043 = vunpack.c.l.b16 %v3951
    %v4044 = vunpack.c.h.b16 %v3951
    %v4045 = vunpack.c.l.b16 %v3952
    %v4046 = vunpack.c.l.b16 %v3953
    %v4047 = vunpack.c.h.b16 %v3953
    %v4048 = vunpack.c.l.b16 %v3954
    %v4049 = vunpack.c.l.b16 %v3955
    %v4050 = vunpack.c.h.b16 %v3955
    %v4051 = vunpack.c.l.b16 %v3956
    %v4052 = vunpack.c.l.b16 %v3957
    %v4053 = vunpack.c.h.b16 %v3957
    %v4054 = vunpack.c.l.b16 %v3958
    %v4055 = vunpack.c.l.b16 %v3959
    %v4056 = vunpack.c.h.b16 %v3959
    %v4057 = vunpack.c.l.b16 %v3960
    %v4058 = vunpack.c.l.b16 %v3961
    %v4059 = vunpack.c.h.b16 %v3961
    %v4060 = vunpack.c.l.b16 %v3962
    %v4061 = vpack.c.b16 %v4016, %v4013
    %v4062 = vpack.c.b16 %v4017, %v4014
    %v4063 = vpack.c.b16 %v4018, %v4015
    %v4064 = vpack.c.b16 %v4022, %v4019
    %v4065 = vpack.c.b16 %v4023, %v4020
    %v4066 = vpack.c.b16 %v4024, %v4021
    %v4067 = vpack.c.b16 %v4028, %v4025
    %v4068 = vpack.c.b16 %v4029, %v4026
    %v4069 = vpack.c.b16 %v4030, %v4027
    %v4070 = vpack.c.b16 %v4034, %v4031
    %v4071 = vpack.c.b16 %v4035, %v4032
    %v4072 = vpack.c.b16 %v4036, %v4033
    %v4073 = vpack.c.b16 %v4040, %v4037
    %v4074 = vpack.c.b16 %v4041, %v4038
    %v4075 = vpack.c.b16 %v4042, %v4039
    %v4076 = vpack.c.b16 %v4046, %v4043
    %v4077 = vpack.c.b16 %v4047, %v4044
    %v4078 = vpack.c.b16 %v4048, %v4045
    %v4079 = vpack.c.b16 %v4052, %v4049
    %v4080 = vpack.c.b16 %v4053, %v4050
    %v4081 = vpack.c.b16 %v4054, %v4051
    %v4082 = vpack.c.b16 %v4058, %v4055
    %v4083 = vpack.c.b16 %v4059, %v4056
    %v4084 = vpack.c.b16 %v4060, %v4057
    %4109 = vmatprep.subr.bf16.mxu0 %v4062
    %4110 = vmatpush1.bf16.msra.mxu0 %v4061
    %4111 = vmatprep.subr.bf16.mxu0 %v4065
    %4112 = vmatpush1.bf16.msra.mxu0 %v4064
    %4113 = vmatprep.subr.bf16.mxu0 %v4068
    %4114 = vmatpush1.bf16.msra.mxu0 %v4067
    %4115 = vmatprep.subr.bf16.mxu0 %v4071
    %4116 = vmatpush1.bf16.msra.mxu0 %v4070
    %4117 = vmatprep.subr.bf16.mxu0 %v4074
    %4118 = vmatpush1.bf16.msra.mxu0 %v4073
    %4119 = vmatprep.subr.bf16.mxu0 %v4077
    %4120 = vmatpush1.bf16.msra.mxu0 %v4076
    %4121 = vmatprep.subr.bf16.mxu0 %v4080
    %4122 = vmatpush1.bf16.msra.mxu0 %v4079
    %4123 = vmatprep.subr.bf16.mxu0 %v4083
    %4124 = vmatpush1.bf16.msra.mxu0 %v4082
    %4125 = vmatprep.subr.bf16.mxu0 0
    %4126 = vmatpush1.bf16.msra.mxu0 0
    %4127 = vmatprep.subr.bf16.mxu0 0
    %4128 = vmatpush1.bf16.msra.mxu0 0
    %4129 = vmatprep.subr.bf16.mxu0 0
    %4130 = vmatpush1.bf16.msra.mxu0 0
    %4131 = vmatprep.subr.bf16.mxu0 0
    %4132 = vmatpush1.bf16.msra.mxu0 0
    %4133 = vmatprep.subr.bf16.mxu0 0
    %4134 = vmatpush1.bf16.msra.mxu0 0
    %4135 = vmatprep.subr.bf16.mxu0 0
    %4136 = vmatpush1.bf16.msra.mxu0 0
    %4137 = vmatprep.subr.bf16.mxu0 0
    %4138 = vmatpush1.bf16.msra.mxu0 0
    %4139 = vmatprep.subr.bf16.mxu0 0
    %4140 = vmatpush1.bf16.msra.mxu0 0
    %4141 = vmatprep.mubr.bf16.mxu0 0
    %4142 = vmatmul.mubr.bf16.gmra.mrb[0].mxu0 %v3963
    %v4143 = vpop.f32.mrb[0].mxu0
    %v4144 = vadd.f32 %v3969, %v4143
    %v4145 = vpop.f32.mrb[0].mxu0
    %v4146 = vadd.f32 %v3973, %v4145
    %v4147 = vpop.f32.mrb[0].mxu0
    %v4148 = vpop.f32.mrb[0].mxu0
    %4149 = vdwg.mxu0
    %4150 = vmatprep.subr.bf16.mxu0 0
    %4151 = vmatpush1.bf16.msra.mxu0 %v4063
    %4152 = vmatprep.subr.bf16.mxu0 0
    %4153 = vmatpush1.bf16.msra.mxu0 %v4066
    %4154 = vmatprep.subr.bf16.mxu0 0
    %4155 = vmatpush1.bf16.msra.mxu0 %v4069
    %4156 = vmatprep.subr.bf16.mxu0 0
    %4157 = vmatpush1.bf16.msra.mxu0 %v4072
    %4158 = vmatprep.subr.bf16.mxu0 0
    %4159 = vmatpush1.bf16.msra.mxu0 %v4075
    %4160 = vmatprep.subr.bf16.mxu0 0
    %4161 = vmatpush1.bf16.msra.mxu0 %v4078
    %4162 = vmatprep.subr.bf16.mxu0 0
    %4163 = vmatpush1.bf16.msra.mxu0 %v4081
    %4164 = vmatprep.subr.bf16.mxu0 0
    %4165 = vmatpush1.bf16.msra.mxu0 %v4084
    %4166 = vmatprep.subr.bf16.mxu0 0
    %4167 = vmatpush1.bf16.msra.mxu0 0
    %4168 = vmatprep.subr.bf16.mxu0 0
    %4169 = vmatpush1.bf16.msra.mxu0 0
    %4170 = vmatprep.subr.bf16.mxu0 0
    %4171 = vmatpush1.bf16.msra.mxu0 0
    %4172 = vmatprep.subr.bf16.mxu0 0
    %4173 = vmatpush1.bf16.msra.mxu0 0
    %4174 = vmatprep.subr.bf16.mxu0 0
    %4175 = vmatpush1.bf16.msra.mxu0 0
    %4176 = vmatprep.subr.bf16.mxu0 0
    %4177 = vmatpush1.bf16.msra.mxu0 0
    %4178 = vmatprep.subr.bf16.mxu0 0
    %4179 = vmatpush1.bf16.msra.mxu0 0
    %4180 = vmatprep.subr.bf16.mxu0 0
    %4181 = vmatpush1.bf16.msra.mxu0 0
    %4182 = vmatprep.mubr.bf16.mxu0 0
    %4183 = vmatmul.mubr.bf16.gmra.mrb[0].mxu0 %v3963
    %v4184 = vpop.f32.mrb[0].mxu0
    %v4185 = vadd.f32 %v3977, %v4184
    %v4186 = vpop.f32.mrb[0].mxu0
    %v4187 = vpop.f32.mrb[0].mxu0
    %v4188 = vpop.f32.mrb[0].mxu0
    %4189 = vdwg.mxu0
    %v4190 = vadd.f32 %v3867, %v4144
    %v4191 = vxor.u32 %v4190, 2147483648
    %v4192 = vmul.f32 %v4191, 1.442695
    %v4193 = vpow.pop %v4192
    %v4194 = vadd.f32 %v4193, 1.0
    %v4195 = vrcp.pop %v4194
    %v4196 = vmul.f32 1.0, %v4195
    %v4197 = vadd.f32 %v3869, %v4146
    %v4198 = vxor.u32 %v4197, 2147483648
    %v4199 = vmul.f32 %v4198, 1.442695
    %v4200 = vpow.pop %v4199
    %v4201 = vadd.f32 %v4200, 1.0
    %v4202 = vrcp.pop %v4201
    %v4203 = vmul.f32 1.0, %v4202
    %v4204 = vmul.f32 %v4196, %v4185
    %v4205 = vadd.f32 %v3918, %v4204
    %v4206 = vtanh.pop %v4205
    %v4207 = vsub.f32 %v3014, %v4206
    %v4208 = vmul.f32 %v4203, %v4207
    %v4209 = vadd.f32 %v4206, %v4208
    %4210 = vst [vmem:[#allocation2] sm:$0xff] %v4209
    %v4211 = vld [vmem:[#allocation7 + $0xc0] sm:$0xff]
    %v4212 = vld [vmem:[#allocation7 + $0xc8] sm:$0xf]
    %v4213 = vld [vmem:[#allocation7 + $0xcc] sm:$0xff]
    %v4214 = vld [vmem:[#allocation7 + $0xd4] sm:$0xf]
    %v4215 = vld [vmem:[#allocation7 + $0xd8] sm:$0xff]
    %v4216 = vld [vmem:[#allocation7 + $0xe0] sm:$0xf]
    %v4217 = vld [vmem:[#allocation7 + $0xe4] sm:$0xff]
    %v4218 = vld [vmem:[#allocation7 + $0xec] sm:$0xf]
    %v4219 = vld [vmem:[#allocation7 + $0xf0] sm:$0xff]
    %v4220 = vld [vmem:[#allocation7 + $0xf8] sm:$0xf]
    %v4221 = vld [vmem:[#allocation7 + $0xfc] sm:$0xff]
    %v4222 = vld [vmem:[#allocation7 + $0x104] sm:$0xf]
    %v4223 = vld [vmem:[#allocation7 + $0x108] sm:$0xff]
    %v4224 = vld [vmem:[#allocation7 + $0x110] sm:$0xf]
    %v4225 = vld [vmem:[#allocation7 + $0x114] sm:$0xff]
    %v4226 = vld [vmem:[#allocation7 + $0x11c] sm:$0xf]
    %v4227 = vld [vmem:[#allocation7 + $0x120] sm:$0xff]
    %v4228 = vld [vmem:[#allocation7 + $0x128] sm:$0xf]
    %v4229 = vld [vmem:[#allocation7 + $0x12c] sm:$0xff]
    %v4230 = vld [vmem:[#allocation7 + $0x134] sm:$0xf]
    %v4231 = vld [vmem:[#allocation7 + $0x138] sm:$0xff]
    %v4232 = vld [vmem:[#allocation7 + $0x140] sm:$0xf]
    %v4233 = vld [vmem:[#allocation7 + $0x144] sm:$0xff]
    %v4234 = vld [vmem:[#allocation7 + $0x14c] sm:$0xf]
    %v4235 = vld [vmem:[#allocation7 + $0x150] sm:$0xff]
    %v4236 = vld [vmem:[#allocation7 + $0x158] sm:$0xf]
    %v4237 = vld [vmem:[#allocation7 + $0x15c] sm:$0xff]
    %v4238 = vld [vmem:[#allocation7 + $0x164] sm:$0xf]
    %v4239 = vld [vmem:[#allocation7 + $0x168] sm:$0xff]
    %v4240 = vld [vmem:[#allocation7 + $0x170] sm:$0xf]
    %v4241 = vld [vmem:[#allocation7 + $0x174] sm:$0xff]
    %v4242 = vld [vmem:[#allocation7 + $0x17c] sm:$0xf]
    %v4243 = vpack.c.bf16 %v4209, %v4209
    %v4244 = vld [vmem:[%s446] ss:$8 sm:$0x7]
    %v4246 = vlaneseq
    %v4247 = vshrl.u32 %v4246, 7
    %v4248 = vsub.s32 0, %v4247
    %v4249 = vrot.slane %v4244, %v4248
    %v4250 = vlaneseq
    %v4251 = vshrl.u32 %v4250, 7
    %v4252 = vsub.s32 1, %v4251
    %v4253 = vrot.slane %v4244, %v4252
    %v4254 = vlaneseq
    %v4255 = vshrl.u32 %v4254, 7
    %v4256 = vsub.s32 2, %v4255
    %v4257 = vrot.slane %v4244, %v4256
    %v4293 = vunpack.c.l.b16 %v4211
    %v4294 = vunpack.c.h.b16 %v4211
    %v4295 = vunpack.c.l.b16 %v4212
    %v4296 = vunpack.c.l.b16 %v4213
    %v4297 = vunpack.c.h.b16 %v4213
    %v4298 = vunpack.c.l.b16 %v4214
    %v4299 = vunpack.c.l.b16 %v4215
    %v4300 = vunpack.c.h.b16 %v4215
    %v4301 = vunpack.c.l.b16 %v4216
    %v4302 = vunpack.c.l.b16 %v4217
    %v4303 = vunpack.c.h.b16 %v4217
    %v4304 = vunpack.c.l.b16 %v4218
    %v4305 = vunpack.c.l.b16 %v4219
    %v4306 = vunpack.c.h.b16 %v4219
    %v4307 = vunpack.c.l.b16 %v4220
    %v4308 = vunpack.c.l.b16 %v4221
    %v4309 = vunpack.c.h.b16 %v4221
    %v4310 = vunpack.c.l.b16 %v4222
    %v4311 = vunpack.c.l.b16 %v4223
    %v4312 = vunpack.c.h.b16 %v4223
    %v4313 = vunpack.c.l.b16 %v4224
    %v4314 = vunpack.c.l.b16 %v4225
    %v4315 = vunpack.c.h.b16 %v4225
    %v4316 = vunpack.c.l.b16 %v4226
    %v4317 = vunpack.c.l.b16 %v4227
    %v4318 = vunpack.c.h.b16 %v4227
    %v4319 = vunpack.c.l.b16 %v4228
    %v4320 = vunpack.c.l.b16 %v4229
    %v4321 = vunpack.c.h.b16 %v4229
    %v4322 = vunpack.c.l.b16 %v4230
    %v4323 = vunpack.c.l.b16 %v4231
    %v4324 = vunpack.c.h.b16 %v4231
    %v4325 = vunpack.c.l.b16 %v4232
    %v4326 = vunpack.c.l.b16 %v4233
    %v4327 = vunpack.c.h.b16 %v4233
    %v4328 = vunpack.c.l.b16 %v4234
    %v4329 = vunpack.c.l.b16 %v4235
    %v4330 = vunpack.c.h.b16 %v4235
    %v4331 = vunpack.c.l.b16 %v4236
    %v4332 = vunpack.c.l.b16 %v4237
    %v4333 = vunpack.c.h.b16 %v4237
    %v4334 = vunpack.c.l.b16 %v4238
    %v4335 = vunpack.c.l.b16 %v4239
    %v4336 = vunpack.c.h.b16 %v4239
    %v4337 = vunpack.c.l.b16 %v4240
    %v4338 = vunpack.c.l.b16 %v4241
    %v4339 = vunpack.c.h.b16 %v4241
    %v4340 = vunpack.c.l.b16 %v4242
    %v4341 = vpack.c.b16 %v4296, %v4293
    %v4342 = vpack.c.b16 %v4297, %v4294
    %v4343 = vpack.c.b16 %v4298, %v4295
    %v4344 = vpack.c.b16 %v4302, %v4299
    %v4345 = vpack.c.b16 %v4303, %v4300
    %v4346 = vpack.c.b16 %v4304, %v4301
    %v4347 = vpack.c.b16 %v4308, %v4305
    %v4348 = vpack.c.b16 %v4309, %v4306
    %v4349 = vpack.c.b16 %v4310, %v4307
    %v4350 = vpack.c.b16 %v4314, %v4311
    %v4351 = vpack.c.b16 %v4315, %v4312
    %v4352 = vpack.c.b16 %v4316, %v4313
    %v4353 = vpack.c.b16 %v4320, %v4317
    %v4354 = vpack.c.b16 %v4321, %v4318
    %v4355 = vpack.c.b16 %v4322, %v4319
    %v4356 = vpack.c.b16 %v4326, %v4323
    %v4357 = vpack.c.b16 %v4327, %v4324
    %v4358 = vpack.c.b16 %v4328, %v4325
    %v4359 = vpack.c.b16 %v4332, %v4329
    %v4360 = vpack.c.b16 %v4333, %v4330
    %v4361 = vpack.c.b16 %v4334, %v4331
    %v4362 = vpack.c.b16 %v4338, %v4335
    %v4363 = vpack.c.b16 %v4339, %v4336
    %v4364 = vpack.c.b16 %v4340, %v4337
    %4389 = vmatprep.subr.bf16.mxu0 %v4342
    %4390 = vmatpush1.bf16.msra.mxu0 %v4341
    %4391 = vmatprep.subr.bf16.mxu0 %v4345
    %4392 = vmatpush1.bf16.msra.mxu0 %v4344
    %4393 = vmatprep.subr.bf16.mxu0 %v4348
    %4394 = vmatpush1.bf16.msra.mxu0 %v4347
    %4395 = vmatprep.subr.bf16.mxu0 %v4351
    %4396 = vmatpush1.bf16.msra.mxu0 %v4350
    %4397 = vmatprep.subr.bf16.mxu0 %v4354
    %4398 = vmatpush1.bf16.msra.mxu0 %v4353
    %4399 = vmatprep.subr.bf16.mxu0 %v4357
    %4400 = vmatpush1.bf16.msra.mxu0 %v4356
    %4401 = vmatprep.subr.bf16.mxu0 %v4360
    %4402 = vmatpush1.bf16.msra.mxu0 %v4359
    %4403 = vmatprep.subr.bf16.mxu0 %v4363
    %4404 = vmatpush1.bf16.msra.mxu0 %v4362
    %4405 = vmatprep.subr.bf16.mxu0 0
    %4406 = vmatpush1.bf16.msra.mxu0 0
    %4407 = vmatprep.subr.bf16.mxu0 0
    %4408 = vmatpush1.bf16.msra.mxu0 0
    %4409 = vmatprep.subr.bf16.mxu0 0
    %4410 = vmatpush1.bf16.msra.mxu0 0
    %4411 = vmatprep.subr.bf16.mxu0 0
    %4412 = vmatpush1.bf16.msra.mxu0 0
    %4413 = vmatprep.subr.bf16.mxu0 0
    %4414 = vmatpush1.bf16.msra.mxu0 0
    %4415 = vmatprep.subr.bf16.mxu0 0
    %4416 = vmatpush1.bf16.msra.mxu0 0
    %4417 = vmatprep.subr.bf16.mxu0 0
    %4418 = vmatpush1.bf16.msra.mxu0 0
    %4419 = vmatprep.subr.bf16.mxu0 0
    %4420 = vmatpush1.bf16.msra.mxu0 0
    %4421 = vmatprep.mubr.bf16.mxu0 0
    %4422 = vmatmul.mubr.bf16.gmra.mrb[0].mxu0 %v4243
    %v4423 = vpop.f32.mrb[0].mxu0
    %v4424 = vadd.f32 %v4249, %v4423
    %v4425 = vpop.f32.mrb[0].mxu0
    %v4426 = vadd.f32 %v4253, %v4425
    %v4427 = vpop.f32.mrb[0].mxu0
    %v4428 = vpop.f32.mrb[0].mxu0
    %4429 = vdwg.mxu0
    %4430 = vmatprep.subr.bf16.mxu0 0
    %4431 = vmatpush1.bf16.msra.mxu0 %v4343
    %4432 = vmatprep.subr.bf16.mxu0 0
    %4433 = vmatpush1.bf16.msra.mxu0 %v4346
    %4434 = vmatprep.subr.bf16.mxu0 0
    %4435 = vmatpush1.bf16.msra.mxu0 %v4349
    %4436 = vmatprep.subr.bf16.mxu0 0
    %4437 = vmatpush1.bf16.msra.mxu0 %v4352
    %4438 = vmatprep.subr.bf16.mxu0 0
    %4439 = vmatpush1.bf16.msra.mxu0 %v4355
    %4440 = vmatprep.subr.bf16.mxu0 0
    %4441 = vmatpush1.bf16.msra.mxu0 %v4358
    %4442 = vmatprep.subr.bf16.mxu0 0
    %4443 = vmatpush1.bf16.msra.mxu0 %v4361
    %4444 = vmatprep.subr.bf16.mxu0 0
    %4445 = vmatpush1.bf16.msra.mxu0 %v4364
    %4446 = vmatprep.subr.bf16.mxu0 0
    %4447 = vmatpush1.bf16.msra.mxu0 0
    %4448 = vmatprep.subr.bf16.mxu0 0
    %4449 = vmatpush1.bf16.msra.mxu0 0
    %4450 = vmatprep.subr.bf16.mxu0 0
    %4451 = vmatpush1.bf16.msra.mxu0 0
    %4452 = vmatprep.subr.bf16.mxu0 0
    %4453 = vmatpush1.bf16.msra.mxu0 0
    %4454 = vmatprep.subr.bf16.mxu0 0
    %4455 = vmatpush1.bf16.msra.mxu0 0
    %4456 = vmatprep.subr.bf16.mxu0 0
    %4457 = vmatpush1.bf16.msra.mxu0 0
    %4458 = vmatprep.subr.bf16.mxu0 0
    %4459 = vmatpush1.bf16.msra.mxu0 0
    %4460 = vmatprep.subr.bf16.mxu0 0
    %4461 = vmatpush1.bf16.msra.mxu0 0
    %4462 = vmatprep.mubr.bf16.mxu0 0
    %4463 = vmatmul.mubr.bf16.gmra.mrb[0].mxu0 %v4243
    %v4464 = vpop.f32.mrb[0].mxu0
    %v4465 = vadd.f32 %v4257, %v4464
    %v4466 = vpop.f32.mrb[0].mxu0
    %v4467 = vpop.f32.mrb[0].mxu0
    %v4468 = vpop.f32.mrb[0].mxu0
    %4469 = vdwg.mxu0
    %v4470 = vadd.f32 %v3871, %v4424
    %v4471 = vxor.u32 %v4470, 2147483648
    %v4472 = vmul.f32 %v4471, 1.442695
    %v4473 = vpow.pop %v4472
    %v4474 = vadd.f32 %v4473, 1.0
    %v4475 = vrcp.pop %v4474
    %v4476 = vmul.f32 1.0, %v4475
    %v4477 = vadd.f32 %v3873, %v4426
    %v4478 = vxor.u32 %v4477, 2147483648
    %v4479 = vmul.f32 %v4478, 1.442695
    %v4480 = vpow.pop %v4479
    %v4481 = vadd.f32 %v4480, 1.0
    %v4482 = vrcp.pop %v4481
    %v4483 = vmul.f32 1.0, %v4482
    %v4484 = vmul.f32 %v4476, %v4465
    %v4485 = vadd.f32 %v3921, %v4484
    %v4486 = vtanh.pop %v4485
    %v4487 = vsub.f32 %v4209, %v4486
    %v4488 = vmul.f32 %v4483, %v4487
    %v4489 = vadd.f32 %v4486, %v4488
    %4490 = vst [vmem:[#allocation2 + $0x8] sm:$0xff] %v4489
    %v4491 = vld [vmem:[#allocation7 + $0xc0] sm:$0xff]
    %v4492 = vld [vmem:[#allocation7 + $0xc8] sm:$0xf]
    %v4493 = vld [vmem:[#allocation7 + $0xcc] sm:$0xff]
    %v4494 = vld [vmem:[#allocation7 + $0xd4] sm:$0xf]
    %v4495 = vld [vmem:[#allocation7 + $0xd8] sm:$0xff]
    %v4496 = vld [vmem:[#allocation7 + $0xe0] sm:$0xf]
    %v4497 = vld [vmem:[#allocation7 + $0xe4] sm:$0xff]
    %v4498 = vld [vmem:[#allocation7 + $0xec] sm:$0xf]
    %v4499 = vld [vmem:[#allocation7 + $0xf0] sm:$0xff]
    %v4500 = vld [vmem:[#allocation7 + $0xf8] sm:$0xf]
    %v4501 = vld [vmem:[#allocation7 + $0xfc] sm:$0xff]
    %v4502 = vld [vmem:[#allocation7 + $0x104] sm:$0xf]
    %v4503 = vld [vmem:[#allocation7 + $0x108] sm:$0xff]
    %v4504 = vld [vmem:[#allocation7 + $0x110] sm:$0xf]
    %v4505 = vld [vmem:[#allocation7 + $0x114] sm:$0xff]
    %v4506 = vld [vmem:[#allocation7 + $0x11c] sm:$0xf]
    %v4507 = vld [vmem:[#allocation7 + $0x120] sm:$0xff]
    %v4508 = vld [vmem:[#allocation7 + $0x128] sm:$0xf]
    %v4509 = vld [vmem:[#allocation7 + $0x12c] sm:$0xff]
    %v4510 = vld [vmem:[#allocation7 + $0x134] sm:$0xf]
    %v4511 = vld [vmem:[#allocation7 + $0x138] sm:$0xff]
    %v4512 = vld [vmem:[#allocation7 + $0x140] sm:$0xf]
    %v4513 = vld [vmem:[#allocation7 + $0x144] sm:$0xff]
    %v4514 = vld [vmem:[#allocation7 + $0x14c] sm:$0xf]
    %v4515 = vld [vmem:[#allocation7 + $0x150] sm:$0xff]
    %v4516 = vld [vmem:[#allocation7 + $0x158] sm:$0xf]
    %v4517 = vld [vmem:[#allocation7 + $0x15c] sm:$0xff]
    %v4518 = vld [vmem:[#allocation7 + $0x164] sm:$0xf]
    %v4519 = vld [vmem:[#allocation7 + $0x168] sm:$0xff]
    %v4520 = vld [vmem:[#allocation7 + $0x170] sm:$0xf]
    %v4521 = vld [vmem:[#allocation7 + $0x174] sm:$0xff]
    %v4522 = vld [vmem:[#allocation7 + $0x17c] sm:$0xf]
    %v4523 = vpack.c.bf16 %v4489, %v4489
    %v4524 = vld [vmem:[%s446] ss:$8 sm:$0x7]
    %v4526 = vlaneseq
    %v4527 = vshrl.u32 %v4526, 7
    %v4528 = vsub.s32 0, %v4527
    %v4529 = vrot.slane %v4524, %v4528
    %v4530 = vlaneseq
    %v4531 = vshrl.u32 %v4530, 7
    %v4532 = vsub.s32 1, %v4531
    %v4533 = vrot.slane %v4524, %v4532
    %v4534 = vlaneseq
    %v4535 = vshrl.u32 %v4534, 7
    %v4536 = vsub.s32 2, %v4535
    %v4537 = vrot.slane %v4524, %v4536
    %v4573 = vunpack.c.l.b16 %v4491
    %v4574 = vunpack.c.h.b16 %v4491
    %v4575 = vunpack.c.l.b16 %v4492
    %v4576 = vunpack.c.l.b16 %v4493
    %v4577 = vunpack.c.h.b16 %v4493
    %v4578 = vunpack.c.l.b16 %v4494
    %v4579 = vunpack.c.l.b16 %v4495
    %v4580 = vunpack.c.h.b16 %v4495
    %v4581 = vunpack.c.l.b16 %v4496
    %v4582 = vunpack.c.l.b16 %v4497
    %v4583 = vunpack.c.h.b16 %v4497
    %v4584 = vunpack.c.l.b16 %v4498
    %v4585 = vunpack.c.l.b16 %v4499
    %v4586 = vunpack.c.h.b16 %v4499
    %v4587 = vunpack.c.l.b16 %v4500
    %v4588 = vunpack.c.l.b16 %v4501
    %v4589 = vunpack.c.h.b16 %v4501
    %v4590 = vunpack.c.l.b16 %v4502
    %v4591 = vunpack.c.l.b16 %v4503
    %v4592 = vunpack.c.h.b16 %v4503
    %v4593 = vunpack.c.l.b16 %v4504
    %v4594 = vunpack.c.l.b16 %v4505
    %v4595 = vunpack.c.h.b16 %v4505
    %v4596 = vunpack.c.l.b16 %v4506
    %v4597 = vunpack.c.l.b16 %v4507
    %v4598 = vunpack.c.h.b16 %v4507
    %v4599 = vunpack.c.l.b16 %v4508
    %v4600 = vunpack.c.l.b16 %v4509
    %v4601 = vunpack.c.h.b16 %v4509
    %v4602 = vunpack.c.l.b16 %v4510
    %v4603 = vunpack.c.l.b16 %v4511
    %v4604 = vunpack.c.h.b16 %v4511
    %v4605 = vunpack.c.l.b16 %v4512
    %v4606 = vunpack.c.l.b16 %v4513
    %v4607 = vunpack.c.h.b16 %v4513
    %v4608 = vunpack.c.l.b16 %v4514
    %v4609 = vunpack.c.l.b16 %v4515
    %v4610 = vunpack.c.h.b16 %v4515
    %v4611 = vunpack.c.l.b16 %v4516
    %v4612 = vunpack.c.l.b16 %v4517
    %v4613 = vunpack.c.h.b16 %v4517
    %v4614 = vunpack.c.l.b16 %v4518
    %v4615 = vunpack.c.l.b16 %v4519
    %v4616 = vunpack.c.h.b16 %v4519
    %v4617 = vunpack.c.l.b16 %v4520
    %v4618 = vunpack.c.l.b16 %v4521
    %v4619 = vunpack.c.h.b16 %v4521
    %v4620 = vunpack.c.l.b16 %v4522
    %v4621 = vpack.c.b16 %v4576, %v4573
    %v4622 = vpack.c.b16 %v4577, %v4574
    %v4623 = vpack.c.b16 %v4578, %v4575
    %v4624 = vpack.c.b16 %v4582, %v4579
    %v4625 = vpack.c.b16 %v4583, %v4580
    %v4626 = vpack.c.b16 %v4584, %v4581
    %v4627 = vpack.c.b16 %v4588, %v4585
    %v4628 = vpack.c.b16 %v4589, %v4586
    %v4629 = vpack.c.b16 %v4590, %v4587
    %v4630 = vpack.c.b16 %v4594, %v4591
    %v4631 = vpack.c.b16 %v4595, %v4592
    %v4632 = vpack.c.b16 %v4596, %v4593
    %v4633 = vpack.c.b16 %v4600, %v4597
    %v4634 = vpack.c.b16 %v4601, %v4598
    %v4635 = vpack.c.b16 %v4602, %v4599
    %v4636 = vpack.c.b16 %v4606, %v4603
    %v4637 = vpack.c.b16 %v4607, %v4604
    %v4638 = vpack.c.b16 %v4608, %v4605
    %v4639 = vpack.c.b16 %v4612, %v4609
    %v4640 = vpack.c.b16 %v4613, %v4610
    %v4641 = vpack.c.b16 %v4614, %v4611
    %v4642 = vpack.c.b16 %v4618, %v4615
    %v4643 = vpack.c.b16 %v4619, %v4616
    %v4644 = vpack.c.b16 %v4620, %v4617
    %4669 = vmatprep.subr.bf16.mxu0 %v4622
    %4670 = vmatpush1.bf16.msra.mxu0 %v4621
    %4671 = vmatprep.subr.bf16.mxu0 %v4625
    %4672 = vmatpush1.bf16.msra.mxu0 %v4624
    %4673 = vmatprep.subr.bf16.mxu0 %v4628
    %4674 = vmatpush1.bf16.msra.mxu0 %v4627
    %4675 = vmatprep.subr.bf16.mxu0 %v4631
    %4676 = vmatpush1.bf16.msra.mxu0 %v4630
    %4677 = vmatprep.subr.bf16.mxu0 %v4634
    %4678 = vmatpush1.bf16.msra.mxu0 %v4633
    %4679 = vmatprep.subr.bf16.mxu0 %v4637
    %4680 = vmatpush1.bf16.msra.mxu0 %v4636
    %4681 = vmatprep.subr.bf16.mxu0 %v4640
    %4682 = vmatpush1.bf16.msra.mxu0 %v4639
    %4683 = vmatprep.subr.bf16.mxu0 %v4643
    %4684 = vmatpush1.bf16.msra.mxu0 %v4642
    %4685 = vmatprep.subr.bf16.mxu0 0
    %4686 = vmatpush1.bf16.msra.mxu0 0
    %4687 = vmatprep.subr.bf16.mxu0 0
    %4688 = vmatpush1.bf16.msra.mxu0 0
    %4689 = vmatprep.subr.bf16.mxu0 0
    %4690 = vmatpush1.bf16.msra.mxu0 0
    %4691 = vmatprep.subr.bf16.mxu0 0
    %4692 = vmatpush1.bf16.msra.mxu0 0
    %4693 = vmatprep.subr.bf16.mxu0 0
    %4694 = vmatpush1.bf16.msra.mxu0 0
    %4695 = vmatprep.subr.bf16.mxu0 0
    %4696 = vmatpush1.bf16.msra.mxu0 0
    %4697 = vmatprep.subr.bf16.mxu0 0
    %4698 = vmatpush1.bf16.msra.mxu0 0
    %4699 = vmatprep.subr.bf16.mxu0 0
    %4700 = vmatpush1.bf16.msra.mxu0 0
    %4701 = vmatprep.mubr.bf16.mxu0 0
    %4702 = vmatmul.mubr.bf16.gmra.mrb[0].mxu0 %v4523
    %v4703 = vpop.f32.mrb[0].mxu0
    %v4704 = vadd.f32 %v4529, %v4703
    %v4705 = vpop.f32.mrb[0].mxu0
    %v4706 = vadd.f32 %v4533, %v4705
    %v4707 = vpop.f32.mrb[0].mxu0
    %v4708 = vpop.f32.mrb[0].mxu0
    %4709 = vdwg.mxu0
    %4710 = vmatprep.subr.bf16.mxu0 0
    %4711 = vmatpush1.bf16.msra.mxu0 %v4623
    %4712 = vmatprep.subr.bf16.mxu0 0
    %4713 = vmatpush1.bf16.msra.mxu0 %v4626
    %4714 = vmatprep.subr.bf16.mxu0 0
    %4715 = vmatpush1.bf16.msra.mxu0 %v4629
    %4716 = vmatprep.subr.bf16.mxu0 0
    %4717 = vmatpush1.bf16.msra.mxu0 %v4632
    %4718 = vmatprep.subr.bf16.mxu0 0
    %4719 = vmatpush1.bf16.msra.mxu0 %v4635
    %4720 = vmatprep.subr.bf16.mxu0 0
    %4721 = vmatpush1.bf16.msra.mxu0 %v4638
    %4722 = vmatprep.subr.bf16.mxu0 0
    %4723 = vmatpush1.bf16.msra.mxu0 %v4641
    %4724 = vmatprep.subr.bf16.mxu0 0
    %4725 = vmatpush1.bf16.msra.mxu0 %v4644
    %4726 = vmatprep.subr.bf16.mxu0 0
    %4727 = vmatpush1.bf16.msra.mxu0 0
    %4728 = vmatprep.subr.bf16.mxu0 0
    %4729 = vmatpush1.bf16.msra.mxu0 0
    %4730 = vmatprep.subr.bf16.mxu0 0
    %4731 = vmatpush1.bf16.msra.mxu0 0
    %4732 = vmatprep.subr.bf16.mxu0 0
    %4733 = vmatpush1.bf16.msra.mxu0 0
    %4734 = vmatprep.subr.bf16.mxu0 0
    %4735 = vmatpush1.bf16.msra.mxu0 0
    %4736 = vmatprep.subr.bf16.mxu0 0
    %4737 = vmatpush1.bf16.msra.mxu0 0
    %4738 = vmatprep.subr.bf16.mxu0 0
    %4739 = vmatpush1.bf16.msra.mxu0 0
    %4740 = vmatprep.subr.bf16.mxu0 0
    %4741 = vmatpush1.bf16.msra.mxu0 0
    %4742 = vmatprep.mubr.bf16.mxu0 0
    %4743 = vmatmul.mubr.bf16.gmra.mrb[0].mxu0 %v4523
    %v4744 = vpop.f32.mrb[0].mxu0
    %v4745 = vadd.f32 %v4537, %v4744
    %v4746 = vpop.f32.mrb[0].mxu0
    %v4747 = vpop.f32.mrb[0].mxu0
    %v4748 = vpop.f32.mrb[0].mxu0
    %4749 = vdwg.mxu0
    %v4750 = vadd.f32 %v3877, %v4704
    %v4751 = vxor.u32 %v4750, 2147483648
    %v4752 = vmul.f32 %v4751, 1.442695
    %v4753 = vpow.pop %v4752
    %v4754 = vadd.f32 %v4753, 1.0
    %v4755 = vrcp.pop %v4754
    %v4756 = vmul.f32 1.0, %v4755
    %v4757 = vadd.f32 %v3879, %v4706
    %v4758 = vxor.u32 %v4757, 2147483648
    %v4759 = vmul.f32 %v4758, 1.442695
    %v4760 = vpow.pop %v4759
    %v4761 = vadd.f32 %v4760, 1.0
    %v4762 = vrcp.pop %v4761
    %v4763 = vmul.f32 1.0, %v4762
    %v4764 = vmul.f32 %v4756, %v4745
    %v4765 = vadd.f32 %v3926, %v4764
    %v4766 = vtanh.pop %v4765
    %v4767 = vsub.f32 %v4489, %v4766
    %v4768 = vmul.f32 %v4763, %v4767
    %v4769 = vadd.f32 %v4766, %v4768
    %4770 = vst [vmem:[#allocation2 + $0x10] sm:$0xff] %v4769
    %v4771 = vld [vmem:[#allocation2] sm:$0xff]
    %v4772 = vld [vmem:[#allocation2 + $0x8] sm:$0xff]
    %v4773 = vld [vmem:[#allocation2 + $0x10] sm:$0xff]
    %v4774 = vpack.c.bf16 %v4772, %v4771
    %v4775 = vpack.c.bf16 %v4773, %v4773
    %v4777 = vsel %vm1263, %v4775, 0
    %4779 = vmatprep.subr.bf16.mxu0 0
    %4780 = vmatpush1.bf16.msra.mxu0 %v4774
    %4781 = vmatprep.subr.bf16.mxu0 0
    %4782 = vmatpush1.bf16.msra.mxu0 %v4777
    %4783 = vmatprep.subr.bf16.mxu0 0
    %4784 = vmatpush1.bf16.msra.mxu0 0
    %4785 = vmatprep.subr.bf16.mxu0 0
    %4786 = vmatpush1.bf16.msra.mxu0 0
    %4787 = vmatprep.subr.bf16.mxu0 0
    %4788 = vmatpush1.bf16.msra.mxu0 0
    %4789 = vmatprep.subr.bf16.mxu0 0
    %4790 = vmatpush1.bf16.msra.mxu0 0
    %4791 = vmatprep.subr.bf16.mxu0 0
    %4792 = vmatpush1.bf16.msra.mxu0 0
    %4793 = vmatprep.subr.bf16.mxu0 0
    %4794 = vmatpush1.bf16.msra.mxu0 0
    %4795 = vmatprep.subr.bf16.mxu0 0
    %4796 = vmatpush1.bf16.msra.mxu0 0
    %4797 = vmatprep.subr.bf16.mxu0 0
    %4798 = vmatpush1.bf16.msra.mxu0 0
    %4799 = vmatprep.subr.bf16.mxu0 0
    %4800 = vmatpush1.bf16.msra.mxu0 0
    %4801 = vmatprep.subr.bf16.mxu0 0
    %4802 = vmatpush1.bf16.msra.mxu0 0
    %4803 = vmatprep.subr.bf16.mxu0 0
    %4804 = vmatpush1.bf16.msra.mxu0 0
    %4805 = vmatprep.subr.bf16.mxu0 0
    %4806 = vmatpush1.bf16.msra.mxu0 0
    %4807 = vmatprep.subr.bf16.mxu0 0
    %4808 = vmatpush1.bf16.msra.mxu0 0
    %4809 = vmatprep.subr.bf16.mxu0 0
    %4810 = vmatpush1.bf16.msra.mxu0 0
    %4811 = vmatprep.mubr.bf16.mxu0 0
    %4812 = vmatmul.mubr.bf16.gmra.mrb[0].mxu0 %v1261
    %v4813 = vpop.f32.mrb[0].mxu0
    %v4814 = vadd.f32 0.0, %v4813
    %v4815 = vpop.f32.mrb[0].mxu0
    %v4816 = vpop.f32.mrb[0].mxu0
    %v4817 = vpop.f32.mrb[0].mxu0
    %4818 = vdwg.mxu0
    %v4819 = vld [vmem:[#allocation7 + $0x180] sm:$0xff]
    %v4820 = vld [vmem:[#allocation7 + $0x188] sm:$0xf]
    %v4821 = vld [vmem:[#allocation7 + $0x18c] sm:$0xff]
    %v4822 = vld [vmem:[#allocation7 + $0x194] sm:$0xf]
    %v4823 = vld [vmem:[#allocation7 + $0x198] sm:$0xff]
    %v4824 = vld [vmem:[#allocation7 + $0x1a0] sm:$0xf]
    %v4825 = vld [vmem:[#allocation7 + $0x1a4] sm:$0xff]
    %v4826 = vld [vmem:[#allocation7 + $0x1ac] sm:$0xf]
    %v4827 = vld [vmem:[#allocation7 + $0x1b0] sm:$0xff]
    %v4828 = vld [vmem:[#allocation7 + $0x1b8] sm:$0xf]
    %v4829 = vld [vmem:[#allocation7 + $0x1bc] sm:$0xff]
    %v4830 = vld [vmem:[#allocation7 + $0x1c4] sm:$0xf]
    %v4831 = vld [vmem:[#allocation7 + $0x1c8] sm:$0xff]
    %v4832 = vld [vmem:[#allocation7 + $0x1d0] sm:$0xf]
    %v4833 = vld [vmem:[#allocation7 + $0x1d4] sm:$0xff]
    %v4834 = vld [vmem:[#allocation7 + $0x1dc] sm:$0xf]
    %v4835 = vld [vmem:[#allocation7 + $0x1e0] sm:$0xff]
    %v4836 = vld [vmem:[#allocation7 + $0x1e8] sm:$0xf]
    %v4837 = vld [vmem:[#allocation7 + $0x1ec] sm:$0xff]
    %v4838 = vld [vmem:[#allocation7 + $0x1f4] sm:$0xf]
    %v4839 = vld [vmem:[#allocation7 + $0x1f8] sm:$0xff]
    %v4840 = vld [vmem:[#allocation7 + $0x200] sm:$0xf]
    %v4841 = vld [vmem:[#allocation7 + $0x204] sm:$0xff]
    %v4842 = vld [vmem:[#allocation7 + $0x20c] sm:$0xf]
    %v4843 = vld [vmem:[#allocation7 + $0x210] sm:$0xff]
    %v4844 = vld [vmem:[#allocation7 + $0x218] sm:$0xf]
    %v4845 = vld [vmem:[#allocation7 + $0x21c] sm:$0xff]
    %v4846 = vld [vmem:[#allocation7 + $0x224] sm:$0xf]
    %v4847 = vld [vmem:[#allocation7 + $0x228] sm:$0xff]
    %v4848 = vld [vmem:[#allocation7 + $0x230] sm:$0xf]
    %v4849 = vld [vmem:[#allocation7 + $0x234] sm:$0xff]
    %v4850 = vld [vmem:[#allocation7 + $0x23c] sm:$0xf]
    %v4851 = vpack.c.bf16 %v4814, %v4814
    %v4852 = vld [vmem:[%s1340] ss:$8 sm:$0x7]
    %v4854 = vlaneseq
    %v4855 = vshrl.u32 %v4854, 7
    %v4856 = vsub.s32 0, %v4855
    %v4857 = vrot.slane %v4852, %v4856
    %v4858 = vlaneseq
    %v4859 = vshrl.u32 %v4858, 7
    %v4860 = vsub.s32 1, %v4859
    %v4861 = vrot.slane %v4852, %v4860
    %v4862 = vlaneseq
    %v4863 = vshrl.u32 %v4862, 7
    %v4864 = vsub.s32 2, %v4863
    %v4865 = vrot.slane %v4852, %v4864
    %v4901 = vunpack.c.l.b16 %v4819
    %v4902 = vunpack.c.h.b16 %v4819
    %v4903 = vunpack.c.l.b16 %v4820
    %v4904 = vunpack.c.l.b16 %v4821
    %v4905 = vunpack.c.h.b16 %v4821
    %v4906 = vunpack.c.l.b16 %v4822
    %v4907 = vunpack.c.l.b16 %v4823
    %v4908 = vunpack.c.h.b16 %v4823
    %v4909 = vunpack.c.l.b16 %v4824
    %v4910 = vunpack.c.l.b16 %v4825
    %v4911 = vunpack.c.h.b16 %v4825
    %v4912 = vunpack.c.l.b16 %v4826
    %v4913 = vunpack.c.l.b16 %v4827
    %v4914 = vunpack.c.h.b16 %v4827
    %v4915 = vunpack.c.l.b16 %v4828
    %v4916 = vunpack.c.l.b16 %v4829
    %v4917 = vunpack.c.h.b16 %v4829
    %v4918 = vunpack.c.l.b16 %v4830
    %v4919 = vunpack.c.l.b16 %v4831
    %v4920 = vunpack.c.h.b16 %v4831
    %v4921 = vunpack.c.l.b16 %v4832
    %v4922 = vunpack.c.l.b16 %v4833
    %v4923 = vunpack.c.h.b16 %v4833
    %v4924 = vunpack.c.l.b16 %v4834
    %v4925 = vunpack.c.l.b16 %v4835
    %v4926 = vunpack.c.h.b16 %v4835
    %v4927 = vunpack.c.l.b16 %v4836
    %v4928 = vunpack.c.l.b16 %v4837
    %v4929 = vunpack.c.h.b16 %v4837
    %v4930 = vunpack.c.l.b16 %v4838
    %v4931 = vunpack.c.l.b16 %v4839
    %v4932 = vunpack.c.h.b16 %v4839
    %v4933 = vunpack.c.l.b16 %v4840
    %v4934 = vunpack.c.l.b16 %v4841
    %v4935 = vunpack.c.h.b16 %v4841
    %v4936 = vunpack.c.l.b16 %v4842
    %v4937 = vunpack.c.l.b16 %v4843
    %v4938 = vunpack.c.h.b16 %v4843
    %v4939 = vunpack.c.l.b16 %v4844
    %v4940 = vunpack.c.l.b16 %v4845
    %v4941 = vunpack.c.h.b16 %v4845
    %v4942 = vunpack.c.l.b16 %v4846
    %v4943 = vunpack.c.l.b16 %v4847
    %v4944 = vunpack.c.h.b16 %v4847
    %v4945 = vunpack.c.l.b16 %v4848
    %v4946 = vunpack.c.l.b16 %v4849
    %v4947 = vunpack.c.h.b16 %v4849
    %v4948 = vunpack.c.l.b16 %v4850
    %v4949 = vpack.c.b16 %v4904, %v4901
    %v4950 = vpack.c.b16 %v4905, %v4902
    %v4951 = vpack.c.b16 %v4906, %v4903
    %v4952 = vpack.c.b16 %v4910, %v4907
    %v4953 = vpack.c.b16 %v4911, %v4908
    %v4954 = vpack.c.b16 %v4912, %v4909
    %v4955 = vpack.c.b16 %v4916, %v4913
    %v4956 = vpack.c.b16 %v4917, %v4914
    %v4957 = vpack.c.b16 %v4918, %v4915
    %v4958 = vpack.c.b16 %v4922, %v4919
    %v4959 = vpack.c.b16 %v4923, %v4920
    %v4960 = vpack.c.b16 %v4924, %v4921
    %v4961 = vpack.c.b16 %v4928, %v4925
    %v4962 = vpack.c.b16 %v4929, %v4926
    %v4963 = vpack.c.b16 %v4930, %v4927
    %v4964 = vpack.c.b16 %v4934, %v4931
    %v4965 = vpack.c.b16 %v4935, %v4932
    %v4966 = vpack.c.b16 %v4936, %v4933
    %v4967 = vpack.c.b16 %v4940, %v4937
    %v4968 = vpack.c.b16 %v4941, %v4938
    %v4969 = vpack.c.b16 %v4942, %v4939
    %v4970 = vpack.c.b16 %v4946, %v4943
    %v4971 = vpack.c.b16 %v4947, %v4944
    %v4972 = vpack.c.b16 %v4948, %v4945
    %4997 = vmatprep.subr.bf16.mxu0 %v4950
    %4998 = vmatpush1.bf16.msra.mxu0 %v4949
    %4999 = vmatprep.subr.bf16.mxu0 %v4953
    %5000 = vmatpush1.bf16.msra.mxu0 %v4952
    %5001 = vmatprep.subr.bf16.mxu0 %v4956
    %5002 = vmatpush1.bf16.msra.mxu0 %v4955
    %5003 = vmatprep.subr.bf16.mxu0 %v4959
    %5004 = vmatpush1.bf16.msra.mxu0 %v4958
    %5005 = vmatprep.subr.bf16.mxu0 %v4962
    %5006 = vmatpush1.bf16.msra.mxu0 %v4961
    %5007 = vmatprep.subr.bf16.mxu0 %v4965
    %5008 = vmatpush1.bf16.msra.mxu0 %v4964
    %5009 = vmatprep.subr.bf16.mxu0 %v4968
    %5010 = vmatpush1.bf16.msra.mxu0 %v4967
    %5011 = vmatprep.subr.bf16.mxu0 %v4971
    %5012 = vmatpush1.bf16.msra.mxu0 %v4970
    %5013 = vmatprep.subr.bf16.mxu0 0
    %5014 = vmatpush1.bf16.msra.mxu0 0
    %5015 = vmatprep.subr.bf16.mxu0 0
    %5016 = vmatpush1.bf16.msra.mxu0 0
    %5017 = vmatprep.subr.bf16.mxu0 0
    %5018 = vmatpush1.bf16.msra.mxu0 0
    %5019 = vmatprep.subr.bf16.mxu0 0
    %5020 = vmatpush1.bf16.msra.mxu0 0
    %5021 = vmatprep.subr.bf16.mxu0 0
    %5022 = vmatpush1.bf16.msra.mxu0 0
    %5023 = vmatprep.subr.bf16.mxu0 0
    %5024 = vmatpush1.bf16.msra.mxu0 0
    %5025 = vmatprep.subr.bf16.mxu0 0
    %5026 = vmatpush1.bf16.msra.mxu0 0
    %5027 = vmatprep.subr.bf16.mxu0 0
    %5028 = vmatpush1.bf16.msra.mxu0 0
    %5029 = vmatprep.mubr.bf16.mxu0 0
    %5030 = vmatmul.mubr.bf16.gmra.mrb[0].mxu0 %v4851
    %v5031 = vpop.f32.mrb[0].mxu0
    %v5032 = vadd.f32 %v4857, %v5031
    %v5033 = vpop.f32.mrb[0].mxu0
    %v5034 = vadd.f32 %v4861, %v5033
    %v5035 = vpop.f32.mrb[0].mxu0
    %v5036 = vpop.f32.mrb[0].mxu0
    %5037 = vdwg.mxu0
    %5038 = vmatprep.subr.bf16.mxu0 0
    %5039 = vmatpush1.bf16.msra.mxu0 %v4951
    %5040 = vmatprep.subr.bf16.mxu0 0
    %5041 = vmatpush1.bf16.msra.mxu0 %v4954
    %5042 = vmatprep.subr.bf16.mxu0 0
    %5043 = vmatpush1.bf16.msra.mxu0 %v4957
    %5044 = vmatprep.subr.bf16.mxu0 0
    %5045 = vmatpush1.bf16.msra.mxu0 %v4960
    %5046 = vmatprep.subr.bf16.mxu0 0
    %5047 = vmatpush1.bf16.msra.mxu0 %v4963
    %5048 = vmatprep.subr.bf16.mxu0 0
    %5049 = vmatpush1.bf16.msra.mxu0 %v4966
    %5050 = vmatprep.subr.bf16.mxu0 0
    %5051 = vmatpush1.bf16.msra.mxu0 %v4969
    %5052 = vmatprep.subr.bf16.mxu0 0
    %5053 = vmatpush1.bf16.msra.mxu0 %v4972
    %5054 = vmatprep.subr.bf16.mxu0 0
    %5055 = vmatpush1.bf16.msra.mxu0 0
    %5056 = vmatprep.subr.bf16.mxu0 0
    %5057 = vmatpush1.bf16.msra.mxu0 0
    %5058 = vmatprep.subr.bf16.mxu0 0
    %5059 = vmatpush1.bf16.msra.mxu0 0
    %5060 = vmatprep.subr.bf16.mxu0 0
    %5061 = vmatpush1.bf16.msra.mxu0 0
    %5062 = vmatprep.subr.bf16.mxu0 0
    %5063 = vmatpush1.bf16.msra.mxu0 0
    %5064 = vmatprep.subr.bf16.mxu0 0
    %5065 = vmatpush1.bf16.msra.mxu0 0
    %5066 = vmatprep.subr.bf16.mxu0 0
    %5067 = vmatpush1.bf16.msra.mxu0 0
    %5068 = vmatprep.subr.bf16.mxu0 0
    %5069 = vmatpush1.bf16.msra.mxu0 0
    %5070 = vmatprep.mubr.bf16.mxu0 0
    %5071 = vmatmul.mubr.bf16.gmra.mrb[0].mxu0 %v4851
    %v5072 = vpop.f32.mrb[0].mxu0
    %v5073 = vadd.f32 %v4865, %v5072
    %v5074 = vpop.f32.mrb[0].mxu0
    %v5075 = vpop.f32.mrb[0].mxu0
    %v5076 = vpop.f32.mrb[0].mxu0
    %5077 = vdwg.mxu0
    %v5078 = vld [vmem:[#allocation7 + $0x240] sm:$0xff]
    %v5079 = vld [vmem:[#allocation7 + $0x248] sm:$0xf]
    %v5080 = vld [vmem:[#allocation7 + $0x24c] sm:$0xff]
    %v5081 = vld [vmem:[#allocation7 + $0x254] sm:$0xf]
    %v5082 = vld [vmem:[#allocation7 + $0x258] sm:$0xff]
    %v5083 = vld [vmem:[#allocation7 + $0x260] sm:$0xf]
    %v5084 = vld [vmem:[#allocation7 + $0x264] sm:$0xff]
    %v5085 = vld [vmem:[#allocation7 + $0x26c] sm:$0xf]
    %v5086 = vld [vmem:[#allocation7 + $0x270] sm:$0xff]
    %v5087 = vld [vmem:[#allocation7 + $0x278] sm:$0xf]
    %v5088 = vld [vmem:[#allocation7 + $0x27c] sm:$0xff]
    %v5089 = vld [vmem:[#allocation7 + $0x284] sm:$0xf]
    %v5090 = vld [vmem:[#allocation7 + $0x288] sm:$0xff]
    %v5091 = vld [vmem:[#allocation7 + $0x290] sm:$0xf]
    %v5092 = vld [vmem:[#allocation7 + $0x294] sm:$0xff]
    %v5093 = vld [vmem:[#allocation7 + $0x29c] sm:$0xf]
    %v5094 = vld [vmem:[#allocation7 + $0x2a0] sm:$0xff]
    %v5095 = vld [vmem:[#allocation7 + $0x2a8] sm:$0xf]
    %v5096 = vld [vmem:[#allocation7 + $0x2ac] sm:$0xff]
    %v5097 = vld [vmem:[#allocation7 + $0x2b4] sm:$0xf]
    %v5098 = vld [vmem:[#allocation7 + $0x2b8] sm:$0xff]
    %v5099 = vld [vmem:[#allocation7 + $0x2c0] sm:$0xf]
    %v5100 = vld [vmem:[#allocation7 + $0x2c4] sm:$0xff]
    %v5101 = vld [vmem:[#allocation7 + $0x2cc] sm:$0xf]
    %v5102 = vld [vmem:[#allocation7 + $0x2d0] sm:$0xff]
    %v5103 = vld [vmem:[#allocation7 + $0x2d8] sm:$0xf]
    %v5104 = vld [vmem:[#allocation7 + $0x2dc] sm:$0xff]
    %v5105 = vld [vmem:[#allocation7 + $0x2e4] sm:$0xf]
    %v5106 = vld [vmem:[#allocation7 + $0x2e8] sm:$0xff]
    %v5107 = vld [vmem:[#allocation7 + $0x2f0] sm:$0xf]
    %v5108 = vld [vmem:[#allocation7 + $0x2f4] sm:$0xff]
    %v5109 = vld [vmem:[#allocation7 + $0x2fc] sm:$0xf]
    %v5110 = vld [vmem:[%s1599] ss:$8 sm:$0x7]
    %v5112 = vlaneseq
    %v5113 = vshrl.u32 %v5112, 7
    %v5114 = vsub.s32 0, %v5113
    %v5115 = vrot.slane %v5110, %v5114
    %v5116 = vlaneseq
    %v5117 = vshrl.u32 %v5116, 7
    %v5118 = vsub.s32 1, %v5117
    %v5119 = vrot.slane %v5110, %v5118
    %v5120 = vlaneseq
    %v5121 = vshrl.u32 %v5120, 7
    %v5122 = vsub.s32 2, %v5121
    %v5123 = vrot.slane %v5110, %v5122
    %v5159 = vunpack.c.l.b16 %v5078
    %v5160 = vunpack.c.h.b16 %v5078
    %v5161 = vunpack.c.l.b16 %v5079
    %v5162 = vunpack.c.l.b16 %v5080
    %v5163 = vunpack.c.h.b16 %v5080
    %v5164 = vunpack.c.l.b16 %v5081
    %v5165 = vunpack.c.l.b16 %v5082
    %v5166 = vunpack.c.h.b16 %v5082
    %v5167 = vunpack.c.l.b16 %v5083
    %v5168 = vunpack.c.l.b16 %v5084
    %v5169 = vunpack.c.h.b16 %v5084
    %v5170 = vunpack.c.l.b16 %v5085
    %v5171 = vunpack.c.l.b16 %v5086
    %v5172 = vunpack.c.h.b16 %v5086
    %v5173 = vunpack.c.l.b16 %v5087
    %v5174 = vunpack.c.l.b16 %v5088
    %v5175 = vunpack.c.h.b16 %v5088
    %v5176 = vunpack.c.l.b16 %v5089
    %v5177 = vunpack.c.l.b16 %v5090
    %v5178 = vunpack.c.h.b16 %v5090
    %v5179 = vunpack.c.l.b16 %v5091
    %v5180 = vunpack.c.l.b16 %v5092
    %v5181 = vunpack.c.h.b16 %v5092
    %v5182 = vunpack.c.l.b16 %v5093
    %v5183 = vunpack.c.l.b16 %v5094
    %v5184 = vunpack.c.h.b16 %v5094
    %v5185 = vunpack.c.l.b16 %v5095
    %v5186 = vunpack.c.l.b16 %v5096
    %v5187 = vunpack.c.h.b16 %v5096
    %v5188 = vunpack.c.l.b16 %v5097
    %v5189 = vunpack.c.l.b16 %v5098
    %v5190 = vunpack.c.h.b16 %v5098
    %v5191 = vunpack.c.l.b16 %v5099
    %v5192 = vunpack.c.l.b16 %v5100
    %v5193 = vunpack.c.h.b16 %v5100
    %v5194 = vunpack.c.l.b16 %v5101
    %v5195 = vunpack.c.l.b16 %v5102
    %v5196 = vunpack.c.h.b16 %v5102
    %v5197 = vunpack.c.l.b16 %v5103
    %v5198 = vunpack.c.l.b16 %v5104
    %v5199 = vunpack.c.h.b16 %v5104
    %v5200 = vunpack.c.l.b16 %v5105
    %v5201 = vunpack.c.l.b16 %v5106
    %v5202 = vunpack.c.h.b16 %v5106
    %v5203 = vunpack.c.l.b16 %v5107
    %v5204 = vunpack.c.l.b16 %v5108
    %v5205 = vunpack.c.h.b16 %v5108
    %v5206 = vunpack.c.l.b16 %v5109
    %v5207 = vpack.c.b16 %v5162, %v5159
    %v5208 = vpack.c.b16 %v5163, %v5160
    %v5209 = vpack.c.b16 %v5164, %v5161
    %v5210 = vpack.c.b16 %v5168, %v5165
    %v5211 = vpack.c.b16 %v5169, %v5166
    %v5212 = vpack.c.b16 %v5170, %v5167
    %v5213 = vpack.c.b16 %v5174, %v5171
    %v5214 = vpack.c.b16 %v5175, %v5172
    %v5215 = vpack.c.b16 %v5176, %v5173
    %v5216 = vpack.c.b16 %v5180, %v5177
    %v5217 = vpack.c.b16 %v5181, %v5178
    %v5218 = vpack.c.b16 %v5182, %v5179
    %v5219 = vpack.c.b16 %v5186, %v5183
    %v5220 = vpack.c.b16 %v5187, %v5184
    %v5221 = vpack.c.b16 %v5188, %v5185
    %v5222 = vpack.c.b16 %v5192, %v5189
    %v5223 = vpack.c.b16 %v5193, %v5190
    %v5224 = vpack.c.b16 %v5194, %v5191
    %v5225 = vpack.c.b16 %v5198, %v5195
    %v5226 = vpack.c.b16 %v5199, %v5196
    %v5227 = vpack.c.b16 %v5200, %v5197
    %v5228 = vpack.c.b16 %v5204, %v5201
    %v5229 = vpack.c.b16 %v5205, %v5202
    %v5230 = vpack.c.b16 %v5206, %v5203
    %5255 = vmatprep.subr.bf16.mxu0 %v5208
    %5256 = vmatpush1.bf16.msra.mxu0 %v5207
    %5257 = vmatprep.subr.bf16.mxu0 %v5211
    %5258 = vmatpush1.bf16.msra.mxu0 %v5210
    %5259 = vmatprep.subr.bf16.mxu0 %v5214
    %5260 = vmatpush1.bf16.msra.mxu0 %v5213
    %5261 = vmatprep.subr.bf16.mxu0 %v5217
    %5262 = vmatpush1.bf16.msra.mxu0 %v5216
    %5263 = vmatprep.subr.bf16.mxu0 %v5220
    %5264 = vmatpush1.bf16.msra.mxu0 %v5219
    %5265 = vmatprep.subr.bf16.mxu0 %v5223
    %5266 = vmatpush1.bf16.msra.mxu0 %v5222
    %5267 = vmatprep.subr.bf16.mxu0 %v5226
    %5268 = vmatpush1.bf16.msra.mxu0 %v5225
    %5269 = vmatprep.subr.bf16.mxu0 %v5229
    %5270 = vmatpush1.bf16.msra.mxu0 %v5228
    %5271 = vmatprep.subr.bf16.mxu0 0
    %5272 = vmatpush1.bf16.msra.mxu0 0
    %5273 = vmatprep.subr.bf16.mxu0 0
    %5274 = vmatpush1.bf16.msra.mxu0 0
    %5275 = vmatprep.subr.bf16.mxu0 0
    %5276 = vmatpush1.bf16.msra.mxu0 0
    %5277 = vmatprep.subr.bf16.mxu0 0
    %5278 = vmatpush1.bf16.msra.mxu0 0
    %5279 = vmatprep.subr.bf16.mxu0 0
    %5280 = vmatpush1.bf16.msra.mxu0 0
    %5281 = vmatprep.subr.bf16.mxu0 0
    %5282 = vmatpush1.bf16.msra.mxu0 0
    %5283 = vmatprep.subr.bf16.mxu0 0
    %5284 = vmatpush1.bf16.msra.mxu0 0
    %5285 = vmatprep.subr.bf16.mxu0 0
    %5286 = vmatpush1.bf16.msra.mxu0 0
    %5287 = vmatprep.mubr.bf16.mxu0 0
    %5288 = vmatmul.mubr.bf16.gmra.mrb[0].mxu0 %v3601
    %v5289 = vpop.f32.mrb[0].mxu0
    %v5290 = vadd.f32 %v5115, %v5289
    %v5291 = vpop.f32.mrb[0].mxu0
    %v5292 = vadd.f32 %v5119, %v5291
    %v5293 = vpop.f32.mrb[0].mxu0
    %v5294 = vpop.f32.mrb[0].mxu0
    %5295 = vdwg.mxu0
    %5296 = vmatprep.subr.bf16.mxu0 0
    %5297 = vmatpush1.bf16.msra.mxu0 %v5209
    %5298 = vmatprep.subr.bf16.mxu0 0
    %5299 = vmatpush1.bf16.msra.mxu0 %v5212
    %5300 = vmatprep.subr.bf16.mxu0 0
    %5301 = vmatpush1.bf16.msra.mxu0 %v5215
    %5302 = vmatprep.subr.bf16.mxu0 0
    %5303 = vmatpush1.bf16.msra.mxu0 %v5218
    %5304 = vmatprep.subr.bf16.mxu0 0
    %5305 = vmatpush1.bf16.msra.mxu0 %v5221
    %5306 = vmatprep.subr.bf16.mxu0 0
    %5307 = vmatpush1.bf16.msra.mxu0 %v5224
    %5308 = vmatprep.subr.bf16.mxu0 0
    %5309 = vmatpush1.bf16.msra.mxu0 %v5227
    %5310 = vmatprep.subr.bf16.mxu0 0
    %5311 = vmatpush1.bf16.msra.mxu0 %v5230
    %5312 = vmatprep.subr.bf16.mxu0 0
    %5313 = vmatpush1.bf16.msra.mxu0 0
    %5314 = vmatprep.subr.bf16.mxu0 0
    %5315 = vmatpush1.bf16.msra.mxu0 0
    %5316 = vmatprep.subr.bf16.mxu0 0
    %5317 = vmatpush1.bf16.msra.mxu0 0
    %5318 = vmatprep.subr.bf16.mxu0 0
    %5319 = vmatpush1.bf16.msra.mxu0 0
    %5320 = vmatprep.subr.bf16.mxu0 0
    %5321 = vmatpush1.bf16.msra.mxu0 0
    %5322 = vmatprep.subr.bf16.mxu0 0
    %5323 = vmatpush1.bf16.msra.mxu0 0
    %5324 = vmatprep.subr.bf16.mxu0 0
    %5325 = vmatpush1.bf16.msra.mxu0 0
    %5326 = vmatprep.subr.bf16.mxu0 0
    %5327 = vmatpush1.bf16.msra.mxu0 0
    %5328 = vmatprep.mubr.bf16.mxu0 0
    %5329 = vmatmul.mubr.bf16.gmra.mrb[0].mxu0 %v3601
    %v5330 = vpop.f32.mrb[0].mxu0
    %v5331 = vadd.f32 %v5123, %v5330
    %v5332 = vpop.f32.mrb[0].mxu0
    %v5333 = vpop.f32.mrb[0].mxu0
    %v5334 = vpop.f32.mrb[0].mxu0
    %5335 = vdwg.mxu0
    %v5336 = vadd.f32 %v5032, %v5290
    %v5337 = vxor.u32 %v5336, 2147483648
    %v5338 = vmul.f32 %v5337, 1.442695
    %v5339 = vpow.pop %v5338
    %v5340 = vadd.f32 %v5339, 1.0
    %v5341 = vrcp.pop %v5340
    %v5342 = vmul.f32 1.0, %v5341
    %v5343 = vadd.f32 %v5034, %v5292
    %v5344 = vxor.u32 %v5343, 2147483648
    %v5345 = vmul.f32 %v5344, 1.442695
    %v5346 = vpow.pop %v5345
    %v5347 = vadd.f32 %v5346, 1.0
    %v5348 = vrcp.pop %v5347
    %v5349 = vmul.f32 1.0, %v5348
    %v5350 = vmul.f32 %v5342, %v5331
    %v5351 = vadd.f32 %v5073, %v5350
    %v5352 = vtanh.pop %v5351
    %v5353 = vsub.f32 %v3600, %v5352
    %v5354 = vmul.f32 %v5349, %v5353
    %v5355 = vadd.f32 %v5352, %v5354
    %v5356 = vpack.c.bf16 %v5355, %v5355
    %v5358 = vsel %vm83, %v5356, 0
    %5360 = vmatprep.subr.bf16.mxu0 0
    %5361 = vmatpush1.bf16.msra.mxu0 %v5358
    %5362 = vmatprep.subr.bf16.mxu0 0
    %5363 = vmatpush1.bf16.msra.mxu0 0
    %5364 = vmatprep.subr.bf16.mxu0 0
    %5365 = vmatpush1.bf16.msra.mxu0 0
    %5366 = vmatprep.subr.bf16.mxu0 0
    %5367 = vmatpush1.bf16.msra.mxu0 0
    %5368 = vmatprep.subr.bf16.mxu0 0
    %5369 = vmatpush1.bf16.msra.mxu0 0
    %5370 = vmatprep.subr.bf16.mxu0 0
    %5371 = vmatpush1.bf16.msra.mxu0 0
    %5372 = vmatprep.subr.bf16.mxu0 0
    %5373 = vmatpush1.bf16.msra.mxu0 0
    %5374 = vmatprep.subr.bf16.mxu0 0
    %5375 = vmatpush1.bf16.msra.mxu0 0
    %5376 = vmatprep.subr.bf16.mxu0 0
    %5377 = vmatpush1.bf16.msra.mxu0 0
    %5378 = vmatprep.subr.bf16.mxu0 0
    %5379 = vmatpush1.bf16.msra.mxu0 0
    %5380 = vmatprep.subr.bf16.mxu0 0
    %5381 = vmatpush1.bf16.msra.mxu0 0
    %5382 = vmatprep.subr.bf16.mxu0 0
    %5383 = vmatpush1.bf16.msra.mxu0 0
    %5384 = vmatprep.subr.bf16.mxu0 0
    %5385 = vmatpush1.bf16.msra.mxu0 0
    %5386 = vmatprep.subr.bf16.mxu0 0
    %5387 = vmatpush1.bf16.msra.mxu0 0
    %5388 = vmatprep.subr.bf16.mxu0 0
    %5389 = vmatpush1.bf16.msra.mxu0 0
    %5390 = vmatprep.subr.bf16.mxu0 0
    %5391 = vmatpush1.bf16.msra.mxu0 0
    %5392 = vmatprep.mubr.bf16.mxu0 0
    %5393 = vmatmul.mubr.bf16.gmra.mrb[0].mxu0 %v78
    %v5394 = vpop.f32.mrb[0].mxu0
    %v5395 = vadd.f32 0.0, %v5394
    %v5396 = vpop.f32.mrb[0].mxu0
    %v5397 = vpop.f32.mrb[0].mxu0
    %v5398 = vadd.f32 0.0, %v5397
    %v5399 = vpop.f32.mrb[0].mxu0
    %5400 = vmatprep.mubr.bf16.mxu0 0
    %5401 = vmatmul.mubr.bf16.gmra.mrb[0].mxu0 %v81
    %v5402 = vpop.f32.mrb[0].mxu0
    %v5403 = vadd.f32 0.0, %v5402
    %v5404 = vpop.f32.mrb[0].mxu0
    %v5405 = vpop.f32.mrb[0].mxu0
    %v5406 = vpop.f32.mrb[0].mxu0
    %5407 = vdwg.mxu0
    %v5408 = vld [vmem:[#allocation7] sm:$0xff]
    %v5409 = vld [vmem:[#allocation7 + $0x8] sm:$0xf]
    %v5410 = vld [vmem:[#allocation7 + $0xc] sm:$0xff]
    %v5411 = vld [vmem:[#allocation7 + $0x14] sm:$0xf]
    %v5412 = vld [vmem:[#allocation7 + $0x18] sm:$0xff]
    %v5413 = vld [vmem:[#allocation7 + $0x20] sm:$0xf]
    %v5414 = vld [vmem:[#allocation7 + $0x24] sm:$0xff]
    %v5415 = vld [vmem:[#allocation7 + $0x2c] sm:$0xf]
    %v5416 = vld [vmem:[#allocation7 + $0x30] sm:$0xff]
    %v5417 = vld [vmem:[#allocation7 + $0x38] sm:$0xf]
    %v5418 = vld [vmem:[#allocation7 + $0x3c] sm:$0xff]
    %v5419 = vld [vmem:[#allocation7 + $0x44] sm:$0xf]
    %v5420 = vld [vmem:[#allocation7 + $0x48] sm:$0xff]
    %v5421 = vld [vmem:[#allocation7 + $0x50] sm:$0xf]
    %v5422 = vld [vmem:[#allocation7 + $0x54] sm:$0xff]
    %v5423 = vld [vmem:[#allocation7 + $0x5c] sm:$0xf]
    %v5424 = vld [vmem:[#allocation7 + $0x60] sm:$0xff]
    %v5425 = vld [vmem:[#allocation7 + $0x68] sm:$0xf]
    %v5426 = vld [vmem:[#allocation7 + $0x6c] sm:$0xff]
    %v5427 = vld [vmem:[#allocation7 + $0x74] sm:$0xf]
    %v5428 = vld [vmem:[#allocation7 + $0x78] sm:$0xff]
    %v5429 = vld [vmem:[#allocation7 + $0x80] sm:$0xf]
    %v5430 = vld [vmem:[#allocation7 + $0x84] sm:$0xff]
    %v5431 = vld [vmem:[#allocation7 + $0x8c] sm:$0xf]
    %v5432 = vld [vmem:[#allocation7 + $0x90] sm:$0xff]
    %v5433 = vld [vmem:[#allocation7 + $0x98] sm:$0xf]
    %v5434 = vld [vmem:[#allocation7 + $0x9c] sm:$0xff]
    %v5435 = vld [vmem:[#allocation7 + $0xa4] sm:$0xf]
    %v5436 = vld [vmem:[#allocation7 + $0xa8] sm:$0xff]
    %v5437 = vld [vmem:[#allocation7 + $0xb0] sm:$0xf]
    %v5438 = vld [vmem:[#allocation7 + $0xb4] sm:$0xff]
    %v5439 = vld [vmem:[#allocation7 + $0xbc] sm:$0xf]
    %v5440 = vpack.c.bf16 %v5398, %v5395
    %v5441 = vpack.c.bf16 %v5403, %v5403
    %v5442 = vld [vmem:[%s5] ss:$8 sm:$0x7]
    %v5444 = vlaneseq
    %v5445 = vshrl.u32 %v5444, 7
    %v5446 = vsub.s32 0, %v5445
    %v5447 = vrot.slane %v5442, %v5446
    %v5448 = vlaneseq
    %v5449 = vshrl.u32 %v5448, 7
    %v5450 = vsub.s32 1, %v5449
    %v5451 = vrot.slane %v5442, %v5450
    %v5452 = vlaneseq
    %v5453 = vshrl.u32 %v5452, 7
    %v5454 = vsub.s32 2, %v5453
    %v5455 = vrot.slane %v5442, %v5454
    %v5491 = vunpack.c.l.b16 %v5408
    %v5492 = vunpack.c.h.b16 %v5408
    %v5493 = vunpack.c.l.b16 %v5409
    %v5494 = vunpack.c.l.b16 %v5410
    %v5495 = vunpack.c.h.b16 %v5410
    %v5496 = vunpack.c.l.b16 %v5411
    %v5497 = vunpack.c.l.b16 %v5412
    %v5498 = vunpack.c.h.b16 %v5412
    %v5499 = vunpack.c.l.b16 %v5413
    %v5500 = vunpack.c.l.b16 %v5414
    %v5501 = vunpack.c.h.b16 %v5414
    %v5502 = vunpack.c.l.b16 %v5415
    %v5503 = vunpack.c.l.b16 %v5416
    %v5504 = vunpack.c.h.b16 %v5416
    %v5505 = vunpack.c.l.b16 %v5417
    %v5506 = vunpack.c.l.b16 %v5418
    %v5507 = vunpack.c.h.b16 %v5418
    %v5508 = vunpack.c.l.b16 %v5419
    %v5509 = vunpack.c.l.b16 %v5420
    %v5510 = vunpack.c.h.b16 %v5420
    %v5511 = vunpack.c.l.b16 %v5421
    %v5512 = vunpack.c.l.b16 %v5422
    %v5513 = vunpack.c.h.b16 %v5422
    %v5514 = vunpack.c.l.b16 %v5423
    %v5515 = vunpack.c.l.b16 %v5424
    %v5516 = vunpack.c.h.b16 %v5424
    %v5517 = vunpack.c.l.b16 %v5425
    %v5518 = vunpack.c.l.b16 %v5426
    %v5519 = vunpack.c.h.b16 %v5426
    %v5520 = vunpack.c.l.b16 %v5427
    %v5521 = vunpack.c.l.b16 %v5428
    %v5522 = vunpack.c.h.b16 %v5428
    %v5523 = vunpack.c.l.b16 %v5429
    %v5524 = vunpack.c.l.b16 %v5430
    %v5525 = vunpack.c.h.b16 %v5430
    %v5526 = vunpack.c.l.b16 %v5431
    %v5527 = vunpack.c.l.b16 %v5432
    %v5528 = vunpack.c.h.b16 %v5432
    %v5529 = vunpack.c.l.b16 %v5433
    %v5530 = vunpack.c.l.b16 %v5434
    %v5531 = vunpack.c.h.b16 %v5434
    %v5532 = vunpack.c.l.b16 %v5435
    %v5533 = vunpack.c.l.b16 %v5436
    %v5534 = vunpack.c.h.b16 %v5436
    %v5535 = vunpack.c.l.b16 %v5437
    %v5536 = vunpack.c.l.b16 %v5438
    %v5537 = vunpack.c.h.b16 %v5438
    %v5538 = vunpack.c.l.b16 %v5439
    %v5539 = vpack.c.b16 %v5494, %v5491
    %v5540 = vpack.c.b16 %v5495, %v5492
    %v5541 = vpack.c.b16 %v5496, %v5493
    %v5542 = vpack.c.b16 %v5500, %v5497
    %v5543 = vpack.c.b16 %v5501, %v5498
    %v5544 = vpack.c.b16 %v5502, %v5499
    %v5545 = vpack.c.b16 %v5506, %v5503
    %v5546 = vpack.c.b16 %v5507, %v5504
    %v5547 = vpack.c.b16 %v5508, %v5505
    %v5548 = vpack.c.b16 %v5512, %v5509
    %v5549 = vpack.c.b16 %v5513, %v5510
    %v5550 = vpack.c.b16 %v5514, %v5511
    %v5551 = vpack.c.b16 %v5518, %v5515
    %v5552 = vpack.c.b16 %v5519, %v5516
    %v5553 = vpack.c.b16 %v5520, %v5517
    %v5554 = vpack.c.b16 %v5524, %v5521
    %v5555 = vpack.c.b16 %v5525, %v5522
    %v5556 = vpack.c.b16 %v5526, %v5523
    %v5557 = vpack.c.b16 %v5530, %v5527
    %v5558 = vpack.c.b16 %v5531, %v5528
    %v5559 = vpack.c.b16 %v5532, %v5529
    %v5560 = vpack.c.b16 %v5536, %v5533
    %v5561 = vpack.c.b16 %v5537, %v5534
    %v5562 = vpack.c.b16 %v5538, %v5535
    %5587 = vmatprep.subr.bf16.mxu0 %v5540
    %5588 = vmatpush1.bf16.msra.mxu0 %v5539
    %5589 = vmatprep.subr.bf16.mxu0 %v5543
    %5590 = vmatpush1.bf16.msra.mxu0 %v5542
    %5591 = vmatprep.subr.bf16.mxu0 %v5546
    %5592 = vmatpush1.bf16.msra.mxu0 %v5545
    %5593 = vmatprep.subr.bf16.mxu0 %v5549
    %5594 = vmatpush1.bf16.msra.mxu0 %v5548
    %5595 = vmatprep.subr.bf16.mxu0 %v5552
    %5596 = vmatpush1.bf16.msra.mxu0 %v5551
    %5597 = vmatprep.subr.bf16.mxu0 %v5555
    %5598 = vmatpush1.bf16.msra.mxu0 %v5554
    %5599 = vmatprep.subr.bf16.mxu0 %v5558
    %5600 = vmatpush1.bf16.msra.mxu0 %v5557
    %5601 = vmatprep.subr.bf16.mxu0 %v5561
    %5602 = vmatpush1.bf16.msra.mxu0 %v5560
    %5603 = vmatprep.subr.bf16.mxu0 0
    %5604 = vmatpush1.bf16.msra.mxu0 0
    %5605 = vmatprep.subr.bf16.mxu0 0
    %5606 = vmatpush1.bf16.msra.mxu0 0
    %5607 = vmatprep.subr.bf16.mxu0 0
    %5608 = vmatpush1.bf16.msra.mxu0 0
    %5609 = vmatprep.subr.bf16.mxu0 0
    %5610 = vmatpush1.bf16.msra.mxu0 0
    %5611 = vmatprep.subr.bf16.mxu0 0
    %5612 = vmatpush1.bf16.msra.mxu0 0
    %5613 = vmatprep.subr.bf16.mxu0 0
    %5614 = vmatpush1.bf16.msra.mxu0 0
    %5615 = vmatprep.subr.bf16.mxu0 0
    %5616 = vmatpush1.bf16.msra.mxu0 0
    %5617 = vmatprep.subr.bf16.mxu0 0
    %5618 = vmatpush1.bf16.msra.mxu0 0
    %5619 = vmatprep.mubr.bf16.mxu0 0
    %5620 = vmatmul.mubr.bf16.gmra.mrb[0].mxu0 %v5440
    %v5621 = vpop.f32.mrb[0].mxu0
    %v5622 = vadd.f32 %v5447, %v5621
    %v5623 = vpop.f32.mrb[0].mxu0
    %v5624 = vadd.f32 %v5451, %v5623
    %v5625 = vpop.f32.mrb[0].mxu0
    %v5626 = vadd.f32 %v5447, %v5625
    %v5627 = vpop.f32.mrb[0].mxu0
    %v5628 = vadd.f32 %v5451, %v5627
    %5629 = vmatprep.mubr.bf16.mxu0 0
    %5630 = vmatmul.mubr.bf16.gmra.mrb[0].mxu0 %v5441
    %v5631 = vpop.f32.mrb[0].mxu0
    %v5632 = vadd.f32 %v5447, %v5631
    %v5633 = vpop.f32.mrb[0].mxu0
    %v5634 = vadd.f32 %v5451, %v5633
    %v5635 = vpop.f32.mrb[0].mxu0
    %v5636 = vpop.f32.mrb[0].mxu0
    %5637 = vdwg.mxu0
    %5638 = vmatprep.subr.bf16.mxu0 0
    %5639 = vmatpush1.bf16.msra.mxu0 %v5541
    %5640 = vmatprep.subr.bf16.mxu0 0
    %5641 = vmatpush1.bf16.msra.mxu0 %v5544
    %5642 = vmatprep.subr.bf16.mxu0 0
    %5643 = vmatpush1.bf16.msra.mxu0 %v5547
    %5644 = vmatprep.subr.bf16.mxu0 0
    %5645 = vmatpush1.bf16.msra.mxu0 %v5550
    %5646 = vmatprep.subr.bf16.mxu0 0
    %5647 = vmatpush1.bf16.msra.mxu0 %v5553
    %5648 = vmatprep.subr.bf16.mxu0 0
    %5649 = vmatpush1.bf16.msra.mxu0 %v5556
    %5650 = vmatprep.subr.bf16.mxu0 0
    %5651 = vmatpush1.bf16.msra.mxu0 %v5559
    %5652 = vmatprep.subr.bf16.mxu0 0
    %5653 = vmatpush1.bf16.msra.mxu0 %v5562
    %5654 = vmatprep.subr.bf16.mxu0 0
    %5655 = vmatpush1.bf16.msra.mxu0 0
    %5656 = vmatprep.subr.bf16.mxu0 0
    %5657 = vmatpush1.bf16.msra.mxu0 0
    %5658 = vmatprep.subr.bf16.mxu0 0
    %5659 = vmatpush1.bf16.msra.mxu0 0
    %5660 = vmatprep.subr.bf16.mxu0 0
    %5661 = vmatpush1.bf16.msra.mxu0 0
    %5662 = vmatprep.subr.bf16.mxu0 0
    %5663 = vmatpush1.bf16.msra.mxu0 0
    %5664 = vmatprep.subr.bf16.mxu0 0
    %5665 = vmatpush1.bf16.msra.mxu0 0
    %5666 = vmatprep.subr.bf16.mxu0 0
    %5667 = vmatpush1.bf16.msra.mxu0 0
    %5668 = vmatprep.subr.bf16.mxu0 0
    %5669 = vmatpush1.bf16.msra.mxu0 0
    %5670 = vmatprep.mubr.bf16.mxu0 0
    %5671 = vmatmul.mubr.bf16.gmra.mrb[0].mxu0 %v5440
    %v5672 = vpop.f32.mrb[0].mxu0
    %v5673 = vadd.f32 %v5455, %v5672
    %v5674 = vpop.f32.mrb[0].mxu0
    %v5675 = vpop.f32.mrb[0].mxu0
    %v5676 = vadd.f32 %v5455, %v5675
    %v5677 = vpop.f32.mrb[0].mxu0
    %5678 = vmatprep.mubr.bf16.mxu0 0
    %5679 = vmatmul.mubr.bf16.gmra.mrb[0].mxu0 %v5441
    %v5680 = vpop.f32.mrb[0].mxu0
    %v5681 = vadd.f32 %v5455, %v5680
    %v5682 = vpop.f32.mrb[0].mxu0
    %v5683 = vpop.f32.mrb[0].mxu0
    %v5684 = vpop.f32.mrb[0].mxu0
    %5685 = vdwg.mxu0
    %v5686 = vld [vmem:[#allocation7 + $0xc0] sm:$0xff]
    %v5687 = vld [vmem:[#allocation7 + $0xc8] sm:$0xf]
    %v5688 = vld [vmem:[#allocation7 + $0xcc] sm:$0xff]
    %v5689 = vld [vmem:[#allocation7 + $0xd4] sm:$0xf]
    %v5690 = vld [vmem:[#allocation7 + $0xd8] sm:$0xff]
    %v5691 = vld [vmem:[#allocation7 + $0xe0] sm:$0xf]
    %v5692 = vld [vmem:[#allocation7 + $0xe4] sm:$0xff]
    %v5693 = vld [vmem:[#allocation7 + $0xec] sm:$0xf]
    %v5694 = vld [vmem:[#allocation7 + $0xf0] sm:$0xff]
    %v5695 = vld [vmem:[#allocation7 + $0xf8] sm:$0xf]
    %v5696 = vld [vmem:[#allocation7 + $0xfc] sm:$0xff]
    %v5697 = vld [vmem:[#allocation7 + $0x104] sm:$0xf]
    %v5698 = vld [vmem:[#allocation7 + $0x108] sm:$0xff]
    %v5699 = vld [vmem:[#allocation7 + $0x110] sm:$0xf]
    %v5700 = vld [vmem:[#allocation7 + $0x114] sm:$0xff]
    %v5701 = vld [vmem:[#allocation7 + $0x11c] sm:$0xf]
    %v5702 = vld [vmem:[#allocation7 + $0x120] sm:$0xff]
    %v5703 = vld [vmem:[#allocation7 + $0x128] sm:$0xf]
    %v5704 = vld [vmem:[#allocation7 + $0x12c] sm:$0xff]
    %v5705 = vld [vmem:[#allocation7 + $0x134] sm:$0xf]
    %v5706 = vld [vmem:[#allocation7 + $0x138] sm:$0xff]
    %v5707 = vld [vmem:[#allocation7 + $0x140] sm:$0xf]
    %v5708 = vld [vmem:[#allocation7 + $0x144] sm:$0xff]
    %v5709 = vld [vmem:[#allocation7 + $0x14c] sm:$0xf]
    %v5710 = vld [vmem:[#allocation7 + $0x150] sm:$0xff]
    %v5711 = vld [vmem:[#allocation7 + $0x158] sm:$0xf]
    %v5712 = vld [vmem:[#allocation7 + $0x15c] sm:$0xff]
    %v5713 = vld [vmem:[#allocation7 + $0x164] sm:$0xf]
    %v5714 = vld [vmem:[#allocation7 + $0x168] sm:$0xff]
    %v5715 = vld [vmem:[#allocation7 + $0x170] sm:$0xf]
    %v5716 = vld [vmem:[#allocation7 + $0x174] sm:$0xff]
    %v5717 = vld [vmem:[#allocation7 + $0x17c] sm:$0xf]
    %v5718 = vpack.c.bf16 %v4769, %v4769
    %v5719 = vld [vmem:[%s446] ss:$8 sm:$0x7]
    %v5721 = vlaneseq
    %v5722 = vshrl.u32 %v5721, 7
    %v5723 = vsub.s32 0, %v5722
    %v5724 = vrot.slane %v5719, %v5723
    %v5725 = vlaneseq
    %v5726 = vshrl.u32 %v5725, 7
    %v5727 = vsub.s32 1, %v5726
    %v5728 = vrot.slane %v5719, %v5727
    %v5729 = vlaneseq
    %v5730 = vshrl.u32 %v5729, 7
    %v5731 = vsub.s32 2, %v5730
    %v5732 = vrot.slane %v5719, %v5731
    %v5768 = vunpack.c.l.b16 %v5686
    %v5769 = vunpack.c.h.b16 %v5686
    %v5770 = vunpack.c.l.b16 %v5687
    %v5771 = vunpack.c.l.b16 %v5688
    %v5772 = vunpack.c.h.b16 %v5688
    %v5773 = vunpack.c.l.b16 %v5689
    %v5774 = vunpack.c.l.b16 %v5690
    %v5775 = vunpack.c.h.b16 %v5690
    %v5776 = vunpack.c.l.b16 %v5691
    %v5777 = vunpack.c.l.b16 %v5692
    %v5778 = vunpack.c.h.b16 %v5692
    %v5779 = vunpack.c.l.b16 %v5693
    %v5780 = vunpack.c.l.b16 %v5694
    %v5781 = vunpack.c.h.b16 %v5694
    %v5782 = vunpack.c.l.b16 %v5695
    %v5783 = vunpack.c.l.b16 %v5696
    %v5784 = vunpack.c.h.b16 %v5696
    %v5785 = vunpack.c.l.b16 %v5697
    %v5786 = vunpack.c.l.b16 %v5698
    %v5787 = vunpack.c.h.b16 %v5698
    %v5788 = vunpack.c.l.b16 %v5699
    %v5789 = vunpack.c.l.b16 %v5700
    %v5790 = vunpack.c.h.b16 %v5700
    %v5791 = vunpack.c.l.b16 %v5701
    %v5792 = vunpack.c.l.b16 %v5702
    %v5793 = vunpack.c.h.b16 %v5702
    %v5794 = vunpack.c.l.b16 %v5703
    %v5795 = vunpack.c.l.b16 %v5704
    %v5796 = vunpack.c.h.b16 %v5704
    %v5797 = vunpack.c.l.b16 %v5705
    %v5798 = vunpack.c.l.b16 %v5706
    %v5799 = vunpack.c.h.b16 %v5706
    %v5800 = vunpack.c.l.b16 %v5707
    %v5801 = vunpack.c.l.b16 %v5708
    %v5802 = vunpack.c.h.b16 %v5708
    %v5803 = vunpack.c.l.b16 %v5709
    %v5804 = vunpack.c.l.b16 %v5710
    %v5805 = vunpack.c.h.b16 %v5710
    %v5806 = vunpack.c.l.b16 %v5711
    %v5807 = vunpack.c.l.b16 %v5712
    %v5808 = vunpack.c.h.b16 %v5712
    %v5809 = vunpack.c.l.b16 %v5713
    %v5810 = vunpack.c.l.b16 %v5714
    %v5811 = vunpack.c.h.b16 %v5714
    %v5812 = vunpack.c.l.b16 %v5715
    %v5813 = vunpack.c.l.b16 %v5716
    %v5814 = vunpack.c.h.b16 %v5716
    %v5815 = vunpack.c.l.b16 %v5717
    %v5816 = vpack.c.b16 %v5771, %v5768
    %v5817 = vpack.c.b16 %v5772, %v5769
    %v5818 = vpack.c.b16 %v5773, %v5770
    %v5819 = vpack.c.b16 %v5777, %v5774
    %v5820 = vpack.c.b16 %v5778, %v5775
    %v5821 = vpack.c.b16 %v5779, %v5776
    %v5822 = vpack.c.b16 %v5783, %v5780
    %v5823 = vpack.c.b16 %v5784, %v5781
    %v5824 = vpack.c.b16 %v5785, %v5782
    %v5825 = vpack.c.b16 %v5789, %v5786
    %v5826 = vpack.c.b16 %v5790, %v5787
    %v5827 = vpack.c.b16 %v5791, %v5788
    %v5828 = vpack.c.b16 %v5795, %v5792
    %v5829 = vpack.c.b16 %v5796, %v5793
    %v5830 = vpack.c.b16 %v5797, %v5794
    %v5831 = vpack.c.b16 %v5801, %v5798
    %v5832 = vpack.c.b16 %v5802, %v5799
    %v5833 = vpack.c.b16 %v5803, %v5800
    %v5834 = vpack.c.b16 %v5807, %v5804
    %v5835 = vpack.c.b16 %v5808, %v5805
    %v5836 = vpack.c.b16 %v5809, %v5806
    %v5837 = vpack.c.b16 %v5813, %v5810
    %v5838 = vpack.c.b16 %v5814, %v5811
    %v5839 = vpack.c.b16 %v5815, %v5812
    %5864 = vmatprep.subr.bf16.mxu0 %v5817
    %5865 = vmatpush1.bf16.msra.mxu0 %v5816
    %5866 = vmatprep.subr.bf16.mxu0 %v5820
    %5867 = vmatpush1.bf16.msra.mxu0 %v5819
    %5868 = vmatprep.subr.bf16.mxu0 %v5823
    %5869 = vmatpush1.bf16.msra.mxu0 %v5822
    %5870 = vmatprep.subr.bf16.mxu0 %v5826
    %5871 = vmatpush1.bf16.msra.mxu0 %v5825
    %5872 = vmatprep.subr.bf16.mxu0 %v5829
    %5873 = vmatpush1.bf16.msra.mxu0 %v5828
    %5874 = vmatprep.subr.bf16.mxu0 %v5832
    %5875 = vmatpush1.bf16.msra.mxu0 %v5831
    %5876 = vmatprep.subr.bf16.mxu0 %v5835
    %5877 = vmatpush1.bf16.msra.mxu0 %v5834
    %5878 = vmatprep.subr.bf16.mxu0 %v5838
    %5879 = vmatpush1.bf16.msra.mxu0 %v5837
    %5880 = vmatprep.subr.bf16.mxu0 0
    %5881 = vmatpush1.bf16.msra.mxu0 0
    %5882 = vmatprep.subr.bf16.mxu0 0
    %5883 = vmatpush1.bf16.msra.mxu0 0
    %5884 = vmatprep.subr.bf16.mxu0 0
    %5885 = vmatpush1.bf16.msra.mxu0 0
    %5886 = vmatprep.subr.bf16.mxu0 0
    %5887 = vmatpush1.bf16.msra.mxu0 0
    %5888 = vmatprep.subr.bf16.mxu0 0
    %5889 = vmatpush1.bf16.msra.mxu0 0
    %5890 = vmatprep.subr.bf16.mxu0 0
    %5891 = vmatpush1.bf16.msra.mxu0 0
    %5892 = vmatprep.subr.bf16.mxu0 0
    %5893 = vmatpush1.bf16.msra.mxu0 0
    %5894 = vmatprep.subr.bf16.mxu0 0
    %5895 = vmatpush1.bf16.msra.mxu0 0
    %5896 = vmatprep.mubr.bf16.mxu0 0
    %5897 = vmatmul.mubr.bf16.gmra.mrb[0].mxu0 %v5718
    %v5898 = vpop.f32.mrb[0].mxu0
    %v5899 = vadd.f32 %v5724, %v5898
    %v5900 = vpop.f32.mrb[0].mxu0
    %v5901 = vadd.f32 %v5728, %v5900
    %v5902 = vpop.f32.mrb[0].mxu0
    %v5903 = vpop.f32.mrb[0].mxu0
    %5904 = vdwg.mxu0
    %5905 = vmatprep.subr.bf16.mxu0 0
    %5906 = vmatpush1.bf16.msra.mxu0 %v5818
    %5907 = vmatprep.subr.bf16.mxu0 0
    %5908 = vmatpush1.bf16.msra.mxu0 %v5821
    %5909 = vmatprep.subr.bf16.mxu0 0
    %5910 = vmatpush1.bf16.msra.mxu0 %v5824
    %5911 = vmatprep.subr.bf16.mxu0 0
    %5912 = vmatpush1.bf16.msra.mxu0 %v5827
    %5913 = vmatprep.subr.bf16.mxu0 0
    %5914 = vmatpush1.bf16.msra.mxu0 %v5830
    %5915 = vmatprep.subr.bf16.mxu0 0
    %5916 = vmatpush1.bf16.msra.mxu0 %v5833
    %5917 = vmatprep.subr.bf16.mxu0 0
    %5918 = vmatpush1.bf16.msra.mxu0 %v5836
    %5919 = vmatprep.subr.bf16.mxu0 0
    %5920 = vmatpush1.bf16.msra.mxu0 %v5839
    %5921 = vmatprep.subr.bf16.mxu0 0
    %5922 = vmatpush1.bf16.msra.mxu0 0
    %5923 = vmatprep.subr.bf16.mxu0 0
    %5924 = vmatpush1.bf16.msra.mxu0 0
    %5925 = vmatprep.subr.bf16.mxu0 0
    %5926 = vmatpush1.bf16.msra.mxu0 0
    %5927 = vmatprep.subr.bf16.mxu0 0
    %5928 = vmatpush1.bf16.msra.mxu0 0
    %5929 = vmatprep.subr.bf16.mxu0 0
    %5930 = vmatpush1.bf16.msra.mxu0 0
    %5931 = vmatprep.subr.bf16.mxu0 0
    %5932 = vmatpush1.bf16.msra.mxu0 0
    %5933 = vmatprep.subr.bf16.mxu0 0
    %5934 = vmatpush1.bf16.msra.mxu0 0
    %5935 = vmatprep.subr.bf16.mxu0 0
    %5936 = vmatpush1.bf16.msra.mxu0 0
    %5937 = vmatprep.mubr.bf16.mxu0 0
    %5938 = vmatmul.mubr.bf16.gmra.mrb[0].mxu0 %v5718
    %v5939 = vpop.f32.mrb[0].mxu0
    %v5940 = vadd.f32 %v5732, %v5939
    %v5941 = vpop.f32.mrb[0].mxu0
    %v5942 = vpop.f32.mrb[0].mxu0
    %v5943 = vpop.f32.mrb[0].mxu0
    %5944 = vdwg.mxu0
    %v5945 = vadd.f32 %v5622, %v5899
    %v5946 = vxor.u32 %v5945, 2147483648
    %v5947 = vmul.f32 %v5946, 1.442695
    %v5948 = vpow.pop %v5947
    %v5949 = vadd.f32 %v5948, 1.0
    %v5950 = vrcp.pop %v5949
    %v5951 = vmul.f32 1.0, %v5950
    %v5952 = vadd.f32 %v5624, %v5901
    %v5953 = vxor.u32 %v5952, 2147483648
    %v5954 = vmul.f32 %v5953, 1.442695
    %v5955 = vpow.pop %v5954
    %v5956 = vadd.f32 %v5955, 1.0
    %v5957 = vrcp.pop %v5956
    %v5958 = vmul.f32 1.0, %v5957
    %v5959 = vmul.f32 %v5951, %v5940
    %v5960 = vadd.f32 %v5673, %v5959
    %v5961 = vtanh.pop %v5960
    %v5962 = vsub.f32 %v4769, %v5961
    %v5963 = vmul.f32 %v5958, %v5962
    %v5964 = vadd.f32 %v5961, %v5963
    %5965 = vst [vmem:[#allocation2] sm:$0xff] %v5964
    %v5966 = vld [vmem:[#allocation7 + $0xc0] sm:$0xff]
    %v5967 = vld [vmem:[#allocation7 + $0xc8] sm:$0xf]
    %v5968 = vld [vmem:[#allocation7 + $0xcc] sm:$0xff]
    %v5969 = vld [vmem:[#allocation7 + $0xd4] sm:$0xf]
    %v5970 = vld [vmem:[#allocation7 + $0xd8] sm:$0xff]
    %v5971 = vld [vmem:[#allocation7 + $0xe0] sm:$0xf]
    %v5972 = vld [vmem:[#allocation7 + $0xe4] sm:$0xff]
    %v5973 = vld [vmem:[#allocation7 + $0xec] sm:$0xf]
    %v5974 = vld [vmem:[#allocation7 + $0xf0] sm:$0xff]
    %v5975 = vld [vmem:[#allocation7 + $0xf8] sm:$0xf]
    %v5976 = vld [vmem:[#allocation7 + $0xfc] sm:$0xff]
    %v5977 = vld [vmem:[#allocation7 + $0x104] sm:$0xf]
    %v5978 = vld [vmem:[#allocation7 + $0x108] sm:$0xff]
    %v5979 = vld [vmem:[#allocation7 + $0x110] sm:$0xf]
    %v5980 = vld [vmem:[#allocation7 + $0x114] sm:$0xff]
    %v5981 = vld [vmem:[#allocation7 + $0x11c] sm:$0xf]
    %v5982 = vld [vmem:[#allocation7 + $0x120] sm:$0xff]
    %v5983 = vld [vmem:[#allocation7 + $0x128] sm:$0xf]
    %v5984 = vld [vmem:[#allocation7 + $0x12c] sm:$0xff]
    %v5985 = vld [vmem:[#allocation7 + $0x134] sm:$0xf]
    %v5986 = vld [vmem:[#allocation7 + $0x138] sm:$0xff]
    %v5987 = vld [vmem:[#allocation7 + $0x140] sm:$0xf]
    %v5988 = vld [vmem:[#allocation7 + $0x144] sm:$0xff]
    %v5989 = vld [vmem:[#allocation7 + $0x14c] sm:$0xf]
    %v5990 = vld [vmem:[#allocation7 + $0x150] sm:$0xff]
    %v5991 = vld [vmem:[#allocation7 + $0x158] sm:$0xf]
    %v5992 = vld [vmem:[#allocation7 + $0x15c] sm:$0xff]
    %v5993 = vld [vmem:[#allocation7 + $0x164] sm:$0xf]
    %v5994 = vld [vmem:[#allocation7 + $0x168] sm:$0xff]
    %v5995 = vld [vmem:[#allocation7 + $0x170] sm:$0xf]
    %v5996 = vld [vmem:[#allocation7 + $0x174] sm:$0xff]
    %v5997 = vld [vmem:[#allocation7 + $0x17c] sm:$0xf]
    %v5998 = vpack.c.bf16 %v5964, %v5964
    %v5999 = vld [vmem:[%s446] ss:$8 sm:$0x7]
    %v6001 = vlaneseq
    %v6002 = vshrl.u32 %v6001, 7
    %v6003 = vsub.s32 0, %v6002
    %v6004 = vrot.slane %v5999, %v6003
    %v6005 = vlaneseq
    %v6006 = vshrl.u32 %v6005, 7
    %v6007 = vsub.s32 1, %v6006
    %v6008 = vrot.slane %v5999, %v6007
    %v6009 = vlaneseq
    %v6010 = vshrl.u32 %v6009, 7
    %v6011 = vsub.s32 2, %v6010
    %v6012 = vrot.slane %v5999, %v6011
    %v6048 = vunpack.c.l.b16 %v5966
    %v6049 = vunpack.c.h.b16 %v5966
    %v6050 = vunpack.c.l.b16 %v5967
    %v6051 = vunpack.c.l.b16 %v5968
    %v6052 = vunpack.c.h.b16 %v5968
    %v6053 = vunpack.c.l.b16 %v5969
    %v6054 = vunpack.c.l.b16 %v5970
    %v6055 = vunpack.c.h.b16 %v5970
    %v6056 = vunpack.c.l.b16 %v5971
    %v6057 = vunpack.c.l.b16 %v5972
    %v6058 = vunpack.c.h.b16 %v5972
    %v6059 = vunpack.c.l.b16 %v5973
    %v6060 = vunpack.c.l.b16 %v5974
    %v6061 = vunpack.c.h.b16 %v5974
    %v6062 = vunpack.c.l.b16 %v5975
    %v6063 = vunpack.c.l.b16 %v5976
    %v6064 = vunpack.c.h.b16 %v5976
    %v6065 = vunpack.c.l.b16 %v5977
    %v6066 = vunpack.c.l.b16 %v5978
    %v6067 = vunpack.c.h.b16 %v5978
    %v6068 = vunpack.c.l.b16 %v5979
    %v6069 = vunpack.c.l.b16 %v5980
    %v6070 = vunpack.c.h.b16 %v5980
    %v6071 = vunpack.c.l.b16 %v5981
    %v6072 = vunpack.c.l.b16 %v5982
    %v6073 = vunpack.c.h.b16 %v5982
    %v6074 = vunpack.c.l.b16 %v5983
    %v6075 = vunpack.c.l.b16 %v5984
    %v6076 = vunpack.c.h.b16 %v5984
    %v6077 = vunpack.c.l.b16 %v5985
    %v6078 = vunpack.c.l.b16 %v5986
    %v6079 = vunpack.c.h.b16 %v5986
    %v6080 = vunpack.c.l.b16 %v5987
    %v6081 = vunpack.c.l.b16 %v5988
    %v6082 = vunpack.c.h.b16 %v5988
    %v6083 = vunpack.c.l.b16 %v5989
    %v6084 = vunpack.c.l.b16 %v5990
    %v6085 = vunpack.c.h.b16 %v5990
    %v6086 = vunpack.c.l.b16 %v5991
    %v6087 = vunpack.c.l.b16 %v5992
    %v6088 = vunpack.c.h.b16 %v5992
    %v6089 = vunpack.c.l.b16 %v5993
    %v6090 = vunpack.c.l.b16 %v5994
    %v6091 = vunpack.c.h.b16 %v5994
    %v6092 = vunpack.c.l.b16 %v5995
    %v6093 = vunpack.c.l.b16 %v5996
    %v6094 = vunpack.c.h.b16 %v5996
    %v6095 = vunpack.c.l.b16 %v5997
    %v6096 = vpack.c.b16 %v6051, %v6048
    %v6097 = vpack.c.b16 %v6052, %v6049
    %v6098 = vpack.c.b16 %v6053, %v6050
    %v6099 = vpack.c.b16 %v6057, %v6054
    %v6100 = vpack.c.b16 %v6058, %v6055
    %v6101 = vpack.c.b16 %v6059, %v6056
    %v6102 = vpack.c.b16 %v6063, %v6060
    %v6103 = vpack.c.b16 %v6064, %v6061
    %v6104 = vpack.c.b16 %v6065, %v6062
    %v6105 = vpack.c.b16 %v6069, %v6066
    %v6106 = vpack.c.b16 %v6070, %v6067
    %v6107 = vpack.c.b16 %v6071, %v6068
    %v6108 = vpack.c.b16 %v6075, %v6072
    %v6109 = vpack.c.b16 %v6076, %v6073
    %v6110 = vpack.c.b16 %v6077, %v6074
    %v6111 = vpack.c.b16 %v6081, %v6078
    %v6112 = vpack.c.b16 %v6082, %v6079
    %v6113 = vpack.c.b16 %v6083, %v6080
    %v6114 = vpack.c.b16 %v6087, %v6084
    %v6115 = vpack.c.b16 %v6088, %v6085
    %v6116 = vpack.c.b16 %v6089, %v6086
    %v6117 = vpack.c.b16 %v6093, %v6090
    %v6118 = vpack.c.b16 %v6094, %v6091
    %v6119 = vpack.c.b16 %v6095, %v6092
    %6144 = vmatprep.subr.bf16.mxu0 %v6097
    %6145 = vmatpush1.bf16.msra.mxu0 %v6096
    %6146 = vmatprep.subr.bf16.mxu0 %v6100
    %6147 = vmatpush1.bf16.msra.mxu0 %v6099
    %6148 = vmatprep.subr.bf16.mxu0 %v6103
    %6149 = vmatpush1.bf16.msra.mxu0 %v6102
    %6150 = vmatprep.subr.bf16.mxu0 %v6106
    %6151 = vmatpush1.bf16.msra.mxu0 %v6105
    %6152 = vmatprep.subr.bf16.mxu0 %v6109
    %6153 = vmatpush1.bf16.msra.mxu0 %v6108
    %6154 = vmatprep.subr.bf16.mxu0 %v6112
    %6155 = vmatpush1.bf16.msra.mxu0 %v6111
    %6156 = vmatprep.subr.bf16.mxu0 %v6115
    %6157 = vmatpush1.bf16.msra.mxu0 %v6114
    %6158 = vmatprep.subr.bf16.mxu0 %v6118
    %6159 = vmatpush1.bf16.msra.mxu0 %v6117
    %6160 = vmatprep.subr.bf16.mxu0 0
    %6161 = vmatpush1.bf16.msra.mxu0 0
    %6162 = vmatprep.subr.bf16.mxu0 0
    %6163 = vmatpush1.bf16.msra.mxu0 0
    %6164 = vmatprep.subr.bf16.mxu0 0
    %6165 = vmatpush1.bf16.msra.mxu0 0
    %6166 = vmatprep.subr.bf16.mxu0 0
    %6167 = vmatpush1.bf16.msra.mxu0 0
    %6168 = vmatprep.subr.bf16.mxu0 0
    %6169 = vmatpush1.bf16.msra.mxu0 0
    %6170 = vmatprep.subr.bf16.mxu0 0
    %6171 = vmatpush1.bf16.msra.mxu0 0
    %6172 = vmatprep.subr.bf16.mxu0 0
    %6173 = vmatpush1.bf16.msra.mxu0 0
    %6174 = vmatprep.subr.bf16.mxu0 0
    %6175 = vmatpush1.bf16.msra.mxu0 0
    %6176 = vmatprep.mubr.bf16.mxu0 0
    %6177 = vmatmul.mubr.bf16.gmra.mrb[0].mxu0 %v5998
    %v6178 = vpop.f32.mrb[0].mxu0
    %v6179 = vadd.f32 %v6004, %v6178
    %v6180 = vpop.f32.mrb[0].mxu0
    %v6181 = vadd.f32 %v6008, %v6180
    %v6182 = vpop.f32.mrb[0].mxu0
    %v6183 = vpop.f32.mrb[0].mxu0
    %6184 = vdwg.mxu0
    %6185 = vmatprep.subr.bf16.mxu0 0
    %6186 = vmatpush1.bf16.msra.mxu0 %v6098
    %6187 = vmatprep.subr.bf16.mxu0 0
    %6188 = vmatpush1.bf16.msra.mxu0 %v6101
    %6189 = vmatprep.subr.bf16.mxu0 0
    %6190 = vmatpush1.bf16.msra.mxu0 %v6104
    %6191 = vmatprep.subr.bf16.mxu0 0
    %6192 = vmatpush1.bf16.msra.mxu0 %v6107
    %6193 = vmatprep.subr.bf16.mxu0 0
    %6194 = vmatpush1.bf16.msra.mxu0 %v6110
    %6195 = vmatprep.subr.bf16.mxu0 0
    %6196 = vmatpush1.bf16.msra.mxu0 %v6113
    %6197 = vmatprep.subr.bf16.mxu0 0
    %6198 = vmatpush1.bf16.msra.mxu0 %v6116
    %6199 = vmatprep.subr.bf16.mxu0 0
    %6200 = vmatpush1.bf16.msra.mxu0 %v6119
    %6201 = vmatprep.subr.bf16.mxu0 0
    %6202 = vmatpush1.bf16.msra.mxu0 0
    %6203 = vmatprep.subr.bf16.mxu0 0
    %6204 = vmatpush1.bf16.msra.mxu0 0
    %6205 = vmatprep.subr.bf16.mxu0 0
    %6206 = vmatpush1.bf16.msra.mxu0 0
    %6207 = vmatprep.subr.bf16.mxu0 0
    %6208 = vmatpush1.bf16.msra.mxu0 0
    %6209 = vmatprep.subr.bf16.mxu0 0
    %6210 = vmatpush1.bf16.msra.mxu0 0
    %6211 = vmatprep.subr.bf16.mxu0 0
    %6212 = vmatpush1.bf16.msra.mxu0 0
    %6213 = vmatprep.subr.bf16.mxu0 0
    %6214 = vmatpush1.bf16.msra.mxu0 0
    %6215 = vmatprep.subr.bf16.mxu0 0
    %6216 = vmatpush1.bf16.msra.mxu0 0
    %6217 = vmatprep.mubr.bf16.mxu0 0
    %6218 = vmatmul.mubr.bf16.gmra.mrb[0].mxu0 %v5998
    %v6219 = vpop.f32.mrb[0].mxu0
    %v6220 = vadd.f32 %v6012, %v6219
    %v6221 = vpop.f32.mrb[0].mxu0
    %v6222 = vpop.f32.mrb[0].mxu0
    %v6223 = vpop.f32.mrb[0].mxu0
    %6224 = vdwg.mxu0
    %v6225 = vadd.f32 %v5626, %v6179
    %v6226 = vxor.u32 %v6225, 2147483648
    %v6227 = vmul.f32 %v6226, 1.442695
    %v6228 = vpow.pop %v6227
    %v6229 = vadd.f32 %v6228, 1.0
    %v6230 = vrcp.pop %v6229
    %v6231 = vmul.f32 1.0, %v6230
    %v6232 = vadd.f32 %v5628, %v6181
    %v6233 = vxor.u32 %v6232, 2147483648
    %v6234 = vmul.f32 %v6233, 1.442695
    %v6235 = vpow.pop %v6234
    %v6236 = vadd.f32 %v6235, 1.0
    %v6237 = vrcp.pop %v6236
    %v6238 = vmul.f32 1.0, %v6237
    %v6239 = vmul.f32 %v6231, %v6220
    %v6240 = vadd.f32 %v5676, %v6239
    %v6241 = vtanh.pop %v6240
    %v6242 = vsub.f32 %v5964, %v6241
    %v6243 = vmul.f32 %v6238, %v6242
    %v6244 = vadd.f32 %v6241, %v6243
    %6245 = vst [vmem:[#allocation2 + $0x8] sm:$0xff] %v6244
    %v6246 = vld [vmem:[#allocation7 + $0xc0] sm:$0xff]
    %v6247 = vld [vmem:[#allocation7 + $0xc8] sm:$0xf]
    %v6248 = vld [vmem:[#allocation7 + $0xcc] sm:$0xff]
    %v6249 = vld [vmem:[#allocation7 + $0xd4] sm:$0xf]
    %v6250 = vld [vmem:[#allocation7 + $0xd8] sm:$0xff]
    %v6251 = vld [vmem:[#allocation7 + $0xe0] sm:$0xf]
    %v6252 = vld [vmem:[#allocation7 + $0xe4] sm:$0xff]
    %v6253 = vld [vmem:[#allocation7 + $0xec] sm:$0xf]
    %v6254 = vld [vmem:[#allocation7 + $0xf0] sm:$0xff]
    %v6255 = vld [vmem:[#allocation7 + $0xf8] sm:$0xf]
    %v6256 = vld [vmem:[#allocation7 + $0xfc] sm:$0xff]
    %v6257 = vld [vmem:[#allocation7 + $0x104] sm:$0xf]
    %v6258 = vld [vmem:[#allocation7 + $0x108] sm:$0xff]
    %v6259 = vld [vmem:[#allocation7 + $0x110] sm:$0xf]
    %v6260 = vld [vmem:[#allocation7 + $0x114] sm:$0xff]
    %v6261 = vld [vmem:[#allocation7 + $0x11c] sm:$0xf]
    %v6262 = vld [vmem:[#allocation7 + $0x120] sm:$0xff]
    %v6263 = vld [vmem:[#allocation7 + $0x128] sm:$0xf]
    %v6264 = vld [vmem:[#allocation7 + $0x12c] sm:$0xff]
    %v6265 = vld [vmem:[#allocation7 + $0x134] sm:$0xf]
    %v6266 = vld [vmem:[#allocation7 + $0x138] sm:$0xff]
    %v6267 = vld [vmem:[#allocation7 + $0x140] sm:$0xf]
    %v6268 = vld [vmem:[#allocation7 + $0x144] sm:$0xff]
    %v6269 = vld [vmem:[#allocation7 + $0x14c] sm:$0xf]
    %v6270 = vld [vmem:[#allocation7 + $0x150] sm:$0xff]
    %v6271 = vld [vmem:[#allocation7 + $0x158] sm:$0xf]
    %v6272 = vld [vmem:[#allocation7 + $0x15c] sm:$0xff]
    %v6273 = vld [vmem:[#allocation7 + $0x164] sm:$0xf]
    %v6274 = vld [vmem:[#allocation7 + $0x168] sm:$0xff]
    %v6275 = vld [vmem:[#allocation7 + $0x170] sm:$0xf]
    %v6276 = vld [vmem:[#allocation7 + $0x174] sm:$0xff]
    %v6277 = vld [vmem:[#allocation7 + $0x17c] sm:$0xf]
    %v6278 = vpack.c.bf16 %v6244, %v6244
    %v6279 = vld [vmem:[%s446] ss:$8 sm:$0x7]
    %v6281 = vlaneseq
    %v6282 = vshrl.u32 %v6281, 7
    %v6283 = vsub.s32 0, %v6282
    %v6284 = vrot.slane %v6279, %v6283
    %v6285 = vlaneseq
    %v6286 = vshrl.u32 %v6285, 7
    %v6287 = vsub.s32 1, %v6286
    %v6288 = vrot.slane %v6279, %v6287
    %v6289 = vlaneseq
    %v6290 = vshrl.u32 %v6289, 7
    %v6291 = vsub.s32 2, %v6290
    %v6292 = vrot.slane %v6279, %v6291
    %v6328 = vunpack.c.l.b16 %v6246
    %v6329 = vunpack.c.h.b16 %v6246
    %v6330 = vunpack.c.l.b16 %v6247
    %v6331 = vunpack.c.l.b16 %v6248
    %v6332 = vunpack.c.h.b16 %v6248
    %v6333 = vunpack.c.l.b16 %v6249
    %v6334 = vunpack.c.l.b16 %v6250
    %v6335 = vunpack.c.h.b16 %v6250
    %v6336 = vunpack.c.l.b16 %v6251
    %v6337 = vunpack.c.l.b16 %v6252
    %v6338 = vunpack.c.h.b16 %v6252
    %v6339 = vunpack.c.l.b16 %v6253
    %v6340 = vunpack.c.l.b16 %v6254
    %v6341 = vunpack.c.h.b16 %v6254
    %v6342 = vunpack.c.l.b16 %v6255
    %v6343 = vunpack.c.l.b16 %v6256
    %v6344 = vunpack.c.h.b16 %v6256
    %v6345 = vunpack.c.l.b16 %v6257
    %v6346 = vunpack.c.l.b16 %v6258
    %v6347 = vunpack.c.h.b16 %v6258
    %v6348 = vunpack.c.l.b16 %v6259
    %v6349 = vunpack.c.l.b16 %v6260
    %v6350 = vunpack.c.h.b16 %v6260
    %v6351 = vunpack.c.l.b16 %v6261
    %v6352 = vunpack.c.l.b16 %v6262
    %v6353 = vunpack.c.h.b16 %v6262
    %v6354 = vunpack.c.l.b16 %v6263
    %v6355 = vunpack.c.l.b16 %v6264
    %v6356 = vunpack.c.h.b16 %v6264
    %v6357 = vunpack.c.l.b16 %v6265
    %v6358 = vunpack.c.l.b16 %v6266
    %v6359 = vunpack.c.h.b16 %v6266
    %v6360 = vunpack.c.l.b16 %v6267
    %v6361 = vunpack.c.l.b16 %v6268
    %v6362 = vunpack.c.h.b16 %v6268
    %v6363 = vunpack.c.l.b16 %v6269
    %v6364 = vunpack.c.l.b16 %v6270
    %v6365 = vunpack.c.h.b16 %v6270
    %v6366 = vunpack.c.l.b16 %v6271
    %v6367 = vunpack.c.l.b16 %v6272
    %v6368 = vunpack.c.h.b16 %v6272
    %v6369 = vunpack.c.l.b16 %v6273
    %v6370 = vunpack.c.l.b16 %v6274
    %v6371 = vunpack.c.h.b16 %v6274
    %v6372 = vunpack.c.l.b16 %v6275
    %v6373 = vunpack.c.l.b16 %v6276
    %v6374 = vunpack.c.h.b16 %v6276
    %v6375 = vunpack.c.l.b16 %v6277
    %v6376 = vpack.c.b16 %v6331, %v6328
    %v6377 = vpack.c.b16 %v6332, %v6329
    %v6378 = vpack.c.b16 %v6333, %v6330
    %v6379 = vpack.c.b16 %v6337, %v6334
    %v6380 = vpack.c.b16 %v6338, %v6335
    %v6381 = vpack.c.b16 %v6339, %v6336
    %v6382 = vpack.c.b16 %v6343, %v6340
    %v6383 = vpack.c.b16 %v6344, %v6341
    %v6384 = vpack.c.b16 %v6345, %v6342
    %v6385 = vpack.c.b16 %v6349, %v6346
    %v6386 = vpack.c.b16 %v6350, %v6347
    %v6387 = vpack.c.b16 %v6351, %v6348
    %v6388 = vpack.c.b16 %v6355, %v6352
    %v6389 = vpack.c.b16 %v6356, %v6353
    %v6390 = vpack.c.b16 %v6357, %v6354
    %v6391 = vpack.c.b16 %v6361, %v6358
    %v6392 = vpack.c.b16 %v6362, %v6359
    %v6393 = vpack.c.b16 %v6363, %v6360
    %v6394 = vpack.c.b16 %v6367, %v6364
    %v6395 = vpack.c.b16 %v6368, %v6365
    %v6396 = vpack.c.b16 %v6369, %v6366
    %v6397 = vpack.c.b16 %v6373, %v6370
    %v6398 = vpack.c.b16 %v6374, %v6371
    %v6399 = vpack.c.b16 %v6375, %v6372
    %6424 = vmatprep.subr.bf16.mxu0 %v6377
    %6425 = vmatpush1.bf16.msra.mxu0 %v6376
    %6426 = vmatprep.subr.bf16.mxu0 %v6380
    %6427 = vmatpush1.bf16.msra.mxu0 %v6379
    %6428 = vmatprep.subr.bf16.mxu0 %v6383
    %6429 = vmatpush1.bf16.msra.mxu0 %v6382
    %6430 = vmatprep.subr.bf16.mxu0 %v6386
    %6431 = vmatpush1.bf16.msra.mxu0 %v6385
    %6432 = vmatprep.subr.bf16.mxu0 %v6389
    %6433 = vmatpush1.bf16.msra.mxu0 %v6388
    %6434 = vmatprep.subr.bf16.mxu0 %v6392
    %6435 = vmatpush1.bf16.msra.mxu0 %v6391
    %6436 = vmatprep.subr.bf16.mxu0 %v6395
    %6437 = vmatpush1.bf16.msra.mxu0 %v6394
    %6438 = vmatprep.subr.bf16.mxu0 %v6398
    %6439 = vmatpush1.bf16.msra.mxu0 %v6397
    %6440 = vmatprep.subr.bf16.mxu0 0
    %6441 = vmatpush1.bf16.msra.mxu0 0
    %6442 = vmatprep.subr.bf16.mxu0 0
    %6443 = vmatpush1.bf16.msra.mxu0 0
    %6444 = vmatprep.subr.bf16.mxu0 0
    %6445 = vmatpush1.bf16.msra.mxu0 0
    %6446 = vmatprep.subr.bf16.mxu0 0
    %6447 = vmatpush1.bf16.msra.mxu0 0
    %6448 = vmatprep.subr.bf16.mxu0 0
    %6449 = vmatpush1.bf16.msra.mxu0 0
    %6450 = vmatprep.subr.bf16.mxu0 0
    %6451 = vmatpush1.bf16.msra.mxu0 0
    %6452 = vmatprep.subr.bf16.mxu0 0
    %6453 = vmatpush1.bf16.msra.mxu0 0
    %6454 = vmatprep.subr.bf16.mxu0 0
    %6455 = vmatpush1.bf16.msra.mxu0 0
    %6456 = vmatprep.mubr.bf16.mxu0 0
    %6457 = vmatmul.mubr.bf16.gmra.mrb[0].mxu0 %v6278
    %v6458 = vpop.f32.mrb[0].mxu0
    %v6459 = vadd.f32 %v6284, %v6458
    %v6460 = vpop.f32.mrb[0].mxu0
    %v6461 = vadd.f32 %v6288, %v6460
    %v6462 = vpop.f32.mrb[0].mxu0
    %v6463 = vpop.f32.mrb[0].mxu0
    %6464 = vdwg.mxu0
    %6465 = vmatprep.subr.bf16.mxu0 0
    %6466 = vmatpush1.bf16.msra.mxu0 %v6378
    %6467 = vmatprep.subr.bf16.mxu0 0
    %6468 = vmatpush1.bf16.msra.mxu0 %v6381
    %6469 = vmatprep.subr.bf16.mxu0 0
    %6470 = vmatpush1.bf16.msra.mxu0 %v6384
    %6471 = vmatprep.subr.bf16.mxu0 0
    %6472 = vmatpush1.bf16.msra.mxu0 %v6387
    %6473 = vmatprep.subr.bf16.mxu0 0
    %6474 = vmatpush1.bf16.msra.mxu0 %v6390
    %6475 = vmatprep.subr.bf16.mxu0 0
    %6476 = vmatpush1.bf16.msra.mxu0 %v6393
    %6477 = vmatprep.subr.bf16.mxu0 0
    %6478 = vmatpush1.bf16.msra.mxu0 %v6396
    %6479 = vmatprep.subr.bf16.mxu0 0
    %6480 = vmatpush1.bf16.msra.mxu0 %v6399
    %6481 = vmatprep.subr.bf16.mxu0 0
    %6482 = vmatpush1.bf16.msra.mxu0 0
    %6483 = vmatprep.subr.bf16.mxu0 0
    %6484 = vmatpush1.bf16.msra.mxu0 0
    %6485 = vmatprep.subr.bf16.mxu0 0
    %6486 = vmatpush1.bf16.msra.mxu0 0
    %6487 = vmatprep.subr.bf16.mxu0 0
    %6488 = vmatpush1.bf16.msra.mxu0 0
    %6489 = vmatprep.subr.bf16.mxu0 0
    %6490 = vmatpush1.bf16.msra.mxu0 0
    %6491 = vmatprep.subr.bf16.mxu0 0
    %6492 = vmatpush1.bf16.msra.mxu0 0
    %6493 = vmatprep.subr.bf16.mxu0 0
    %6494 = vmatpush1.bf16.msra.mxu0 0
    %6495 = vmatprep.subr.bf16.mxu0 0
    %6496 = vmatpush1.bf16.msra.mxu0 0
    %6497 = vmatprep.mubr.bf16.mxu0 0
    %6498 = vmatmul.mubr.bf16.gmra.mrb[0].mxu0 %v6278
    %v6499 = vpop.f32.mrb[0].mxu0
    %v6500 = vadd.f32 %v6292, %v6499
    %v6501 = vpop.f32.mrb[0].mxu0
    %v6502 = vpop.f32.mrb[0].mxu0
    %v6503 = vpop.f32.mrb[0].mxu0
    %6504 = vdwg.mxu0
    %v6505 = vadd.f32 %v5632, %v6459
    %v6506 = vxor.u32 %v6505, 2147483648
    %v6507 = vmul.f32 %v6506, 1.442695
    %v6508 = vpow.pop %v6507
    %v6509 = vadd.f32 %v6508, 1.0
    %v6510 = vrcp.pop %v6509
    %v6511 = vmul.f32 1.0, %v6510
    %v6512 = vadd.f32 %v5634, %v6461
    %v6513 = vxor.u32 %v6512, 2147483648
    %v6514 = vmul.f32 %v6513, 1.442695
    %v6515 = vpow.pop %v6514
    %v6516 = vadd.f32 %v6515, 1.0
    %v6517 = vrcp.pop %v6516
    %v6518 = vmul.f32 1.0, %v6517
    %v6519 = vmul.f32 %v6511, %v6500
    %v6520 = vadd.f32 %v5681, %v6519
    %v6521 = vtanh.pop %v6520
    %v6522 = vsub.f32 %v6244, %v6521
    %v6523 = vmul.f32 %v6518, %v6522
    %v6524 = vadd.f32 %v6521, %v6523
    %6525 = vst [vmem:[#allocation2 + $0x10] sm:$0xff] %v6524
    %v6526 = vld [vmem:[#allocation7 + $0x300] sm:$0xf]
    %v6527 = vld [vmem:[#allocation7 + $0x30c] sm:$0xf]
    %v6528 = vld [vmem:[#allocation7 + $0x318] sm:$0xf]
    %v6529 = vld [vmem:[#allocation7 + $0x324] sm:$0xf]
    %v6530 = vld [vmem:[#allocation7 + $0x330] sm:$0xf]
    %v6531 = vld [vmem:[#allocation7 + $0x33c] sm:$0xf]
    %v6532 = vld [vmem:[#allocation7 + $0x348] sm:$0xf]
    %v6533 = vld [vmem:[#allocation7 + $0x354] sm:$0xf]
    %v6534 = vld [vmem:[#allocation7 + $0x360] sm:$0xf]
    %v6535 = vld [vmem:[#allocation7 + $0x36c] sm:$0xf]
    %v6536 = vld [vmem:[#allocation7 + $0x378] sm:$0xf]
    %v6537 = vld [vmem:[#allocation7 + $0x384] sm:$0xf]
    %v6538 = vld [vmem:[#allocation7 + $0x390] sm:$0xf]
    %v6539 = vld [vmem:[#allocation7 + $0x39c] sm:$0xf]
    %v6540 = vld [vmem:[#allocation7 + $0x3a8] sm:$0xf]
    %v6541 = vld [vmem:[#allocation7 + $0x3b4] sm:$0xf]
    %v6542 = vpack.c.bf16 %v6524, %v6524
    %v6543 = vld [vmem:[%s5 + $0x4] ss:$0 sm:$0xff]
    %v6560 = vunpack.c.l.b16 %v6526
    %v6561 = vunpack.c.l.b16 %v6527
    %v6562 = vunpack.c.l.b16 %v6528
    %v6563 = vunpack.c.l.b16 %v6529
    %v6564 = vunpack.c.l.b16 %v6530
    %v6565 = vunpack.c.l.b16 %v6531
    %v6566 = vunpack.c.l.b16 %v6532
    %v6567 = vunpack.c.l.b16 %v6533
    %v6568 = vunpack.c.l.b16 %v6534
    %v6569 = vunpack.c.l.b16 %v6535
    %v6570 = vunpack.c.l.b16 %v6536
    %v6571 = vunpack.c.l.b16 %v6537
    %v6572 = vunpack.c.l.b16 %v6538
    %v6573 = vunpack.c.l.b16 %v6539
    %v6574 = vunpack.c.l.b16 %v6540
    %v6575 = vunpack.c.l.b16 %v6541
    %v6576 = vpack.c.b16 %v6561, %v6560
    %v6577 = vpack.c.b16 %v6563, %v6562
    %v6578 = vpack.c.b16 %v6565, %v6564
    %v6579 = vpack.c.b16 %v6567, %v6566
    %v6580 = vpack.c.b16 %v6569, %v6568
    %v6581 = vpack.c.b16 %v6571, %v6570
    %v6582 = vpack.c.b16 %v6573, %v6572
    %v6583 = vpack.c.b16 %v6575, %v6574
    %6592 = vmatprep.subr.bf16.mxu0 0
    %6593 = vmatpush1.bf16.msra.mxu0 %v6576
    %6594 = vmatprep.subr.bf16.mxu0 0
    %6595 = vmatpush1.bf16.msra.mxu0 %v6577
    %6596 = vmatprep.subr.bf16.mxu0 0
    %6597 = vmatpush1.bf16.msra.mxu0 %v6578
    %6598 = vmatprep.subr.bf16.mxu0 0
    %6599 = vmatpush1.bf16.msra.mxu0 %v6579
    %6600 = vmatprep.subr.bf16.mxu0 0
    %6601 = vmatpush1.bf16.msra.mxu0 %v6580
    %6602 = vmatprep.subr.bf16.mxu0 0
    %6603 = vmatpush1.bf16.msra.mxu0 %v6581
    %6604 = vmatprep.subr.bf16.mxu0 0
    %6605 = vmatpush1.bf16.msra.mxu0 %v6582
    %6606 = vmatprep.subr.bf16.mxu0 0
    %6607 = vmatpush1.bf16.msra.mxu0 %v6583
    %6608 = vmatprep.subr.bf16.mxu0 0
    %6609 = vmatpush1.bf16.msra.mxu0 0
    %6610 = vmatprep.subr.bf16.mxu0 0
    %6611 = vmatpush1.bf16.msra.mxu0 0
    %6612 = vmatprep.subr.bf16.mxu0 0
    %6613 = vmatpush1.bf16.msra.mxu0 0
    %6614 = vmatprep.subr.bf16.mxu0 0
    %6615 = vmatpush1.bf16.msra.mxu0 0
    %6616 = vmatprep.subr.bf16.mxu0 0
    %6617 = vmatpush1.bf16.msra.mxu0 0
    %6618 = vmatprep.subr.bf16.mxu0 0
    %6619 = vmatpush1.bf16.msra.mxu0 0
    %6620 = vmatprep.subr.bf16.mxu0 0
    %6621 = vmatpush1.bf16.msra.mxu0 0
    %6622 = vmatprep.subr.bf16.mxu0 0
    %6623 = vmatpush1.bf16.msra.mxu0 0
    %6624 = vmatprep.mubr.bf16.mxu0 0
    %6625 = vmatmul.mubr.bf16.gmra.mrb[0].mxu0 %v6542
    %v6626 = vpop.f32.mrb[0].mxu0
    %v6627 = vadd.f32 %v6543, %v6626
    %v6628 = vpop.f32.mrb[0].mxu0
    %v6629 = vpop.f32.mrb[0].mxu0
    %v6630 = vpop.f32.mrb[0].mxu0
    %6631 = vdwg.mxu0
    %vm6632 = vcmp.gt.f32.partialorder %v6627, 0.0
    %v6633 = vmul.f32 %v6627, 1.442695
    %v6634 = vpow.pop %v6633
    %v6635 = vsub.f32 %v6634, 1.0
    %v6636 = vmul.f32 %v6635, 1.6732632
    %v6637 = vsel %vm6632, %v6627, %v6636
    %v6638 = vmul.f32 %v6637, 1.050701
    %v6639 = vld [vmem:[#allocation7 + $0x3c0] sm:$0xf]
    %v6640 = vld [vmem:[#allocation7 + $0x3cc] sm:$0xf]
    %v6641 = vld [vmem:[#allocation7 + $0x3d8] sm:$0xf]
    %v6642 = vld [vmem:[#allocation7 + $0x3e4] sm:$0xf]
    %v6643 = vld [vmem:[#allocation7 + $0x3f0] sm:$0xf]
    %v6644 = vld [vmem:[#allocation7 + $0x3fc] sm:$0xf]
    %v6645 = vld [vmem:[#allocation7 + $0x408] sm:$0xf]
    %v6646 = vld [vmem:[#allocation7 + $0x414] sm:$0xf]
    %v6647 = vld [vmem:[#allocation7 + $0x420] sm:$0xf]
    %v6648 = vld [vmem:[#allocation7 + $0x42c] sm:$0xf]
    %v6649 = vld [vmem:[#allocation7 + $0x438] sm:$0xf]
    %v6650 = vld [vmem:[#allocation7 + $0x444] sm:$0xf]
    %v6651 = vld [vmem:[#allocation7 + $0x450] sm:$0xf]
    %v6652 = vld [vmem:[#allocation7 + $0x45c] sm:$0xf]
    %v6653 = vld [vmem:[#allocation7 + $0x468] sm:$0xf]
    %v6654 = vld [vmem:[#allocation7 + $0x474] sm:$0xf]
    %v6655 = vpack.c.bf16 %v6638, %v6638
    %v6656 = vld [vmem:[%s5 + $0x5] ss:$0 sm:$0xff]
    %v6673 = vunpack.c.l.b16 %v6639
    %v6674 = vunpack.c.l.b16 %v6640
    %v6675 = vunpack.c.l.b16 %v6641
    %v6676 = vunpack.c.l.b16 %v6642
    %v6677 = vunpack.c.l.b16 %v6643
    %v6678 = vunpack.c.l.b16 %v6644
    %v6679 = vunpack.c.l.b16 %v6645
    %v6680 = vunpack.c.l.b16 %v6646
    %v6681 = vunpack.c.l.b16 %v6647
    %v6682 = vunpack.c.l.b16 %v6648
    %v6683 = vunpack.c.l.b16 %v6649
    %v6684 = vunpack.c.l.b16 %v6650
    %v6685 = vunpack.c.l.b16 %v6651
    %v6686 = vunpack.c.l.b16 %v6652
    %v6687 = vunpack.c.l.b16 %v6653
    %v6688 = vunpack.c.l.b16 %v6654
    %v6689 = vpack.c.b16 %v6674, %v6673
    %v6690 = vpack.c.b16 %v6676, %v6675
    %v6691 = vpack.c.b16 %v6678, %v6677
    %v6692 = vpack.c.b16 %v6680, %v6679
    %v6693 = vpack.c.b16 %v6682, %v6681
    %v6694 = vpack.c.b16 %v6684, %v6683
    %v6695 = vpack.c.b16 %v6686, %v6685
    %v6696 = vpack.c.b16 %v6688, %v6687
    %6705 = vmatprep.subr.bf16.mxu0 0
    %6706 = vmatpush1.bf16.msra.mxu0 %v6689
    %6707 = vmatprep.subr.bf16.mxu0 0
    %6708 = vmatpush1.bf16.msra.mxu0 %v6690
    %6709 = vmatprep.subr.bf16.mxu0 0
    %6710 = vmatpush1.bf16.msra.mxu0 %v6691
    %6711 = vmatprep.subr.bf16.mxu0 0
    %6712 = vmatpush1.bf16.msra.mxu0 %v6692
    %6713 = vmatprep.subr.bf16.mxu0 0
    %6714 = vmatpush1.bf16.msra.mxu0 %v6693
    %6715 = vmatprep.subr.bf16.mxu0 0
    %6716 = vmatpush1.bf16.msra.mxu0 %v6694
    %6717 = vmatprep.subr.bf16.mxu0 0
    %6718 = vmatpush1.bf16.msra.mxu0 %v6695
    %6719 = vmatprep.subr.bf16.mxu0 0
    %6720 = vmatpush1.bf16.msra.mxu0 %v6696
    %6721 = vmatprep.subr.bf16.mxu0 0
    %6722 = vmatpush1.bf16.msra.mxu0 0
    %6723 = vmatprep.subr.bf16.mxu0 0
    %6724 = vmatpush1.bf16.msra.mxu0 0
    %6725 = vmatprep.subr.bf16.mxu0 0
    %6726 = vmatpush1.bf16.msra.mxu0 0
    %6727 = vmatprep.subr.bf16.mxu0 0
    %6728 = vmatpush1.bf16.msra.mxu0 0
    %6729 = vmatprep.subr.bf16.mxu0 0
    %6730 = vmatpush1.bf16.msra.mxu0 0
    %6731 = vmatprep.subr.bf16.mxu0 0
    %6732 = vmatpush1.bf16.msra.mxu0 0
    %6733 = vmatprep.subr.bf16.mxu0 0
    %6734 = vmatpush1.bf16.msra.mxu0 0
    %6735 = vmatprep.subr.bf16.mxu0 0
    %6736 = vmatpush1.bf16.msra.mxu0 0
    %6737 = vmatprep.mubr.bf16.mxu0 0
    %6738 = vmatmul.mubr.bf16.gmra.mrb[0].mxu0 %v6655
    %v6739 = vpop.f32.mrb[0].mxu0
    %v6740 = vadd.f32 %v6656, %v6739
    %v6741 = vpop.f32.mrb[0].mxu0
    %v6742 = vpop.f32.mrb[0].mxu0
    %v6743 = vpop.f32.mrb[0].mxu0
    %6744 = vdwg.mxu0
    %vm6745 = vcmp.gt.f32.partialorder %v6740, 0.0
    %v6746 = vmul.f32 %v6740, 1.442695
    %v6747 = vpow.pop %v6746
    %v6748 = vsub.f32 %v6747, 1.0
    %v6749 = vmul.f32 %v6748, 1.6732632
    %v6750 = vsel %vm6745, %v6740, %v6749
    %v6751 = vmul.f32 %v6750, 1.050701
    %v6752 = vld [vmem:[#allocation7 + $0x480] sm:$0xf]
    %v6753 = vld [vmem:[#allocation7 + $0x48c] sm:$0xf]
    %v6754 = vld [vmem:[#allocation7 + $0x498] sm:$0xf]
    %v6755 = vld [vmem:[#allocation7 + $0x4a4] sm:$0xf]
    %v6756 = vld [vmem:[#allocation7 + $0x4b0] sm:$0xf]
    %v6757 = vld [vmem:[#allocation7 + $0x4bc] sm:$0xf]
    %v6758 = vld [vmem:[#allocation7 + $0x4c8] sm:$0xf]
    %v6759 = vld [vmem:[#allocation7 + $0x4d4] sm:$0xf]
    %v6760 = vld [vmem:[#allocation7 + $0x4e0] sm:$0xf]
    %v6761 = vld [vmem:[#allocation7 + $0x4ec] sm:$0xf]
    %v6762 = vld [vmem:[#allocation7 + $0x4f8] sm:$0xf]
    %v6763 = vld [vmem:[#allocation7 + $0x504] sm:$0xf]
    %v6764 = vld [vmem:[#allocation7 + $0x510] sm:$0xf]
    %v6765 = vld [vmem:[#allocation7 + $0x51c] sm:$0xf]
    %v6766 = vld [vmem:[#allocation7 + $0x528] sm:$0xf]
    %v6767 = vld [vmem:[#allocation7 + $0x534] sm:$0xf]
    %v6768 = vpack.c.bf16 %v6751, %v6751
    %v6769 = vld [vmem:[%s5 + $0x6] ss:$0 sm:$0xff]
    %v6786 = vunpack.c.l.b16 %v6752
    %v6787 = vunpack.c.l.b16 %v6753
    %v6788 = vunpack.c.l.b16 %v6754
    %v6789 = vunpack.c.l.b16 %v6755
    %v6790 = vunpack.c.l.b16 %v6756
    %v6791 = vunpack.c.l.b16 %v6757
    %v6792 = vunpack.c.l.b16 %v6758
    %v6793 = vunpack.c.l.b16 %v6759
    %v6794 = vunpack.c.l.b16 %v6760
    %v6795 = vunpack.c.l.b16 %v6761
    %v6796 = vunpack.c.l.b16 %v6762
    %v6797 = vunpack.c.l.b16 %v6763
    %v6798 = vunpack.c.l.b16 %v6764
    %v6799 = vunpack.c.l.b16 %v6765
    %v6800 = vunpack.c.l.b16 %v6766
    %v6801 = vunpack.c.l.b16 %v6767
    %v6802 = vpack.c.b16 %v6787, %v6786
    %v6803 = vpack.c.b16 %v6789, %v6788
    %v6804 = vpack.c.b16 %v6791, %v6790
    %v6805 = vpack.c.b16 %v6793, %v6792
    %v6806 = vpack.c.b16 %v6795, %v6794
    %v6807 = vpack.c.b16 %v6797, %v6796
    %v6808 = vpack.c.b16 %v6799, %v6798
    %v6809 = vpack.c.b16 %v6801, %v6800
    %6818 = vmatprep.subr.bf16.mxu0 0
    %6819 = vmatpush1.bf16.msra.mxu0 %v6802
    %6820 = vmatprep.subr.bf16.mxu0 0
    %6821 = vmatpush1.bf16.msra.mxu0 %v6803
    %6822 = vmatprep.subr.bf16.mxu0 0
    %6823 = vmatpush1.bf16.msra.mxu0 %v6804
    %6824 = vmatprep.subr.bf16.mxu0 0
    %6825 = vmatpush1.bf16.msra.mxu0 %v6805
    %6826 = vmatprep.subr.bf16.mxu0 0
    %6827 = vmatpush1.bf16.msra.mxu0 %v6806
    %6828 = vmatprep.subr.bf16.mxu0 0
    %6829 = vmatpush1.bf16.msra.mxu0 %v6807
    %6830 = vmatprep.subr.bf16.mxu0 0
    %6831 = vmatpush1.bf16.msra.mxu0 %v6808
    %6832 = vmatprep.subr.bf16.mxu0 0
    %6833 = vmatpush1.bf16.msra.mxu0 %v6809
    %6834 = vmatprep.subr.bf16.mxu0 0
    %6835 = vmatpush1.bf16.msra.mxu0 0
    %6836 = vmatprep.subr.bf16.mxu0 0
    %6837 = vmatpush1.bf16.msra.mxu0 0
    %6838 = vmatprep.subr.bf16.mxu0 0
    %6839 = vmatpush1.bf16.msra.mxu0 0
    %6840 = vmatprep.subr.bf16.mxu0 0
    %6841 = vmatpush1.bf16.msra.mxu0 0
    %6842 = vmatprep.subr.bf16.mxu0 0
    %6843 = vmatpush1.bf16.msra.mxu0 0
    %6844 = vmatprep.subr.bf16.mxu0 0
    %6845 = vmatpush1.bf16.msra.mxu0 0
    %6846 = vmatprep.subr.bf16.mxu0 0
    %6847 = vmatpush1.bf16.msra.mxu0 0
    %6848 = vmatprep.subr.bf16.mxu0 0
    %6849 = vmatpush1.bf16.msra.mxu0 0
    %6850 = vmatprep.mubr.bf16.mxu0 0
    %6851 = vmatmul.mubr.bf16.gmra.mrb[0].mxu0 %v6768
    %v6852 = vpop.f32.mrb[0].mxu0
    %v6853 = vadd.f32 %v6769, %v6852
    %v6854 = vpop.f32.mrb[0].mxu0
    %v6855 = vpop.f32.mrb[0].mxu0
    %v6856 = vpop.f32.mrb[0].mxu0
    %6857 = vdwg.mxu0
    %vm6858 = vcmask 3072
    %6859 = vst.msk [vmem:[%s6] sm:$0xf] %vm6858, %v6853
    // Predicated region
    $region38: #{tpu_custom_call.1} parent=1 // pred_check
      _
    $region39: #{tpu_custom_call.1} parent=1 // pred_check_branch
      %6861 = sbr.rel (0) target = $region41
    $region40: #{tpu_custom_call.1} parent=1 // pred_region
      _
    $region41: #{tpu_custom_call.1} parent=1 // pred_fallthru
      _
    // Predicated region
    $region42: #{tpu_custom_call.1} parent=1 // pred_check
      _
    $region43: #{tpu_custom_call.1} parent=1 // pred_check_branch
      %6863 = sbr.rel (0) target = $region45
    $region44: #{tpu_custom_call.1} parent=1 // pred_region
      _
    $region45: #{tpu_custom_call.1} parent=1 // pred_fallthru
      _
    %6864 = vsyncpa [#allocation4], 1
    %6865 = vsyncpa [#allocation6], 1

</llo_original>
